<compile_context>
chip_gen: v5e
topology: v5e:2x2
jax: 0.10.0
libtpu: 0.0.40
codegen_flags: <defaults>
</compile_context>

<pallas_src>
import functools

import jax
import jax.numpy as jnp
from jax import lax
from jax.experimental import pallas as pl
from jax.experimental.pallas import tpu as pltpu


_BN_EPS = 1e-5
_SMALL_M_THRESHOLD = 16  # below this, a pallas_call costs more than the math


# ----------------------------------------------------------------------------
# Pallas kernel: fused (im2col GEMM) + per-channel affine + optional LeakyReLU
# ----------------------------------------------------------------------------
def _gemm_affine_lrelu_kernel(x_ref, w_ref, scale_ref, shift_ref, o_ref, *,
                              neg_slope):
    # x_ref:     (TILE_M, K)   bf16   im2col patch rows for this tile
    # w_ref:     (K, CO)       bf16   reshaped conv weight (resident block)
    # scale_ref: (1, CO)       f32    folded BN scale (or ones)
    # shift_ref: (1, CO)       f32    folded BN shift / conv bias
    # o_ref:     (TILE_M, CO)  bf16
    acc = jnp.dot(x_ref[...], w_ref[...],
                  preferred_element_type=jnp.float32)        # MXU, f32 accum
    y = acc * scale_ref[...] + shift_ref[...]                 # VPU epilogue
    if neg_slope is not None:
        y = jnp.where(y >= 0.0, y, jnp.float32(neg_slope) * y)
    o_ref[...] = y.astype(o_ref.dtype)


def _round_up(x, m):
    return ((x + m - 1) // m) * m


def _fused_gemm(cols, w_mat, scale, shift, *, neg_slope):
    """cols: (M, K); w_mat: (K, CO); scale/shift: (CO,) -> (M, CO) bf16."""
    M, K = cols.shape
    CO = w_mat.shape[1]

    cols_bf = cols.astype(jnp.bfloat16)
    w_bf = w_mat.astype(jnp.bfloat16)
    scale_row = scale.reshape(1, CO).astype(jnp.float32)
    shift_row = shift.reshape(1, CO).astype(jnp.float32)

    if M < _SMALL_M_THRESHOLD:
        # Degenerate tail GEMM (e.g. the final 2x8192 @ 8192x1 matvec): per the
        # perf review, kernel-launch + padding overhead exceeds the math here.
        acc = jnp.dot(cols_bf, w_bf, preferred_element_type=jnp.float32)
        y = acc * scale_row + shift_row
        if neg_slope is not None:
            y = jnp.where(y >= 0.0, y, jnp.float32(neg_slope) * y)
        return y.astype(jnp.bfloat16)

    # M tiling: large tiles to amortize per-step overhead, but keep >=2 grid
    # steps on the big layers so dual-TC chips (v7x) get both cores busy.
    # bf16 sublane tile is 16, so tile_m / m_pad are multiples of 16.
    if M >= 512:
        tile_m = min(1024, _round_up(pl.cdiv(M, 2), 16))
    else:
        tile_m = _round_up(M, 16)
    m_pad = _round_up(M, tile_m)
    if m_pad != M:
        cols_bf = jnp.pad(cols_bf, ((0, m_pad - M), (0, 0)))

    kernel = functools.partial(_gemm_affine_lrelu_kernel, neg_slope=neg_slope)

    out = pl.pallas_call(
        kernel,
        out_shape=jax.ShapeDtypeStruct((m_pad, CO), jnp.bfloat16),
        grid_spec=pltpu.PrefetchScalarGridSpec(
            num_scalar_prefetch=0,
            grid=(m_pad // tile_m,),
            in_specs=[
                pl.BlockSpec((tile_m, K), lambda i: (i, 0)),   # cols tile
                pl.BlockSpec((K, CO), lambda i: (0, 0)),       # resident weight
                pl.BlockSpec((1, CO), lambda i: (0, 0)),       # scale
                pl.BlockSpec((1, CO), lambda i: (0, 0)),       # shift
            ],
            out_specs=pl.BlockSpec((tile_m, CO), lambda i: (i, 0)),
        ),
        compiler_params=pltpu.CompilerParams(
            dimension_semantics=("parallel",)),
    )(cols_bf, w_bf, scale_row, shift_row)

    return out[:M, :]


# ----------------------------------------------------------------------------
# im2col for Conv3d(kernel=4, stride=2, padding=1), channels-last (NDHWC)
# ----------------------------------------------------------------------------
def _im2col_3d_ndhwc(x, *, k=4, s=2, p=1):
    n, d, h, w, c = x.shape
    od = (d + 2 * p - k) // s + 1
    oh = (h + 2 * p - k) // s + 1
    ow = (w + 2 * p - k) // s + 1
    xp = jnp.pad(x, ((0, 0), (p, p), (p, p), (p, p), (0, 0)))
    patches = []
    for kd in range(k):
        for kh in range(k):
            for kw in range(k):
                patches.append(
                    xp[:, kd:kd + s * od:s, kh:kh + s * oh:s,
                       kw:kw + s * ow:s, :])
    cols = jnp.stack(patches, axis=4)                  # (n, od, oh, ow, k^3, c)
    cols = cols.reshape(n * od * oh * ow, k ** 3 * c)  # tap-major, ci-minor
    return cols, (n, od, oh, ow)


def _conv3d_block(x_ndhwc, weight, scale, shift, *, neg_slope):
    """Conv3d(k=4,s=2,p=1) + per-channel affine + optional LeakyReLU (NDHWC)."""
    co, ci = weight.shape[0], weight.shape[1]
    cols, (n, od, oh, ow) = _im2col_3d_ndhwc(x_ndhwc)
    # (co, ci, kd, kh, kw) -> (kd, kh, kw, ci, co) -> (k^3*ci, co): matches the
    # tap-major / ci-minor column ordering produced by _im2col_3d_ndhwc.
    w_mat = jnp.transpose(weight, (2, 3, 4, 1, 0)).reshape(-1, co)
    out = _fused_gemm(cols, w_mat,
                      scale.astype(jnp.float32), shift.astype(jnp.float32),
                      neg_slope=neg_slope)
    return out.reshape(n, od, oh, ow, co)              # stays channels-last


# ----------------------------------------------------------------------------
# Full Discriminator forward
# ----------------------------------------------------------------------------
@jax.jit
def discriminator_forward(x, params):
    p = params
    # NCDHW -> NDHWC once; intermediate activations stay channels-last bf16.
    y = jnp.transpose(x, (0, 2, 3, 4, 1)).astype(jnp.bfloat16)
    # layer 1: Conv3d(1, c0, bias=True) + LeakyReLU(0.2)
    y = _conv3d_block(y, p["w1"], jnp.ones_like(p["b1"]), p["b1"],
                      neg_slope=0.2)
    # layers 2-4: Conv3d(bias=False) + BatchNorm3d (folded, eval) + LeakyReLU
    for i in (2, 3, 4):
        scale = p[f"g{i}"] / jnp.sqrt(p[f"v{i}"] + _BN_EPS)
        shift = p[f"be{i}"] - p[f"m{i}"] * scale
        y = _conv3d_block(y, p[f"w{i}"], scale, shift, neg_slope=0.2)
    # layer 5: Conv3d(c3, 1, bias=True), no activation
    y = _conv3d_block(y, p["w5"], jnp.ones_like(p["b5"]), p["b5"],
                      neg_slope=None)
    # back to NCDHW, f32 for the caller
    return jnp.transpose(y, (0, 4, 1, 2, 3)).astype(jnp.float32)


# ----------------------------------------------------------------------------
# Pure-JAX references (lax conv) for correctness checking
# ----------------------------------------------------------------------------
def _conv3d_ref(x, w, b, *, operand_dtype, precision=None):
    out = lax.conv_general_dilated(
        x.astype(operand_dtype), w.astype(operand_dtype),
        window_strides=(2, 2, 2), padding=[(1, 1)] * 3,
        dimension_numbers=("NCDHW", "OIDHW", "NCDHW"),
        preferred_element_type=jnp.float32,
        precision=precision)
    if b is not None:
        out = out + b.reshape(1, -1, 1, 1, 1)
    return out


def _reference_forward(x, p, *, matched):
    """matched=True reproduces the kernel's bf16-operand / f32-accum numerics."""
    opd = jnp.bfloat16 if matched else jnp.float32
    prec = None if matched else lax.Precision.HIGHEST

    def q(y):  # per-layer bf16 storage round-trip (matched mode only)
        return y.astype(jnp.bfloat16).astype(jnp.float32) if matched else y

    y = _conv3d_ref(x, p["w1"], p["b1"], operand_dtype=opd, precision=prec)
    y = q(jnp.where(y >= 0, y, 0.2 * y))
    for i in (2, 3, 4):
        y = _conv3d_ref(y, p[f"w{i}"], None, operand_dtype=opd, precision=prec)
        scale = p[f"g{i}"] / jnp.sqrt(p[f"v{i}"] + _BN_EPS)
        shift = p[f"be{i}"] - p[f"m{i}"] * scale
        y = y * scale.reshape(1, -1, 1, 1, 1) + shift.reshape(1, -1, 1, 1, 1)
        y = q(jnp.where(y >= 0, y, 0.2 * y))
    y = _conv3d_ref(y, p["w5"], p["b5"], operand_dtype=opd, precision=prec)
    return q(y)


# ----------------------------------------------------------------------------
# Parameter construction + smoke test
# ----------------------------------------------------------------------------
def _init_params(key, image_channels=1, channels=(16, 32, 64, 128)):
    ks = list(jax.random.split(key, 32))
    nxt = iter(ks).__next__
    p = {}

    def conv_w(co, ci):
        fan_in = ci * 4 * 4 * 4
        return (jax.random.normal(nxt(), (co, ci, 4, 4, 4), jnp.float32)
                * jnp.sqrt(2.0 / fan_in))

    c0, c1, c2, c3 = channels
    p["w1"] = conv_w(c0, image_channels)
    p["b1"] = 0.1 * jax.random.normal(nxt(), (c0,), jnp.float32)
    for i, (ci, co) in zip((2, 3, 4), ((c0, c1), (c1, c2), (c2, c3))):
        p[f"w{i}"] = conv_w(co, ci)
        p[f"g{i}"] = 1.0 + 0.1 * jax.random.normal(nxt(), (co,), jnp.float32)
        p[f"be{i}"] = 0.1 * jax.random.normal(nxt(), (co,), jnp.float32)
        p[f"m{i}"] = 0.1 * jax.random.normal(nxt(), (co,), jnp.float32)
        p[f"v{i}"] = jax.random.uniform(nxt(), (co,), jnp.float32, 0.5, 1.5)
    p["w5"] = conv_w(image_channels, c3)
    p["b5"] = 0.1 * jax.random.normal(nxt(), (image_channels,), jnp.float32)
    return p


if __name__ == "__main__":
    key = jax.random.PRNGKey(0)
    k_x, k_p = jax.random.split(key)

    # Input: (batch=2, channels=1, 32^3 volume) -> spatial halves 5 times to 1.
    x = jax.random.normal(k_x, (2, 1, 32, 32, 32), dtype=jnp.float32)
    params = _init_params(k_p)

    out = discriminator_forward(x, params)
    out = jax.block_until_ready(out)
    assert out.shape == (2, 1, 1, 1, 1), out.shape
    assert out.dtype == jnp.float32

    # 1) Tight check against a matched-precision (bf16 operand, f32 accum)
    #    reference: validates im2col ordering, BN folding, LeakyReLU and GEMM.
    ref_m = _reference_forward(x, params, matched=True)
    err_m = float(jnp.max(jnp.abs(out - ref_m)) /
                  (jnp.max(jnp.abs(ref_m)) + 1e-8))
    assert err_m < 2e-2, f"mismatch vs matched-precision reference: {err_m}"

    # 2) Loose sanity check against the full-f32 reference (bounds the bf16
    #    quantization error introduced deliberately for MXU throughput).
    ref_f = _reference_forward(x, params, matched=False)
    abs_err = float(jnp.max(jnp.abs(out - ref_f)))
    assert abs_err <= 0.05 + 0.1 * float(jnp.max(jnp.abs(ref_f))), (
        f"bf16 quantization error too large vs f32 reference: {abs_err}")

    print("KERNEL_OK")
</pallas_src>

<mosaic_0001>
module attributes {stable_mosaic.version = 11 : i64} {
  func.func @_gemm_affine_lrelu_kernel(%arg0: i32, %arg1: memref<1024x64xbf16, #tpu.memory_space<vmem>>, %arg2: memref<64x16xbf16, #tpu.memory_space<vmem>>, %arg3: memref<1x16xf32, #tpu.memory_space<vmem>>, %arg4: memref<1x16xf32, #tpu.memory_space<vmem>>, %arg5: memref<1024x16xbf16, #tpu.memory_space<vmem>>) attributes {dimension_semantics = [#tpu.dimension_semantics<parallel>], iteration_bounds = array<i64: 8>, scalar_prefetch = 0 : i64, scratch_operands = 0 : i64, tpu.core_type = #tpu.core_type<tc>, window_params = [{transform_indices = @transform_0, window_bounds = array<i64: 1024, 64>}, {pipeline_mode = #tpu.pipeline_mode<synchronous>, transform_indices = @transform_1, window_bounds = array<i64: 64, 16>}, {pipeline_mode = #tpu.pipeline_mode<synchronous>, transform_indices = @transform_2, window_bounds = array<i64: 1, 16>}, {pipeline_mode = #tpu.pipeline_mode<synchronous>, transform_indices = @transform_3, window_bounds = array<i64: 1, 16>}, {transform_indices = @transform_4, window_bounds = array<i64: 1024, 16>}]} {
    %c0 = arith.constant 0 : index
    %c0_0 = arith.constant 0 : index
    %0 = vector.load %arg1[%c0, %c0_0] : memref<1024x64xbf16, #tpu.memory_space<vmem>>, vector<1024x64xbf16>
    %c0_1 = arith.constant 0 : index
    %c0_2 = arith.constant 0 : index
    %1 = vector.load %arg2[%c0_1, %c0_2] : memref<64x16xbf16, #tpu.memory_space<vmem>>, vector<64x16xbf16>
    %cst = arith.constant dense<0.000000e+00> : vector<1024x16xf32>
    %2 = tpu.matmul %0, %1, %cst {dimension_numbers = #tpu.dot_dimension_numbers<[1], [0], [0], [1], [0, 0, 1, 1], [], []>} : vector<1024x64xbf16>, vector<64x16xbf16>, vector<1024x16xf32> -> vector<1024x16xf32>
    %c0_3 = arith.constant 0 : index
    %c0_4 = arith.constant 0 : index
    %3 = vector.load %arg3[%c0_3, %c0_4] : memref<1x16xf32, #tpu.memory_space<vmem>>, vector<1x16xf32>
    %4 = vector.broadcast %3 : vector<1x16xf32> to vector<1024x16xf32>
    %5 = arith.mulf %2, %4 : vector<1024x16xf32>
    %c0_5 = arith.constant 0 : index
    %c0_6 = arith.constant 0 : index
    %6 = vector.load %arg4[%c0_5, %c0_6] : memref<1x16xf32, #tpu.memory_space<vmem>>, vector<1x16xf32>
    %7 = vector.broadcast %6 : vector<1x16xf32> to vector<1024x16xf32>
    %8 = arith.addf %5, %7 : vector<1024x16xf32>
    %cst_7 = arith.constant 0.000000e+00 : f32
    %9 = vector.broadcast %cst_7 : f32 to vector<1024x16xf32>
    %10 = arith.cmpf oge, %8, %9 : vector<1024x16xf32>
    %cst_8 = arith.constant 2.000000e-01 : f32
    %11 = vector.broadcast %cst_8 : f32 to vector<1024x16xf32>
    %12 = arith.mulf %11, %8 : vector<1024x16xf32>
    %13 = arith.select %10, %8, %12 : vector<1024x16xi1>, vector<1024x16xf32>
    %14 = arith.truncf %13 : vector<1024x16xf32> to vector<1024x16xbf16>
    %c0_9 = arith.constant 0 : index
    %c0_10 = arith.constant 0 : index
    %15 = vector.load %arg5[%c0_9, %c0_10] : memref<1024x16xbf16, #tpu.memory_space<vmem>>, vector<1024x16xbf16>
    tpu.vector_store %arg5[%c0_9, %c0_10], %14 {strides = array<i32>} : memref<1024x16xbf16, #tpu.memory_space<vmem>>, vector<1024x16xbf16>,
    return
  }
  func.func @transform_0(%arg0: i32) -> (i32, i32) {
    %c0_i32 = arith.constant 0 : i32
    %c0_i32_0 = arith.constant 0 : i32
    return %arg0, %c0_i32 : i32, i32
  }
  func.func @transform_1(%arg0: i32) -> (i32, i32) {
    %c0_i32 = arith.constant 0 : i32
    %c0_i32_0 = arith.constant 0 : i32
    %c0_i32_1 = arith.constant 0 : i32
    return %c0_i32, %c0_i32_0 : i32, i32
  }
  func.func @transform_2(%arg0: i32) -> (i32, i32) {
    %c0_i32 = arith.constant 0 : i32
    %c0_i32_0 = arith.constant 0 : i32
    %c0_i32_1 = arith.constant 0 : i32
    return %c0_i32, %c0_i32_0 : i32, i32
  }
  func.func @transform_3(%arg0: i32) -> (i32, i32) {
    %c0_i32 = arith.constant 0 : i32
    %c0_i32_0 = arith.constant 0 : i32
    %c0_i32_1 = arith.constant 0 : i32
    return %c0_i32, %c0_i32_0 : i32, i32
  }
  func.func @transform_4(%arg0: i32) -> (i32, i32) {
    %c0_i32 = arith.constant 0 : i32
    %c0_i32_0 = arith.constant 0 : i32
    return %arg0, %c0_i32 : i32, i32
  }
}

module attributes {stable_mosaic.version = 11 : i64} {
  func.func @_gemm_affine_lrelu_kernel(%arg0: i32, %arg1: memref<512x1024xbf16, #tpu.memory_space<vmem>>, %arg2: memref<1024x32xbf16, #tpu.memory_space<vmem>>, %arg3: memref<1x32xf32, #tpu.memory_space<vmem>>, %arg4: memref<1x32xf32, #tpu.memory_space<vmem>>, %arg5: memref<512x32xbf16, #tpu.memory_space<vmem>>) attributes {dimension_semantics = [#tpu.dimension_semantics<parallel>], iteration_bounds = array<i64: 2>, scalar_prefetch = 0 : i64, scratch_operands = 0 : i64, tpu.core_type = #tpu.core_type<tc>, window_params = [{transform_indices = @transform_0, window_bounds = array<i64: 512, 1024>}, {pipeline_mode = #tpu.pipeline_mode<synchronous>, transform_indices = @transform_1, window_bounds = array<i64: 1024, 32>}, {pipeline_mode = #tpu.pipeline_mode<synchronous>, transform_indices = @transform_2, window_bounds = array<i64: 1, 32>}, {pipeline_mode = #tpu.pipeline_mode<synchronous>, transform_indices = @transform_3, window_bounds = array<i64: 1, 32>}, {transform_indices = @transform_4, window_bounds = array<i64: 512, 32>}]} {
    %c0 = arith.constant 0 : index
    %c0_0 = arith.constant 0 : index
    %0 = vector.load %arg1[%c0, %c0_0] : memref<512x1024xbf16, #tpu.memory_space<vmem>>, vector<512x1024xbf16>
    %c0_1 = arith.constant 0 : index
    %c0_2 = arith.constant 0 : index
    %1 = vector.load %arg2[%c0_1, %c0_2] : memref<1024x32xbf16, #tpu.memory_space<vmem>>, vector<1024x32xbf16>
    %cst = arith.constant dense<0.000000e+00> : vector<512x32xf32>
    %2 = tpu.matmul %0, %1, %cst {dimension_numbers = #tpu.dot_dimension_numbers<[1], [0], [0], [1], [0, 0, 1, 1], [], []>} : vector<512x1024xbf16>, vector<1024x32xbf16>, vector<512x32xf32> -> vector<512x32xf32>
    %c0_3 = arith.constant 0 : index
    %c0_4 = arith.constant 0 : index
    %3 = vector.load %arg3[%c0_3, %c0_4] : memref<1x32xf32, #tpu.memory_space<vmem>>, vector<1x32xf32>
    %4 = vector.broadcast %3 : vector<1x32xf32> to vector<512x32xf32>
    %5 = arith.mulf %2, %4 : vector<512x32xf32>
    %c0_5 = arith.constant 0 : index
    %c0_6 = arith.constant 0 : index
    %6 = vector.load %arg4[%c0_5, %c0_6] : memref<1x32xf32, #tpu.memory_space<vmem>>, vector<1x32xf32>
    %7 = vector.broadcast %6 : vector<1x32xf32> to vector<512x32xf32>
    %8 = arith.addf %5, %7 : vector<512x32xf32>
    %cst_7 = arith.constant 0.000000e+00 : f32
    %9 = vector.broadcast %cst_7 : f32 to vector<512x32xf32>
    %10 = arith.cmpf oge, %8, %9 : vector<512x32xf32>
    %cst_8 = arith.constant 2.000000e-01 : f32
    %11 = vector.broadcast %cst_8 : f32 to vector<512x32xf32>
    %12 = arith.mulf %11, %8 : vector<512x32xf32>
    %13 = arith.select %10, %8, %12 : vector<512x32xi1>, vector<512x32xf32>
    %14 = arith.truncf %13 : vector<512x32xf32> to vector<512x32xbf16>
    %c0_9 = arith.constant 0 : index
    %c0_10 = arith.constant 0 : index
    %15 = vector.load %arg5[%c0_9, %c0_10] : memref<512x32xbf16, #tpu.memory_space<vmem>>, vector<512x32xbf16>
    tpu.vector_store %arg5[%c0_9, %c0_10], %14 {strides = array<i32>} : memref<512x32xbf16, #tpu.memory_space<vmem>>, vector<512x32xbf16>,
    return
  }
  func.func @transform_0(%arg0: i32) -> (i32, i32) {
    %c0_i32 = arith.constant 0 : i32
    %c0_i32_0 = arith.constant 0 : i32
    return %arg0, %c0_i32 : i32, i32
  }
  func.func @transform_1(%arg0: i32) -> (i32, i32) {
    %c0_i32 = arith.constant 0 : i32
    %c0_i32_0 = arith.constant 0 : i32
    %c0_i32_1 = arith.constant 0 : i32
    return %c0_i32, %c0_i32_0 : i32, i32
  }
  func.func @transform_2(%arg0: i32) -> (i32, i32) {
    %c0_i32 = arith.constant 0 : i32
    %c0_i32_0 = arith.constant 0 : i32
    %c0_i32_1 = arith.constant 0 : i32
    return %c0_i32, %c0_i32_0 : i32, i32
  }
  func.func @transform_3(%arg0: i32) -> (i32, i32) {
    %c0_i32 = arith.constant 0 : i32
    %c0_i32_0 = arith.constant 0 : i32
    %c0_i32_1 = arith.constant 0 : i32
    return %c0_i32, %c0_i32_0 : i32, i32
  }
  func.func @transform_4(%arg0: i32) -> (i32, i32) {
    %c0_i32 = arith.constant 0 : i32
    %c0_i32_0 = arith.constant 0 : i32
    return %arg0, %c0_i32 : i32, i32
  }
}

module attributes {stable_mosaic.version = 11 : i64} {
  func.func @_gemm_affine_lrelu_kernel(%arg0: i32, %arg1: memref<128x2048xbf16, #tpu.memory_space<vmem>>, %arg2: memref<2048x64xbf16, #tpu.memory_space<vmem>>, %arg3: memref<1x64xf32, #tpu.memory_space<vmem>>, %arg4: memref<1x64xf32, #tpu.memory_space<vmem>>, %arg5: memref<128x64xbf16, #tpu.memory_space<vmem>>) attributes {dimension_semantics = [#tpu.dimension_semantics<parallel>], iteration_bounds = array<i64: 1>, scalar_prefetch = 0 : i64, scratch_operands = 0 : i64, tpu.core_type = #tpu.core_type<tc>, window_params = [{transform_indices = @transform_0, window_bounds = array<i64: 128, 2048>}, {pipeline_mode = #tpu.pipeline_mode<synchronous>, transform_indices = @transform_1, window_bounds = array<i64: 2048, 64>}, {pipeline_mode = #tpu.pipeline_mode<synchronous>, transform_indices = @transform_2, window_bounds = array<i64: 1, 64>}, {pipeline_mode = #tpu.pipeline_mode<synchronous>, transform_indices = @transform_3, window_bounds = array<i64: 1, 64>}, {transform_indices = @transform_4, window_bounds = array<i64: 128, 64>}]} {
    %c0 = arith.constant 0 : index
    %c0_0 = arith.constant 0 : index
    %0 = vector.load %arg1[%c0, %c0_0] : memref<128x2048xbf16, #tpu.memory_space<vmem>>, vector<128x2048xbf16>
    %c0_1 = arith.constant 0 : index
    %c0_2 = arith.constant 0 : index
    %1 = vector.load %arg2[%c0_1, %c0_2] : memref<2048x64xbf16, #tpu.memory_space<vmem>>, vector<2048x64xbf16>
    %cst = arith.constant dense<0.000000e+00> : vector<128x64xf32>
    %2 = tpu.matmul %0, %1, %cst {dimension_numbers = #tpu.dot_dimension_numbers<[1], [0], [0], [1], [0, 0, 1, 1], [], []>} : vector<128x2048xbf16>, vector<2048x64xbf16>, vector<128x64xf32> -> vector<128x64xf32>
    %c0_3 = arith.constant 0 : index
    %c0_4 = arith.constant 0 : index
    %3 = vector.load %arg3[%c0_3, %c0_4] : memref<1x64xf32, #tpu.memory_space<vmem>>, vector<1x64xf32>
    %4 = vector.broadcast %3 : vector<1x64xf32> to vector<128x64xf32>
    %5 = arith.mulf %2, %4 : vector<128x64xf32>
    %c0_5 = arith.constant 0 : index
    %c0_6 = arith.constant 0 : index
    %6 = vector.load %arg4[%c0_5, %c0_6] : memref<1x64xf32, #tpu.memory_space<vmem>>, vector<1x64xf32>
    %7 = vector.broadcast %6 : vector<1x64xf32> to vector<128x64xf32>
    %8 = arith.addf %5, %7 : vector<128x64xf32>
    %cst_7 = arith.constant 0.000000e+00 : f32
    %9 = vector.broadcast %cst_7 : f32 to vector<128x64xf32>
    %10 = arith.cmpf oge, %8, %9 : vector<128x64xf32>
    %cst_8 = arith.constant 2.000000e-01 : f32
    %11 = vector.broadcast %cst_8 : f32 to vector<128x64xf32>
    %12 = arith.mulf %11, %8 : vector<128x64xf32>
    %13 = arith.select %10, %8, %12 : vector<128x64xi1>, vector<128x64xf32>
    %14 = arith.truncf %13 : vector<128x64xf32> to vector<128x64xbf16>
    %c0_9 = arith.constant 0 : index
    %c0_10 = arith.constant 0 : index
    %15 = vector.load %arg5[%c0_9, %c0_10] : memref<128x64xbf16, #tpu.memory_space<vmem>>, vector<128x64xbf16>
    tpu.vector_store %arg5[%c0_9, %c0_10], %14 {strides = array<i32>} : memref<128x64xbf16, #tpu.memory_space<vmem>>, vector<128x64xbf16>,
    return
  }
  func.func @transform_0(%arg0: i32) -> (i32, i32) {
    %c0_i32 = arith.constant 0 : i32
    %c0_i32_0 = arith.constant 0 : i32
    return %arg0, %c0_i32 : i32, i32
  }
  func.func @transform_1(%arg0: i32) -> (i32, i32) {
    %c0_i32 = arith.constant 0 : i32
    %c0_i32_0 = arith.constant 0 : i32
    %c0_i32_1 = arith.constant 0 : i32
    return %c0_i32, %c0_i32_0 : i32, i32
  }
  func.func @transform_2(%arg0: i32) -> (i32, i32) {
    %c0_i32 = arith.constant 0 : i32
    %c0_i32_0 = arith.constant 0 : i32
    %c0_i32_1 = arith.constant 0 : i32
    return %c0_i32, %c0_i32_0 : i32, i32
  }
  func.func @transform_3(%arg0: i32) -> (i32, i32) {
    %c0_i32 = arith.constant 0 : i32
    %c0_i32_0 = arith.constant 0 : i32
    %c0_i32_1 = arith.constant 0 : i32
    return %c0_i32, %c0_i32_0 : i32, i32
  }
  func.func @transform_4(%arg0: i32) -> (i32, i32) {
    %c0_i32 = arith.constant 0 : i32
    %c0_i32_0 = arith.constant 0 : i32
    return %arg0, %c0_i32 : i32, i32
  }
}

module attributes {stable_mosaic.version = 11 : i64} {
  func.func @_gemm_affine_lrelu_kernel(%arg0: i32, %arg1: memref<16x4096xbf16, #tpu.memory_space<vmem>>, %arg2: memref<4096x128xbf16, #tpu.memory_space<vmem>>, %arg3: memref<1x128xf32, #tpu.memory_space<vmem>>, %arg4: memref<1x128xf32, #tpu.memory_space<vmem>>, %arg5: memref<16x128xbf16, #tpu.memory_space<vmem>>) attributes {dimension_semantics = [#tpu.dimension_semantics<parallel>], iteration_bounds = array<i64: 1>, scalar_prefetch = 0 : i64, scratch_operands = 0 : i64, tpu.core_type = #tpu.core_type<tc>, window_params = [{transform_indices = @transform_0, window_bounds = array<i64: 16, 4096>}, {pipeline_mode = #tpu.pipeline_mode<synchronous>, transform_indices = @transform_1, window_bounds = array<i64: 4096, 128>}, {pipeline_mode = #tpu.pipeline_mode<synchronous>, transform_indices = @transform_2, window_bounds = array<i64: 1, 128>}, {pipeline_mode = #tpu.pipeline_mode<synchronous>, transform_indices = @transform_3, window_bounds = array<i64: 1, 128>}, {transform_indices = @transform_4, window_bounds = array<i64: 16, 128>}]} {
    %c0 = arith.constant 0 : index
    %c0_0 = arith.constant 0 : index
    %0 = vector.load %arg1[%c0, %c0_0] : memref<16x4096xbf16, #tpu.memory_space<vmem>>, vector<16x4096xbf16>
    %c0_1 = arith.constant 0 : index
    %c0_2 = arith.constant 0 : index
    %1 = vector.load %arg2[%c0_1, %c0_2] : memref<4096x128xbf16, #tpu.memory_space<vmem>>, vector<4096x128xbf16>
    %cst = arith.constant dense<0.000000e+00> : vector<16x128xf32>
    %2 = tpu.matmul %0, %1, %cst {dimension_numbers = #tpu.dot_dimension_numbers<[1], [0], [0], [1], [0, 0, 1, 1], [], []>} : vector<16x4096xbf16>, vector<4096x128xbf16>, vector<16x128xf32> -> vector<16x128xf32>
    %c0_3 = arith.constant 0 : index
    %c0_4 = arith.constant 0 : index
    %3 = vector.load %arg3[%c0_3, %c0_4] : memref<1x128xf32, #tpu.memory_space<vmem>>, vector<1x128xf32>
    %4 = vector.broadcast %3 : vector<1x128xf32> to vector<16x128xf32>
    %5 = arith.mulf %2, %4 : vector<16x128xf32>
    %c0_5 = arith.constant 0 : index
    %c0_6 = arith.constant 0 : index
    %6 = vector.load %arg4[%c0_5, %c0_6] : memref<1x128xf32, #tpu.memory_space<vmem>>, vector<1x128xf32>
    %7 = vector.broadcast %6 : vector<1x128xf32> to vector<16x128xf32>
    %8 = arith.addf %5, %7 : vector<16x128xf32>
    %cst_7 = arith.constant 0.000000e+00 : f32
    %9 = vector.broadcast %cst_7 : f32 to vector<16x128xf32>
    %10 = arith.cmpf oge, %8, %9 : vector<16x128xf32>
    %cst_8 = arith.constant 2.000000e-01 : f32
    %11 = vector.broadcast %cst_8 : f32 to vector<16x128xf32>
    %12 = arith.mulf %11, %8 : vector<16x128xf32>
    %13 = arith.select %10, %8, %12 : vector<16x128xi1>, vector<16x128xf32>
    %14 = arith.truncf %13 : vector<16x128xf32> to vector<16x128xbf16>
    %c0_9 = arith.constant 0 : index
    %c0_10 = arith.constant 0 : index
    %15 = vector.load %arg5[%c0_9, %c0_10] : memref<16x128xbf16, #tpu.memory_space<vmem>>, vector<16x128xbf16>
    tpu.vector_store %arg5[%c0_9, %c0_10], %14 {strides = array<i32>} : memref<16x128xbf16, #tpu.memory_space<vmem>>, vector<16x128xbf16>,
    return
  }
  func.func @transform_0(%arg0: i32) -> (i32, i32) {
    %c0_i32 = arith.constant 0 : i32
    %c0_i32_0 = arith.constant 0 : i32
    return %arg0, %c0_i32 : i32, i32
  }
  func.func @transform_1(%arg0: i32) -> (i32, i32) {
    %c0_i32 = arith.constant 0 : i32
    %c0_i32_0 = arith.constant 0 : i32
    %c0_i32_1 = arith.constant 0 : i32
    return %c0_i32, %c0_i32_0 : i32, i32
  }
  func.func @transform_2(%arg0: i32) -> (i32, i32) {
    %c0_i32 = arith.constant 0 : i32
    %c0_i32_0 = arith.constant 0 : i32
    %c0_i32_1 = arith.constant 0 : i32
    return %c0_i32, %c0_i32_0 : i32, i32
  }
  func.func @transform_3(%arg0: i32) -> (i32, i32) {
    %c0_i32 = arith.constant 0 : i32
    %c0_i32_0 = arith.constant 0 : i32
    %c0_i32_1 = arith.constant 0 : i32
    return %c0_i32, %c0_i32_0 : i32, i32
  }
  func.func @transform_4(%arg0: i32) -> (i32, i32) {
    %c0_i32 = arith.constant 0 : i32
    %c0_i32_0 = arith.constant 0 : i32
    return %arg0, %c0_i32 : i32, i32
  }
}

</mosaic_0001>

<llo_original>
// kernel: discriminator_forward.4
$region0: #{discriminator_forward.4}
  #allocation0 [shape = 'u32[]', space=smem, size = 0x4, offset = 0x4, fixed_abs, tag = 'smem constant byte address 0x4 - core index']
  #allocation1 [shape = 'u32[72,128]{1,0:T(1,128)}', space=vmem, size = 0x9000, scoped, tag = 'internal scratch']
  %s0 = inlined_call_operand.hbm [shape: bf16[8192,64], index: 0, kind: input, shape index: {}]
  %s1 = inlined_call_operand.vmem [shape: bf16[64,16], index: 1, kind: input, shape index: {}]
  %s2 = inlined_call_operand.vmem [shape: f32[1,16], index: 2, kind: input, shape index: {}]
  %s3 = inlined_call_operand.vmem [shape: f32[1,16], index: 3, kind: input, shape index: {}]
  %s4 = inlined_call_operand.vmem [shape: bf16[8192,16], index: 4, kind: output, shape index: {}]
  %s5 = sld [smem:[#allocation0]]
  $region53: #{discriminator_forward.4} parent=0
    _
  %s7 = ssub.s32 1, %s5
  %s8 = scalar_select 0, %s7, %s5
  $region1: #{discriminator_forward.4} parent=0
    #allocation2 [shape = 'u8[524288]{0}', space=vmem, size = 0x80000, scoped, tag = 'input window, operand 0']
    #allocation3 [shape = 's32[2]{0}', space=sflag, size = 0x8, scoped, tag = 'scoped memory for discriminator_forward.4']
    %9 = vsyncpa [#allocation3], 0
    %s10 = scalar_lea.sflag [#allocation3], 1
    %11 = vsyncpa %s10, 0
    loop: start=0, step=1, limit=10
    $region2: #{discriminator_forward.4} parent=1 // loop_pre_header
      _
    $region3: #{discriminator_forward.4} parent=1 // loop_header
      %s13 = sphi 0, %s17
      %p14 = scmp.ge.s32.totalorder %s13, 10
      %s23 = sphi 0, %s25
      %s26 = sphi 0, %s23
      %s27 = sphi 0, %s26
      %s43 = sphi 0, %s27
      %s47 = sphi 0, %s47
      %s49 = sphi 0, %s47
      %s50 = sphi 0, %s49
      %s64 = sphi 0, %s50
      %s68 = sphi 0, %s68
      %s70 = sphi 0, %s68
      %s71 = sphi 0, %s70
      %s85 = sphi 0, %s71
      %s89 = sphi 0, %s89
      %s91 = sphi 0, %s89
      %s92 = sphi 0, %s91
      %s106 = sphi 0, %s92
      %s112 = sphi 0, %s114
      %s115 = sphi 0, %s112
      %s116 = sphi 0, %s115
      %s132 = sphi 0, %s116
    $region4: #{discriminator_forward.4} parent=1 // loop_header_branch
      %16 = sbr.rel (%p14) target = $region8
    $region5: #{discriminator_forward.4} parent=1 // loop_body
      %s18 = ssub.s32 %s13, 1
      %s19 = ssub.s32 %s13, 2
      %s20 = sadd.s32 %s13, 1
      %s21 = ssub.s32 %s13, %s20
      %p22 = scmp.eq.s32.totalorder %s21, 0
      %s24 = sadd.s32 %s23, 1
      %s25 = scalar_select %p22, %s23, %s24
      %p28 = pneg %p22
      %p29 = scmp.eq.s32.totalorder %s13, 7
      %p30 = por %p28, %p29
      %p31 = scmp.ne.s32.totalorder %s23, %s26
      %p32 = scmp.eq.s32.totalorder %s13, 0
      %p33 = por %p31, %p32
      %p34 = scmp.ne.s32.totalorder %s23, %s26
      %p35 = scmp.eq.s32.totalorder %s18, 7
      %p36 = por %p34, %p35
      %p37 = scmp.ne.s32.totalorder %s26, %s27
      %p38 = scmp.eq.s32.totalorder %s18, 0
      %p39 = por %p37, %p38
      %p40 = scmp.ne.s32.totalorder %s26, %s27
      %p41 = scmp.eq.s32.totalorder %s19, 7
      %p42 = por %p40, %p41
      %p44 = scmp.ne.s32.totalorder %s27, %s43
      %p45 = scmp.eq.s32.totalorder %s19, 0
      %p46 = por %p44, %p45
      %s48 = sadd.s32 %s47, 1
      %p51 = scmp.eq.s32.totalorder %s13, 7
      %p52 = scmp.ne.s32.totalorder %s47, %s49
      %p53 = scmp.eq.s32.totalorder %s13, 0
      %p54 = por %p52, %p53
      %p55 = scmp.ne.s32.totalorder %s47, %s49
      %p56 = scmp.eq.s32.totalorder %s18, 7
      %p57 = por %p55, %p56
      %p58 = scmp.ne.s32.totalorder %s49, %s50
      %p59 = scmp.eq.s32.totalorder %s18, 0
      %p60 = por %p58, %p59
      %p61 = scmp.ne.s32.totalorder %s49, %s50
      %p62 = scmp.eq.s32.totalorder %s19, 7
      %p63 = por %p61, %p62
      %p65 = scmp.ne.s32.totalorder %s50, %s64
      %p66 = scmp.eq.s32.totalorder %s19, 0
      %p67 = por %p65, %p66
      %s69 = sadd.s32 %s68, 1
      %p72 = scmp.eq.s32.totalorder %s13, 7
      %p73 = scmp.ne.s32.totalorder %s68, %s70
      %p74 = scmp.eq.s32.totalorder %s13, 0
      %p75 = por %p73, %p74
      %p76 = scmp.ne.s32.totalorder %s68, %s70
      %p77 = scmp.eq.s32.totalorder %s18, 7
      %p78 = por %p76, %p77
      %p79 = scmp.ne.s32.totalorder %s70, %s71
      %p80 = scmp.eq.s32.totalorder %s18, 0
      %p81 = por %p79, %p80
      %p82 = scmp.ne.s32.totalorder %s70, %s71
      %p83 = scmp.eq.s32.totalorder %s19, 7
      %p84 = por %p82, %p83
      %p86 = scmp.ne.s32.totalorder %s71, %s85
      %p87 = scmp.eq.s32.totalorder %s19, 0
      %p88 = por %p86, %p87
      %s90 = sadd.s32 %s89, 1
      %p93 = scmp.eq.s32.totalorder %s13, 7
      %p94 = scmp.ne.s32.totalorder %s89, %s91
      %p95 = scmp.eq.s32.totalorder %s13, 0
      %p96 = por %p94, %p95
      %p97 = scmp.ne.s32.totalorder %s89, %s91
      %p98 = scmp.eq.s32.totalorder %s18, 7
      %p99 = por %p97, %p98
      %p100 = scmp.ne.s32.totalorder %s91, %s92
      %p101 = scmp.eq.s32.totalorder %s18, 0
      %p102 = por %p100, %p101
      %p103 = scmp.ne.s32.totalorder %s91, %s92
      %p104 = scmp.eq.s32.totalorder %s19, 7
      %p105 = por %p103, %p104
      %p107 = scmp.ne.s32.totalorder %s92, %s106
      %p108 = scmp.eq.s32.totalorder %s19, 0
      %p109 = por %p107, %p108
      %s110 = ssub.s32 %s13, %s20
      %p111 = scmp.eq.s32.totalorder %s110, 0
      %s113 = sadd.s32 %s112, 1
      %s114 = scalar_select %p111, %s112, %s113
      %p117 = pneg %p111
      %p118 = scmp.eq.s32.totalorder %s13, 7
      %p119 = por %p117, %p118
      %p120 = scmp.ne.s32.totalorder %s112, %s115
      %p121 = scmp.eq.s32.totalorder %s13, 0
      %p122 = por %p120, %p121
      %p123 = scmp.ne.s32.totalorder %s112, %s115
      %p124 = scmp.eq.s32.totalorder %s18, 7
      %p125 = por %p123, %p124
      %p126 = scmp.ne.s32.totalorder %s115, %s116
      %p127 = scmp.eq.s32.totalorder %s18, 0
      %p128 = por %p126, %p127
      %p129 = scmp.ne.s32.totalorder %s115, %s116
      %p130 = scmp.eq.s32.totalorder %s19, 7
      %p131 = por %p129, %p130
      %p133 = scmp.ne.s32.totalorder %s116, %s132
      %p134 = scmp.eq.s32.totalorder %s19, 0
      %p135 = por %p133, %p134
      %p136 = scmp.le.s32.totalorder 1, %s13
      %p137 = scmp.lt.s32.totalorder %s13, 9
      %p138 = pnand %p136, %p137
      %p139 = pneg %p138
      // Predicated region
      $region9: #{discriminator_forward.4} parent=5 // pred_check
        _
      $region10: #{discriminator_forward.4} parent=5 // pred_check_branch
        %141 = sbr.rel (%p138) target = $region12
      $region11: #{discriminator_forward.4} parent=5 // pred_region
        %s142 = ssub.s32 %s13, 1
        // Predicated region
        $region13: #{discriminator_forward.4} parent=11 // pred_check
          %p143 = pneg %p60
        $region14: #{discriminator_forward.4} parent=11 // pred_check_branch
          %145 = sbr.rel (%p143) target = $region16
        $region15: #{discriminator_forward.4} parent=11 // pred_region
          _
        $region16: #{discriminator_forward.4} parent=11 // pred_fallthru
          _
        // Predicated region
        $region17: #{discriminator_forward.4} parent=11 // pred_check
          %p146 = pneg %p81
        $region18: #{discriminator_forward.4} parent=11 // pred_check_branch
          %148 = sbr.rel (%p146) target = $region20
        $region19: #{discriminator_forward.4} parent=11 // pred_region
          _
        $region20: #{discriminator_forward.4} parent=11 // pred_fallthru
          _
        // Predicated region
        $region21: #{discriminator_forward.4} parent=11 // pred_check
          %p149 = pneg %p102
        $region22: #{discriminator_forward.4} parent=11 // pred_check_branch
          %151 = sbr.rel (%p149) target = $region24
        $region23: #{discriminator_forward.4} parent=11 // pred_region
          _
        $region24: #{discriminator_forward.4} parent=11 // pred_fallthru
          _
      $region12: #{discriminator_forward.4} parent=5 // pred_fallthru
        _
      %p152 = scmp.lt.s32.totalorder %s13, 8
      // Predicated region
      $region25: #{discriminator_forward.4} parent=5 // pred_check
        %p153 = pneg %p152
      $region26: #{discriminator_forward.4} parent=5 // pred_check_branch
        %155 = sbr.rel (%p153) target = $region28
      $region27: #{discriminator_forward.4} parent=5 // pred_region
        // Predicated region
        $region29: #{discriminator_forward.4} parent=27 // pred_check
          %p156 = pneg %p33
        $region30: #{discriminator_forward.4} parent=27 // pred_check_branch
          %158 = sbr.rel (%p156) target = $region32
        $region31: #{discriminator_forward.4} parent=27 // pred_region
          %s159 = sand.u32 %s23, 1
          %s160 = scalar_lea.sflag [#allocation3], %s159
          %s161 = sand.u32 %s23, 1
          %s162 = smul.addr %s161, 512
          %s163 = scalar_lea.vmem [#allocation2], %s162
          %s164 = smul.u32 128, %s13
          %166 = vsyncadd %s160, 0
          %s167 = smul.addr %s164, 4
          %s168 = scalar_lea.hbm %s0, %s167
          %s169 = sshll.u32 %s168, 4
          %s170 = int_to_ptr.hbm [resolvable:$true] %s169
          %s171 = sshll.u32 %s163, 4
          %s172 = int_to_ptr.vmem [resolvable:$true] %s171
          %177 = dma.hbm_to_vmem [thread:$0]  %s170, 8192, %s172, %s160, 64, 64, 4
        $region32: #{discriminator_forward.4} parent=27 // pred_fallthru
          _
      $region28: #{discriminator_forward.4} parent=5 // pred_fallthru
        _
      %p178 = scmp.le.s32.totalorder 1, %s13
      %p179 = scmp.lt.s32.totalorder %s13, 9
      %p180 = pnand %p178, %p179
      %p181 = pneg %p180
      // Predicated region
      $region33: #{discriminator_forward.4} parent=5 // pred_check
        _
      $region34: #{discriminator_forward.4} parent=5 // pred_check_branch
        %183 = sbr.rel (%p180) target = $region36
      $region35: #{discriminator_forward.4} parent=5 // pred_region
        %s184 = ssub.s32 %s13, 1
        %s185 = sand.u32 %s26, 1
        %s186 = scalar_lea.sflag [#allocation3], %s185
        %s187 = sand.u32 %s26, 1
        %s188 = smul.addr %s187, 512
        %s189 = scalar_lea.vmem [#allocation2], %s188
        // Predicated region
        $region37: #{discriminator_forward.4} parent=35 // pred_check
          %p190 = pneg %p39
        $region38: #{discriminator_forward.4} parent=35 // pred_check_branch
          %192 = sbr.rel (%p190) target = $region40
        $region39: #{discriminator_forward.4} parent=35 // pred_region
          %194 = dma.done %s186, 8192
        $region40: #{discriminator_forward.4} parent=35 // pred_fallthru
          _
        %s195 = sand.u32 %s26, 1
        %s196 = scalar_lea.sflag [#allocation3], %s195
        %s197 = sand.u32 %s26, 1
        %s198 = smul.addr %s197, 512
        %s199 = scalar_lea.vmem [#allocation2], %s198
        %p200 = pneg %p39
        %p201 = pneg %p36
        %p202 = pneg %p60
        %p203 = pneg %p57
        %p204 = pneg %p81
        %p205 = pneg %p78
        %p206 = pneg %p102
        %p207 = pneg %p99
        %p208 = pneg %p128
        %p209 = pneg %p125
        %s210 = smul.u32 128, %s18
        %p211 = scmp.lt.s32.totalorder %s210, 1023
        %s212 = scalar_select %p211, %s210, 1023
        %s213 = smul.addr %s212, 4
        %s214 = scalar_lea.vmem %s4, %s213
        %s215 = smul.u32 128, %s18
        %s216 = smul.u32 128, %s18
        %p217 = scmp.lt.s32.totalorder %s216, 1023
        %s218 = scalar_select %p217, %s216, 1023
        %s219 = smul.addr %s218, 4
        %s220 = scalar_lea.vmem %s4, %s219
        %s221 = smul.u32 128, %s18
        %v223 = vld [vmem:[%s189] sm:$0xf]
        %v224 = vld [vmem:[%s189 + $0x4] sm:$0xf]
        %v225 = vld [vmem:[%s189 + $0x8] sm:$0xf]
        %v226 = vld [vmem:[%s189 + $0xc] sm:$0xf]
        %v227 = vld [vmem:[%s189 + $0x10] sm:$0xf]
        %v228 = vld [vmem:[%s189 + $0x14] sm:$0xf]
        %v229 = vld [vmem:[%s189 + $0x18] sm:$0xf]
        %v230 = vld [vmem:[%s189 + $0x1c] sm:$0xf]
        %v231 = vld [vmem:[%s189 + $0x20] sm:$0xf]
        %v232 = vld [vmem:[%s189 + $0x24] sm:$0xf]
        %v233 = vld [vmem:[%s189 + $0x28] sm:$0xf]
        %v234 = vld [vmem:[%s189 + $0x2c] sm:$0xf]
        %v235 = vld [vmem:[%s189 + $0x30] sm:$0xf]
        %v236 = vld [vmem:[%s189 + $0x34] sm:$0xf]
        %v237 = vld [vmem:[%s189 + $0x38] sm:$0xf]
        %v238 = vld [vmem:[%s189 + $0x3c] sm:$0xf]
        %v239 = vld [vmem:[%s189 + $0x40] sm:$0xf]
        %v240 = vld [vmem:[%s189 + $0x44] sm:$0xf]
        %v241 = vld [vmem:[%s189 + $0x48] sm:$0xf]
        %v242 = vld [vmem:[%s189 + $0x4c] sm:$0xf]
        %v243 = vld [vmem:[%s189 + $0x50] sm:$0xf]
        %v244 = vld [vmem:[%s189 + $0x54] sm:$0xf]
        %v245 = vld [vmem:[%s189 + $0x58] sm:$0xf]
        %v246 = vld [vmem:[%s189 + $0x5c] sm:$0xf]
        %v247 = vld [vmem:[%s189 + $0x60] sm:$0xf]
        %v248 = vld [vmem:[%s189 + $0x64] sm:$0xf]
        %v249 = vld [vmem:[%s189 + $0x68] sm:$0xf]
        %v250 = vld [vmem:[%s189 + $0x6c] sm:$0xf]
        %v251 = vld [vmem:[%s189 + $0x70] sm:$0xf]
        %v252 = vld [vmem:[%s189 + $0x74] sm:$0xf]
        %v253 = vld [vmem:[%s189 + $0x78] sm:$0xf]
        %v254 = vld [vmem:[%s189 + $0x7c] sm:$0xf]
        %v255 = vld [vmem:[%s189 + $0x80] sm:$0xf]
        %v256 = vld [vmem:[%s189 + $0x84] sm:$0xf]
        %v257 = vld [vmem:[%s189 + $0x88] sm:$0xf]
        %v258 = vld [vmem:[%s189 + $0x8c] sm:$0xf]
        %v259 = vld [vmem:[%s189 + $0x90] sm:$0xf]
        %v260 = vld [vmem:[%s189 + $0x94] sm:$0xf]
        %v261 = vld [vmem:[%s189 + $0x98] sm:$0xf]
        %v262 = vld [vmem:[%s189 + $0x9c] sm:$0xf]
        %v263 = vld [vmem:[%s189 + $0xa0] sm:$0xf]
        %v264 = vld [vmem:[%s189 + $0xa4] sm:$0xf]
        %v265 = vld [vmem:[%s189 + $0xa8] sm:$0xf]
        %v266 = vld [vmem:[%s189 + $0xac] sm:$0xf]
        %v267 = vld [vmem:[%s189 + $0xb0] sm:$0xf]
        %v268 = vld [vmem:[%s189 + $0xb4] sm:$0xf]
        %v269 = vld [vmem:[%s189 + $0xb8] sm:$0xf]
        %v270 = vld [vmem:[%s189 + $0xbc] sm:$0xf]
        %v271 = vld [vmem:[%s189 + $0xc0] sm:$0xf]
        %v272 = vld [vmem:[%s189 + $0xc4] sm:$0xf]
        %v273 = vld [vmem:[%s189 + $0xc8] sm:$0xf]
        %v274 = vld [vmem:[%s189 + $0xcc] sm:$0xf]
        %v275 = vld [vmem:[%s189 + $0xd0] sm:$0xf]
        %v276 = vld [vmem:[%s189 + $0xd4] sm:$0xf]
        %v277 = vld [vmem:[%s189 + $0xd8] sm:$0xf]
        %v278 = vld [vmem:[%s189 + $0xdc] sm:$0xf]
        %v279 = vld [vmem:[%s189 + $0xe0] sm:$0xf]
        %v280 = vld [vmem:[%s189 + $0xe4] sm:$0xf]
        %v281 = vld [vmem:[%s189 + $0xe8] sm:$0xf]
        %v282 = vld [vmem:[%s189 + $0xec] sm:$0xf]
        %v283 = vld [vmem:[%s189 + $0xf0] sm:$0xf]
        %v284 = vld [vmem:[%s189 + $0xf4] sm:$0xf]
        %v285 = vld [vmem:[%s189 + $0xf8] sm:$0xf]
        %v286 = vld [vmem:[%s189 + $0xfc] sm:$0xf]
        %v287 = vld [vmem:[%s189 + $0x100] sm:$0xf]
        %v288 = vld [vmem:[%s189 + $0x104] sm:$0xf]
        %v289 = vld [vmem:[%s189 + $0x108] sm:$0xf]
        %v290 = vld [vmem:[%s189 + $0x10c] sm:$0xf]
        %v291 = vld [vmem:[%s189 + $0x110] sm:$0xf]
        %v292 = vld [vmem:[%s189 + $0x114] sm:$0xf]
        %v293 = vld [vmem:[%s189 + $0x118] sm:$0xf]
        %v294 = vld [vmem:[%s189 + $0x11c] sm:$0xf]
        %v295 = vld [vmem:[%s189 + $0x120] sm:$0xf]
        %v296 = vld [vmem:[%s189 + $0x124] sm:$0xf]
        %v297 = vld [vmem:[%s189 + $0x128] sm:$0xf]
        %v298 = vld [vmem:[%s189 + $0x12c] sm:$0xf]
        %v299 = vld [vmem:[%s189 + $0x130] sm:$0xf]
        %v300 = vld [vmem:[%s189 + $0x134] sm:$0xf]
        %v301 = vld [vmem:[%s189 + $0x138] sm:$0xf]
        %v302 = vld [vmem:[%s189 + $0x13c] sm:$0xf]
        %v303 = vld [vmem:[%s189 + $0x140] sm:$0xf]
        %v304 = vld [vmem:[%s189 + $0x144] sm:$0xf]
        %v305 = vld [vmem:[%s189 + $0x148] sm:$0xf]
        %v306 = vld [vmem:[%s189 + $0x14c] sm:$0xf]
        %v307 = vld [vmem:[%s189 + $0x150] sm:$0xf]
        %v308 = vld [vmem:[%s189 + $0x154] sm:$0xf]
        %v309 = vld [vmem:[%s189 + $0x158] sm:$0xf]
        %v310 = vld [vmem:[%s189 + $0x15c] sm:$0xf]
        %v311 = vld [vmem:[%s189 + $0x160] sm:$0xf]
        %v312 = vld [vmem:[%s189 + $0x164] sm:$0xf]
        %v313 = vld [vmem:[%s189 + $0x168] sm:$0xf]
        %v314 = vld [vmem:[%s189 + $0x16c] sm:$0xf]
        %v315 = vld [vmem:[%s189 + $0x170] sm:$0xf]
        %v316 = vld [vmem:[%s189 + $0x174] sm:$0xf]
        %v317 = vld [vmem:[%s189 + $0x178] sm:$0xf]
        %v318 = vld [vmem:[%s189 + $0x17c] sm:$0xf]
        %v319 = vld [vmem:[%s189 + $0x180] sm:$0xf]
        %v320 = vld [vmem:[%s189 + $0x184] sm:$0xf]
        %v321 = vld [vmem:[%s189 + $0x188] sm:$0xf]
        %v322 = vld [vmem:[%s189 + $0x18c] sm:$0xf]
        %v323 = vld [vmem:[%s189 + $0x190] sm:$0xf]
        %v324 = vld [vmem:[%s189 + $0x194] sm:$0xf]
        %v325 = vld [vmem:[%s189 + $0x198] sm:$0xf]
        %v326 = vld [vmem:[%s189 + $0x19c] sm:$0xf]
        %v327 = vld [vmem:[%s189 + $0x1a0] sm:$0xf]
        %v328 = vld [vmem:[%s189 + $0x1a4] sm:$0xf]
        %v329 = vld [vmem:[%s189 + $0x1a8] sm:$0xf]
        %v330 = vld [vmem:[%s189 + $0x1ac] sm:$0xf]
        %v331 = vld [vmem:[%s189 + $0x1b0] sm:$0xf]
        %v332 = vld [vmem:[%s189 + $0x1b4] sm:$0xf]
        %v333 = vld [vmem:[%s189 + $0x1b8] sm:$0xf]
        %v334 = vld [vmem:[%s189 + $0x1bc] sm:$0xf]
        %v335 = vld [vmem:[%s189 + $0x1c0] sm:$0xf]
        %v336 = vld [vmem:[%s189 + $0x1c4] sm:$0xf]
        %v337 = vld [vmem:[%s189 + $0x1c8] sm:$0xf]
        %v338 = vld [vmem:[%s189 + $0x1cc] sm:$0xf]
        %v339 = vld [vmem:[%s189 + $0x1d0] sm:$0xf]
        %v340 = vld [vmem:[%s189 + $0x1d4] sm:$0xf]
        %v341 = vld [vmem:[%s189 + $0x1d8] sm:$0xf]
        %v342 = vld [vmem:[%s189 + $0x1dc] sm:$0xf]
        %v343 = vld [vmem:[%s189 + $0x1e0] sm:$0xf]
        %v344 = vld [vmem:[%s189 + $0x1e4] sm:$0xf]
        %v345 = vld [vmem:[%s189 + $0x1e8] sm:$0xf]
        %v346 = vld [vmem:[%s189 + $0x1ec] sm:$0xf]
        %v347 = vld [vmem:[%s189 + $0x1f0] sm:$0xf]
        %v348 = vld [vmem:[%s189 + $0x1f4] sm:$0xf]
        %v349 = vld [vmem:[%s189 + $0x1f8] sm:$0xf]
        %v350 = vld [vmem:[%s189 + $0x1fc] sm:$0xf]
        %v351 = vld [vmem:[%s1] sm:$0xf]
        %v352 = vld [vmem:[%s1 + $0x4] sm:$0xf]
        %v353 = vld [vmem:[%s1 + $0x8] sm:$0xf]
        %v354 = vld [vmem:[%s1 + $0xc] sm:$0xf]
        %v355 = vld [vmem:[%s1 + $0x10] sm:$0xf]
        %v356 = vld [vmem:[%s1 + $0x14] sm:$0xf]
        %v357 = vld [vmem:[%s1 + $0x18] sm:$0xf]
        %v358 = vld [vmem:[%s1 + $0x1c] sm:$0xf]
        %v487 = vunpack.c.l.b16 %v223
        %v488 = vunpack.c.l.b16 %v224
        %v489 = vunpack.c.l.b16 %v225
        %v490 = vunpack.c.l.b16 %v226
        %v491 = vunpack.c.l.b16 %v227
        %v492 = vunpack.c.l.b16 %v228
        %v493 = vunpack.c.l.b16 %v229
        %v494 = vunpack.c.l.b16 %v230
        %v495 = vunpack.c.l.b16 %v231
        %v496 = vunpack.c.l.b16 %v232
        %v497 = vunpack.c.l.b16 %v233
        %v498 = vunpack.c.l.b16 %v234
        %v499 = vunpack.c.l.b16 %v235
        %v500 = vunpack.c.l.b16 %v236
        %v501 = vunpack.c.l.b16 %v237
        %v502 = vunpack.c.l.b16 %v238
        %v503 = vunpack.c.l.b16 %v239
        %v504 = vunpack.c.l.b16 %v240
        %v505 = vunpack.c.l.b16 %v241
        %v506 = vunpack.c.l.b16 %v242
        %v507 = vunpack.c.l.b16 %v243
        %v508 = vunpack.c.l.b16 %v244
        %v509 = vunpack.c.l.b16 %v245
        %v510 = vunpack.c.l.b16 %v246
        %v511 = vunpack.c.l.b16 %v247
        %v512 = vunpack.c.l.b16 %v248
        %v513 = vunpack.c.l.b16 %v249
        %v514 = vunpack.c.l.b16 %v250
        %v515 = vunpack.c.l.b16 %v251
        %v516 = vunpack.c.l.b16 %v252
        %v517 = vunpack.c.l.b16 %v253
        %v518 = vunpack.c.l.b16 %v254
        %v519 = vunpack.c.l.b16 %v255
        %v520 = vunpack.c.l.b16 %v256
        %v521 = vunpack.c.l.b16 %v257
        %v522 = vunpack.c.l.b16 %v258
        %v523 = vunpack.c.l.b16 %v259
        %v524 = vunpack.c.l.b16 %v260
        %v525 = vunpack.c.l.b16 %v261
        %v526 = vunpack.c.l.b16 %v262
        %v527 = vunpack.c.l.b16 %v263
        %v528 = vunpack.c.l.b16 %v264
        %v529 = vunpack.c.l.b16 %v265
        %v530 = vunpack.c.l.b16 %v266
        %v531 = vunpack.c.l.b16 %v267
        %v532 = vunpack.c.l.b16 %v268
        %v533 = vunpack.c.l.b16 %v269
        %v534 = vunpack.c.l.b16 %v270
        %v535 = vunpack.c.l.b16 %v271
        %v536 = vunpack.c.l.b16 %v272
        %v537 = vunpack.c.l.b16 %v273
        %v538 = vunpack.c.l.b16 %v274
        %v539 = vunpack.c.l.b16 %v275
        %v540 = vunpack.c.l.b16 %v276
        %v541 = vunpack.c.l.b16 %v277
        %v542 = vunpack.c.l.b16 %v278
        %v543 = vunpack.c.l.b16 %v279
        %v544 = vunpack.c.l.b16 %v280
        %v545 = vunpack.c.l.b16 %v281
        %v546 = vunpack.c.l.b16 %v282
        %v547 = vunpack.c.l.b16 %v283
        %v548 = vunpack.c.l.b16 %v284
        %v549 = vunpack.c.l.b16 %v285
        %v550 = vunpack.c.l.b16 %v286
        %v551 = vunpack.c.l.b16 %v287
        %v552 = vunpack.c.l.b16 %v288
        %v553 = vunpack.c.l.b16 %v289
        %v554 = vunpack.c.l.b16 %v290
        %v555 = vunpack.c.l.b16 %v291
        %v556 = vunpack.c.l.b16 %v292
        %v557 = vunpack.c.l.b16 %v293
        %v558 = vunpack.c.l.b16 %v294
        %v559 = vunpack.c.l.b16 %v295
        %v560 = vunpack.c.l.b16 %v296
        %v561 = vunpack.c.l.b16 %v297
        %v562 = vunpack.c.l.b16 %v298
        %v563 = vunpack.c.l.b16 %v299
        %v564 = vunpack.c.l.b16 %v300
        %v565 = vunpack.c.l.b16 %v301
        %v566 = vunpack.c.l.b16 %v302
        %v567 = vunpack.c.l.b16 %v303
        %v568 = vunpack.c.l.b16 %v304
        %v569 = vunpack.c.l.b16 %v305
        %v570 = vunpack.c.l.b16 %v306
        %v571 = vunpack.c.l.b16 %v307
        %v572 = vunpack.c.l.b16 %v308
        %v573 = vunpack.c.l.b16 %v309
        %v574 = vunpack.c.l.b16 %v310
        %v575 = vunpack.c.l.b16 %v311
        %v576 = vunpack.c.l.b16 %v312
        %v577 = vunpack.c.l.b16 %v313
        %v578 = vunpack.c.l.b16 %v314
        %v579 = vunpack.c.l.b16 %v315
        %v580 = vunpack.c.l.b16 %v316
        %v581 = vunpack.c.l.b16 %v317
        %v582 = vunpack.c.l.b16 %v318
        %v583 = vunpack.c.l.b16 %v319
        %v584 = vunpack.c.l.b16 %v320
        %v585 = vunpack.c.l.b16 %v321
        %v586 = vunpack.c.l.b16 %v322
        %v587 = vunpack.c.l.b16 %v323
        %v588 = vunpack.c.l.b16 %v324
        %v589 = vunpack.c.l.b16 %v325
        %v590 = vunpack.c.l.b16 %v326
        %v591 = vunpack.c.l.b16 %v327
        %v592 = vunpack.c.l.b16 %v328
        %v593 = vunpack.c.l.b16 %v329
        %v594 = vunpack.c.l.b16 %v330
        %v595 = vunpack.c.l.b16 %v331
        %v596 = vunpack.c.l.b16 %v332
        %v597 = vunpack.c.l.b16 %v333
        %v598 = vunpack.c.l.b16 %v334
        %v599 = vunpack.c.l.b16 %v335
        %v600 = vunpack.c.l.b16 %v336
        %v601 = vunpack.c.l.b16 %v337
        %v602 = vunpack.c.l.b16 %v338
        %v603 = vunpack.c.l.b16 %v339
        %v604 = vunpack.c.l.b16 %v340
        %v605 = vunpack.c.l.b16 %v341
        %v606 = vunpack.c.l.b16 %v342
        %v607 = vunpack.c.l.b16 %v343
        %v608 = vunpack.c.l.b16 %v344
        %v609 = vunpack.c.l.b16 %v345
        %v610 = vunpack.c.l.b16 %v346
        %v611 = vunpack.c.l.b16 %v347
        %v612 = vunpack.c.l.b16 %v348
        %v613 = vunpack.c.l.b16 %v349
        %v614 = vunpack.c.l.b16 %v350
        %v615 = vpack.c.b16 %v488, %v487
        %v616 = vpack.c.b16 %v490, %v489
        %v617 = vpack.c.b16 %v492, %v491
        %v618 = vpack.c.b16 %v494, %v493
        %v619 = vpack.c.b16 %v496, %v495
        %v620 = vpack.c.b16 %v498, %v497
        %v621 = vpack.c.b16 %v500, %v499
        %v622 = vpack.c.b16 %v502, %v501
        %v623 = vpack.c.b16 %v504, %v503
        %v624 = vpack.c.b16 %v506, %v505
        %v625 = vpack.c.b16 %v508, %v507
        %v626 = vpack.c.b16 %v510, %v509
        %v627 = vpack.c.b16 %v512, %v511
        %v628 = vpack.c.b16 %v514, %v513
        %v629 = vpack.c.b16 %v516, %v515
        %v630 = vpack.c.b16 %v518, %v517
        %v631 = vpack.c.b16 %v520, %v519
        %v632 = vpack.c.b16 %v522, %v521
        %v633 = vpack.c.b16 %v524, %v523
        %v634 = vpack.c.b16 %v526, %v525
        %v635 = vpack.c.b16 %v528, %v527
        %v636 = vpack.c.b16 %v530, %v529
        %v637 = vpack.c.b16 %v532, %v531
        %v638 = vpack.c.b16 %v534, %v533
        %v639 = vpack.c.b16 %v536, %v535
        %v640 = vpack.c.b16 %v538, %v537
        %v641 = vpack.c.b16 %v540, %v539
        %v642 = vpack.c.b16 %v542, %v541
        %v643 = vpack.c.b16 %v544, %v543
        %v644 = vpack.c.b16 %v546, %v545
        %v645 = vpack.c.b16 %v548, %v547
        %v646 = vpack.c.b16 %v550, %v549
        %v647 = vpack.c.b16 %v552, %v551
        %v648 = vpack.c.b16 %v554, %v553
        %v649 = vpack.c.b16 %v556, %v555
        %v650 = vpack.c.b16 %v558, %v557
        %v651 = vpack.c.b16 %v560, %v559
        %v652 = vpack.c.b16 %v562, %v561
        %v653 = vpack.c.b16 %v564, %v563
        %v654 = vpack.c.b16 %v566, %v565
        %v655 = vpack.c.b16 %v568, %v567
        %v656 = vpack.c.b16 %v570, %v569
        %v657 = vpack.c.b16 %v572, %v571
        %v658 = vpack.c.b16 %v574, %v573
        %v659 = vpack.c.b16 %v576, %v575
        %v660 = vpack.c.b16 %v578, %v577
        %v661 = vpack.c.b16 %v580, %v579
        %v662 = vpack.c.b16 %v582, %v581
        %v663 = vpack.c.b16 %v584, %v583
        %v664 = vpack.c.b16 %v586, %v585
        %v665 = vpack.c.b16 %v588, %v587
        %v666 = vpack.c.b16 %v590, %v589
        %v667 = vpack.c.b16 %v592, %v591
        %v668 = vpack.c.b16 %v594, %v593
        %v669 = vpack.c.b16 %v596, %v595
        %v670 = vpack.c.b16 %v598, %v597
        %v671 = vpack.c.b16 %v600, %v599
        %v672 = vpack.c.b16 %v602, %v601
        %v673 = vpack.c.b16 %v604, %v603
        %v674 = vpack.c.b16 %v606, %v605
        %v675 = vpack.c.b16 %v608, %v607
        %v676 = vpack.c.b16 %v610, %v609
        %v677 = vpack.c.b16 %v612, %v611
        %v678 = vpack.c.b16 %v614, %v613
        %v687 = vunpack.c.l.b16 %v351
        %v688 = vunpack.c.l.b16 %v352
        %v689 = vunpack.c.l.b16 %v353
        %v690 = vunpack.c.l.b16 %v354
        %v691 = vunpack.c.l.b16 %v355
        %v692 = vunpack.c.l.b16 %v356
        %v693 = vunpack.c.l.b16 %v357
        %v694 = vunpack.c.l.b16 %v358
        %v695 = vpack.c.b16 %v688, %v687
        %v696 = vpack.c.b16 %v690, %v689
        %v697 = vpack.c.b16 %v692, %v691
        %v698 = vpack.c.b16 %v694, %v693
        %vm703 = vcmask 523264
        %v705 = vsel %vm703, %v615, 0
        %v708 = vsel %vm703, %v616, 0
        %v711 = vsel %vm703, %v617, 0
        %v714 = vsel %vm703, %v618, 0
        %v717 = vsel %vm703, %v619, 0
        %v720 = vsel %vm703, %v620, 0
        %v723 = vsel %vm703, %v621, 0
        %v726 = vsel %vm703, %v622, 0
        %v729 = vsel %vm703, %v623, 0
        %v732 = vsel %vm703, %v624, 0
        %v735 = vsel %vm703, %v625, 0
        %v738 = vsel %vm703, %v626, 0
        %v741 = vsel %vm703, %v627, 0
        %v744 = vsel %vm703, %v628, 0
        %v747 = vsel %vm703, %v629, 0
        %v750 = vsel %vm703, %v630, 0
        %v753 = vsel %vm703, %v631, 0
        %v756 = vsel %vm703, %v632, 0
        %v759 = vsel %vm703, %v633, 0
        %v762 = vsel %vm703, %v634, 0
        %v765 = vsel %vm703, %v635, 0
        %v768 = vsel %vm703, %v636, 0
        %v771 = vsel %vm703, %v637, 0
        %v774 = vsel %vm703, %v638, 0
        %v777 = vsel %vm703, %v639, 0
        %v780 = vsel %vm703, %v640, 0
        %v783 = vsel %vm703, %v641, 0
        %v786 = vsel %vm703, %v642, 0
        %v789 = vsel %vm703, %v643, 0
        %v792 = vsel %vm703, %v644, 0
        %v795 = vsel %vm703, %v645, 0
        %v798 = vsel %vm703, %v646, 0
        %v801 = vsel %vm703, %v647, 0
        %v804 = vsel %vm703, %v648, 0
        %v807 = vsel %vm703, %v649, 0
        %v810 = vsel %vm703, %v650, 0
        %v813 = vsel %vm703, %v651, 0
        %v816 = vsel %vm703, %v652, 0
        %v819 = vsel %vm703, %v653, 0
        %v822 = vsel %vm703, %v654, 0
        %v825 = vsel %vm703, %v655, 0
        %v828 = vsel %vm703, %v656, 0
        %v831 = vsel %vm703, %v657, 0
        %v834 = vsel %vm703, %v658, 0
        %v837 = vsel %vm703, %v659, 0
        %v840 = vsel %vm703, %v660, 0
        %v843 = vsel %vm703, %v661, 0
        %v846 = vsel %vm703, %v662, 0
        %v849 = vsel %vm703, %v663, 0
        %v852 = vsel %vm703, %v664, 0
        %v855 = vsel %vm703, %v665, 0
        %v858 = vsel %vm703, %v666, 0
        %v861 = vsel %vm703, %v667, 0
        %v864 = vsel %vm703, %v668, 0
        %v867 = vsel %vm703, %v669, 0
        %v870 = vsel %vm703, %v670, 0
        %v873 = vsel %vm703, %v671, 0
        %v876 = vsel %vm703, %v672, 0
        %v879 = vsel %vm703, %v673, 0
        %v882 = vsel %vm703, %v674, 0
        %v885 = vsel %vm703, %v675, 0
        %v888 = vsel %vm703, %v676, 0
        %v891 = vsel %vm703, %v677, 0
        %v894 = vsel %vm703, %v678, 0
        %896 = vmatpush.bf16.msra.mxu0 0
        %897 = vmatpush.bf16.msra.mxu0 0
        %898 = vmatpush.bf16.msra.mxu0 0
        %899 = vmatpush.bf16.msra.mxu0 0
        %900 = vmatpush.bf16.msra.mxu0 %v698
        %901 = vmatpush.bf16.msra.mxu0 %v697
        %902 = vmatpush.bf16.msra.mxu0 %v696
        %903 = vmatpush.bf16.msra.mxu0 %v695
        %904 = vmatmul.bf16.gmra.mxu0 %v705
        %v905 = vpop.f32.mrf.mxu0
        %v906 = vadd.f32 0.0, %v905
        %v907 = vpop.f32.mrf.mxu0
        %v908 = vadd.f32 0.0, %v907
        %909 = vmatmul.bf16.gmra.mxu0 %v708
        %v910 = vpop.f32.mrf.mxu0
        %v911 = vadd.f32 0.0, %v910
        %v912 = vpop.f32.mrf.mxu0
        %v913 = vadd.f32 0.0, %v912
        %914 = vmatmul.bf16.gmra.mxu0 %v711
        %v915 = vpop.f32.mrf.mxu0
        %v916 = vadd.f32 0.0, %v915
        %v917 = vpop.f32.mrf.mxu0
        %v918 = vadd.f32 0.0, %v917
        %919 = vmatmul.bf16.gmra.mxu0 %v714
        %v920 = vpop.f32.mrf.mxu0
        %v921 = vadd.f32 0.0, %v920
        %v922 = vpop.f32.mrf.mxu0
        %v923 = vadd.f32 0.0, %v922
        %924 = vmatmul.bf16.gmra.mxu0 %v717
        %v925 = vpop.f32.mrf.mxu0
        %v926 = vadd.f32 0.0, %v925
        %v927 = vpop.f32.mrf.mxu0
        %v928 = vadd.f32 0.0, %v927
        %929 = vmatmul.bf16.gmra.mxu0 %v720
        %v930 = vpop.f32.mrf.mxu0
        %v931 = vadd.f32 0.0, %v930
        %v932 = vpop.f32.mrf.mxu0
        %v933 = vadd.f32 0.0, %v932
        %934 = vmatmul.bf16.gmra.mxu0 %v723
        %v935 = vpop.f32.mrf.mxu0
        %v936 = vadd.f32 0.0, %v935
        %v937 = vpop.f32.mrf.mxu0
        %v938 = vadd.f32 0.0, %v937
        %939 = vmatmul.bf16.gmra.mxu0 %v726
        %v940 = vpop.f32.mrf.mxu0
        %v941 = vadd.f32 0.0, %v940
        %v942 = vpop.f32.mrf.mxu0
        %v943 = vadd.f32 0.0, %v942
        %944 = vmatmul.bf16.gmra.mxu0 %v729
        %v945 = vpop.f32.mrf.mxu0
        %v946 = vadd.f32 0.0, %v945
        %v947 = vpop.f32.mrf.mxu0
        %v948 = vadd.f32 0.0, %v947
        %949 = vmatmul.bf16.gmra.mxu0 %v732
        %v950 = vpop.f32.mrf.mxu0
        %v951 = vadd.f32 0.0, %v950
        %v952 = vpop.f32.mrf.mxu0
        %v953 = vadd.f32 0.0, %v952
        %954 = vmatmul.bf16.gmra.mxu0 %v735
        %v955 = vpop.f32.mrf.mxu0
        %v956 = vadd.f32 0.0, %v955
        %v957 = vpop.f32.mrf.mxu0
        %v958 = vadd.f32 0.0, %v957
        %959 = vmatmul.bf16.gmra.mxu0 %v738
        %v960 = vpop.f32.mrf.mxu0
        %v961 = vadd.f32 0.0, %v960
        %v962 = vpop.f32.mrf.mxu0
        %v963 = vadd.f32 0.0, %v962
        %964 = vmatmul.bf16.gmra.mxu0 %v741
        %v965 = vpop.f32.mrf.mxu0
        %v966 = vadd.f32 0.0, %v965
        %v967 = vpop.f32.mrf.mxu0
        %v968 = vadd.f32 0.0, %v967
        %969 = vmatmul.bf16.gmra.mxu0 %v744
        %v970 = vpop.f32.mrf.mxu0
        %v971 = vadd.f32 0.0, %v970
        %v972 = vpop.f32.mrf.mxu0
        %v973 = vadd.f32 0.0, %v972
        %974 = vmatmul.bf16.gmra.mxu0 %v747
        %v975 = vpop.f32.mrf.mxu0
        %v976 = vadd.f32 0.0, %v975
        %v977 = vpop.f32.mrf.mxu0
        %v978 = vadd.f32 0.0, %v977
        %979 = vmatmul.bf16.gmra.mxu0 %v750
        %v980 = vpop.f32.mrf.mxu0
        %v981 = vadd.f32 0.0, %v980
        %v982 = vpop.f32.mrf.mxu0
        %v983 = vadd.f32 0.0, %v982
        %984 = vmatmul.bf16.gmra.mxu0 %v753
        %v985 = vpop.f32.mrf.mxu0
        %v986 = vadd.f32 0.0, %v985
        %v987 = vpop.f32.mrf.mxu0
        %v988 = vadd.f32 0.0, %v987
        %989 = vmatmul.bf16.gmra.mxu0 %v756
        %v990 = vpop.f32.mrf.mxu0
        %v991 = vadd.f32 0.0, %v990
        %v992 = vpop.f32.mrf.mxu0
        %v993 = vadd.f32 0.0, %v992
        %994 = vmatmul.bf16.gmra.mxu0 %v759
        %v995 = vpop.f32.mrf.mxu0
        %v996 = vadd.f32 0.0, %v995
        %v997 = vpop.f32.mrf.mxu0
        %v998 = vadd.f32 0.0, %v997
        %999 = vmatmul.bf16.gmra.mxu0 %v762
        %v1000 = vpop.f32.mrf.mxu0
        %v1001 = vadd.f32 0.0, %v1000
        %v1002 = vpop.f32.mrf.mxu0
        %v1003 = vadd.f32 0.0, %v1002
        %1004 = vmatmul.bf16.gmra.mxu0 %v765
        %v1005 = vpop.f32.mrf.mxu0
        %v1006 = vadd.f32 0.0, %v1005
        %v1007 = vpop.f32.mrf.mxu0
        %v1008 = vadd.f32 0.0, %v1007
        %1009 = vmatmul.bf16.gmra.mxu0 %v768
        %v1010 = vpop.f32.mrf.mxu0
        %v1011 = vadd.f32 0.0, %v1010
        %v1012 = vpop.f32.mrf.mxu0
        %v1013 = vadd.f32 0.0, %v1012
        %1014 = vmatmul.bf16.gmra.mxu0 %v771
        %v1015 = vpop.f32.mrf.mxu0
        %v1016 = vadd.f32 0.0, %v1015
        %v1017 = vpop.f32.mrf.mxu0
        %v1018 = vadd.f32 0.0, %v1017
        %1019 = vmatmul.bf16.gmra.mxu0 %v774
        %v1020 = vpop.f32.mrf.mxu0
        %v1021 = vadd.f32 0.0, %v1020
        %v1022 = vpop.f32.mrf.mxu0
        %v1023 = vadd.f32 0.0, %v1022
        %1024 = vmatmul.bf16.gmra.mxu0 %v777
        %v1025 = vpop.f32.mrf.mxu0
        %v1026 = vadd.f32 0.0, %v1025
        %v1027 = vpop.f32.mrf.mxu0
        %v1028 = vadd.f32 0.0, %v1027
        %1029 = vmatmul.bf16.gmra.mxu0 %v780
        %v1030 = vpop.f32.mrf.mxu0
        %v1031 = vadd.f32 0.0, %v1030
        %v1032 = vpop.f32.mrf.mxu0
        %v1033 = vadd.f32 0.0, %v1032
        %1034 = vmatmul.bf16.gmra.mxu0 %v783
        %v1035 = vpop.f32.mrf.mxu0
        %v1036 = vadd.f32 0.0, %v1035
        %v1037 = vpop.f32.mrf.mxu0
        %v1038 = vadd.f32 0.0, %v1037
        %1039 = vmatmul.bf16.gmra.mxu0 %v786
        %v1040 = vpop.f32.mrf.mxu0
        %v1041 = vadd.f32 0.0, %v1040
        %v1042 = vpop.f32.mrf.mxu0
        %v1043 = vadd.f32 0.0, %v1042
        %1044 = vmatmul.bf16.gmra.mxu0 %v789
        %v1045 = vpop.f32.mrf.mxu0
        %v1046 = vadd.f32 0.0, %v1045
        %v1047 = vpop.f32.mrf.mxu0
        %v1048 = vadd.f32 0.0, %v1047
        %1049 = vmatmul.bf16.gmra.mxu0 %v792
        %v1050 = vpop.f32.mrf.mxu0
        %v1051 = vadd.f32 0.0, %v1050
        %v1052 = vpop.f32.mrf.mxu0
        %v1053 = vadd.f32 0.0, %v1052
        %1054 = vmatmul.bf16.gmra.mxu0 %v795
        %v1055 = vpop.f32.mrf.mxu0
        %v1056 = vadd.f32 0.0, %v1055
        %v1057 = vpop.f32.mrf.mxu0
        %v1058 = vadd.f32 0.0, %v1057
        %1059 = vmatmul.bf16.gmra.mxu0 %v798
        %v1060 = vpop.f32.mrf.mxu0
        %v1061 = vadd.f32 0.0, %v1060
        %v1062 = vpop.f32.mrf.mxu0
        %v1063 = vadd.f32 0.0, %v1062
        %1064 = vmatmul.bf16.gmra.mxu0 %v801
        %v1065 = vpop.f32.mrf.mxu0
        %v1066 = vadd.f32 0.0, %v1065
        %v1067 = vpop.f32.mrf.mxu0
        %v1068 = vadd.f32 0.0, %v1067
        %1069 = vmatmul.bf16.gmra.mxu0 %v804
        %v1070 = vpop.f32.mrf.mxu0
        %v1071 = vadd.f32 0.0, %v1070
        %v1072 = vpop.f32.mrf.mxu0
        %v1073 = vadd.f32 0.0, %v1072
        %1074 = vmatmul.bf16.gmra.mxu0 %v807
        %v1075 = vpop.f32.mrf.mxu0
        %v1076 = vadd.f32 0.0, %v1075
        %v1077 = vpop.f32.mrf.mxu0
        %v1078 = vadd.f32 0.0, %v1077
        %1079 = vmatmul.bf16.gmra.mxu0 %v810
        %v1080 = vpop.f32.mrf.mxu0
        %v1081 = vadd.f32 0.0, %v1080
        %v1082 = vpop.f32.mrf.mxu0
        %v1083 = vadd.f32 0.0, %v1082
        %1084 = vmatmul.bf16.gmra.mxu0 %v813
        %v1085 = vpop.f32.mrf.mxu0
        %v1086 = vadd.f32 0.0, %v1085
        %v1087 = vpop.f32.mrf.mxu0
        %v1088 = vadd.f32 0.0, %v1087
        %1089 = vmatmul.bf16.gmra.mxu0 %v816
        %v1090 = vpop.f32.mrf.mxu0
        %v1091 = vadd.f32 0.0, %v1090
        %v1092 = vpop.f32.mrf.mxu0
        %v1093 = vadd.f32 0.0, %v1092
        %1094 = vmatmul.bf16.gmra.mxu0 %v819
        %v1095 = vpop.f32.mrf.mxu0
        %v1096 = vadd.f32 0.0, %v1095
        %v1097 = vpop.f32.mrf.mxu0
        %v1098 = vadd.f32 0.0, %v1097
        %1099 = vmatmul.bf16.gmra.mxu0 %v822
        %v1100 = vpop.f32.mrf.mxu0
        %v1101 = vadd.f32 0.0, %v1100
        %v1102 = vpop.f32.mrf.mxu0
        %v1103 = vadd.f32 0.0, %v1102
        %1104 = vmatmul.bf16.gmra.mxu0 %v825
        %v1105 = vpop.f32.mrf.mxu0
        %v1106 = vadd.f32 0.0, %v1105
        %v1107 = vpop.f32.mrf.mxu0
        %v1108 = vadd.f32 0.0, %v1107
        %1109 = vmatmul.bf16.gmra.mxu0 %v828
        %v1110 = vpop.f32.mrf.mxu0
        %v1111 = vadd.f32 0.0, %v1110
        %v1112 = vpop.f32.mrf.mxu0
        %v1113 = vadd.f32 0.0, %v1112
        %1114 = vmatmul.bf16.gmra.mxu0 %v831
        %v1115 = vpop.f32.mrf.mxu0
        %v1116 = vadd.f32 0.0, %v1115
        %v1117 = vpop.f32.mrf.mxu0
        %v1118 = vadd.f32 0.0, %v1117
        %1119 = vmatmul.bf16.gmra.mxu0 %v834
        %v1120 = vpop.f32.mrf.mxu0
        %v1121 = vadd.f32 0.0, %v1120
        %v1122 = vpop.f32.mrf.mxu0
        %v1123 = vadd.f32 0.0, %v1122
        %1124 = vmatmul.bf16.gmra.mxu0 %v837
        %v1125 = vpop.f32.mrf.mxu0
        %v1126 = vadd.f32 0.0, %v1125
        %v1127 = vpop.f32.mrf.mxu0
        %v1128 = vadd.f32 0.0, %v1127
        %1129 = vmatmul.bf16.gmra.mxu0 %v840
        %v1130 = vpop.f32.mrf.mxu0
        %v1131 = vadd.f32 0.0, %v1130
        %v1132 = vpop.f32.mrf.mxu0
        %v1133 = vadd.f32 0.0, %v1132
        %1134 = vmatmul.bf16.gmra.mxu0 %v843
        %v1135 = vpop.f32.mrf.mxu0
        %v1136 = vadd.f32 0.0, %v1135
        %v1137 = vpop.f32.mrf.mxu0
        %v1138 = vadd.f32 0.0, %v1137
        %1139 = vmatmul.bf16.gmra.mxu0 %v846
        %v1140 = vpop.f32.mrf.mxu0
        %v1141 = vadd.f32 0.0, %v1140
        %v1142 = vpop.f32.mrf.mxu0
        %v1143 = vadd.f32 0.0, %v1142
        %1144 = vmatmul.bf16.gmra.mxu0 %v849
        %v1145 = vpop.f32.mrf.mxu0
        %v1146 = vadd.f32 0.0, %v1145
        %v1147 = vpop.f32.mrf.mxu0
        %v1148 = vadd.f32 0.0, %v1147
        %1149 = vmatmul.bf16.gmra.mxu0 %v852
        %v1150 = vpop.f32.mrf.mxu0
        %v1151 = vadd.f32 0.0, %v1150
        %v1152 = vpop.f32.mrf.mxu0
        %v1153 = vadd.f32 0.0, %v1152
        %1154 = vmatmul.bf16.gmra.mxu0 %v855
        %v1155 = vpop.f32.mrf.mxu0
        %v1156 = vadd.f32 0.0, %v1155
        %v1157 = vpop.f32.mrf.mxu0
        %v1158 = vadd.f32 0.0, %v1157
        %1159 = vmatmul.bf16.gmra.mxu0 %v858
        %v1160 = vpop.f32.mrf.mxu0
        %v1161 = vadd.f32 0.0, %v1160
        %v1162 = vpop.f32.mrf.mxu0
        %v1163 = vadd.f32 0.0, %v1162
        %1164 = vmatmul.bf16.gmra.mxu0 %v861
        %v1165 = vpop.f32.mrf.mxu0
        %v1166 = vadd.f32 0.0, %v1165
        %v1167 = vpop.f32.mrf.mxu0
        %v1168 = vadd.f32 0.0, %v1167
        %1169 = vmatmul.bf16.gmra.mxu0 %v864
        %v1170 = vpop.f32.mrf.mxu0
        %v1171 = vadd.f32 0.0, %v1170
        %v1172 = vpop.f32.mrf.mxu0
        %v1173 = vadd.f32 0.0, %v1172
        %1174 = vmatmul.bf16.gmra.mxu0 %v867
        %v1175 = vpop.f32.mrf.mxu0
        %v1176 = vadd.f32 0.0, %v1175
        %v1177 = vpop.f32.mrf.mxu0
        %v1178 = vadd.f32 0.0, %v1177
        %1179 = vmatmul.bf16.gmra.mxu0 %v870
        %v1180 = vpop.f32.mrf.mxu0
        %v1181 = vadd.f32 0.0, %v1180
        %v1182 = vpop.f32.mrf.mxu0
        %v1183 = vadd.f32 0.0, %v1182
        %1184 = vmatmul.bf16.gmra.mxu0 %v873
        %v1185 = vpop.f32.mrf.mxu0
        %v1186 = vadd.f32 0.0, %v1185
        %v1187 = vpop.f32.mrf.mxu0
        %v1188 = vadd.f32 0.0, %v1187
        %1189 = vmatmul.bf16.gmra.mxu0 %v876
        %v1190 = vpop.f32.mrf.mxu0
        %v1191 = vadd.f32 0.0, %v1190
        %v1192 = vpop.f32.mrf.mxu0
        %v1193 = vadd.f32 0.0, %v1192
        %1194 = vmatmul.bf16.gmra.mxu0 %v879
        %v1195 = vpop.f32.mrf.mxu0
        %v1196 = vadd.f32 0.0, %v1195
        %v1197 = vpop.f32.mrf.mxu0
        %v1198 = vadd.f32 0.0, %v1197
        %1199 = vmatmul.bf16.gmra.mxu0 %v882
        %v1200 = vpop.f32.mrf.mxu0
        %v1201 = vadd.f32 0.0, %v1200
        %v1202 = vpop.f32.mrf.mxu0
        %v1203 = vadd.f32 0.0, %v1202
        %1204 = vmatmul.bf16.gmra.mxu0 %v885
        %v1205 = vpop.f32.mrf.mxu0
        %v1206 = vadd.f32 0.0, %v1205
        %v1207 = vpop.f32.mrf.mxu0
        %v1208 = vadd.f32 0.0, %v1207
        %1209 = vmatmul.bf16.gmra.mxu0 %v888
        %v1210 = vpop.f32.mrf.mxu0
        %v1211 = vadd.f32 0.0, %v1210
        %v1212 = vpop.f32.mrf.mxu0
        %v1213 = vadd.f32 0.0, %v1212
        %1214 = vmatmul.bf16.gmra.mxu0 %v891
        %v1215 = vpop.f32.mrf.mxu0
        %v1216 = vadd.f32 0.0, %v1215
        %v1217 = vpop.f32.mrf.mxu0
        %v1218 = vadd.f32 0.0, %v1217
        %1219 = vmatmul.bf16.gmra.mxu0 %v894
        %v1220 = vpop.f32.mrf.mxu0
        %v1221 = vadd.f32 0.0, %v1220
        %v1222 = vpop.f32.mrf.mxu0
        %v1223 = vadd.f32 0.0, %v1222
        %1224 = vdwg.mxu0
        %v1225 = vld [vmem:[%s2] sm:$0x1]
        %v1227 = vperm.slane %v1225, 0
        %v1229 = vmul.f32 %v906, %v1227
        %v1230 = vmul.f32 %v908, %v1227
        %v1231 = vmul.f32 %v911, %v1227
        %v1232 = vmul.f32 %v913, %v1227
        %v1233 = vmul.f32 %v916, %v1227
        %v1234 = vmul.f32 %v918, %v1227
        %v1235 = vmul.f32 %v921, %v1227
        %v1236 = vmul.f32 %v923, %v1227
        %v1237 = vmul.f32 %v926, %v1227
        %v1238 = vmul.f32 %v928, %v1227
        %v1239 = vmul.f32 %v931, %v1227
        %v1240 = vmul.f32 %v933, %v1227
        %v1241 = vmul.f32 %v936, %v1227
        %v1242 = vmul.f32 %v938, %v1227
        %v1243 = vmul.f32 %v941, %v1227
        %v1244 = vmul.f32 %v943, %v1227
        %v1245 = vmul.f32 %v946, %v1227
        %v1246 = vmul.f32 %v948, %v1227
        %v1247 = vmul.f32 %v951, %v1227
        %v1248 = vmul.f32 %v953, %v1227
        %v1249 = vmul.f32 %v956, %v1227
        %v1250 = vmul.f32 %v958, %v1227
        %v1251 = vmul.f32 %v961, %v1227
        %v1252 = vmul.f32 %v963, %v1227
        %v1253 = vmul.f32 %v966, %v1227
        %v1254 = vmul.f32 %v968, %v1227
        %v1255 = vmul.f32 %v971, %v1227
        %v1256 = vmul.f32 %v973, %v1227
        %v1257 = vmul.f32 %v976, %v1227
        %v1258 = vmul.f32 %v978, %v1227
        %v1259 = vmul.f32 %v981, %v1227
        %v1260 = vmul.f32 %v983, %v1227
        %v1261 = vmul.f32 %v986, %v1227
        %v1262 = vmul.f32 %v988, %v1227
        %v1263 = vmul.f32 %v991, %v1227
        %v1264 = vmul.f32 %v993, %v1227
        %v1265 = vmul.f32 %v996, %v1227
        %v1266 = vmul.f32 %v998, %v1227
        %v1267 = vmul.f32 %v1001, %v1227
        %v1268 = vmul.f32 %v1003, %v1227
        %v1269 = vmul.f32 %v1006, %v1227
        %v1270 = vmul.f32 %v1008, %v1227
        %v1271 = vmul.f32 %v1011, %v1227
        %v1272 = vmul.f32 %v1013, %v1227
        %v1273 = vmul.f32 %v1016, %v1227
        %v1274 = vmul.f32 %v1018, %v1227
        %v1275 = vmul.f32 %v1021, %v1227
        %v1276 = vmul.f32 %v1023, %v1227
        %v1277 = vmul.f32 %v1026, %v1227
        %v1278 = vmul.f32 %v1028, %v1227
        %v1279 = vmul.f32 %v1031, %v1227
        %v1280 = vmul.f32 %v1033, %v1227
        %v1281 = vmul.f32 %v1036, %v1227
        %v1282 = vmul.f32 %v1038, %v1227
        %v1283 = vmul.f32 %v1041, %v1227
        %v1284 = vmul.f32 %v1043, %v1227
        %v1285 = vmul.f32 %v1046, %v1227
        %v1286 = vmul.f32 %v1048, %v1227
        %v1287 = vmul.f32 %v1051, %v1227
        %v1288 = vmul.f32 %v1053, %v1227
        %v1289 = vmul.f32 %v1056, %v1227
        %v1290 = vmul.f32 %v1058, %v1227
        %v1291 = vmul.f32 %v1061, %v1227
        %v1292 = vmul.f32 %v1063, %v1227
        %v1293 = vmul.f32 %v1066, %v1227
        %v1294 = vmul.f32 %v1068, %v1227
        %v1295 = vmul.f32 %v1071, %v1227
        %v1296 = vmul.f32 %v1073, %v1227
        %v1297 = vmul.f32 %v1076, %v1227
        %v1298 = vmul.f32 %v1078, %v1227
        %v1299 = vmul.f32 %v1081, %v1227
        %v1300 = vmul.f32 %v1083, %v1227
        %v1301 = vmul.f32 %v1086, %v1227
        %v1302 = vmul.f32 %v1088, %v1227
        %v1303 = vmul.f32 %v1091, %v1227
        %v1304 = vmul.f32 %v1093, %v1227
        %v1305 = vmul.f32 %v1096, %v1227
        %v1306 = vmul.f32 %v1098, %v1227
        %v1307 = vmul.f32 %v1101, %v1227
        %v1308 = vmul.f32 %v1103, %v1227
        %v1309 = vmul.f32 %v1106, %v1227
        %v1310 = vmul.f32 %v1108, %v1227
        %v1311 = vmul.f32 %v1111, %v1227
        %v1312 = vmul.f32 %v1113, %v1227
        %v1313 = vmul.f32 %v1116, %v1227
        %v1314 = vmul.f32 %v1118, %v1227
        %v1315 = vmul.f32 %v1121, %v1227
        %v1316 = vmul.f32 %v1123, %v1227
        %v1317 = vmul.f32 %v1126, %v1227
        %v1318 = vmul.f32 %v1128, %v1227
        %v1319 = vmul.f32 %v1131, %v1227
        %v1320 = vmul.f32 %v1133, %v1227
        %v1321 = vmul.f32 %v1136, %v1227
        %v1322 = vmul.f32 %v1138, %v1227
        %v1323 = vmul.f32 %v1141, %v1227
        %v1324 = vmul.f32 %v1143, %v1227
        %v1325 = vmul.f32 %v1146, %v1227
        %v1326 = vmul.f32 %v1148, %v1227
        %v1327 = vmul.f32 %v1151, %v1227
        %v1328 = vmul.f32 %v1153, %v1227
        %v1329 = vmul.f32 %v1156, %v1227
        %v1330 = vmul.f32 %v1158, %v1227
        %v1331 = vmul.f32 %v1161, %v1227
        %v1332 = vmul.f32 %v1163, %v1227
        %v1333 = vmul.f32 %v1166, %v1227
        %v1334 = vmul.f32 %v1168, %v1227
        %v1335 = vmul.f32 %v1171, %v1227
        %v1336 = vmul.f32 %v1173, %v1227
        %v1337 = vmul.f32 %v1176, %v1227
        %v1338 = vmul.f32 %v1178, %v1227
        %v1339 = vmul.f32 %v1181, %v1227
        %v1340 = vmul.f32 %v1183, %v1227
        %v1341 = vmul.f32 %v1186, %v1227
        %v1342 = vmul.f32 %v1188, %v1227
        %v1343 = vmul.f32 %v1191, %v1227
        %v1344 = vmul.f32 %v1193, %v1227
        %v1345 = vmul.f32 %v1196, %v1227
        %v1346 = vmul.f32 %v1198, %v1227
        %v1347 = vmul.f32 %v1201, %v1227
        %v1348 = vmul.f32 %v1203, %v1227
        %v1349 = vmul.f32 %v1206, %v1227
        %v1350 = vmul.f32 %v1208, %v1227
        %v1351 = vmul.f32 %v1211, %v1227
        %v1352 = vmul.f32 %v1213, %v1227
        %v1353 = vmul.f32 %v1216, %v1227
        %v1354 = vmul.f32 %v1218, %v1227
        %v1355 = vmul.f32 %v1221, %v1227
        %v1356 = vmul.f32 %v1223, %v1227
        %v1357 = vld [vmem:[%s3] sm:$0x1]
        %v1359 = vperm.slane %v1357, 0
        %v1361 = vadd.f32 %v1229, %v1359
        %v1362 = vadd.f32 %v1230, %v1359
        %v1363 = vadd.f32 %v1231, %v1359
        %v1364 = vadd.f32 %v1232, %v1359
        %v1365 = vadd.f32 %v1233, %v1359
        %v1366 = vadd.f32 %v1234, %v1359
        %v1367 = vadd.f32 %v1235, %v1359
        %v1368 = vadd.f32 %v1236, %v1359
        %v1369 = vadd.f32 %v1237, %v1359
        %v1370 = vadd.f32 %v1238, %v1359
        %v1371 = vadd.f32 %v1239, %v1359
        %v1372 = vadd.f32 %v1240, %v1359
        %v1373 = vadd.f32 %v1241, %v1359
        %v1374 = vadd.f32 %v1242, %v1359
        %v1375 = vadd.f32 %v1243, %v1359
        %v1376 = vadd.f32 %v1244, %v1359
        %v1377 = vadd.f32 %v1245, %v1359
        %v1378 = vadd.f32 %v1246, %v1359
        %v1379 = vadd.f32 %v1247, %v1359
        %v1380 = vadd.f32 %v1248, %v1359
        %v1381 = vadd.f32 %v1249, %v1359
        %v1382 = vadd.f32 %v1250, %v1359
        %v1383 = vadd.f32 %v1251, %v1359
        %v1384 = vadd.f32 %v1252, %v1359
        %v1385 = vadd.f32 %v1253, %v1359
        %v1386 = vadd.f32 %v1254, %v1359
        %v1387 = vadd.f32 %v1255, %v1359
        %v1388 = vadd.f32 %v1256, %v1359
        %v1389 = vadd.f32 %v1257, %v1359
        %v1390 = vadd.f32 %v1258, %v1359
        %v1391 = vadd.f32 %v1259, %v1359
        %v1392 = vadd.f32 %v1260, %v1359
        %v1393 = vadd.f32 %v1261, %v1359
        %v1394 = vadd.f32 %v1262, %v1359
        %v1395 = vadd.f32 %v1263, %v1359
        %v1396 = vadd.f32 %v1264, %v1359
        %v1397 = vadd.f32 %v1265, %v1359
        %v1398 = vadd.f32 %v1266, %v1359
        %v1399 = vadd.f32 %v1267, %v1359
        %v1400 = vadd.f32 %v1268, %v1359
        %v1401 = vadd.f32 %v1269, %v1359
        %v1402 = vadd.f32 %v1270, %v1359
        %v1403 = vadd.f32 %v1271, %v1359
        %v1404 = vadd.f32 %v1272, %v1359
        %v1405 = vadd.f32 %v1273, %v1359
        %v1406 = vadd.f32 %v1274, %v1359
        %v1407 = vadd.f32 %v1275, %v1359
        %v1408 = vadd.f32 %v1276, %v1359
        %v1409 = vadd.f32 %v1277, %v1359
        %v1410 = vadd.f32 %v1278, %v1359
        %v1411 = vadd.f32 %v1279, %v1359
        %v1412 = vadd.f32 %v1280, %v1359
        %v1413 = vadd.f32 %v1281, %v1359
        %v1414 = vadd.f32 %v1282, %v1359
        %v1415 = vadd.f32 %v1283, %v1359
        %v1416 = vadd.f32 %v1284, %v1359
        %v1417 = vadd.f32 %v1285, %v1359
        %v1418 = vadd.f32 %v1286, %v1359
        %v1419 = vadd.f32 %v1287, %v1359
        %v1420 = vadd.f32 %v1288, %v1359
        %v1421 = vadd.f32 %v1289, %v1359
        %v1422 = vadd.f32 %v1290, %v1359
        %v1423 = vadd.f32 %v1291, %v1359
        %v1424 = vadd.f32 %v1292, %v1359
        %v1425 = vadd.f32 %v1293, %v1359
        %v1426 = vadd.f32 %v1294, %v1359
        %v1427 = vadd.f32 %v1295, %v1359
        %v1428 = vadd.f32 %v1296, %v1359
        %v1429 = vadd.f32 %v1297, %v1359
        %v1430 = vadd.f32 %v1298, %v1359
        %v1431 = vadd.f32 %v1299, %v1359
        %v1432 = vadd.f32 %v1300, %v1359
        %v1433 = vadd.f32 %v1301, %v1359
        %v1434 = vadd.f32 %v1302, %v1359
        %v1435 = vadd.f32 %v1303, %v1359
        %v1436 = vadd.f32 %v1304, %v1359
        %v1437 = vadd.f32 %v1305, %v1359
        %v1438 = vadd.f32 %v1306, %v1359
        %v1439 = vadd.f32 %v1307, %v1359
        %v1440 = vadd.f32 %v1308, %v1359
        %v1441 = vadd.f32 %v1309, %v1359
        %v1442 = vadd.f32 %v1310, %v1359
        %v1443 = vadd.f32 %v1311, %v1359
        %v1444 = vadd.f32 %v1312, %v1359
        %v1445 = vadd.f32 %v1313, %v1359
        %v1446 = vadd.f32 %v1314, %v1359
        %v1447 = vadd.f32 %v1315, %v1359
        %v1448 = vadd.f32 %v1316, %v1359
        %v1449 = vadd.f32 %v1317, %v1359
        %v1450 = vadd.f32 %v1318, %v1359
        %v1451 = vadd.f32 %v1319, %v1359
        %v1452 = vadd.f32 %v1320, %v1359
        %v1453 = vadd.f32 %v1321, %v1359
        %v1454 = vadd.f32 %v1322, %v1359
        %v1455 = vadd.f32 %v1323, %v1359
        %v1456 = vadd.f32 %v1324, %v1359
        %v1457 = vadd.f32 %v1325, %v1359
        %v1458 = vadd.f32 %v1326, %v1359
        %v1459 = vadd.f32 %v1327, %v1359
        %v1460 = vadd.f32 %v1328, %v1359
        %v1461 = vadd.f32 %v1329, %v1359
        %v1462 = vadd.f32 %v1330, %v1359
        %v1463 = vadd.f32 %v1331, %v1359
        %v1464 = vadd.f32 %v1332, %v1359
        %v1465 = vadd.f32 %v1333, %v1359
        %v1466 = vadd.f32 %v1334, %v1359
        %v1467 = vadd.f32 %v1335, %v1359
        %v1468 = vadd.f32 %v1336, %v1359
        %v1469 = vadd.f32 %v1337, %v1359
        %v1470 = vadd.f32 %v1338, %v1359
        %v1471 = vadd.f32 %v1339, %v1359
        %v1472 = vadd.f32 %v1340, %v1359
        %v1473 = vadd.f32 %v1341, %v1359
        %v1474 = vadd.f32 %v1342, %v1359
        %v1475 = vadd.f32 %v1343, %v1359
        %v1476 = vadd.f32 %v1344, %v1359
        %v1477 = vadd.f32 %v1345, %v1359
        %v1478 = vadd.f32 %v1346, %v1359
        %v1479 = vadd.f32 %v1347, %v1359
        %v1480 = vadd.f32 %v1348, %v1359
        %v1481 = vadd.f32 %v1349, %v1359
        %v1482 = vadd.f32 %v1350, %v1359
        %v1483 = vadd.f32 %v1351, %v1359
        %v1484 = vadd.f32 %v1352, %v1359
        %v1485 = vadd.f32 %v1353, %v1359
        %v1486 = vadd.f32 %v1354, %v1359
        %v1487 = vadd.f32 %v1355, %v1359
        %v1488 = vadd.f32 %v1356, %v1359
        %vm1489 = vcmp.ge.f32.partialorder %v1361, 0.0
        %vm1490 = vcmp.ge.f32.partialorder %v1362, 0.0
        %vm1491 = vcmp.ge.f32.partialorder %v1363, 0.0
        %vm1492 = vcmp.ge.f32.partialorder %v1364, 0.0
        %vm1493 = vcmp.ge.f32.partialorder %v1365, 0.0
        %vm1494 = vcmp.ge.f32.partialorder %v1366, 0.0
        %vm1495 = vcmp.ge.f32.partialorder %v1367, 0.0
        %vm1496 = vcmp.ge.f32.partialorder %v1368, 0.0
        %vm1497 = vcmp.ge.f32.partialorder %v1369, 0.0
        %vm1498 = vcmp.ge.f32.partialorder %v1370, 0.0
        %vm1499 = vcmp.ge.f32.partialorder %v1371, 0.0
        %vm1500 = vcmp.ge.f32.partialorder %v1372, 0.0
        %vm1501 = vcmp.ge.f32.partialorder %v1373, 0.0
        %vm1502 = vcmp.ge.f32.partialorder %v1374, 0.0
        %vm1503 = vcmp.ge.f32.partialorder %v1375, 0.0
        %vm1504 = vcmp.ge.f32.partialorder %v1376, 0.0
        %vm1505 = vcmp.ge.f32.partialorder %v1377, 0.0
        %vm1506 = vcmp.ge.f32.partialorder %v1378, 0.0
        %vm1507 = vcmp.ge.f32.partialorder %v1379, 0.0
        %vm1508 = vcmp.ge.f32.partialorder %v1380, 0.0
        %vm1509 = vcmp.ge.f32.partialorder %v1381, 0.0
        %vm1510 = vcmp.ge.f32.partialorder %v1382, 0.0
        %vm1511 = vcmp.ge.f32.partialorder %v1383, 0.0
        %vm1512 = vcmp.ge.f32.partialorder %v1384, 0.0
        %vm1513 = vcmp.ge.f32.partialorder %v1385, 0.0
        %vm1514 = vcmp.ge.f32.partialorder %v1386, 0.0
        %vm1515 = vcmp.ge.f32.partialorder %v1387, 0.0
        %vm1516 = vcmp.ge.f32.partialorder %v1388, 0.0
        %vm1517 = vcmp.ge.f32.partialorder %v1389, 0.0
        %vm1518 = vcmp.ge.f32.partialorder %v1390, 0.0
        %vm1519 = vcmp.ge.f32.partialorder %v1391, 0.0
        %vm1520 = vcmp.ge.f32.partialorder %v1392, 0.0
        %vm1521 = vcmp.ge.f32.partialorder %v1393, 0.0
        %vm1522 = vcmp.ge.f32.partialorder %v1394, 0.0
        %vm1523 = vcmp.ge.f32.partialorder %v1395, 0.0
        %vm1524 = vcmp.ge.f32.partialorder %v1396, 0.0
        %vm1525 = vcmp.ge.f32.partialorder %v1397, 0.0
        %vm1526 = vcmp.ge.f32.partialorder %v1398, 0.0
        %vm1527 = vcmp.ge.f32.partialorder %v1399, 0.0
        %vm1528 = vcmp.ge.f32.partialorder %v1400, 0.0
        %vm1529 = vcmp.ge.f32.partialorder %v1401, 0.0
        %vm1530 = vcmp.ge.f32.partialorder %v1402, 0.0
        %vm1531 = vcmp.ge.f32.partialorder %v1403, 0.0
        %vm1532 = vcmp.ge.f32.partialorder %v1404, 0.0
        %vm1533 = vcmp.ge.f32.partialorder %v1405, 0.0
        %vm1534 = vcmp.ge.f32.partialorder %v1406, 0.0
        %vm1535 = vcmp.ge.f32.partialorder %v1407, 0.0
        %vm1536 = vcmp.ge.f32.partialorder %v1408, 0.0
        %vm1537 = vcmp.ge.f32.partialorder %v1409, 0.0
        %vm1538 = vcmp.ge.f32.partialorder %v1410, 0.0
        %vm1539 = vcmp.ge.f32.partialorder %v1411, 0.0
        %vm1540 = vcmp.ge.f32.partialorder %v1412, 0.0
        %vm1541 = vcmp.ge.f32.partialorder %v1413, 0.0
        %vm1542 = vcmp.ge.f32.partialorder %v1414, 0.0
        %vm1543 = vcmp.ge.f32.partialorder %v1415, 0.0
        %vm1544 = vcmp.ge.f32.partialorder %v1416, 0.0
        %vm1545 = vcmp.ge.f32.partialorder %v1417, 0.0
        %vm1546 = vcmp.ge.f32.partialorder %v1418, 0.0
        %vm1547 = vcmp.ge.f32.partialorder %v1419, 0.0
        %vm1548 = vcmp.ge.f32.partialorder %v1420, 0.0
        %vm1549 = vcmp.ge.f32.partialorder %v1421, 0.0
        %vm1550 = vcmp.ge.f32.partialorder %v1422, 0.0
        %vm1551 = vcmp.ge.f32.partialorder %v1423, 0.0
        %vm1552 = vcmp.ge.f32.partialorder %v1424, 0.0
        %vm1553 = vcmp.ge.f32.partialorder %v1425, 0.0
        %vm1554 = vcmp.ge.f32.partialorder %v1426, 0.0
        %vm1555 = vcmp.ge.f32.partialorder %v1427, 0.0
        %vm1556 = vcmp.ge.f32.partialorder %v1428, 0.0
        %vm1557 = vcmp.ge.f32.partialorder %v1429, 0.0
        %vm1558 = vcmp.ge.f32.partialorder %v1430, 0.0
        %vm1559 = vcmp.ge.f32.partialorder %v1431, 0.0
        %vm1560 = vcmp.ge.f32.partialorder %v1432, 0.0
        %vm1561 = vcmp.ge.f32.partialorder %v1433, 0.0
        %vm1562 = vcmp.ge.f32.partialorder %v1434, 0.0
        %vm1563 = vcmp.ge.f32.partialorder %v1435, 0.0
        %vm1564 = vcmp.ge.f32.partialorder %v1436, 0.0
        %vm1565 = vcmp.ge.f32.partialorder %v1437, 0.0
        %vm1566 = vcmp.ge.f32.partialorder %v1438, 0.0
        %vm1567 = vcmp.ge.f32.partialorder %v1439, 0.0
        %vm1568 = vcmp.ge.f32.partialorder %v1440, 0.0
        %vm1569 = vcmp.ge.f32.partialorder %v1441, 0.0
        %vm1570 = vcmp.ge.f32.partialorder %v1442, 0.0
        %vm1571 = vcmp.ge.f32.partialorder %v1443, 0.0
        %vm1572 = vcmp.ge.f32.partialorder %v1444, 0.0
        %vm1573 = vcmp.ge.f32.partialorder %v1445, 0.0
        %vm1574 = vcmp.ge.f32.partialorder %v1446, 0.0
        %vm1575 = vcmp.ge.f32.partialorder %v1447, 0.0
        %vm1576 = vcmp.ge.f32.partialorder %v1448, 0.0
        %vm1577 = vcmp.ge.f32.partialorder %v1449, 0.0
        %vm1578 = vcmp.ge.f32.partialorder %v1450, 0.0
        %vm1579 = vcmp.ge.f32.partialorder %v1451, 0.0
        %vm1580 = vcmp.ge.f32.partialorder %v1452, 0.0
        %vm1581 = vcmp.ge.f32.partialorder %v1453, 0.0
        %vm1582 = vcmp.ge.f32.partialorder %v1454, 0.0
        %vm1583 = vcmp.ge.f32.partialorder %v1455, 0.0
        %vm1584 = vcmp.ge.f32.partialorder %v1456, 0.0
        %vm1585 = vcmp.ge.f32.partialorder %v1457, 0.0
        %vm1586 = vcmp.ge.f32.partialorder %v1458, 0.0
        %vm1587 = vcmp.ge.f32.partialorder %v1459, 0.0
        %vm1588 = vcmp.ge.f32.partialorder %v1460, 0.0
        %vm1589 = vcmp.ge.f32.partialorder %v1461, 0.0
        %vm1590 = vcmp.ge.f32.partialorder %v1462, 0.0
        %vm1591 = vcmp.ge.f32.partialorder %v1463, 0.0
        %vm1592 = vcmp.ge.f32.partialorder %v1464, 0.0
        %vm1593 = vcmp.ge.f32.partialorder %v1465, 0.0
        %vm1594 = vcmp.ge.f32.partialorder %v1466, 0.0
        %vm1595 = vcmp.ge.f32.partialorder %v1467, 0.0
        %vm1596 = vcmp.ge.f32.partialorder %v1468, 0.0
        %vm1597 = vcmp.ge.f32.partialorder %v1469, 0.0
        %vm1598 = vcmp.ge.f32.partialorder %v1470, 0.0
        %vm1599 = vcmp.ge.f32.partialorder %v1471, 0.0
        %vm1600 = vcmp.ge.f32.partialorder %v1472, 0.0
        %vm1601 = vcmp.ge.f32.partialorder %v1473, 0.0
        %vm1602 = vcmp.ge.f32.partialorder %v1474, 0.0
        %vm1603 = vcmp.ge.f32.partialorder %v1475, 0.0
        %vm1604 = vcmp.ge.f32.partialorder %v1476, 0.0
        %vm1605 = vcmp.ge.f32.partialorder %v1477, 0.0
        %vm1606 = vcmp.ge.f32.partialorder %v1478, 0.0
        %vm1607 = vcmp.ge.f32.partialorder %v1479, 0.0
        %vm1608 = vcmp.ge.f32.partialorder %v1480, 0.0
        %vm1609 = vcmp.ge.f32.partialorder %v1481, 0.0
        %vm1610 = vcmp.ge.f32.partialorder %v1482, 0.0
        %vm1611 = vcmp.ge.f32.partialorder %v1483, 0.0
        %vm1612 = vcmp.ge.f32.partialorder %v1484, 0.0
        %vm1613 = vcmp.ge.f32.partialorder %v1485, 0.0
        %vm1614 = vcmp.ge.f32.partialorder %v1486, 0.0
        %vm1615 = vcmp.ge.f32.partialorder %v1487, 0.0
        %vm1616 = vcmp.ge.f32.partialorder %v1488, 0.0
        %v1617 = vmul.f32 %v1361, 0.2
        %v1618 = vmul.f32 %v1362, 0.2
        %v1619 = vmul.f32 %v1363, 0.2
        %v1620 = vmul.f32 %v1364, 0.2
        %v1621 = vmul.f32 %v1365, 0.2
        %v1622 = vmul.f32 %v1366, 0.2
        %v1623 = vmul.f32 %v1367, 0.2
        %v1624 = vmul.f32 %v1368, 0.2
        %v1625 = vmul.f32 %v1369, 0.2
        %v1626 = vmul.f32 %v1370, 0.2
        %v1627 = vmul.f32 %v1371, 0.2
        %v1628 = vmul.f32 %v1372, 0.2
        %v1629 = vmul.f32 %v1373, 0.2
        %v1630 = vmul.f32 %v1374, 0.2
        %v1631 = vmul.f32 %v1375, 0.2
        %v1632 = vmul.f32 %v1376, 0.2
        %v1633 = vmul.f32 %v1377, 0.2
        %v1634 = vmul.f32 %v1378, 0.2
        %v1635 = vmul.f32 %v1379, 0.2
        %v1636 = vmul.f32 %v1380, 0.2
        %v1637 = vmul.f32 %v1381, 0.2
        %v1638 = vmul.f32 %v1382, 0.2
        %v1639 = vmul.f32 %v1383, 0.2
        %v1640 = vmul.f32 %v1384, 0.2
        %v1641 = vmul.f32 %v1385, 0.2
        %v1642 = vmul.f32 %v1386, 0.2
        %v1643 = vmul.f32 %v1387, 0.2
        %v1644 = vmul.f32 %v1388, 0.2
        %v1645 = vmul.f32 %v1389, 0.2
        %v1646 = vmul.f32 %v1390, 0.2
        %v1647 = vmul.f32 %v1391, 0.2
        %v1648 = vmul.f32 %v1392, 0.2
        %v1649 = vmul.f32 %v1393, 0.2
        %v1650 = vmul.f32 %v1394, 0.2
        %v1651 = vmul.f32 %v1395, 0.2
        %v1652 = vmul.f32 %v1396, 0.2
        %v1653 = vmul.f32 %v1397, 0.2
        %v1654 = vmul.f32 %v1398, 0.2
        %v1655 = vmul.f32 %v1399, 0.2
        %v1656 = vmul.f32 %v1400, 0.2
        %v1657 = vmul.f32 %v1401, 0.2
        %v1658 = vmul.f32 %v1402, 0.2
        %v1659 = vmul.f32 %v1403, 0.2
        %v1660 = vmul.f32 %v1404, 0.2
        %v1661 = vmul.f32 %v1405, 0.2
        %v1662 = vmul.f32 %v1406, 0.2
        %v1663 = vmul.f32 %v1407, 0.2
        %v1664 = vmul.f32 %v1408, 0.2
        %v1665 = vmul.f32 %v1409, 0.2
        %v1666 = vmul.f32 %v1410, 0.2
        %v1667 = vmul.f32 %v1411, 0.2
        %v1668 = vmul.f32 %v1412, 0.2
        %v1669 = vmul.f32 %v1413, 0.2
        %v1670 = vmul.f32 %v1414, 0.2
        %v1671 = vmul.f32 %v1415, 0.2
        %v1672 = vmul.f32 %v1416, 0.2
        %v1673 = vmul.f32 %v1417, 0.2
        %v1674 = vmul.f32 %v1418, 0.2
        %v1675 = vmul.f32 %v1419, 0.2
        %v1676 = vmul.f32 %v1420, 0.2
        %v1677 = vmul.f32 %v1421, 0.2
        %v1678 = vmul.f32 %v1422, 0.2
        %v1679 = vmul.f32 %v1423, 0.2
        %v1680 = vmul.f32 %v1424, 0.2
        %v1681 = vmul.f32 %v1425, 0.2
        %v1682 = vmul.f32 %v1426, 0.2
        %v1683 = vmul.f32 %v1427, 0.2
        %v1684 = vmul.f32 %v1428, 0.2
        %v1685 = vmul.f32 %v1429, 0.2
        %v1686 = vmul.f32 %v1430, 0.2
        %v1687 = vmul.f32 %v1431, 0.2
        %v1688 = vmul.f32 %v1432, 0.2
        %v1689 = vmul.f32 %v1433, 0.2
        %v1690 = vmul.f32 %v1434, 0.2
        %v1691 = vmul.f32 %v1435, 0.2
        %v1692 = vmul.f32 %v1436, 0.2
        %v1693 = vmul.f32 %v1437, 0.2
        %v1694 = vmul.f32 %v1438, 0.2
        %v1695 = vmul.f32 %v1439, 0.2
        %v1696 = vmul.f32 %v1440, 0.2
        %v1697 = vmul.f32 %v1441, 0.2
        %v1698 = vmul.f32 %v1442, 0.2
        %v1699 = vmul.f32 %v1443, 0.2
        %v1700 = vmul.f32 %v1444, 0.2
        %v1701 = vmul.f32 %v1445, 0.2
        %v1702 = vmul.f32 %v1446, 0.2
        %v1703 = vmul.f32 %v1447, 0.2
        %v1704 = vmul.f32 %v1448, 0.2
        %v1705 = vmul.f32 %v1449, 0.2
        %v1706 = vmul.f32 %v1450, 0.2
        %v1707 = vmul.f32 %v1451, 0.2
        %v1708 = vmul.f32 %v1452, 0.2
        %v1709 = vmul.f32 %v1453, 0.2
        %v1710 = vmul.f32 %v1454, 0.2
        %v1711 = vmul.f32 %v1455, 0.2
        %v1712 = vmul.f32 %v1456, 0.2
        %v1713 = vmul.f32 %v1457, 0.2
        %v1714 = vmul.f32 %v1458, 0.2
        %v1715 = vmul.f32 %v1459, 0.2
        %v1716 = vmul.f32 %v1460, 0.2
        %v1717 = vmul.f32 %v1461, 0.2
        %v1718 = vmul.f32 %v1462, 0.2
        %v1719 = vmul.f32 %v1463, 0.2
        %v1720 = vmul.f32 %v1464, 0.2
        %v1721 = vmul.f32 %v1465, 0.2
        %v1722 = vmul.f32 %v1466, 0.2
        %v1723 = vmul.f32 %v1467, 0.2
        %v1724 = vmul.f32 %v1468, 0.2
        %v1725 = vmul.f32 %v1469, 0.2
        %v1726 = vmul.f32 %v1470, 0.2
        %v1727 = vmul.f32 %v1471, 0.2
        %v1728 = vmul.f32 %v1472, 0.2
        %v1729 = vmul.f32 %v1473, 0.2
        %v1730 = vmul.f32 %v1474, 0.2
        %v1731 = vmul.f32 %v1475, 0.2
        %v1732 = vmul.f32 %v1476, 0.2
        %v1733 = vmul.f32 %v1477, 0.2
        %v1734 = vmul.f32 %v1478, 0.2
        %v1735 = vmul.f32 %v1479, 0.2
        %v1736 = vmul.f32 %v1480, 0.2
        %v1737 = vmul.f32 %v1481, 0.2
        %v1738 = vmul.f32 %v1482, 0.2
        %v1739 = vmul.f32 %v1483, 0.2
        %v1740 = vmul.f32 %v1484, 0.2
        %v1741 = vmul.f32 %v1485, 0.2
        %v1742 = vmul.f32 %v1486, 0.2
        %v1743 = vmul.f32 %v1487, 0.2
        %v1744 = vmul.f32 %v1488, 0.2
        %v1745 = vsel %vm1489, %v1361, %v1617
        %v1746 = vsel %vm1490, %v1362, %v1618
        %v1747 = vsel %vm1491, %v1363, %v1619
        %v1748 = vsel %vm1492, %v1364, %v1620
        %v1749 = vsel %vm1493, %v1365, %v1621
        %v1750 = vsel %vm1494, %v1366, %v1622
        %v1751 = vsel %vm1495, %v1367, %v1623
        %v1752 = vsel %vm1496, %v1368, %v1624
        %v1753 = vsel %vm1497, %v1369, %v1625
        %v1754 = vsel %vm1498, %v1370, %v1626
        %v1755 = vsel %vm1499, %v1371, %v1627
        %v1756 = vsel %vm1500, %v1372, %v1628
        %v1757 = vsel %vm1501, %v1373, %v1629
        %v1758 = vsel %vm1502, %v1374, %v1630
        %v1759 = vsel %vm1503, %v1375, %v1631
        %v1760 = vsel %vm1504, %v1376, %v1632
        %v1761 = vsel %vm1505, %v1377, %v1633
        %v1762 = vsel %vm1506, %v1378, %v1634
        %v1763 = vsel %vm1507, %v1379, %v1635
        %v1764 = vsel %vm1508, %v1380, %v1636
        %v1765 = vsel %vm1509, %v1381, %v1637
        %v1766 = vsel %vm1510, %v1382, %v1638
        %v1767 = vsel %vm1511, %v1383, %v1639
        %v1768 = vsel %vm1512, %v1384, %v1640
        %v1769 = vsel %vm1513, %v1385, %v1641
        %v1770 = vsel %vm1514, %v1386, %v1642
        %v1771 = vsel %vm1515, %v1387, %v1643
        %v1772 = vsel %vm1516, %v1388, %v1644
        %v1773 = vsel %vm1517, %v1389, %v1645
        %v1774 = vsel %vm1518, %v1390, %v1646
        %v1775 = vsel %vm1519, %v1391, %v1647
        %v1776 = vsel %vm1520, %v1392, %v1648
        %v1777 = vsel %vm1521, %v1393, %v1649
        %v1778 = vsel %vm1522, %v1394, %v1650
        %v1779 = vsel %vm1523, %v1395, %v1651
        %v1780 = vsel %vm1524, %v1396, %v1652
        %v1781 = vsel %vm1525, %v1397, %v1653
        %v1782 = vsel %vm1526, %v1398, %v1654
        %v1783 = vsel %vm1527, %v1399, %v1655
        %v1784 = vsel %vm1528, %v1400, %v1656
        %v1785 = vsel %vm1529, %v1401, %v1657
        %v1786 = vsel %vm1530, %v1402, %v1658
        %v1787 = vsel %vm1531, %v1403, %v1659
        %v1788 = vsel %vm1532, %v1404, %v1660
        %v1789 = vsel %vm1533, %v1405, %v1661
        %v1790 = vsel %vm1534, %v1406, %v1662
        %v1791 = vsel %vm1535, %v1407, %v1663
        %v1792 = vsel %vm1536, %v1408, %v1664
        %v1793 = vsel %vm1537, %v1409, %v1665
        %v1794 = vsel %vm1538, %v1410, %v1666
        %v1795 = vsel %vm1539, %v1411, %v1667
        %v1796 = vsel %vm1540, %v1412, %v1668
        %v1797 = vsel %vm1541, %v1413, %v1669
        %v1798 = vsel %vm1542, %v1414, %v1670
        %v1799 = vsel %vm1543, %v1415, %v1671
        %v1800 = vsel %vm1544, %v1416, %v1672
        %v1801 = vsel %vm1545, %v1417, %v1673
        %v1802 = vsel %vm1546, %v1418, %v1674
        %v1803 = vsel %vm1547, %v1419, %v1675
        %v1804 = vsel %vm1548, %v1420, %v1676
        %v1805 = vsel %vm1549, %v1421, %v1677
        %v1806 = vsel %vm1550, %v1422, %v1678
        %v1807 = vsel %vm1551, %v1423, %v1679
        %v1808 = vsel %vm1552, %v1424, %v1680
        %v1809 = vsel %vm1553, %v1425, %v1681
        %v1810 = vsel %vm1554, %v1426, %v1682
        %v1811 = vsel %vm1555, %v1427, %v1683
        %v1812 = vsel %vm1556, %v1428, %v1684
        %v1813 = vsel %vm1557, %v1429, %v1685
        %v1814 = vsel %vm1558, %v1430, %v1686
        %v1815 = vsel %vm1559, %v1431, %v1687
        %v1816 = vsel %vm1560, %v1432, %v1688
        %v1817 = vsel %vm1561, %v1433, %v1689
        %v1818 = vsel %vm1562, %v1434, %v1690
        %v1819 = vsel %vm1563, %v1435, %v1691
        %v1820 = vsel %vm1564, %v1436, %v1692
        %v1821 = vsel %vm1565, %v1437, %v1693
        %v1822 = vsel %vm1566, %v1438, %v1694
        %v1823 = vsel %vm1567, %v1439, %v1695
        %v1824 = vsel %vm1568, %v1440, %v1696
        %v1825 = vsel %vm1569, %v1441, %v1697
        %v1826 = vsel %vm1570, %v1442, %v1698
        %v1827 = vsel %vm1571, %v1443, %v1699
        %v1828 = vsel %vm1572, %v1444, %v1700
        %v1829 = vsel %vm1573, %v1445, %v1701
        %v1830 = vsel %vm1574, %v1446, %v1702
        %v1831 = vsel %vm1575, %v1447, %v1703
        %v1832 = vsel %vm1576, %v1448, %v1704
        %v1833 = vsel %vm1577, %v1449, %v1705
        %v1834 = vsel %vm1578, %v1450, %v1706
        %v1835 = vsel %vm1579, %v1451, %v1707
        %v1836 = vsel %vm1580, %v1452, %v1708
        %v1837 = vsel %vm1581, %v1453, %v1709
        %v1838 = vsel %vm1582, %v1454, %v1710
        %v1839 = vsel %vm1583, %v1455, %v1711
        %v1840 = vsel %vm1584, %v1456, %v1712
        %v1841 = vsel %vm1585, %v1457, %v1713
        %v1842 = vsel %vm1586, %v1458, %v1714
        %v1843 = vsel %vm1587, %v1459, %v1715
        %v1844 = vsel %vm1588, %v1460, %v1716
        %v1845 = vsel %vm1589, %v1461, %v1717
        %v1846 = vsel %vm1590, %v1462, %v1718
        %v1847 = vsel %vm1591, %v1463, %v1719
        %v1848 = vsel %vm1592, %v1464, %v1720
        %v1849 = vsel %vm1593, %v1465, %v1721
        %v1850 = vsel %vm1594, %v1466, %v1722
        %v1851 = vsel %vm1595, %v1467, %v1723
        %v1852 = vsel %vm1596, %v1468, %v1724
        %v1853 = vsel %vm1597, %v1469, %v1725
        %v1854 = vsel %vm1598, %v1470, %v1726
        %v1855 = vsel %vm1599, %v1471, %v1727
        %v1856 = vsel %vm1600, %v1472, %v1728
        %v1857 = vsel %vm1601, %v1473, %v1729
        %v1858 = vsel %vm1602, %v1474, %v1730
        %v1859 = vsel %vm1603, %v1475, %v1731
        %v1860 = vsel %vm1604, %v1476, %v1732
        %v1861 = vsel %vm1605, %v1477, %v1733
        %v1862 = vsel %vm1606, %v1478, %v1734
        %v1863 = vsel %vm1607, %v1479, %v1735
        %v1864 = vsel %vm1608, %v1480, %v1736
        %v1865 = vsel %vm1609, %v1481, %v1737
        %v1866 = vsel %vm1610, %v1482, %v1738
        %v1867 = vsel %vm1611, %v1483, %v1739
        %v1868 = vsel %vm1612, %v1484, %v1740
        %v1869 = vsel %vm1613, %v1485, %v1741
        %v1870 = vsel %vm1614, %v1486, %v1742
        %v1871 = vsel %vm1615, %v1487, %v1743
        %v1872 = vsel %vm1616, %v1488, %v1744
        %v1873 = vpack.c.bf16 %v1745, %v1745
        %v1874 = vpack.c.bf16 %v1746, %v1746
        %v1875 = vpack.c.bf16 %v1747, %v1747
        %v1876 = vpack.c.bf16 %v1748, %v1748
        %v1877 = vpack.c.bf16 %v1749, %v1749
        %v1878 = vpack.c.bf16 %v1750, %v1750
        %v1879 = vpack.c.bf16 %v1751, %v1751
        %v1880 = vpack.c.bf16 %v1752, %v1752
        %v1881 = vpack.c.bf16 %v1753, %v1753
        %v1882 = vpack.c.bf16 %v1754, %v1754
        %v1883 = vpack.c.bf16 %v1755, %v1755
        %v1884 = vpack.c.bf16 %v1756, %v1756
        %v1885 = vpack.c.bf16 %v1757, %v1757
        %v1886 = vpack.c.bf16 %v1758, %v1758
        %v1887 = vpack.c.bf16 %v1759, %v1759
        %v1888 = vpack.c.bf16 %v1760, %v1760
        %v1889 = vpack.c.bf16 %v1761, %v1761
        %v1890 = vpack.c.bf16 %v1762, %v1762
        %v1891 = vpack.c.bf16 %v1763, %v1763
        %v1892 = vpack.c.bf16 %v1764, %v1764
        %v1893 = vpack.c.bf16 %v1765, %v1765
        %v1894 = vpack.c.bf16 %v1766, %v1766
        %v1895 = vpack.c.bf16 %v1767, %v1767
        %v1896 = vpack.c.bf16 %v1768, %v1768
        %v1897 = vpack.c.bf16 %v1769, %v1769
        %v1898 = vpack.c.bf16 %v1770, %v1770
        %v1899 = vpack.c.bf16 %v1771, %v1771
        %v1900 = vpack.c.bf16 %v1772, %v1772
        %v1901 = vpack.c.bf16 %v1773, %v1773
        %v1902 = vpack.c.bf16 %v1774, %v1774
        %v1903 = vpack.c.bf16 %v1775, %v1775
        %v1904 = vpack.c.bf16 %v1776, %v1776
        %v1905 = vpack.c.bf16 %v1777, %v1777
        %v1906 = vpack.c.bf16 %v1778, %v1778
        %v1907 = vpack.c.bf16 %v1779, %v1779
        %v1908 = vpack.c.bf16 %v1780, %v1780
        %v1909 = vpack.c.bf16 %v1781, %v1781
        %v1910 = vpack.c.bf16 %v1782, %v1782
        %v1911 = vpack.c.bf16 %v1783, %v1783
        %v1912 = vpack.c.bf16 %v1784, %v1784
        %v1913 = vpack.c.bf16 %v1785, %v1785
        %v1914 = vpack.c.bf16 %v1786, %v1786
        %v1915 = vpack.c.bf16 %v1787, %v1787
        %v1916 = vpack.c.bf16 %v1788, %v1788
        %v1917 = vpack.c.bf16 %v1789, %v1789
        %v1918 = vpack.c.bf16 %v1790, %v1790
        %v1919 = vpack.c.bf16 %v1791, %v1791
        %v1920 = vpack.c.bf16 %v1792, %v1792
        %v1921 = vpack.c.bf16 %v1793, %v1793
        %v1922 = vpack.c.bf16 %v1794, %v1794
        %v1923 = vpack.c.bf16 %v1795, %v1795
        %v1924 = vpack.c.bf16 %v1796, %v1796
        %v1925 = vpack.c.bf16 %v1797, %v1797
        %v1926 = vpack.c.bf16 %v1798, %v1798
        %v1927 = vpack.c.bf16 %v1799, %v1799
        %v1928 = vpack.c.bf16 %v1800, %v1800
        %v1929 = vpack.c.bf16 %v1801, %v1801
        %v1930 = vpack.c.bf16 %v1802, %v1802
        %v1931 = vpack.c.bf16 %v1803, %v1803
        %v1932 = vpack.c.bf16 %v1804, %v1804
        %v1933 = vpack.c.bf16 %v1805, %v1805
        %v1934 = vpack.c.bf16 %v1806, %v1806
        %v1935 = vpack.c.bf16 %v1807, %v1807
        %v1936 = vpack.c.bf16 %v1808, %v1808
        %v1937 = vpack.c.bf16 %v1809, %v1809
        %v1938 = vpack.c.bf16 %v1810, %v1810
        %v1939 = vpack.c.bf16 %v1811, %v1811
        %v1940 = vpack.c.bf16 %v1812, %v1812
        %v1941 = vpack.c.bf16 %v1813, %v1813
        %v1942 = vpack.c.bf16 %v1814, %v1814
        %v1943 = vpack.c.bf16 %v1815, %v1815
        %v1944 = vpack.c.bf16 %v1816, %v1816
        %v1945 = vpack.c.bf16 %v1817, %v1817
        %v1946 = vpack.c.bf16 %v1818, %v1818
        %v1947 = vpack.c.bf16 %v1819, %v1819
        %v1948 = vpack.c.bf16 %v1820, %v1820
        %v1949 = vpack.c.bf16 %v1821, %v1821
        %v1950 = vpack.c.bf16 %v1822, %v1822
        %v1951 = vpack.c.bf16 %v1823, %v1823
        %v1952 = vpack.c.bf16 %v1824, %v1824
        %v1953 = vpack.c.bf16 %v1825, %v1825
        %v1954 = vpack.c.bf16 %v1826, %v1826
        %v1955 = vpack.c.bf16 %v1827, %v1827
        %v1956 = vpack.c.bf16 %v1828, %v1828
        %v1957 = vpack.c.bf16 %v1829, %v1829
        %v1958 = vpack.c.bf16 %v1830, %v1830
        %v1959 = vpack.c.bf16 %v1831, %v1831
        %v1960 = vpack.c.bf16 %v1832, %v1832
        %v1961 = vpack.c.bf16 %v1833, %v1833
        %v1962 = vpack.c.bf16 %v1834, %v1834
        %v1963 = vpack.c.bf16 %v1835, %v1835
        %v1964 = vpack.c.bf16 %v1836, %v1836
        %v1965 = vpack.c.bf16 %v1837, %v1837
        %v1966 = vpack.c.bf16 %v1838, %v1838
        %v1967 = vpack.c.bf16 %v1839, %v1839
        %v1968 = vpack.c.bf16 %v1840, %v1840
        %v1969 = vpack.c.bf16 %v1841, %v1841
        %v1970 = vpack.c.bf16 %v1842, %v1842
        %v1971 = vpack.c.bf16 %v1843, %v1843
        %v1972 = vpack.c.bf16 %v1844, %v1844
        %v1973 = vpack.c.bf16 %v1845, %v1845
        %v1974 = vpack.c.bf16 %v1846, %v1846
        %v1975 = vpack.c.bf16 %v1847, %v1847
        %v1976 = vpack.c.bf16 %v1848, %v1848
        %v1977 = vpack.c.bf16 %v1849, %v1849
        %v1978 = vpack.c.bf16 %v1850, %v1850
        %v1979 = vpack.c.bf16 %v1851, %v1851
        %v1980 = vpack.c.bf16 %v1852, %v1852
        %v1981 = vpack.c.bf16 %v1853, %v1853
        %v1982 = vpack.c.bf16 %v1854, %v1854
        %v1983 = vpack.c.bf16 %v1855, %v1855
        %v1984 = vpack.c.bf16 %v1856, %v1856
        %v1985 = vpack.c.bf16 %v1857, %v1857
        %v1986 = vpack.c.bf16 %v1858, %v1858
        %v1987 = vpack.c.bf16 %v1859, %v1859
        %v1988 = vpack.c.bf16 %v1860, %v1860
        %v1989 = vpack.c.bf16 %v1861, %v1861
        %v1990 = vpack.c.bf16 %v1862, %v1862
        %v1991 = vpack.c.bf16 %v1863, %v1863
        %v1992 = vpack.c.bf16 %v1864, %v1864
        %v1993 = vpack.c.bf16 %v1865, %v1865
        %v1994 = vpack.c.bf16 %v1866, %v1866
        %v1995 = vpack.c.bf16 %v1867, %v1867
        %v1996 = vpack.c.bf16 %v1868, %v1868
        %v1997 = vpack.c.bf16 %v1869, %v1869
        %v1998 = vpack.c.bf16 %v1870, %v1870
        %v1999 = vpack.c.bf16 %v1871, %v1871
        %v2000 = vpack.c.bf16 %v1872, %v1872
        %vm2001 = vcmask 125952
        %2002 = vst.msk [vmem:[%s220] sm:$0xf] %vm2001, %v1873
        %2003 = vst.msk [vmem:[%s220 + $0x4] sm:$0xf] %vm2001, %v1874
        %2004 = vst.msk [vmem:[%s220 + $0x8] sm:$0xf] %vm2001, %v1875
        %2005 = vst.msk [vmem:[%s220 + $0xc] sm:$0xf] %vm2001, %v1876
        %2006 = vst.msk [vmem:[%s220 + $0x10] sm:$0xf] %vm2001, %v1877
        %2007 = vst.msk [vmem:[%s220 + $0x14] sm:$0xf] %vm2001, %v1878
        %2008 = vst.msk [vmem:[%s220 + $0x18] sm:$0xf] %vm2001, %v1879
        %2009 = vst.msk [vmem:[%s220 + $0x1c] sm:$0xf] %vm2001, %v1880
        %2010 = vst.msk [vmem:[%s220 + $0x20] sm:$0xf] %vm2001, %v1881
        %2011 = vst.msk [vmem:[%s220 + $0x24] sm:$0xf] %vm2001, %v1882
        %2012 = vst.msk [vmem:[%s220 + $0x28] sm:$0xf] %vm2001, %v1883
        %2013 = vst.msk [vmem:[%s220 + $0x2c] sm:$0xf] %vm2001, %v1884
        %2014 = vst.msk [vmem:[%s220 + $0x30] sm:$0xf] %vm2001, %v1885
        %2015 = vst.msk [vmem:[%s220 + $0x34] sm:$0xf] %vm2001, %v1886
        %2016 = vst.msk [vmem:[%s220 + $0x38] sm:$0xf] %vm2001, %v1887
        %2017 = vst.msk [vmem:[%s220 + $0x3c] sm:$0xf] %vm2001, %v1888
        %2018 = vst.msk [vmem:[%s220 + $0x40] sm:$0xf] %vm2001, %v1889
        %2019 = vst.msk [vmem:[%s220 + $0x44] sm:$0xf] %vm2001, %v1890
        %2020 = vst.msk [vmem:[%s220 + $0x48] sm:$0xf] %vm2001, %v1891
        %2021 = vst.msk [vmem:[%s220 + $0x4c] sm:$0xf] %vm2001, %v1892
        %2022 = vst.msk [vmem:[%s220 + $0x50] sm:$0xf] %vm2001, %v1893
        %2023 = vst.msk [vmem:[%s220 + $0x54] sm:$0xf] %vm2001, %v1894
        %2024 = vst.msk [vmem:[%s220 + $0x58] sm:$0xf] %vm2001, %v1895
        %2025 = vst.msk [vmem:[%s220 + $0x5c] sm:$0xf] %vm2001, %v1896
        %2026 = vst.msk [vmem:[%s220 + $0x60] sm:$0xf] %vm2001, %v1897
        %2027 = vst.msk [vmem:[%s220 + $0x64] sm:$0xf] %vm2001, %v1898
        %2028 = vst.msk [vmem:[%s220 + $0x68] sm:$0xf] %vm2001, %v1899
        %2029 = vst.msk [vmem:[%s220 + $0x6c] sm:$0xf] %vm2001, %v1900
        %2030 = vst.msk [vmem:[%s220 + $0x70] sm:$0xf] %vm2001, %v1901
        %2031 = vst.msk [vmem:[%s220 + $0x74] sm:$0xf] %vm2001, %v1902
        %2032 = vst.msk [vmem:[%s220 + $0x78] sm:$0xf] %vm2001, %v1903
        %2033 = vst.msk [vmem:[%s220 + $0x7c] sm:$0xf] %vm2001, %v1904
        %2034 = vst.msk [vmem:[%s220 + $0x80] sm:$0xf] %vm2001, %v1905
        %2035 = vst.msk [vmem:[%s220 + $0x84] sm:$0xf] %vm2001, %v1906
        %2036 = vst.msk [vmem:[%s220 + $0x88] sm:$0xf] %vm2001, %v1907
        %2037 = vst.msk [vmem:[%s220 + $0x8c] sm:$0xf] %vm2001, %v1908
        %2038 = vst.msk [vmem:[%s220 + $0x90] sm:$0xf] %vm2001, %v1909
        %2039 = vst.msk [vmem:[%s220 + $0x94] sm:$0xf] %vm2001, %v1910
        %2040 = vst.msk [vmem:[%s220 + $0x98] sm:$0xf] %vm2001, %v1911
        %2041 = vst.msk [vmem:[%s220 + $0x9c] sm:$0xf] %vm2001, %v1912
        %2042 = vst.msk [vmem:[%s220 + $0xa0] sm:$0xf] %vm2001, %v1913
        %2043 = vst.msk [vmem:[%s220 + $0xa4] sm:$0xf] %vm2001, %v1914
        %2044 = vst.msk [vmem:[%s220 + $0xa8] sm:$0xf] %vm2001, %v1915
        %2045 = vst.msk [vmem:[%s220 + $0xac] sm:$0xf] %vm2001, %v1916
        %2046 = vst.msk [vmem:[%s220 + $0xb0] sm:$0xf] %vm2001, %v1917
        %2047 = vst.msk [vmem:[%s220 + $0xb4] sm:$0xf] %vm2001, %v1918
        %2048 = vst.msk [vmem:[%s220 + $0xb8] sm:$0xf] %vm2001, %v1919
        %2049 = vst.msk [vmem:[%s220 + $0xbc] sm:$0xf] %vm2001, %v1920
        %2050 = vst.msk [vmem:[%s220 + $0xc0] sm:$0xf] %vm2001, %v1921
        %2051 = vst.msk [vmem:[%s220 + $0xc4] sm:$0xf] %vm2001, %v1922
        %2052 = vst.msk [vmem:[%s220 + $0xc8] sm:$0xf] %vm2001, %v1923
        %2053 = vst.msk [vmem:[%s220 + $0xcc] sm:$0xf] %vm2001, %v1924
        %2054 = vst.msk [vmem:[%s220 + $0xd0] sm:$0xf] %vm2001, %v1925
        %2055 = vst.msk [vmem:[%s220 + $0xd4] sm:$0xf] %vm2001, %v1926
        %2056 = vst.msk [vmem:[%s220 + $0xd8] sm:$0xf] %vm2001, %v1927
        %2057 = vst.msk [vmem:[%s220 + $0xdc] sm:$0xf] %vm2001, %v1928
        %2058 = vst.msk [vmem:[%s220 + $0xe0] sm:$0xf] %vm2001, %v1929
        %2059 = vst.msk [vmem:[%s220 + $0xe4] sm:$0xf] %vm2001, %v1930
        %2060 = vst.msk [vmem:[%s220 + $0xe8] sm:$0xf] %vm2001, %v1931
        %2061 = vst.msk [vmem:[%s220 + $0xec] sm:$0xf] %vm2001, %v1932
        %2062 = vst.msk [vmem:[%s220 + $0xf0] sm:$0xf] %vm2001, %v1933
        %2063 = vst.msk [vmem:[%s220 + $0xf4] sm:$0xf] %vm2001, %v1934
        %2064 = vst.msk [vmem:[%s220 + $0xf8] sm:$0xf] %vm2001, %v1935
        %2065 = vst.msk [vmem:[%s220 + $0xfc] sm:$0xf] %vm2001, %v1936
        %2066 = vst.msk [vmem:[%s220 + $0x100] sm:$0xf] %vm2001, %v1937
        %2067 = vst.msk [vmem:[%s220 + $0x104] sm:$0xf] %vm2001, %v1938
        %2068 = vst.msk [vmem:[%s220 + $0x108] sm:$0xf] %vm2001, %v1939
        %2069 = vst.msk [vmem:[%s220 + $0x10c] sm:$0xf] %vm2001, %v1940
        %2070 = vst.msk [vmem:[%s220 + $0x110] sm:$0xf] %vm2001, %v1941
        %2071 = vst.msk [vmem:[%s220 + $0x114] sm:$0xf] %vm2001, %v1942
        %2072 = vst.msk [vmem:[%s220 + $0x118] sm:$0xf] %vm2001, %v1943
        %2073 = vst.msk [vmem:[%s220 + $0x11c] sm:$0xf] %vm2001, %v1944
        %2074 = vst.msk [vmem:[%s220 + $0x120] sm:$0xf] %vm2001, %v1945
        %2075 = vst.msk [vmem:[%s220 + $0x124] sm:$0xf] %vm2001, %v1946
        %2076 = vst.msk [vmem:[%s220 + $0x128] sm:$0xf] %vm2001, %v1947
        %2077 = vst.msk [vmem:[%s220 + $0x12c] sm:$0xf] %vm2001, %v1948
        %2078 = vst.msk [vmem:[%s220 + $0x130] sm:$0xf] %vm2001, %v1949
        %2079 = vst.msk [vmem:[%s220 + $0x134] sm:$0xf] %vm2001, %v1950
        %2080 = vst.msk [vmem:[%s220 + $0x138] sm:$0xf] %vm2001, %v1951
        %2081 = vst.msk [vmem:[%s220 + $0x13c] sm:$0xf] %vm2001, %v1952
        %2082 = vst.msk [vmem:[%s220 + $0x140] sm:$0xf] %vm2001, %v1953
        %2083 = vst.msk [vmem:[%s220 + $0x144] sm:$0xf] %vm2001, %v1954
        %2084 = vst.msk [vmem:[%s220 + $0x148] sm:$0xf] %vm2001, %v1955
        %2085 = vst.msk [vmem:[%s220 + $0x14c] sm:$0xf] %vm2001, %v1956
        %2086 = vst.msk [vmem:[%s220 + $0x150] sm:$0xf] %vm2001, %v1957
        %2087 = vst.msk [vmem:[%s220 + $0x154] sm:$0xf] %vm2001, %v1958
        %2088 = vst.msk [vmem:[%s220 + $0x158] sm:$0xf] %vm2001, %v1959
        %2089 = vst.msk [vmem:[%s220 + $0x15c] sm:$0xf] %vm2001, %v1960
        %2090 = vst.msk [vmem:[%s220 + $0x160] sm:$0xf] %vm2001, %v1961
        %2091 = vst.msk [vmem:[%s220 + $0x164] sm:$0xf] %vm2001, %v1962
        %2092 = vst.msk [vmem:[%s220 + $0x168] sm:$0xf] %vm2001, %v1963
        %2093 = vst.msk [vmem:[%s220 + $0x16c] sm:$0xf] %vm2001, %v1964
        %2094 = vst.msk [vmem:[%s220 + $0x170] sm:$0xf] %vm2001, %v1965
        %2095 = vst.msk [vmem:[%s220 + $0x174] sm:$0xf] %vm2001, %v1966
        %2096 = vst.msk [vmem:[%s220 + $0x178] sm:$0xf] %vm2001, %v1967
        %2097 = vst.msk [vmem:[%s220 + $0x17c] sm:$0xf] %vm2001, %v1968
        %2098 = vst.msk [vmem:[%s220 + $0x180] sm:$0xf] %vm2001, %v1969
        %2099 = vst.msk [vmem:[%s220 + $0x184] sm:$0xf] %vm2001, %v1970
        %2100 = vst.msk [vmem:[%s220 + $0x188] sm:$0xf] %vm2001, %v1971
        %2101 = vst.msk [vmem:[%s220 + $0x18c] sm:$0xf] %vm2001, %v1972
        %2102 = vst.msk [vmem:[%s220 + $0x190] sm:$0xf] %vm2001, %v1973
        %2103 = vst.msk [vmem:[%s220 + $0x194] sm:$0xf] %vm2001, %v1974
        %2104 = vst.msk [vmem:[%s220 + $0x198] sm:$0xf] %vm2001, %v1975
        %2105 = vst.msk [vmem:[%s220 + $0x19c] sm:$0xf] %vm2001, %v1976
        %2106 = vst.msk [vmem:[%s220 + $0x1a0] sm:$0xf] %vm2001, %v1977
        %2107 = vst.msk [vmem:[%s220 + $0x1a4] sm:$0xf] %vm2001, %v1978
        %2108 = vst.msk [vmem:[%s220 + $0x1a8] sm:$0xf] %vm2001, %v1979
        %2109 = vst.msk [vmem:[%s220 + $0x1ac] sm:$0xf] %vm2001, %v1980
        %2110 = vst.msk [vmem:[%s220 + $0x1b0] sm:$0xf] %vm2001, %v1981
        %2111 = vst.msk [vmem:[%s220 + $0x1b4] sm:$0xf] %vm2001, %v1982
        %2112 = vst.msk [vmem:[%s220 + $0x1b8] sm:$0xf] %vm2001, %v1983
        %2113 = vst.msk [vmem:[%s220 + $0x1bc] sm:$0xf] %vm2001, %v1984
        %2114 = vst.msk [vmem:[%s220 + $0x1c0] sm:$0xf] %vm2001, %v1985
        %2115 = vst.msk [vmem:[%s220 + $0x1c4] sm:$0xf] %vm2001, %v1986
        %2116 = vst.msk [vmem:[%s220 + $0x1c8] sm:$0xf] %vm2001, %v1987
        %2117 = vst.msk [vmem:[%s220 + $0x1cc] sm:$0xf] %vm2001, %v1988
        %2118 = vst.msk [vmem:[%s220 + $0x1d0] sm:$0xf] %vm2001, %v1989
        %2119 = vst.msk [vmem:[%s220 + $0x1d4] sm:$0xf] %vm2001, %v1990
        %2120 = vst.msk [vmem:[%s220 + $0x1d8] sm:$0xf] %vm2001, %v1991
        %2121 = vst.msk [vmem:[%s220 + $0x1dc] sm:$0xf] %vm2001, %v1992
        %2122 = vst.msk [vmem:[%s220 + $0x1e0] sm:$0xf] %vm2001, %v1993
        %2123 = vst.msk [vmem:[%s220 + $0x1e4] sm:$0xf] %vm2001, %v1994
        %2124 = vst.msk [vmem:[%s220 + $0x1e8] sm:$0xf] %vm2001, %v1995
        %2125 = vst.msk [vmem:[%s220 + $0x1ec] sm:$0xf] %vm2001, %v1996
        %2126 = vst.msk [vmem:[%s220 + $0x1f0] sm:$0xf] %vm2001, %v1997
        %2127 = vst.msk [vmem:[%s220 + $0x1f4] sm:$0xf] %vm2001, %v1998
        %2128 = vst.msk [vmem:[%s220 + $0x1f8] sm:$0xf] %vm2001, %v1999
        %2129 = vst.msk [vmem:[%s220 + $0x1fc] sm:$0xf] %vm2001, %v2000
        %s2130 = smul.u32 128, %s18
        %p2131 = scmp.lt.s32.totalorder %s2130, 1023
        %s2132 = scalar_select %p2131, %s2130, 1023
        %s2133 = smul.addr %s2132, 4
        %s2134 = scalar_lea.vmem %s4, %s2133
        // Predicated region
        $region41: #{discriminator_forward.4} parent=35 // pred_check
          %p2135 = pneg %p125
        $region42: #{discriminator_forward.4} parent=35 // pred_check_branch
          %2137 = sbr.rel (%p2135) target = $region44
        $region43: #{discriminator_forward.4} parent=35 // pred_region
          %s2138 = smul.u32 128, %s18
        $region44: #{discriminator_forward.4} parent=35 // pred_fallthru
          _
      $region36: #{discriminator_forward.4} parent=5 // pred_fallthru
        _
      %p2139 = scmp.le.s32.totalorder 2, %s13
      // Predicated region
      $region45: #{discriminator_forward.4} parent=5 // pred_check
        %p2140 = pneg %p2139
      $region46: #{discriminator_forward.4} parent=5 // pred_check_branch
        %2142 = sbr.rel (%p2140) target = $region48
      $region47: #{discriminator_forward.4} parent=5 // pred_region
        %s2143 = ssub.s32 %s13, 2
        // Predicated region
        $region49: #{discriminator_forward.4} parent=47 // pred_check
          %p2144 = pneg %p131
        $region50: #{discriminator_forward.4} parent=47 // pred_check_branch
          %2146 = sbr.rel (%p2144) target = $region52
        $region51: #{discriminator_forward.4} parent=47 // pred_region
          %s2147 = smul.u32 128, %s19
          %p2148 = scmp.lt.s32.totalorder %s2147, 1023
          %s2149 = scalar_select %p2148, %s2147, 1023
          %s2150 = smul.addr %s2149, 4
          %s2151 = scalar_lea.vmem %s4, %s2150
        $region52: #{discriminator_forward.4} parent=47 // pred_fallthru
          _
      $region48: #{discriminator_forward.4} parent=5 // pred_fallthru
        _
    $region6: #{discriminator_forward.4} parent=1 // loop_footer
      %s17 = sadd.s32 1, %s13
    $region7: #{discriminator_forward.4} parent=1 // loop_footer_branch
      %12 = sbr.rel target = $region3
    $region8: #{discriminator_forward.4} parent=1 // loop_exit
      _
    %2152 = vsyncpa [#allocation3], 1
    %s2153 = scalar_lea.sflag [#allocation3], 1
    %2154 = vsyncpa %s2153, 1

// kernel: discriminator_forward.5
$region0: #{discriminator_forward.5}
  #allocation0 [shape = 'u32[]', space=smem, size = 0x4, offset = 0x4, fixed_abs, tag = 'smem constant byte address 0x4 - core index']
  #allocation1 [shape = 'u32[72,128]{1,0:T(1,128)}', space=vmem, size = 0x9000, scoped, tag = 'internal scratch']
  %s0 = inlined_call_operand.vmem [shape: bf16[1024,1024], index: 0, kind: input, shape index: {}]
  %s1 = inlined_call_operand.vmem [shape: bf16[1024,32], index: 1, kind: input, shape index: {}]
  %s2 = inlined_call_operand.vmem [shape: f32[1,32], index: 2, kind: input, shape index: {}]
  %s3 = inlined_call_operand.vmem [shape: f32[1,32], index: 3, kind: input, shape index: {}]
  %s4 = inlined_call_operand.vmem [shape: bf16[1024,32], index: 4, kind: output, shape index: {}]
  %s5 = sld [smem:[#allocation0]]
  $region49: #{discriminator_forward.5} parent=0
    _
  %s7 = ssub.s32 1, %s5
  %s8 = scalar_select 0, %s7, %s5
  loop: start=0, step=1, limit=4
  $region2: #{discriminator_forward.5} parent=0 // loop_pre_header
    _
  $region3: #{discriminator_forward.5} parent=0 // loop_header
    %s10 = sphi 0, %s14
    %p11 = scmp.ge.s32.totalorder %s10, 4
    %s20 = sphi 0, %s22
    %s23 = sphi 0, %s20
    %s24 = sphi 0, %s23
    %s40 = sphi 0, %s24
    %s44 = sphi 0, %s44
    %s46 = sphi 0, %s44
    %s47 = sphi 0, %s46
    %s61 = sphi 0, %s47
    %s65 = sphi 0, %s65
    %s67 = sphi 0, %s65
    %s68 = sphi 0, %s67
    %s82 = sphi 0, %s68
    %s86 = sphi 0, %s86
    %s88 = sphi 0, %s86
    %s89 = sphi 0, %s88
    %s103 = sphi 0, %s89
    %s109 = sphi 0, %s111
    %s112 = sphi 0, %s109
    %s113 = sphi 0, %s112
    %s129 = sphi 0, %s113
  $region4: #{discriminator_forward.5} parent=0 // loop_header_branch
    %13 = sbr.rel (%p11) target = $region8
  $region5: #{discriminator_forward.5} parent=0 // loop_body
    %s15 = ssub.s32 %s10, 1
    %s16 = ssub.s32 %s10, 2
    %s17 = sadd.s32 %s10, 1
    %s18 = ssub.s32 %s10, %s17
    %p19 = scmp.eq.s32.totalorder %s18, 0
    %s21 = sadd.s32 %s20, 1
    %s22 = scalar_select %p19, %s20, %s21
    %p25 = pneg %p19
    %p26 = scmp.eq.s32.totalorder %s10, 1
    %p27 = por %p25, %p26
    %p28 = scmp.ne.s32.totalorder %s20, %s23
    %p29 = scmp.eq.s32.totalorder %s10, 0
    %p30 = por %p28, %p29
    %p31 = scmp.ne.s32.totalorder %s20, %s23
    %p32 = scmp.eq.s32.totalorder %s15, 1
    %p33 = por %p31, %p32
    %p34 = scmp.ne.s32.totalorder %s23, %s24
    %p35 = scmp.eq.s32.totalorder %s15, 0
    %p36 = por %p34, %p35
    %p37 = scmp.ne.s32.totalorder %s23, %s24
    %p38 = scmp.eq.s32.totalorder %s16, 1
    %p39 = por %p37, %p38
    %p41 = scmp.ne.s32.totalorder %s24, %s40
    %p42 = scmp.eq.s32.totalorder %s16, 0
    %p43 = por %p41, %p42
    %s45 = sadd.s32 %s44, 1
    %p48 = scmp.eq.s32.totalorder %s10, 1
    %p49 = scmp.ne.s32.totalorder %s44, %s46
    %p50 = scmp.eq.s32.totalorder %s10, 0
    %p51 = por %p49, %p50
    %p52 = scmp.ne.s32.totalorder %s44, %s46
    %p53 = scmp.eq.s32.totalorder %s15, 1
    %p54 = por %p52, %p53
    %p55 = scmp.ne.s32.totalorder %s46, %s47
    %p56 = scmp.eq.s32.totalorder %s15, 0
    %p57 = por %p55, %p56
    %p58 = scmp.ne.s32.totalorder %s46, %s47
    %p59 = scmp.eq.s32.totalorder %s16, 1
    %p60 = por %p58, %p59
    %p62 = scmp.ne.s32.totalorder %s47, %s61
    %p63 = scmp.eq.s32.totalorder %s16, 0
    %p64 = por %p62, %p63
    %s66 = sadd.s32 %s65, 1
    %p69 = scmp.eq.s32.totalorder %s10, 1
    %p70 = scmp.ne.s32.totalorder %s65, %s67
    %p71 = scmp.eq.s32.totalorder %s10, 0
    %p72 = por %p70, %p71
    %p73 = scmp.ne.s32.totalorder %s65, %s67
    %p74 = scmp.eq.s32.totalorder %s15, 1
    %p75 = por %p73, %p74
    %p76 = scmp.ne.s32.totalorder %s67, %s68
    %p77 = scmp.eq.s32.totalorder %s15, 0
    %p78 = por %p76, %p77
    %p79 = scmp.ne.s32.totalorder %s67, %s68
    %p80 = scmp.eq.s32.totalorder %s16, 1
    %p81 = por %p79, %p80
    %p83 = scmp.ne.s32.totalorder %s68, %s82
    %p84 = scmp.eq.s32.totalorder %s16, 0
    %p85 = por %p83, %p84
    %s87 = sadd.s32 %s86, 1
    %p90 = scmp.eq.s32.totalorder %s10, 1
    %p91 = scmp.ne.s32.totalorder %s86, %s88
    %p92 = scmp.eq.s32.totalorder %s10, 0
    %p93 = por %p91, %p92
    %p94 = scmp.ne.s32.totalorder %s86, %s88
    %p95 = scmp.eq.s32.totalorder %s15, 1
    %p96 = por %p94, %p95
    %p97 = scmp.ne.s32.totalorder %s88, %s89
    %p98 = scmp.eq.s32.totalorder %s15, 0
    %p99 = por %p97, %p98
    %p100 = scmp.ne.s32.totalorder %s88, %s89
    %p101 = scmp.eq.s32.totalorder %s16, 1
    %p102 = por %p100, %p101
    %p104 = scmp.ne.s32.totalorder %s89, %s103
    %p105 = scmp.eq.s32.totalorder %s16, 0
    %p106 = por %p104, %p105
    %s107 = ssub.s32 %s10, %s17
    %p108 = scmp.eq.s32.totalorder %s107, 0
    %s110 = sadd.s32 %s109, 1
    %s111 = scalar_select %p108, %s109, %s110
    %p114 = pneg %p108
    %p115 = scmp.eq.s32.totalorder %s10, 1
    %p116 = por %p114, %p115
    %p117 = scmp.ne.s32.totalorder %s109, %s112
    %p118 = scmp.eq.s32.totalorder %s10, 0
    %p119 = por %p117, %p118
    %p120 = scmp.ne.s32.totalorder %s109, %s112
    %p121 = scmp.eq.s32.totalorder %s15, 1
    %p122 = por %p120, %p121
    %p123 = scmp.ne.s32.totalorder %s112, %s113
    %p124 = scmp.eq.s32.totalorder %s15, 0
    %p125 = por %p123, %p124
    %p126 = scmp.ne.s32.totalorder %s112, %s113
    %p127 = scmp.eq.s32.totalorder %s16, 1
    %p128 = por %p126, %p127
    %p130 = scmp.ne.s32.totalorder %s113, %s129
    %p131 = scmp.eq.s32.totalorder %s16, 0
    %p132 = por %p130, %p131
    %p133 = scmp.le.s32.totalorder 1, %s10
    %p134 = scmp.lt.s32.totalorder %s10, 3
    %p135 = pnand %p133, %p134
    %p136 = pneg %p135
    // Predicated region
    $region9: #{discriminator_forward.5} parent=5 // pred_check
      _
    $region10: #{discriminator_forward.5} parent=5 // pred_check_branch
      %138 = sbr.rel (%p135) target = $region12
    $region11: #{discriminator_forward.5} parent=5 // pred_region
      %s139 = ssub.s32 %s10, 1
      // Predicated region
      $region13: #{discriminator_forward.5} parent=11 // pred_check
        %p140 = pneg %p57
      $region14: #{discriminator_forward.5} parent=11 // pred_check_branch
        %142 = sbr.rel (%p140) target = $region16
      $region15: #{discriminator_forward.5} parent=11 // pred_region
        _
      $region16: #{discriminator_forward.5} parent=11 // pred_fallthru
        _
      // Predicated region
      $region17: #{discriminator_forward.5} parent=11 // pred_check
        %p143 = pneg %p78
      $region18: #{discriminator_forward.5} parent=11 // pred_check_branch
        %145 = sbr.rel (%p143) target = $region20
      $region19: #{discriminator_forward.5} parent=11 // pred_region
        _
      $region20: #{discriminator_forward.5} parent=11 // pred_fallthru
        _
      // Predicated region
      $region21: #{discriminator_forward.5} parent=11 // pred_check
        %p146 = pneg %p99
      $region22: #{discriminator_forward.5} parent=11 // pred_check_branch
        %148 = sbr.rel (%p146) target = $region24
      $region23: #{discriminator_forward.5} parent=11 // pred_region
        _
      $region24: #{discriminator_forward.5} parent=11 // pred_fallthru
        _
    $region12: #{discriminator_forward.5} parent=5 // pred_fallthru
      _
    %p149 = scmp.lt.s32.totalorder %s10, 2
    // Predicated region
    $region25: #{discriminator_forward.5} parent=5 // pred_check
      %p150 = pneg %p149
    $region26: #{discriminator_forward.5} parent=5 // pred_check_branch
      %152 = sbr.rel (%p150) target = $region28
    $region27: #{discriminator_forward.5} parent=5 // pred_region
      // Predicated region
      $region29: #{discriminator_forward.5} parent=27 // pred_check
        %p153 = pneg %p30
      $region30: #{discriminator_forward.5} parent=27 // pred_check_branch
        %155 = sbr.rel (%p153) target = $region32
      $region31: #{discriminator_forward.5} parent=27 // pred_region
        %s156 = smul.u32 64, %s10
        %p157 = scmp.lt.s32.totalorder %s156, 127
        %s158 = scalar_select %p157, %s156, 127
        %s159 = smul.addr %s158, 8
        %s160 = smul.addr %s159, 4
        %s161 = scalar_lea.vmem %s0, %s160
        %s162 = smul.u32 64, %s10
      $region32: #{discriminator_forward.5} parent=27 // pred_fallthru
        _
    $region28: #{discriminator_forward.5} parent=5 // pred_fallthru
      _
    %p163 = scmp.le.s32.totalorder 1, %s10
    %p164 = scmp.lt.s32.totalorder %s10, 3
    %p165 = pnand %p163, %p164
    %p166 = pneg %p165
    // Predicated region
    $region33: #{discriminator_forward.5} parent=5 // pred_check
      _
    $region34: #{discriminator_forward.5} parent=5 // pred_check_branch
      %168 = sbr.rel (%p165) target = $region36
    $region35: #{discriminator_forward.5} parent=5 // pred_region
      %s169 = ssub.s32 %s10, 1
      %s170 = smul.u32 64, %s15
      %p171 = scmp.lt.s32.totalorder %s170, 127
      %s172 = scalar_select %p171, %s170, 127
      %s173 = smul.addr %s172, 8
      %s174 = smul.addr %s173, 4
      %s175 = scalar_lea.vmem %s0, %s174
      %p176 = pneg %p36
      %p177 = pneg %p33
      %p178 = pneg %p57
      %p179 = pneg %p54
      %p180 = pneg %p78
      %p181 = pneg %p75
      %p182 = pneg %p99
      %p183 = pneg %p96
      %p184 = pneg %p125
      %p185 = pneg %p122
      %s186 = smul.u32 64, %s15
      %p187 = scmp.lt.s32.totalorder %s186, 127
      %s188 = scalar_select %p187, %s186, 127
      %s189 = smul.addr %s188, 4
      %s190 = scalar_lea.vmem %s4, %s189
      %s191 = smul.u32 64, %s15
      %p192 = scmp.lt.s32.totalorder %s191, 127
      %s193 = scalar_select %p192, %s191, 127
      %s194 = smul.addr %s193, 8
      %s195 = smul.addr %s194, 4
      %s196 = scalar_lea.vmem %s0, %s195
      %s197 = smul.u32 64, %s15
      %s198 = smul.u32 64, %s15
      %p199 = scmp.lt.s32.totalorder %s198, 127
      %s200 = scalar_select %p199, %s198, 127
      %s201 = smul.addr %s200, 4
      %s202 = scalar_lea.vmem %s4, %s201
      %s203 = smul.u32 64, %s15
      %v204 = vld [vmem:[%s196] sm:$0xff]
      %v205 = vld [vmem:[%s196 + $0x8] sm:$0xff]
      %v206 = vld [vmem:[%s196 + $0x10] sm:$0xff]
      %v207 = vld [vmem:[%s196 + $0x18] sm:$0xff]
      %v208 = vld [vmem:[%s196 + $0x20] sm:$0xff]
      %v209 = vld [vmem:[%s196 + $0x28] sm:$0xff]
      %v210 = vld [vmem:[%s196 + $0x30] sm:$0xff]
      %v211 = vld [vmem:[%s196 + $0x38] sm:$0xff]
      %v212 = vld [vmem:[%s196 + $0x40] sm:$0xff]
      %v213 = vld [vmem:[%s196 + $0x48] sm:$0xff]
      %v214 = vld [vmem:[%s196 + $0x50] sm:$0xff]
      %v215 = vld [vmem:[%s196 + $0x58] sm:$0xff]
      %v216 = vld [vmem:[%s196 + $0x60] sm:$0xff]
      %v217 = vld [vmem:[%s196 + $0x68] sm:$0xff]
      %v218 = vld [vmem:[%s196 + $0x70] sm:$0xff]
      %v219 = vld [vmem:[%s196 + $0x78] sm:$0xff]
      %v220 = vld [vmem:[%s196 + $0x80] sm:$0xff]
      %v221 = vld [vmem:[%s196 + $0x88] sm:$0xff]
      %v222 = vld [vmem:[%s196 + $0x90] sm:$0xff]
      %v223 = vld [vmem:[%s196 + $0x98] sm:$0xff]
      %v224 = vld [vmem:[%s196 + $0xa0] sm:$0xff]
      %v225 = vld [vmem:[%s196 + $0xa8] sm:$0xff]
      %v226 = vld [vmem:[%s196 + $0xb0] sm:$0xff]
      %v227 = vld [vmem:[%s196 + $0xb8] sm:$0xff]
      %v228 = vld [vmem:[%s196 + $0xc0] sm:$0xff]
      %v229 = vld [vmem:[%s196 + $0xc8] sm:$0xff]
      %v230 = vld [vmem:[%s196 + $0xd0] sm:$0xff]
      %v231 = vld [vmem:[%s196 + $0xd8] sm:$0xff]
      %v232 = vld [vmem:[%s196 + $0xe0] sm:$0xff]
      %v233 = vld [vmem:[%s196 + $0xe8] sm:$0xff]
      %v234 = vld [vmem:[%s196 + $0xf0] sm:$0xff]
      %v235 = vld [vmem:[%s196 + $0xf8] sm:$0xff]
      %v236 = vld [vmem:[%s196 + $0x100] sm:$0xff]
      %v237 = vld [vmem:[%s196 + $0x108] sm:$0xff]
      %v238 = vld [vmem:[%s196 + $0x110] sm:$0xff]
      %v239 = vld [vmem:[%s196 + $0x118] sm:$0xff]
      %v240 = vld [vmem:[%s196 + $0x120] sm:$0xff]
      %v241 = vld [vmem:[%s196 + $0x128] sm:$0xff]
      %v242 = vld [vmem:[%s196 + $0x130] sm:$0xff]
      %v243 = vld [vmem:[%s196 + $0x138] sm:$0xff]
      %v244 = vld [vmem:[%s196 + $0x140] sm:$0xff]
      %v245 = vld [vmem:[%s196 + $0x148] sm:$0xff]
      %v246 = vld [vmem:[%s196 + $0x150] sm:$0xff]
      %v247 = vld [vmem:[%s196 + $0x158] sm:$0xff]
      %v248 = vld [vmem:[%s196 + $0x160] sm:$0xff]
      %v249 = vld [vmem:[%s196 + $0x168] sm:$0xff]
      %v250 = vld [vmem:[%s196 + $0x170] sm:$0xff]
      %v251 = vld [vmem:[%s196 + $0x178] sm:$0xff]
      %v252 = vld [vmem:[%s196 + $0x180] sm:$0xff]
      %v253 = vld [vmem:[%s196 + $0x188] sm:$0xff]
      %v254 = vld [vmem:[%s196 + $0x190] sm:$0xff]
      %v255 = vld [vmem:[%s196 + $0x198] sm:$0xff]
      %v256 = vld [vmem:[%s196 + $0x1a0] sm:$0xff]
      %v257 = vld [vmem:[%s196 + $0x1a8] sm:$0xff]
      %v258 = vld [vmem:[%s196 + $0x1b0] sm:$0xff]
      %v259 = vld [vmem:[%s196 + $0x1b8] sm:$0xff]
      %v260 = vld [vmem:[%s196 + $0x1c0] sm:$0xff]
      %v261 = vld [vmem:[%s196 + $0x1c8] sm:$0xff]
      %v262 = vld [vmem:[%s196 + $0x1d0] sm:$0xff]
      %v263 = vld [vmem:[%s196 + $0x1d8] sm:$0xff]
      %v264 = vld [vmem:[%s196 + $0x1e0] sm:$0xff]
      %v265 = vld [vmem:[%s196 + $0x1e8] sm:$0xff]
      %v266 = vld [vmem:[%s196 + $0x1f0] sm:$0xff]
      %v267 = vld [vmem:[%s196 + $0x1f8] sm:$0xff]
      %v268 = vld [vmem:[%s196 + $0x200] sm:$0xff]
      %v269 = vld [vmem:[%s196 + $0x208] sm:$0xff]
      %v270 = vld [vmem:[%s196 + $0x210] sm:$0xff]
      %v271 = vld [vmem:[%s196 + $0x218] sm:$0xff]
      %v272 = vld [vmem:[%s196 + $0x220] sm:$0xff]
      %v273 = vld [vmem:[%s196 + $0x228] sm:$0xff]
      %v274 = vld [vmem:[%s196 + $0x230] sm:$0xff]
      %v275 = vld [vmem:[%s196 + $0x238] sm:$0xff]
      %v276 = vld [vmem:[%s196 + $0x240] sm:$0xff]
      %v277 = vld [vmem:[%s196 + $0x248] sm:$0xff]
      %v278 = vld [vmem:[%s196 + $0x250] sm:$0xff]
      %v279 = vld [vmem:[%s196 + $0x258] sm:$0xff]
      %v280 = vld [vmem:[%s196 + $0x260] sm:$0xff]
      %v281 = vld [vmem:[%s196 + $0x268] sm:$0xff]
      %v282 = vld [vmem:[%s196 + $0x270] sm:$0xff]
      %v283 = vld [vmem:[%s196 + $0x278] sm:$0xff]
      %v284 = vld [vmem:[%s196 + $0x280] sm:$0xff]
      %v285 = vld [vmem:[%s196 + $0x288] sm:$0xff]
      %v286 = vld [vmem:[%s196 + $0x290] sm:$0xff]
      %v287 = vld [vmem:[%s196 + $0x298] sm:$0xff]
      %v288 = vld [vmem:[%s196 + $0x2a0] sm:$0xff]
      %v289 = vld [vmem:[%s196 + $0x2a8] sm:$0xff]
      %v290 = vld [vmem:[%s196 + $0x2b0] sm:$0xff]
      %v291 = vld [vmem:[%s196 + $0x2b8] sm:$0xff]
      %v292 = vld [vmem:[%s196 + $0x2c0] sm:$0xff]
      %v293 = vld [vmem:[%s196 + $0x2c8] sm:$0xff]
      %v294 = vld [vmem:[%s196 + $0x2d0] sm:$0xff]
      %v295 = vld [vmem:[%s196 + $0x2d8] sm:$0xff]
      %v296 = vld [vmem:[%s196 + $0x2e0] sm:$0xff]
      %v297 = vld [vmem:[%s196 + $0x2e8] sm:$0xff]
      %v298 = vld [vmem:[%s196 + $0x2f0] sm:$0xff]
      %v299 = vld [vmem:[%s196 + $0x2f8] sm:$0xff]
      %v300 = vld [vmem:[%s196 + $0x300] sm:$0xff]
      %v301 = vld [vmem:[%s196 + $0x308] sm:$0xff]
      %v302 = vld [vmem:[%s196 + $0x310] sm:$0xff]
      %v303 = vld [vmem:[%s196 + $0x318] sm:$0xff]
      %v304 = vld [vmem:[%s196 + $0x320] sm:$0xff]
      %v305 = vld [vmem:[%s196 + $0x328] sm:$0xff]
      %v306 = vld [vmem:[%s196 + $0x330] sm:$0xff]
      %v307 = vld [vmem:[%s196 + $0x338] sm:$0xff]
      %v308 = vld [vmem:[%s196 + $0x340] sm:$0xff]
      %v309 = vld [vmem:[%s196 + $0x348] sm:$0xff]
      %v310 = vld [vmem:[%s196 + $0x350] sm:$0xff]
      %v311 = vld [vmem:[%s196 + $0x358] sm:$0xff]
      %v312 = vld [vmem:[%s196 + $0x360] sm:$0xff]
      %v313 = vld [vmem:[%s196 + $0x368] sm:$0xff]
      %v314 = vld [vmem:[%s196 + $0x370] sm:$0xff]
      %v315 = vld [vmem:[%s196 + $0x378] sm:$0xff]
      %v316 = vld [vmem:[%s196 + $0x380] sm:$0xff]
      %v317 = vld [vmem:[%s196 + $0x388] sm:$0xff]
      %v318 = vld [vmem:[%s196 + $0x390] sm:$0xff]
      %v319 = vld [vmem:[%s196 + $0x398] sm:$0xff]
      %v320 = vld [vmem:[%s196 + $0x3a0] sm:$0xff]
      %v321 = vld [vmem:[%s196 + $0x3a8] sm:$0xff]
      %v322 = vld [vmem:[%s196 + $0x3b0] sm:$0xff]
      %v323 = vld [vmem:[%s196 + $0x3b8] sm:$0xff]
      %v324 = vld [vmem:[%s196 + $0x3c0] sm:$0xff]
      %v325 = vld [vmem:[%s196 + $0x3c8] sm:$0xff]
      %v326 = vld [vmem:[%s196 + $0x3d0] sm:$0xff]
      %v327 = vld [vmem:[%s196 + $0x3d8] sm:$0xff]
      %v328 = vld [vmem:[%s196 + $0x3e0] sm:$0xff]
      %v329 = vld [vmem:[%s196 + $0x3e8] sm:$0xff]
      %v330 = vld [vmem:[%s196 + $0x3f0] sm:$0xff]
      %v331 = vld [vmem:[%s196 + $0x3f8] sm:$0xff]
      %v332 = vld [vmem:[%s196 + $0x400] sm:$0xff]
      %v333 = vld [vmem:[%s196 + $0x408] sm:$0xff]
      %v334 = vld [vmem:[%s196 + $0x410] sm:$0xff]
      %v335 = vld [vmem:[%s196 + $0x418] sm:$0xff]
      %v336 = vld [vmem:[%s196 + $0x420] sm:$0xff]
      %v337 = vld [vmem:[%s196 + $0x428] sm:$0xff]
      %v338 = vld [vmem:[%s196 + $0x430] sm:$0xff]
      %v339 = vld [vmem:[%s196 + $0x438] sm:$0xff]
      %v340 = vld [vmem:[%s196 + $0x440] sm:$0xff]
      %v341 = vld [vmem:[%s196 + $0x448] sm:$0xff]
      %v342 = vld [vmem:[%s196 + $0x450] sm:$0xff]
      %v343 = vld [vmem:[%s196 + $0x458] sm:$0xff]
      %v344 = vld [vmem:[%s196 + $0x460] sm:$0xff]
      %v345 = vld [vmem:[%s196 + $0x468] sm:$0xff]
      %v346 = vld [vmem:[%s196 + $0x470] sm:$0xff]
      %v347 = vld [vmem:[%s196 + $0x478] sm:$0xff]
      %v348 = vld [vmem:[%s196 + $0x480] sm:$0xff]
      %v349 = vld [vmem:[%s196 + $0x488] sm:$0xff]
      %v350 = vld [vmem:[%s196 + $0x490] sm:$0xff]
      %v351 = vld [vmem:[%s196 + $0x498] sm:$0xff]
      %v352 = vld [vmem:[%s196 + $0x4a0] sm:$0xff]
      %v353 = vld [vmem:[%s196 + $0x4a8] sm:$0xff]
      %v354 = vld [vmem:[%s196 + $0x4b0] sm:$0xff]
      %v355 = vld [vmem:[%s196 + $0x4b8] sm:$0xff]
      %v356 = vld [vmem:[%s196 + $0x4c0] sm:$0xff]
      %v357 = vld [vmem:[%s196 + $0x4c8] sm:$0xff]
      %v358 = vld [vmem:[%s196 + $0x4d0] sm:$0xff]
      %v359 = vld [vmem:[%s196 + $0x4d8] sm:$0xff]
      %v360 = vld [vmem:[%s196 + $0x4e0] sm:$0xff]
      %v361 = vld [vmem:[%s196 + $0x4e8] sm:$0xff]
      %v362 = vld [vmem:[%s196 + $0x4f0] sm:$0xff]
      %v363 = vld [vmem:[%s196 + $0x4f8] sm:$0xff]
      %v364 = vld [vmem:[%s196 + $0x500] sm:$0xff]
      %v365 = vld [vmem:[%s196 + $0x508] sm:$0xff]
      %v366 = vld [vmem:[%s196 + $0x510] sm:$0xff]
      %v367 = vld [vmem:[%s196 + $0x518] sm:$0xff]
      %v368 = vld [vmem:[%s196 + $0x520] sm:$0xff]
      %v369 = vld [vmem:[%s196 + $0x528] sm:$0xff]
      %v370 = vld [vmem:[%s196 + $0x530] sm:$0xff]
      %v371 = vld [vmem:[%s196 + $0x538] sm:$0xff]
      %v372 = vld [vmem:[%s196 + $0x540] sm:$0xff]
      %v373 = vld [vmem:[%s196 + $0x548] sm:$0xff]
      %v374 = vld [vmem:[%s196 + $0x550] sm:$0xff]
      %v375 = vld [vmem:[%s196 + $0x558] sm:$0xff]
      %v376 = vld [vmem:[%s196 + $0x560] sm:$0xff]
      %v377 = vld [vmem:[%s196 + $0x568] sm:$0xff]
      %v378 = vld [vmem:[%s196 + $0x570] sm:$0xff]
      %v379 = vld [vmem:[%s196 + $0x578] sm:$0xff]
      %v380 = vld [vmem:[%s196 + $0x580] sm:$0xff]
      %v381 = vld [vmem:[%s196 + $0x588] sm:$0xff]
      %v382 = vld [vmem:[%s196 + $0x590] sm:$0xff]
      %v383 = vld [vmem:[%s196 + $0x598] sm:$0xff]
      %v384 = vld [vmem:[%s196 + $0x5a0] sm:$0xff]
      %v385 = vld [vmem:[%s196 + $0x5a8] sm:$0xff]
      %v386 = vld [vmem:[%s196 + $0x5b0] sm:$0xff]
      %v387 = vld [vmem:[%s196 + $0x5b8] sm:$0xff]
      %v388 = vld [vmem:[%s196 + $0x5c0] sm:$0xff]
      %v389 = vld [vmem:[%s196 + $0x5c8] sm:$0xff]
      %v390 = vld [vmem:[%s196 + $0x5d0] sm:$0xff]
      %v391 = vld [vmem:[%s196 + $0x5d8] sm:$0xff]
      %v392 = vld [vmem:[%s196 + $0x5e0] sm:$0xff]
      %v393 = vld [vmem:[%s196 + $0x5e8] sm:$0xff]
      %v394 = vld [vmem:[%s196 + $0x5f0] sm:$0xff]
      %v395 = vld [vmem:[%s196 + $0x5f8] sm:$0xff]
      %v396 = vld [vmem:[%s196 + $0x600] sm:$0xff]
      %v397 = vld [vmem:[%s196 + $0x608] sm:$0xff]
      %v398 = vld [vmem:[%s196 + $0x610] sm:$0xff]
      %v399 = vld [vmem:[%s196 + $0x618] sm:$0xff]
      %v400 = vld [vmem:[%s196 + $0x620] sm:$0xff]
      %v401 = vld [vmem:[%s196 + $0x628] sm:$0xff]
      %v402 = vld [vmem:[%s196 + $0x630] sm:$0xff]
      %v403 = vld [vmem:[%s196 + $0x638] sm:$0xff]
      %v404 = vld [vmem:[%s196 + $0x640] sm:$0xff]
      %v405 = vld [vmem:[%s196 + $0x648] sm:$0xff]
      %v406 = vld [vmem:[%s196 + $0x650] sm:$0xff]
      %v407 = vld [vmem:[%s196 + $0x658] sm:$0xff]
      %v408 = vld [vmem:[%s196 + $0x660] sm:$0xff]
      %v409 = vld [vmem:[%s196 + $0x668] sm:$0xff]
      %v410 = vld [vmem:[%s196 + $0x670] sm:$0xff]
      %v411 = vld [vmem:[%s196 + $0x678] sm:$0xff]
      %v412 = vld [vmem:[%s196 + $0x680] sm:$0xff]
      %v413 = vld [vmem:[%s196 + $0x688] sm:$0xff]
      %v414 = vld [vmem:[%s196 + $0x690] sm:$0xff]
      %v415 = vld [vmem:[%s196 + $0x698] sm:$0xff]
      %v416 = vld [vmem:[%s196 + $0x6a0] sm:$0xff]
      %v417 = vld [vmem:[%s196 + $0x6a8] sm:$0xff]
      %v418 = vld [vmem:[%s196 + $0x6b0] sm:$0xff]
      %v419 = vld [vmem:[%s196 + $0x6b8] sm:$0xff]
      %v420 = vld [vmem:[%s196 + $0x6c0] sm:$0xff]
      %v421 = vld [vmem:[%s196 + $0x6c8] sm:$0xff]
      %v422 = vld [vmem:[%s196 + $0x6d0] sm:$0xff]
      %v423 = vld [vmem:[%s196 + $0x6d8] sm:$0xff]
      %v424 = vld [vmem:[%s196 + $0x6e0] sm:$0xff]
      %v425 = vld [vmem:[%s196 + $0x6e8] sm:$0xff]
      %v426 = vld [vmem:[%s196 + $0x6f0] sm:$0xff]
      %v427 = vld [vmem:[%s196 + $0x6f8] sm:$0xff]
      %v428 = vld [vmem:[%s196 + $0x700] sm:$0xff]
      %v429 = vld [vmem:[%s196 + $0x708] sm:$0xff]
      %v430 = vld [vmem:[%s196 + $0x710] sm:$0xff]
      %v431 = vld [vmem:[%s196 + $0x718] sm:$0xff]
      %v432 = vld [vmem:[%s196 + $0x720] sm:$0xff]
      %v433 = vld [vmem:[%s196 + $0x728] sm:$0xff]
      %v434 = vld [vmem:[%s196 + $0x730] sm:$0xff]
      %v435 = vld [vmem:[%s196 + $0x738] sm:$0xff]
      %v436 = vld [vmem:[%s196 + $0x740] sm:$0xff]
      %v437 = vld [vmem:[%s196 + $0x748] sm:$0xff]
      %v438 = vld [vmem:[%s196 + $0x750] sm:$0xff]
      %v439 = vld [vmem:[%s196 + $0x758] sm:$0xff]
      %v440 = vld [vmem:[%s196 + $0x760] sm:$0xff]
      %v441 = vld [vmem:[%s196 + $0x768] sm:$0xff]
      %v442 = vld [vmem:[%s196 + $0x770] sm:$0xff]
      %v443 = vld [vmem:[%s196 + $0x778] sm:$0xff]
      %v444 = vld [vmem:[%s196 + $0x780] sm:$0xff]
      %v445 = vld [vmem:[%s196 + $0x788] sm:$0xff]
      %v446 = vld [vmem:[%s196 + $0x790] sm:$0xff]
      %v447 = vld [vmem:[%s196 + $0x798] sm:$0xff]
      %v448 = vld [vmem:[%s196 + $0x7a0] sm:$0xff]
      %v449 = vld [vmem:[%s196 + $0x7a8] sm:$0xff]
      %v450 = vld [vmem:[%s196 + $0x7b0] sm:$0xff]
      %v451 = vld [vmem:[%s196 + $0x7b8] sm:$0xff]
      %v452 = vld [vmem:[%s196 + $0x7c0] sm:$0xff]
      %v453 = vld [vmem:[%s196 + $0x7c8] sm:$0xff]
      %v454 = vld [vmem:[%s196 + $0x7d0] sm:$0xff]
      %v455 = vld [vmem:[%s196 + $0x7d8] sm:$0xff]
      %v456 = vld [vmem:[%s196 + $0x7e0] sm:$0xff]
      %v457 = vld [vmem:[%s196 + $0x7e8] sm:$0xff]
      %v458 = vld [vmem:[%s196 + $0x7f0] sm:$0xff]
      %v459 = vld [vmem:[%s196 + $0x7f8] sm:$0xff]
      %v460 = vld [vmem:[%s1] sm:$0xf]
      %v461 = vld [vmem:[%s1 + $0x4] sm:$0xf]
      %v462 = vld [vmem:[%s1 + $0x8] sm:$0xf]
      %v463 = vld [vmem:[%s1 + $0xc] sm:$0xf]
      %v464 = vld [vmem:[%s1 + $0x10] sm:$0xf]
      %v465 = vld [vmem:[%s1 + $0x14] sm:$0xf]
      %v466 = vld [vmem:[%s1 + $0x18] sm:$0xf]
      %v467 = vld [vmem:[%s1 + $0x1c] sm:$0xf]
      %v468 = vld [vmem:[%s1 + $0x20] sm:$0xf]
      %v469 = vld [vmem:[%s1 + $0x24] sm:$0xf]
      %v470 = vld [vmem:[%s1 + $0x28] sm:$0xf]
      %v471 = vld [vmem:[%s1 + $0x2c] sm:$0xf]
      %v472 = vld [vmem:[%s1 + $0x30] sm:$0xf]
      %v473 = vld [vmem:[%s1 + $0x34] sm:$0xf]
      %v474 = vld [vmem:[%s1 + $0x38] sm:$0xf]
      %v475 = vld [vmem:[%s1 + $0x3c] sm:$0xf]
      %v476 = vld [vmem:[%s1 + $0x40] sm:$0xf]
      %v477 = vld [vmem:[%s1 + $0x44] sm:$0xf]
      %v478 = vld [vmem:[%s1 + $0x48] sm:$0xf]
      %v479 = vld [vmem:[%s1 + $0x4c] sm:$0xf]
      %v480 = vld [vmem:[%s1 + $0x50] sm:$0xf]
      %v481 = vld [vmem:[%s1 + $0x54] sm:$0xf]
      %v482 = vld [vmem:[%s1 + $0x58] sm:$0xf]
      %v483 = vld [vmem:[%s1 + $0x5c] sm:$0xf]
      %v484 = vld [vmem:[%s1 + $0x60] sm:$0xf]
      %v485 = vld [vmem:[%s1 + $0x64] sm:$0xf]
      %v486 = vld [vmem:[%s1 + $0x68] sm:$0xf]
      %v487 = vld [vmem:[%s1 + $0x6c] sm:$0xf]
      %v488 = vld [vmem:[%s1 + $0x70] sm:$0xf]
      %v489 = vld [vmem:[%s1 + $0x74] sm:$0xf]
      %v490 = vld [vmem:[%s1 + $0x78] sm:$0xf]
      %v491 = vld [vmem:[%s1 + $0x7c] sm:$0xf]
      %v492 = vld [vmem:[%s1 + $0x80] sm:$0xf]
      %v493 = vld [vmem:[%s1 + $0x84] sm:$0xf]
      %v494 = vld [vmem:[%s1 + $0x88] sm:$0xf]
      %v495 = vld [vmem:[%s1 + $0x8c] sm:$0xf]
      %v496 = vld [vmem:[%s1 + $0x90] sm:$0xf]
      %v497 = vld [vmem:[%s1 + $0x94] sm:$0xf]
      %v498 = vld [vmem:[%s1 + $0x98] sm:$0xf]
      %v499 = vld [vmem:[%s1 + $0x9c] sm:$0xf]
      %v500 = vld [vmem:[%s1 + $0xa0] sm:$0xf]
      %v501 = vld [vmem:[%s1 + $0xa4] sm:$0xf]
      %v502 = vld [vmem:[%s1 + $0xa8] sm:$0xf]
      %v503 = vld [vmem:[%s1 + $0xac] sm:$0xf]
      %v504 = vld [vmem:[%s1 + $0xb0] sm:$0xf]
      %v505 = vld [vmem:[%s1 + $0xb4] sm:$0xf]
      %v506 = vld [vmem:[%s1 + $0xb8] sm:$0xf]
      %v507 = vld [vmem:[%s1 + $0xbc] sm:$0xf]
      %v508 = vld [vmem:[%s1 + $0xc0] sm:$0xf]
      %v509 = vld [vmem:[%s1 + $0xc4] sm:$0xf]
      %v510 = vld [vmem:[%s1 + $0xc8] sm:$0xf]
      %v511 = vld [vmem:[%s1 + $0xcc] sm:$0xf]
      %v512 = vld [vmem:[%s1 + $0xd0] sm:$0xf]
      %v513 = vld [vmem:[%s1 + $0xd4] sm:$0xf]
      %v514 = vld [vmem:[%s1 + $0xd8] sm:$0xf]
      %v515 = vld [vmem:[%s1 + $0xdc] sm:$0xf]
      %v516 = vld [vmem:[%s1 + $0xe0] sm:$0xf]
      %v517 = vld [vmem:[%s1 + $0xe4] sm:$0xf]
      %v518 = vld [vmem:[%s1 + $0xe8] sm:$0xf]
      %v519 = vld [vmem:[%s1 + $0xec] sm:$0xf]
      %v520 = vld [vmem:[%s1 + $0xf0] sm:$0xf]
      %v521 = vld [vmem:[%s1 + $0xf4] sm:$0xf]
      %v522 = vld [vmem:[%s1 + $0xf8] sm:$0xf]
      %v523 = vld [vmem:[%s1 + $0xfc] sm:$0xf]
      %v524 = vld [vmem:[%s1 + $0x100] sm:$0xf]
      %v525 = vld [vmem:[%s1 + $0x104] sm:$0xf]
      %v526 = vld [vmem:[%s1 + $0x108] sm:$0xf]
      %v527 = vld [vmem:[%s1 + $0x10c] sm:$0xf]
      %v528 = vld [vmem:[%s1 + $0x110] sm:$0xf]
      %v529 = vld [vmem:[%s1 + $0x114] sm:$0xf]
      %v530 = vld [vmem:[%s1 + $0x118] sm:$0xf]
      %v531 = vld [vmem:[%s1 + $0x11c] sm:$0xf]
      %v532 = vld [vmem:[%s1 + $0x120] sm:$0xf]
      %v533 = vld [vmem:[%s1 + $0x124] sm:$0xf]
      %v534 = vld [vmem:[%s1 + $0x128] sm:$0xf]
      %v535 = vld [vmem:[%s1 + $0x12c] sm:$0xf]
      %v536 = vld [vmem:[%s1 + $0x130] sm:$0xf]
      %v537 = vld [vmem:[%s1 + $0x134] sm:$0xf]
      %v538 = vld [vmem:[%s1 + $0x138] sm:$0xf]
      %v539 = vld [vmem:[%s1 + $0x13c] sm:$0xf]
      %v540 = vld [vmem:[%s1 + $0x140] sm:$0xf]
      %v541 = vld [vmem:[%s1 + $0x144] sm:$0xf]
      %v542 = vld [vmem:[%s1 + $0x148] sm:$0xf]
      %v543 = vld [vmem:[%s1 + $0x14c] sm:$0xf]
      %v544 = vld [vmem:[%s1 + $0x150] sm:$0xf]
      %v545 = vld [vmem:[%s1 + $0x154] sm:$0xf]
      %v546 = vld [vmem:[%s1 + $0x158] sm:$0xf]
      %v547 = vld [vmem:[%s1 + $0x15c] sm:$0xf]
      %v548 = vld [vmem:[%s1 + $0x160] sm:$0xf]
      %v549 = vld [vmem:[%s1 + $0x164] sm:$0xf]
      %v550 = vld [vmem:[%s1 + $0x168] sm:$0xf]
      %v551 = vld [vmem:[%s1 + $0x16c] sm:$0xf]
      %v552 = vld [vmem:[%s1 + $0x170] sm:$0xf]
      %v553 = vld [vmem:[%s1 + $0x174] sm:$0xf]
      %v554 = vld [vmem:[%s1 + $0x178] sm:$0xf]
      %v555 = vld [vmem:[%s1 + $0x17c] sm:$0xf]
      %v556 = vld [vmem:[%s1 + $0x180] sm:$0xf]
      %v557 = vld [vmem:[%s1 + $0x184] sm:$0xf]
      %v558 = vld [vmem:[%s1 + $0x188] sm:$0xf]
      %v559 = vld [vmem:[%s1 + $0x18c] sm:$0xf]
      %v560 = vld [vmem:[%s1 + $0x190] sm:$0xf]
      %v561 = vld [vmem:[%s1 + $0x194] sm:$0xf]
      %v562 = vld [vmem:[%s1 + $0x198] sm:$0xf]
      %v563 = vld [vmem:[%s1 + $0x19c] sm:$0xf]
      %v564 = vld [vmem:[%s1 + $0x1a0] sm:$0xf]
      %v565 = vld [vmem:[%s1 + $0x1a4] sm:$0xf]
      %v566 = vld [vmem:[%s1 + $0x1a8] sm:$0xf]
      %v567 = vld [vmem:[%s1 + $0x1ac] sm:$0xf]
      %v568 = vld [vmem:[%s1 + $0x1b0] sm:$0xf]
      %v569 = vld [vmem:[%s1 + $0x1b4] sm:$0xf]
      %v570 = vld [vmem:[%s1 + $0x1b8] sm:$0xf]
      %v571 = vld [vmem:[%s1 + $0x1bc] sm:$0xf]
      %v572 = vld [vmem:[%s1 + $0x1c0] sm:$0xf]
      %v573 = vld [vmem:[%s1 + $0x1c4] sm:$0xf]
      %v574 = vld [vmem:[%s1 + $0x1c8] sm:$0xf]
      %v575 = vld [vmem:[%s1 + $0x1cc] sm:$0xf]
      %v576 = vld [vmem:[%s1 + $0x1d0] sm:$0xf]
      %v577 = vld [vmem:[%s1 + $0x1d4] sm:$0xf]
      %v578 = vld [vmem:[%s1 + $0x1d8] sm:$0xf]
      %v579 = vld [vmem:[%s1 + $0x1dc] sm:$0xf]
      %v580 = vld [vmem:[%s1 + $0x1e0] sm:$0xf]
      %v581 = vld [vmem:[%s1 + $0x1e4] sm:$0xf]
      %v582 = vld [vmem:[%s1 + $0x1e8] sm:$0xf]
      %v583 = vld [vmem:[%s1 + $0x1ec] sm:$0xf]
      %v584 = vld [vmem:[%s1 + $0x1f0] sm:$0xf]
      %v585 = vld [vmem:[%s1 + $0x1f4] sm:$0xf]
      %v586 = vld [vmem:[%s1 + $0x1f8] sm:$0xf]
      %v587 = vld [vmem:[%s1 + $0x1fc] sm:$0xf]
      %v844 = vunpack.c.l.b16 %v204
      %v845 = vunpack.c.h.b16 %v204
      %v846 = vunpack.c.l.b16 %v205
      %v847 = vunpack.c.h.b16 %v205
      %v848 = vunpack.c.l.b16 %v206
      %v849 = vunpack.c.h.b16 %v206
      %v850 = vunpack.c.l.b16 %v207
      %v851 = vunpack.c.h.b16 %v207
      %v852 = vunpack.c.l.b16 %v208
      %v853 = vunpack.c.h.b16 %v208
      %v854 = vunpack.c.l.b16 %v209
      %v855 = vunpack.c.h.b16 %v209
      %v856 = vunpack.c.l.b16 %v210
      %v857 = vunpack.c.h.b16 %v210
      %v858 = vunpack.c.l.b16 %v211
      %v859 = vunpack.c.h.b16 %v211
      %v860 = vunpack.c.l.b16 %v212
      %v861 = vunpack.c.h.b16 %v212
      %v862 = vunpack.c.l.b16 %v213
      %v863 = vunpack.c.h.b16 %v213
      %v864 = vunpack.c.l.b16 %v214
      %v865 = vunpack.c.h.b16 %v214
      %v866 = vunpack.c.l.b16 %v215
      %v867 = vunpack.c.h.b16 %v215
      %v868 = vunpack.c.l.b16 %v216
      %v869 = vunpack.c.h.b16 %v216
      %v870 = vunpack.c.l.b16 %v217
      %v871 = vunpack.c.h.b16 %v217
      %v872 = vunpack.c.l.b16 %v218
      %v873 = vunpack.c.h.b16 %v218
      %v874 = vunpack.c.l.b16 %v219
      %v875 = vunpack.c.h.b16 %v219
      %v876 = vunpack.c.l.b16 %v220
      %v877 = vunpack.c.h.b16 %v220
      %v878 = vunpack.c.l.b16 %v221
      %v879 = vunpack.c.h.b16 %v221
      %v880 = vunpack.c.l.b16 %v222
      %v881 = vunpack.c.h.b16 %v222
      %v882 = vunpack.c.l.b16 %v223
      %v883 = vunpack.c.h.b16 %v223
      %v884 = vunpack.c.l.b16 %v224
      %v885 = vunpack.c.h.b16 %v224
      %v886 = vunpack.c.l.b16 %v225
      %v887 = vunpack.c.h.b16 %v225
      %v888 = vunpack.c.l.b16 %v226
      %v889 = vunpack.c.h.b16 %v226
      %v890 = vunpack.c.l.b16 %v227
      %v891 = vunpack.c.h.b16 %v227
      %v892 = vunpack.c.l.b16 %v228
      %v893 = vunpack.c.h.b16 %v228
      %v894 = vunpack.c.l.b16 %v229
      %v895 = vunpack.c.h.b16 %v229
      %v896 = vunpack.c.l.b16 %v230
      %v897 = vunpack.c.h.b16 %v230
      %v898 = vunpack.c.l.b16 %v231
      %v899 = vunpack.c.h.b16 %v231
      %v900 = vunpack.c.l.b16 %v232
      %v901 = vunpack.c.h.b16 %v232
      %v902 = vunpack.c.l.b16 %v233
      %v903 = vunpack.c.h.b16 %v233
      %v904 = vunpack.c.l.b16 %v234
      %v905 = vunpack.c.h.b16 %v234
      %v906 = vunpack.c.l.b16 %v235
      %v907 = vunpack.c.h.b16 %v235
      %v908 = vunpack.c.l.b16 %v236
      %v909 = vunpack.c.h.b16 %v236
      %v910 = vunpack.c.l.b16 %v237
      %v911 = vunpack.c.h.b16 %v237
      %v912 = vunpack.c.l.b16 %v238
      %v913 = vunpack.c.h.b16 %v238
      %v914 = vunpack.c.l.b16 %v239
      %v915 = vunpack.c.h.b16 %v239
      %v916 = vunpack.c.l.b16 %v240
      %v917 = vunpack.c.h.b16 %v240
      %v918 = vunpack.c.l.b16 %v241
      %v919 = vunpack.c.h.b16 %v241
      %v920 = vunpack.c.l.b16 %v242
      %v921 = vunpack.c.h.b16 %v242
      %v922 = vunpack.c.l.b16 %v243
      %v923 = vunpack.c.h.b16 %v243
      %v924 = vunpack.c.l.b16 %v244
      %v925 = vunpack.c.h.b16 %v244
      %v926 = vunpack.c.l.b16 %v245
      %v927 = vunpack.c.h.b16 %v245
      %v928 = vunpack.c.l.b16 %v246
      %v929 = vunpack.c.h.b16 %v246
      %v930 = vunpack.c.l.b16 %v247
      %v931 = vunpack.c.h.b16 %v247
      %v932 = vunpack.c.l.b16 %v248
      %v933 = vunpack.c.h.b16 %v248
      %v934 = vunpack.c.l.b16 %v249
      %v935 = vunpack.c.h.b16 %v249
      %v936 = vunpack.c.l.b16 %v250
      %v937 = vunpack.c.h.b16 %v250
      %v938 = vunpack.c.l.b16 %v251
      %v939 = vunpack.c.h.b16 %v251
      %v940 = vunpack.c.l.b16 %v252
      %v941 = vunpack.c.h.b16 %v252
      %v942 = vunpack.c.l.b16 %v253
      %v943 = vunpack.c.h.b16 %v253
      %v944 = vunpack.c.l.b16 %v254
      %v945 = vunpack.c.h.b16 %v254
      %v946 = vunpack.c.l.b16 %v255
      %v947 = vunpack.c.h.b16 %v255
      %v948 = vunpack.c.l.b16 %v256
      %v949 = vunpack.c.h.b16 %v256
      %v950 = vunpack.c.l.b16 %v257
      %v951 = vunpack.c.h.b16 %v257
      %v952 = vunpack.c.l.b16 %v258
      %v953 = vunpack.c.h.b16 %v258
      %v954 = vunpack.c.l.b16 %v259
      %v955 = vunpack.c.h.b16 %v259
      %v956 = vunpack.c.l.b16 %v260
      %v957 = vunpack.c.h.b16 %v260
      %v958 = vunpack.c.l.b16 %v261
      %v959 = vunpack.c.h.b16 %v261
      %v960 = vunpack.c.l.b16 %v262
      %v961 = vunpack.c.h.b16 %v262
      %v962 = vunpack.c.l.b16 %v263
      %v963 = vunpack.c.h.b16 %v263
      %v964 = vunpack.c.l.b16 %v264
      %v965 = vunpack.c.h.b16 %v264
      %v966 = vunpack.c.l.b16 %v265
      %v967 = vunpack.c.h.b16 %v265
      %v968 = vunpack.c.l.b16 %v266
      %v969 = vunpack.c.h.b16 %v266
      %v970 = vunpack.c.l.b16 %v267
      %v971 = vunpack.c.h.b16 %v267
      %v972 = vunpack.c.l.b16 %v268
      %v973 = vunpack.c.h.b16 %v268
      %v974 = vunpack.c.l.b16 %v269
      %v975 = vunpack.c.h.b16 %v269
      %v976 = vunpack.c.l.b16 %v270
      %v977 = vunpack.c.h.b16 %v270
      %v978 = vunpack.c.l.b16 %v271
      %v979 = vunpack.c.h.b16 %v271
      %v980 = vunpack.c.l.b16 %v272
      %v981 = vunpack.c.h.b16 %v272
      %v982 = vunpack.c.l.b16 %v273
      %v983 = vunpack.c.h.b16 %v273
      %v984 = vunpack.c.l.b16 %v274
      %v985 = vunpack.c.h.b16 %v274
      %v986 = vunpack.c.l.b16 %v275
      %v987 = vunpack.c.h.b16 %v275
      %v988 = vunpack.c.l.b16 %v276
      %v989 = vunpack.c.h.b16 %v276
      %v990 = vunpack.c.l.b16 %v277
      %v991 = vunpack.c.h.b16 %v277
      %v992 = vunpack.c.l.b16 %v278
      %v993 = vunpack.c.h.b16 %v278
      %v994 = vunpack.c.l.b16 %v279
      %v995 = vunpack.c.h.b16 %v279
      %v996 = vunpack.c.l.b16 %v280
      %v997 = vunpack.c.h.b16 %v280
      %v998 = vunpack.c.l.b16 %v281
      %v999 = vunpack.c.h.b16 %v281
      %v1000 = vunpack.c.l.b16 %v282
      %v1001 = vunpack.c.h.b16 %v282
      %v1002 = vunpack.c.l.b16 %v283
      %v1003 = vunpack.c.h.b16 %v283
      %v1004 = vunpack.c.l.b16 %v284
      %v1005 = vunpack.c.h.b16 %v284
      %v1006 = vunpack.c.l.b16 %v285
      %v1007 = vunpack.c.h.b16 %v285
      %v1008 = vunpack.c.l.b16 %v286
      %v1009 = vunpack.c.h.b16 %v286
      %v1010 = vunpack.c.l.b16 %v287
      %v1011 = vunpack.c.h.b16 %v287
      %v1012 = vunpack.c.l.b16 %v288
      %v1013 = vunpack.c.h.b16 %v288
      %v1014 = vunpack.c.l.b16 %v289
      %v1015 = vunpack.c.h.b16 %v289
      %v1016 = vunpack.c.l.b16 %v290
      %v1017 = vunpack.c.h.b16 %v290
      %v1018 = vunpack.c.l.b16 %v291
      %v1019 = vunpack.c.h.b16 %v291
      %v1020 = vunpack.c.l.b16 %v292
      %v1021 = vunpack.c.h.b16 %v292
      %v1022 = vunpack.c.l.b16 %v293
      %v1023 = vunpack.c.h.b16 %v293
      %v1024 = vunpack.c.l.b16 %v294
      %v1025 = vunpack.c.h.b16 %v294
      %v1026 = vunpack.c.l.b16 %v295
      %v1027 = vunpack.c.h.b16 %v295
      %v1028 = vunpack.c.l.b16 %v296
      %v1029 = vunpack.c.h.b16 %v296
      %v1030 = vunpack.c.l.b16 %v297
      %v1031 = vunpack.c.h.b16 %v297
      %v1032 = vunpack.c.l.b16 %v298
      %v1033 = vunpack.c.h.b16 %v298
      %v1034 = vunpack.c.l.b16 %v299
      %v1035 = vunpack.c.h.b16 %v299
      %v1036 = vunpack.c.l.b16 %v300
      %v1037 = vunpack.c.h.b16 %v300
      %v1038 = vunpack.c.l.b16 %v301
      %v1039 = vunpack.c.h.b16 %v301
      %v1040 = vunpack.c.l.b16 %v302
      %v1041 = vunpack.c.h.b16 %v302
      %v1042 = vunpack.c.l.b16 %v303
      %v1043 = vunpack.c.h.b16 %v303
      %v1044 = vunpack.c.l.b16 %v304
      %v1045 = vunpack.c.h.b16 %v304
      %v1046 = vunpack.c.l.b16 %v305
      %v1047 = vunpack.c.h.b16 %v305
      %v1048 = vunpack.c.l.b16 %v306
      %v1049 = vunpack.c.h.b16 %v306
      %v1050 = vunpack.c.l.b16 %v307
      %v1051 = vunpack.c.h.b16 %v307
      %v1052 = vunpack.c.l.b16 %v308
      %v1053 = vunpack.c.h.b16 %v308
      %v1054 = vunpack.c.l.b16 %v309
      %v1055 = vunpack.c.h.b16 %v309
      %v1056 = vunpack.c.l.b16 %v310
      %v1057 = vunpack.c.h.b16 %v310
      %v1058 = vunpack.c.l.b16 %v311
      %v1059 = vunpack.c.h.b16 %v311
      %v1060 = vunpack.c.l.b16 %v312
      %v1061 = vunpack.c.h.b16 %v312
      %v1062 = vunpack.c.l.b16 %v313
      %v1063 = vunpack.c.h.b16 %v313
      %v1064 = vunpack.c.l.b16 %v314
      %v1065 = vunpack.c.h.b16 %v314
      %v1066 = vunpack.c.l.b16 %v315
      %v1067 = vunpack.c.h.b16 %v315
      %v1068 = vunpack.c.l.b16 %v316
      %v1069 = vunpack.c.h.b16 %v316
      %v1070 = vunpack.c.l.b16 %v317
      %v1071 = vunpack.c.h.b16 %v317
      %v1072 = vunpack.c.l.b16 %v318
      %v1073 = vunpack.c.h.b16 %v318
      %v1074 = vunpack.c.l.b16 %v319
      %v1075 = vunpack.c.h.b16 %v319
      %v1076 = vunpack.c.l.b16 %v320
      %v1077 = vunpack.c.h.b16 %v320
      %v1078 = vunpack.c.l.b16 %v321
      %v1079 = vunpack.c.h.b16 %v321
      %v1080 = vunpack.c.l.b16 %v322
      %v1081 = vunpack.c.h.b16 %v322
      %v1082 = vunpack.c.l.b16 %v323
      %v1083 = vunpack.c.h.b16 %v323
      %v1084 = vunpack.c.l.b16 %v324
      %v1085 = vunpack.c.h.b16 %v324
      %v1086 = vunpack.c.l.b16 %v325
      %v1087 = vunpack.c.h.b16 %v325
      %v1088 = vunpack.c.l.b16 %v326
      %v1089 = vunpack.c.h.b16 %v326
      %v1090 = vunpack.c.l.b16 %v327
      %v1091 = vunpack.c.h.b16 %v327
      %v1092 = vunpack.c.l.b16 %v328
      %v1093 = vunpack.c.h.b16 %v328
      %v1094 = vunpack.c.l.b16 %v329
      %v1095 = vunpack.c.h.b16 %v329
      %v1096 = vunpack.c.l.b16 %v330
      %v1097 = vunpack.c.h.b16 %v330
      %v1098 = vunpack.c.l.b16 %v331
      %v1099 = vunpack.c.h.b16 %v331
      %v1100 = vunpack.c.l.b16 %v332
      %v1101 = vunpack.c.h.b16 %v332
      %v1102 = vunpack.c.l.b16 %v333
      %v1103 = vunpack.c.h.b16 %v333
      %v1104 = vunpack.c.l.b16 %v334
      %v1105 = vunpack.c.h.b16 %v334
      %v1106 = vunpack.c.l.b16 %v335
      %v1107 = vunpack.c.h.b16 %v335
      %v1108 = vunpack.c.l.b16 %v336
      %v1109 = vunpack.c.h.b16 %v336
      %v1110 = vunpack.c.l.b16 %v337
      %v1111 = vunpack.c.h.b16 %v337
      %v1112 = vunpack.c.l.b16 %v338
      %v1113 = vunpack.c.h.b16 %v338
      %v1114 = vunpack.c.l.b16 %v339
      %v1115 = vunpack.c.h.b16 %v339
      %v1116 = vunpack.c.l.b16 %v340
      %v1117 = vunpack.c.h.b16 %v340
      %v1118 = vunpack.c.l.b16 %v341
      %v1119 = vunpack.c.h.b16 %v341
      %v1120 = vunpack.c.l.b16 %v342
      %v1121 = vunpack.c.h.b16 %v342
      %v1122 = vunpack.c.l.b16 %v343
      %v1123 = vunpack.c.h.b16 %v343
      %v1124 = vunpack.c.l.b16 %v344
      %v1125 = vunpack.c.h.b16 %v344
      %v1126 = vunpack.c.l.b16 %v345
      %v1127 = vunpack.c.h.b16 %v345
      %v1128 = vunpack.c.l.b16 %v346
      %v1129 = vunpack.c.h.b16 %v346
      %v1130 = vunpack.c.l.b16 %v347
      %v1131 = vunpack.c.h.b16 %v347
      %v1132 = vunpack.c.l.b16 %v348
      %v1133 = vunpack.c.h.b16 %v348
      %v1134 = vunpack.c.l.b16 %v349
      %v1135 = vunpack.c.h.b16 %v349
      %v1136 = vunpack.c.l.b16 %v350
      %v1137 = vunpack.c.h.b16 %v350
      %v1138 = vunpack.c.l.b16 %v351
      %v1139 = vunpack.c.h.b16 %v351
      %v1140 = vunpack.c.l.b16 %v352
      %v1141 = vunpack.c.h.b16 %v352
      %v1142 = vunpack.c.l.b16 %v353
      %v1143 = vunpack.c.h.b16 %v353
      %v1144 = vunpack.c.l.b16 %v354
      %v1145 = vunpack.c.h.b16 %v354
      %v1146 = vunpack.c.l.b16 %v355
      %v1147 = vunpack.c.h.b16 %v355
      %v1148 = vunpack.c.l.b16 %v356
      %v1149 = vunpack.c.h.b16 %v356
      %v1150 = vunpack.c.l.b16 %v357
      %v1151 = vunpack.c.h.b16 %v357
      %v1152 = vunpack.c.l.b16 %v358
      %v1153 = vunpack.c.h.b16 %v358
      %v1154 = vunpack.c.l.b16 %v359
      %v1155 = vunpack.c.h.b16 %v359
      %v1156 = vunpack.c.l.b16 %v360
      %v1157 = vunpack.c.h.b16 %v360
      %v1158 = vunpack.c.l.b16 %v361
      %v1159 = vunpack.c.h.b16 %v361
      %v1160 = vunpack.c.l.b16 %v362
      %v1161 = vunpack.c.h.b16 %v362
      %v1162 = vunpack.c.l.b16 %v363
      %v1163 = vunpack.c.h.b16 %v363
      %v1164 = vunpack.c.l.b16 %v364
      %v1165 = vunpack.c.h.b16 %v364
      %v1166 = vunpack.c.l.b16 %v365
      %v1167 = vunpack.c.h.b16 %v365
      %v1168 = vunpack.c.l.b16 %v366
      %v1169 = vunpack.c.h.b16 %v366
      %v1170 = vunpack.c.l.b16 %v367
      %v1171 = vunpack.c.h.b16 %v367
      %v1172 = vunpack.c.l.b16 %v368
      %v1173 = vunpack.c.h.b16 %v368
      %v1174 = vunpack.c.l.b16 %v369
      %v1175 = vunpack.c.h.b16 %v369
      %v1176 = vunpack.c.l.b16 %v370
      %v1177 = vunpack.c.h.b16 %v370
      %v1178 = vunpack.c.l.b16 %v371
      %v1179 = vunpack.c.h.b16 %v371
      %v1180 = vunpack.c.l.b16 %v372
      %v1181 = vunpack.c.h.b16 %v372
      %v1182 = vunpack.c.l.b16 %v373
      %v1183 = vunpack.c.h.b16 %v373
      %v1184 = vunpack.c.l.b16 %v374
      %v1185 = vunpack.c.h.b16 %v374
      %v1186 = vunpack.c.l.b16 %v375
      %v1187 = vunpack.c.h.b16 %v375
      %v1188 = vunpack.c.l.b16 %v376
      %v1189 = vunpack.c.h.b16 %v376
      %v1190 = vunpack.c.l.b16 %v377
      %v1191 = vunpack.c.h.b16 %v377
      %v1192 = vunpack.c.l.b16 %v378
      %v1193 = vunpack.c.h.b16 %v378
      %v1194 = vunpack.c.l.b16 %v379
      %v1195 = vunpack.c.h.b16 %v379
      %v1196 = vunpack.c.l.b16 %v380
      %v1197 = vunpack.c.h.b16 %v380
      %v1198 = vunpack.c.l.b16 %v381
      %v1199 = vunpack.c.h.b16 %v381
      %v1200 = vunpack.c.l.b16 %v382
      %v1201 = vunpack.c.h.b16 %v382
      %v1202 = vunpack.c.l.b16 %v383
      %v1203 = vunpack.c.h.b16 %v383
      %v1204 = vunpack.c.l.b16 %v384
      %v1205 = vunpack.c.h.b16 %v384
      %v1206 = vunpack.c.l.b16 %v385
      %v1207 = vunpack.c.h.b16 %v385
      %v1208 = vunpack.c.l.b16 %v386
      %v1209 = vunpack.c.h.b16 %v386
      %v1210 = vunpack.c.l.b16 %v387
      %v1211 = vunpack.c.h.b16 %v387
      %v1212 = vunpack.c.l.b16 %v388
      %v1213 = vunpack.c.h.b16 %v388
      %v1214 = vunpack.c.l.b16 %v389
      %v1215 = vunpack.c.h.b16 %v389
      %v1216 = vunpack.c.l.b16 %v390
      %v1217 = vunpack.c.h.b16 %v390
      %v1218 = vunpack.c.l.b16 %v391
      %v1219 = vunpack.c.h.b16 %v391
      %v1220 = vunpack.c.l.b16 %v392
      %v1221 = vunpack.c.h.b16 %v392
      %v1222 = vunpack.c.l.b16 %v393
      %v1223 = vunpack.c.h.b16 %v393
      %v1224 = vunpack.c.l.b16 %v394
      %v1225 = vunpack.c.h.b16 %v394
      %v1226 = vunpack.c.l.b16 %v395
      %v1227 = vunpack.c.h.b16 %v395
      %v1228 = vunpack.c.l.b16 %v396
      %v1229 = vunpack.c.h.b16 %v396
      %v1230 = vunpack.c.l.b16 %v397
      %v1231 = vunpack.c.h.b16 %v397
      %v1232 = vunpack.c.l.b16 %v398
      %v1233 = vunpack.c.h.b16 %v398
      %v1234 = vunpack.c.l.b16 %v399
      %v1235 = vunpack.c.h.b16 %v399
      %v1236 = vunpack.c.l.b16 %v400
      %v1237 = vunpack.c.h.b16 %v400
      %v1238 = vunpack.c.l.b16 %v401
      %v1239 = vunpack.c.h.b16 %v401
      %v1240 = vunpack.c.l.b16 %v402
      %v1241 = vunpack.c.h.b16 %v402
      %v1242 = vunpack.c.l.b16 %v403
      %v1243 = vunpack.c.h.b16 %v403
      %v1244 = vunpack.c.l.b16 %v404
      %v1245 = vunpack.c.h.b16 %v404
      %v1246 = vunpack.c.l.b16 %v405
      %v1247 = vunpack.c.h.b16 %v405
      %v1248 = vunpack.c.l.b16 %v406
      %v1249 = vunpack.c.h.b16 %v406
      %v1250 = vunpack.c.l.b16 %v407
      %v1251 = vunpack.c.h.b16 %v407
      %v1252 = vunpack.c.l.b16 %v408
      %v1253 = vunpack.c.h.b16 %v408
      %v1254 = vunpack.c.l.b16 %v409
      %v1255 = vunpack.c.h.b16 %v409
      %v1256 = vunpack.c.l.b16 %v410
      %v1257 = vunpack.c.h.b16 %v410
      %v1258 = vunpack.c.l.b16 %v411
      %v1259 = vunpack.c.h.b16 %v411
      %v1260 = vunpack.c.l.b16 %v412
      %v1261 = vunpack.c.h.b16 %v412
      %v1262 = vunpack.c.l.b16 %v413
      %v1263 = vunpack.c.h.b16 %v413
      %v1264 = vunpack.c.l.b16 %v414
      %v1265 = vunpack.c.h.b16 %v414
      %v1266 = vunpack.c.l.b16 %v415
      %v1267 = vunpack.c.h.b16 %v415
      %v1268 = vunpack.c.l.b16 %v416
      %v1269 = vunpack.c.h.b16 %v416
      %v1270 = vunpack.c.l.b16 %v417
      %v1271 = vunpack.c.h.b16 %v417
      %v1272 = vunpack.c.l.b16 %v418
      %v1273 = vunpack.c.h.b16 %v418
      %v1274 = vunpack.c.l.b16 %v419
      %v1275 = vunpack.c.h.b16 %v419
      %v1276 = vunpack.c.l.b16 %v420
      %v1277 = vunpack.c.h.b16 %v420
      %v1278 = vunpack.c.l.b16 %v421
      %v1279 = vunpack.c.h.b16 %v421
      %v1280 = vunpack.c.l.b16 %v422
      %v1281 = vunpack.c.h.b16 %v422
      %v1282 = vunpack.c.l.b16 %v423
      %v1283 = vunpack.c.h.b16 %v423
      %v1284 = vunpack.c.l.b16 %v424
      %v1285 = vunpack.c.h.b16 %v424
      %v1286 = vunpack.c.l.b16 %v425
      %v1287 = vunpack.c.h.b16 %v425
      %v1288 = vunpack.c.l.b16 %v426
      %v1289 = vunpack.c.h.b16 %v426
      %v1290 = vunpack.c.l.b16 %v427
      %v1291 = vunpack.c.h.b16 %v427
      %v1292 = vunpack.c.l.b16 %v428
      %v1293 = vunpack.c.h.b16 %v428
      %v1294 = vunpack.c.l.b16 %v429
      %v1295 = vunpack.c.h.b16 %v429
      %v1296 = vunpack.c.l.b16 %v430
      %v1297 = vunpack.c.h.b16 %v430
      %v1298 = vunpack.c.l.b16 %v431
      %v1299 = vunpack.c.h.b16 %v431
      %v1300 = vunpack.c.l.b16 %v432
      %v1301 = vunpack.c.h.b16 %v432
      %v1302 = vunpack.c.l.b16 %v433
      %v1303 = vunpack.c.h.b16 %v433
      %v1304 = vunpack.c.l.b16 %v434
      %v1305 = vunpack.c.h.b16 %v434
      %v1306 = vunpack.c.l.b16 %v435
      %v1307 = vunpack.c.h.b16 %v435
      %v1308 = vunpack.c.l.b16 %v436
      %v1309 = vunpack.c.h.b16 %v436
      %v1310 = vunpack.c.l.b16 %v437
      %v1311 = vunpack.c.h.b16 %v437
      %v1312 = vunpack.c.l.b16 %v438
      %v1313 = vunpack.c.h.b16 %v438
      %v1314 = vunpack.c.l.b16 %v439
      %v1315 = vunpack.c.h.b16 %v439
      %v1316 = vunpack.c.l.b16 %v440
      %v1317 = vunpack.c.h.b16 %v440
      %v1318 = vunpack.c.l.b16 %v441
      %v1319 = vunpack.c.h.b16 %v441
      %v1320 = vunpack.c.l.b16 %v442
      %v1321 = vunpack.c.h.b16 %v442
      %v1322 = vunpack.c.l.b16 %v443
      %v1323 = vunpack.c.h.b16 %v443
      %v1324 = vunpack.c.l.b16 %v444
      %v1325 = vunpack.c.h.b16 %v444
      %v1326 = vunpack.c.l.b16 %v445
      %v1327 = vunpack.c.h.b16 %v445
      %v1328 = vunpack.c.l.b16 %v446
      %v1329 = vunpack.c.h.b16 %v446
      %v1330 = vunpack.c.l.b16 %v447
      %v1331 = vunpack.c.h.b16 %v447
      %v1332 = vunpack.c.l.b16 %v448
      %v1333 = vunpack.c.h.b16 %v448
      %v1334 = vunpack.c.l.b16 %v449
      %v1335 = vunpack.c.h.b16 %v449
      %v1336 = vunpack.c.l.b16 %v450
      %v1337 = vunpack.c.h.b16 %v450
      %v1338 = vunpack.c.l.b16 %v451
      %v1339 = vunpack.c.h.b16 %v451
      %v1340 = vunpack.c.l.b16 %v452
      %v1341 = vunpack.c.h.b16 %v452
      %v1342 = vunpack.c.l.b16 %v453
      %v1343 = vunpack.c.h.b16 %v453
      %v1344 = vunpack.c.l.b16 %v454
      %v1345 = vunpack.c.h.b16 %v454
      %v1346 = vunpack.c.l.b16 %v455
      %v1347 = vunpack.c.h.b16 %v455
      %v1348 = vunpack.c.l.b16 %v456
      %v1349 = vunpack.c.h.b16 %v456
      %v1350 = vunpack.c.l.b16 %v457
      %v1351 = vunpack.c.h.b16 %v457
      %v1352 = vunpack.c.l.b16 %v458
      %v1353 = vunpack.c.h.b16 %v458
      %v1354 = vunpack.c.l.b16 %v459
      %v1355 = vunpack.c.h.b16 %v459
      %v1356 = vpack.c.b16 %v852, %v844
      %v1357 = vpack.c.b16 %v853, %v845
      %v1358 = vpack.c.b16 %v854, %v846
      %v1359 = vpack.c.b16 %v855, %v847
      %v1360 = vpack.c.b16 %v856, %v848
      %v1361 = vpack.c.b16 %v857, %v849
      %v1362 = vpack.c.b16 %v858, %v850
      %v1363 = vpack.c.b16 %v859, %v851
      %v1364 = vpack.c.b16 %v868, %v860
      %v1365 = vpack.c.b16 %v869, %v861
      %v1366 = vpack.c.b16 %v870, %v862
      %v1367 = vpack.c.b16 %v871, %v863
      %v1368 = vpack.c.b16 %v872, %v864
      %v1369 = vpack.c.b16 %v873, %v865
      %v1370 = vpack.c.b16 %v874, %v866
      %v1371 = vpack.c.b16 %v875, %v867
      %v1372 = vpack.c.b16 %v884, %v876
      %v1373 = vpack.c.b16 %v885, %v877
      %v1374 = vpack.c.b16 %v886, %v878
      %v1375 = vpack.c.b16 %v887, %v879
      %v1376 = vpack.c.b16 %v888, %v880
      %v1377 = vpack.c.b16 %v889, %v881
      %v1378 = vpack.c.b16 %v890, %v882
      %v1379 = vpack.c.b16 %v891, %v883
      %v1380 = vpack.c.b16 %v900, %v892
      %v1381 = vpack.c.b16 %v901, %v893
      %v1382 = vpack.c.b16 %v902, %v894
      %v1383 = vpack.c.b16 %v903, %v895
      %v1384 = vpack.c.b16 %v904, %v896
      %v1385 = vpack.c.b16 %v905, %v897
      %v1386 = vpack.c.b16 %v906, %v898
      %v1387 = vpack.c.b16 %v907, %v899
      %v1388 = vpack.c.b16 %v916, %v908
      %v1389 = vpack.c.b16 %v917, %v909
      %v1390 = vpack.c.b16 %v918, %v910
      %v1391 = vpack.c.b16 %v919, %v911
      %v1392 = vpack.c.b16 %v920, %v912
      %v1393 = vpack.c.b16 %v921, %v913
      %v1394 = vpack.c.b16 %v922, %v914
      %v1395 = vpack.c.b16 %v923, %v915
      %v1396 = vpack.c.b16 %v932, %v924
      %v1397 = vpack.c.b16 %v933, %v925
      %v1398 = vpack.c.b16 %v934, %v926
      %v1399 = vpack.c.b16 %v935, %v927
      %v1400 = vpack.c.b16 %v936, %v928
      %v1401 = vpack.c.b16 %v937, %v929
      %v1402 = vpack.c.b16 %v938, %v930
      %v1403 = vpack.c.b16 %v939, %v931
      %v1404 = vpack.c.b16 %v948, %v940
      %v1405 = vpack.c.b16 %v949, %v941
      %v1406 = vpack.c.b16 %v950, %v942
      %v1407 = vpack.c.b16 %v951, %v943
      %v1408 = vpack.c.b16 %v952, %v944
      %v1409 = vpack.c.b16 %v953, %v945
      %v1410 = vpack.c.b16 %v954, %v946
      %v1411 = vpack.c.b16 %v955, %v947
      %v1412 = vpack.c.b16 %v964, %v956
      %v1413 = vpack.c.b16 %v965, %v957
      %v1414 = vpack.c.b16 %v966, %v958
      %v1415 = vpack.c.b16 %v967, %v959
      %v1416 = vpack.c.b16 %v968, %v960
      %v1417 = vpack.c.b16 %v969, %v961
      %v1418 = vpack.c.b16 %v970, %v962
      %v1419 = vpack.c.b16 %v971, %v963
      %v1420 = vpack.c.b16 %v980, %v972
      %v1421 = vpack.c.b16 %v981, %v973
      %v1422 = vpack.c.b16 %v982, %v974
      %v1423 = vpack.c.b16 %v983, %v975
      %v1424 = vpack.c.b16 %v984, %v976
      %v1425 = vpack.c.b16 %v985, %v977
      %v1426 = vpack.c.b16 %v986, %v978
      %v1427 = vpack.c.b16 %v987, %v979
      %v1428 = vpack.c.b16 %v996, %v988
      %v1429 = vpack.c.b16 %v997, %v989
      %v1430 = vpack.c.b16 %v998, %v990
      %v1431 = vpack.c.b16 %v999, %v991
      %v1432 = vpack.c.b16 %v1000, %v992
      %v1433 = vpack.c.b16 %v1001, %v993
      %v1434 = vpack.c.b16 %v1002, %v994
      %v1435 = vpack.c.b16 %v1003, %v995
      %v1436 = vpack.c.b16 %v1012, %v1004
      %v1437 = vpack.c.b16 %v1013, %v1005
      %v1438 = vpack.c.b16 %v1014, %v1006
      %v1439 = vpack.c.b16 %v1015, %v1007
      %v1440 = vpack.c.b16 %v1016, %v1008
      %v1441 = vpack.c.b16 %v1017, %v1009
      %v1442 = vpack.c.b16 %v1018, %v1010
      %v1443 = vpack.c.b16 %v1019, %v1011
      %v1444 = vpack.c.b16 %v1028, %v1020
      %v1445 = vpack.c.b16 %v1029, %v1021
      %v1446 = vpack.c.b16 %v1030, %v1022
      %v1447 = vpack.c.b16 %v1031, %v1023
      %v1448 = vpack.c.b16 %v1032, %v1024
      %v1449 = vpack.c.b16 %v1033, %v1025
      %v1450 = vpack.c.b16 %v1034, %v1026
      %v1451 = vpack.c.b16 %v1035, %v1027
      %v1452 = vpack.c.b16 %v1044, %v1036
      %v1453 = vpack.c.b16 %v1045, %v1037
      %v1454 = vpack.c.b16 %v1046, %v1038
      %v1455 = vpack.c.b16 %v1047, %v1039
      %v1456 = vpack.c.b16 %v1048, %v1040
      %v1457 = vpack.c.b16 %v1049, %v1041
      %v1458 = vpack.c.b16 %v1050, %v1042
      %v1459 = vpack.c.b16 %v1051, %v1043
      %v1460 = vpack.c.b16 %v1060, %v1052
      %v1461 = vpack.c.b16 %v1061, %v1053
      %v1462 = vpack.c.b16 %v1062, %v1054
      %v1463 = vpack.c.b16 %v1063, %v1055
      %v1464 = vpack.c.b16 %v1064, %v1056
      %v1465 = vpack.c.b16 %v1065, %v1057
      %v1466 = vpack.c.b16 %v1066, %v1058
      %v1467 = vpack.c.b16 %v1067, %v1059
      %v1468 = vpack.c.b16 %v1076, %v1068
      %v1469 = vpack.c.b16 %v1077, %v1069
      %v1470 = vpack.c.b16 %v1078, %v1070
      %v1471 = vpack.c.b16 %v1079, %v1071
      %v1472 = vpack.c.b16 %v1080, %v1072
      %v1473 = vpack.c.b16 %v1081, %v1073
      %v1474 = vpack.c.b16 %v1082, %v1074
      %v1475 = vpack.c.b16 %v1083, %v1075
      %v1476 = vpack.c.b16 %v1092, %v1084
      %v1477 = vpack.c.b16 %v1093, %v1085
      %v1478 = vpack.c.b16 %v1094, %v1086
      %v1479 = vpack.c.b16 %v1095, %v1087
      %v1480 = vpack.c.b16 %v1096, %v1088
      %v1481 = vpack.c.b16 %v1097, %v1089
      %v1482 = vpack.c.b16 %v1098, %v1090
      %v1483 = vpack.c.b16 %v1099, %v1091
      %v1484 = vpack.c.b16 %v1108, %v1100
      %v1485 = vpack.c.b16 %v1109, %v1101
      %v1486 = vpack.c.b16 %v1110, %v1102
      %v1487 = vpack.c.b16 %v1111, %v1103
      %v1488 = vpack.c.b16 %v1112, %v1104
      %v1489 = vpack.c.b16 %v1113, %v1105
      %v1490 = vpack.c.b16 %v1114, %v1106
      %v1491 = vpack.c.b16 %v1115, %v1107
      %v1492 = vpack.c.b16 %v1124, %v1116
      %v1493 = vpack.c.b16 %v1125, %v1117
      %v1494 = vpack.c.b16 %v1126, %v1118
      %v1495 = vpack.c.b16 %v1127, %v1119
      %v1496 = vpack.c.b16 %v1128, %v1120
      %v1497 = vpack.c.b16 %v1129, %v1121
      %v1498 = vpack.c.b16 %v1130, %v1122
      %v1499 = vpack.c.b16 %v1131, %v1123
      %v1500 = vpack.c.b16 %v1140, %v1132
      %v1501 = vpack.c.b16 %v1141, %v1133
      %v1502 = vpack.c.b16 %v1142, %v1134
      %v1503 = vpack.c.b16 %v1143, %v1135
      %v1504 = vpack.c.b16 %v1144, %v1136
      %v1505 = vpack.c.b16 %v1145, %v1137
      %v1506 = vpack.c.b16 %v1146, %v1138
      %v1507 = vpack.c.b16 %v1147, %v1139
      %v1508 = vpack.c.b16 %v1156, %v1148
      %v1509 = vpack.c.b16 %v1157, %v1149
      %v1510 = vpack.c.b16 %v1158, %v1150
      %v1511 = vpack.c.b16 %v1159, %v1151
      %v1512 = vpack.c.b16 %v1160, %v1152
      %v1513 = vpack.c.b16 %v1161, %v1153
      %v1514 = vpack.c.b16 %v1162, %v1154
      %v1515 = vpack.c.b16 %v1163, %v1155
      %v1516 = vpack.c.b16 %v1172, %v1164
      %v1517 = vpack.c.b16 %v1173, %v1165
      %v1518 = vpack.c.b16 %v1174, %v1166
      %v1519 = vpack.c.b16 %v1175, %v1167
      %v1520 = vpack.c.b16 %v1176, %v1168
      %v1521 = vpack.c.b16 %v1177, %v1169
      %v1522 = vpack.c.b16 %v1178, %v1170
      %v1523 = vpack.c.b16 %v1179, %v1171
      %v1524 = vpack.c.b16 %v1188, %v1180
      %v1525 = vpack.c.b16 %v1189, %v1181
      %v1526 = vpack.c.b16 %v1190, %v1182
      %v1527 = vpack.c.b16 %v1191, %v1183
      %v1528 = vpack.c.b16 %v1192, %v1184
      %v1529 = vpack.c.b16 %v1193, %v1185
      %v1530 = vpack.c.b16 %v1194, %v1186
      %v1531 = vpack.c.b16 %v1195, %v1187
      %v1532 = vpack.c.b16 %v1204, %v1196
      %v1533 = vpack.c.b16 %v1205, %v1197
      %v1534 = vpack.c.b16 %v1206, %v1198
      %v1535 = vpack.c.b16 %v1207, %v1199
      %v1536 = vpack.c.b16 %v1208, %v1200
      %v1537 = vpack.c.b16 %v1209, %v1201
      %v1538 = vpack.c.b16 %v1210, %v1202
      %v1539 = vpack.c.b16 %v1211, %v1203
      %v1540 = vpack.c.b16 %v1220, %v1212
      %v1541 = vpack.c.b16 %v1221, %v1213
      %v1542 = vpack.c.b16 %v1222, %v1214
      %v1543 = vpack.c.b16 %v1223, %v1215
      %v1544 = vpack.c.b16 %v1224, %v1216
      %v1545 = vpack.c.b16 %v1225, %v1217
      %v1546 = vpack.c.b16 %v1226, %v1218
      %v1547 = vpack.c.b16 %v1227, %v1219
      %v1548 = vpack.c.b16 %v1236, %v1228
      %v1549 = vpack.c.b16 %v1237, %v1229
      %v1550 = vpack.c.b16 %v1238, %v1230
      %v1551 = vpack.c.b16 %v1239, %v1231
      %v1552 = vpack.c.b16 %v1240, %v1232
      %v1553 = vpack.c.b16 %v1241, %v1233
      %v1554 = vpack.c.b16 %v1242, %v1234
      %v1555 = vpack.c.b16 %v1243, %v1235
      %v1556 = vpack.c.b16 %v1252, %v1244
      %v1557 = vpack.c.b16 %v1253, %v1245
      %v1558 = vpack.c.b16 %v1254, %v1246
      %v1559 = vpack.c.b16 %v1255, %v1247
      %v1560 = vpack.c.b16 %v1256, %v1248
      %v1561 = vpack.c.b16 %v1257, %v1249
      %v1562 = vpack.c.b16 %v1258, %v1250
      %v1563 = vpack.c.b16 %v1259, %v1251
      %v1564 = vpack.c.b16 %v1268, %v1260
      %v1565 = vpack.c.b16 %v1269, %v1261
      %v1566 = vpack.c.b16 %v1270, %v1262
      %v1567 = vpack.c.b16 %v1271, %v1263
      %v1568 = vpack.c.b16 %v1272, %v1264
      %v1569 = vpack.c.b16 %v1273, %v1265
      %v1570 = vpack.c.b16 %v1274, %v1266
      %v1571 = vpack.c.b16 %v1275, %v1267
      %v1572 = vpack.c.b16 %v1284, %v1276
      %v1573 = vpack.c.b16 %v1285, %v1277
      %v1574 = vpack.c.b16 %v1286, %v1278
      %v1575 = vpack.c.b16 %v1287, %v1279
      %v1576 = vpack.c.b16 %v1288, %v1280
      %v1577 = vpack.c.b16 %v1289, %v1281
      %v1578 = vpack.c.b16 %v1290, %v1282
      %v1579 = vpack.c.b16 %v1291, %v1283
      %v1580 = vpack.c.b16 %v1300, %v1292
      %v1581 = vpack.c.b16 %v1301, %v1293
      %v1582 = vpack.c.b16 %v1302, %v1294
      %v1583 = vpack.c.b16 %v1303, %v1295
      %v1584 = vpack.c.b16 %v1304, %v1296
      %v1585 = vpack.c.b16 %v1305, %v1297
      %v1586 = vpack.c.b16 %v1306, %v1298
      %v1587 = vpack.c.b16 %v1307, %v1299
      %v1588 = vpack.c.b16 %v1316, %v1308
      %v1589 = vpack.c.b16 %v1317, %v1309
      %v1590 = vpack.c.b16 %v1318, %v1310
      %v1591 = vpack.c.b16 %v1319, %v1311
      %v1592 = vpack.c.b16 %v1320, %v1312
      %v1593 = vpack.c.b16 %v1321, %v1313
      %v1594 = vpack.c.b16 %v1322, %v1314
      %v1595 = vpack.c.b16 %v1323, %v1315
      %v1596 = vpack.c.b16 %v1332, %v1324
      %v1597 = vpack.c.b16 %v1333, %v1325
      %v1598 = vpack.c.b16 %v1334, %v1326
      %v1599 = vpack.c.b16 %v1335, %v1327
      %v1600 = vpack.c.b16 %v1336, %v1328
      %v1601 = vpack.c.b16 %v1337, %v1329
      %v1602 = vpack.c.b16 %v1338, %v1330
      %v1603 = vpack.c.b16 %v1339, %v1331
      %v1604 = vpack.c.b16 %v1348, %v1340
      %v1605 = vpack.c.b16 %v1349, %v1341
      %v1606 = vpack.c.b16 %v1350, %v1342
      %v1607 = vpack.c.b16 %v1351, %v1343
      %v1608 = vpack.c.b16 %v1352, %v1344
      %v1609 = vpack.c.b16 %v1353, %v1345
      %v1610 = vpack.c.b16 %v1354, %v1346
      %v1611 = vpack.c.b16 %v1355, %v1347
      %v1996 = vunpack.c.l.b16 %v460
      %v1997 = vunpack.c.l.b16 %v461
      %v1998 = vunpack.c.l.b16 %v462
      %v1999 = vunpack.c.l.b16 %v463
      %v2000 = vunpack.c.l.b16 %v464
      %v2001 = vunpack.c.l.b16 %v465
      %v2002 = vunpack.c.l.b16 %v466
      %v2003 = vunpack.c.l.b16 %v467
      %v2004 = vunpack.c.l.b16 %v468
      %v2005 = vunpack.c.l.b16 %v469
      %v2006 = vunpack.c.l.b16 %v470
      %v2007 = vunpack.c.l.b16 %v471
      %v2008 = vunpack.c.l.b16 %v472
      %v2009 = vunpack.c.l.b16 %v473
      %v2010 = vunpack.c.l.b16 %v474
      %v2011 = vunpack.c.l.b16 %v475
      %v2012 = vunpack.c.l.b16 %v476
      %v2013 = vunpack.c.l.b16 %v477
      %v2014 = vunpack.c.l.b16 %v478
      %v2015 = vunpack.c.l.b16 %v479
      %v2016 = vunpack.c.l.b16 %v480
      %v2017 = vunpack.c.l.b16 %v481
      %v2018 = vunpack.c.l.b16 %v482
      %v2019 = vunpack.c.l.b16 %v483
      %v2020 = vunpack.c.l.b16 %v484
      %v2021 = vunpack.c.l.b16 %v485
      %v2022 = vunpack.c.l.b16 %v486
      %v2023 = vunpack.c.l.b16 %v487
      %v2024 = vunpack.c.l.b16 %v488
      %v2025 = vunpack.c.l.b16 %v489
      %v2026 = vunpack.c.l.b16 %v490
      %v2027 = vunpack.c.l.b16 %v491
      %v2028 = vunpack.c.l.b16 %v492
      %v2029 = vunpack.c.l.b16 %v493
      %v2030 = vunpack.c.l.b16 %v494
      %v2031 = vunpack.c.l.b16 %v495
      %v2032 = vunpack.c.l.b16 %v496
      %v2033 = vunpack.c.l.b16 %v497
      %v2034 = vunpack.c.l.b16 %v498
      %v2035 = vunpack.c.l.b16 %v499
      %v2036 = vunpack.c.l.b16 %v500
      %v2037 = vunpack.c.l.b16 %v501
      %v2038 = vunpack.c.l.b16 %v502
      %v2039 = vunpack.c.l.b16 %v503
      %v2040 = vunpack.c.l.b16 %v504
      %v2041 = vunpack.c.l.b16 %v505
      %v2042 = vunpack.c.l.b16 %v506
      %v2043 = vunpack.c.l.b16 %v507
      %v2044 = vunpack.c.l.b16 %v508
      %v2045 = vunpack.c.l.b16 %v509
      %v2046 = vunpack.c.l.b16 %v510
      %v2047 = vunpack.c.l.b16 %v511
      %v2048 = vunpack.c.l.b16 %v512
      %v2049 = vunpack.c.l.b16 %v513
      %v2050 = vunpack.c.l.b16 %v514
      %v2051 = vunpack.c.l.b16 %v515
      %v2052 = vunpack.c.l.b16 %v516
      %v2053 = vunpack.c.l.b16 %v517
      %v2054 = vunpack.c.l.b16 %v518
      %v2055 = vunpack.c.l.b16 %v519
      %v2056 = vunpack.c.l.b16 %v520
      %v2057 = vunpack.c.l.b16 %v521
      %v2058 = vunpack.c.l.b16 %v522
      %v2059 = vunpack.c.l.b16 %v523
      %v2060 = vunpack.c.l.b16 %v524
      %v2061 = vunpack.c.l.b16 %v525
      %v2062 = vunpack.c.l.b16 %v526
      %v2063 = vunpack.c.l.b16 %v527
      %v2064 = vunpack.c.l.b16 %v528
      %v2065 = vunpack.c.l.b16 %v529
      %v2066 = vunpack.c.l.b16 %v530
      %v2067 = vunpack.c.l.b16 %v531
      %v2068 = vunpack.c.l.b16 %v532
      %v2069 = vunpack.c.l.b16 %v533
      %v2070 = vunpack.c.l.b16 %v534
      %v2071 = vunpack.c.l.b16 %v535
      %v2072 = vunpack.c.l.b16 %v536
      %v2073 = vunpack.c.l.b16 %v537
      %v2074 = vunpack.c.l.b16 %v538
      %v2075 = vunpack.c.l.b16 %v539
      %v2076 = vunpack.c.l.b16 %v540
      %v2077 = vunpack.c.l.b16 %v541
      %v2078 = vunpack.c.l.b16 %v542
      %v2079 = vunpack.c.l.b16 %v543
      %v2080 = vunpack.c.l.b16 %v544
      %v2081 = vunpack.c.l.b16 %v545
      %v2082 = vunpack.c.l.b16 %v546
      %v2083 = vunpack.c.l.b16 %v547
      %v2084 = vunpack.c.l.b16 %v548
      %v2085 = vunpack.c.l.b16 %v549
      %v2086 = vunpack.c.l.b16 %v550
      %v2087 = vunpack.c.l.b16 %v551
      %v2088 = vunpack.c.l.b16 %v552
      %v2089 = vunpack.c.l.b16 %v553
      %v2090 = vunpack.c.l.b16 %v554
      %v2091 = vunpack.c.l.b16 %v555
      %v2092 = vunpack.c.l.b16 %v556
      %v2093 = vunpack.c.l.b16 %v557
      %v2094 = vunpack.c.l.b16 %v558
      %v2095 = vunpack.c.l.b16 %v559
      %v2096 = vunpack.c.l.b16 %v560
      %v2097 = vunpack.c.l.b16 %v561
      %v2098 = vunpack.c.l.b16 %v562
      %v2099 = vunpack.c.l.b16 %v563
      %v2100 = vunpack.c.l.b16 %v564
      %v2101 = vunpack.c.l.b16 %v565
      %v2102 = vunpack.c.l.b16 %v566
      %v2103 = vunpack.c.l.b16 %v567
      %v2104 = vunpack.c.l.b16 %v568
      %v2105 = vunpack.c.l.b16 %v569
      %v2106 = vunpack.c.l.b16 %v570
      %v2107 = vunpack.c.l.b16 %v571
      %v2108 = vunpack.c.l.b16 %v572
      %v2109 = vunpack.c.l.b16 %v573
      %v2110 = vunpack.c.l.b16 %v574
      %v2111 = vunpack.c.l.b16 %v575
      %v2112 = vunpack.c.l.b16 %v576
      %v2113 = vunpack.c.l.b16 %v577
      %v2114 = vunpack.c.l.b16 %v578
      %v2115 = vunpack.c.l.b16 %v579
      %v2116 = vunpack.c.l.b16 %v580
      %v2117 = vunpack.c.l.b16 %v581
      %v2118 = vunpack.c.l.b16 %v582
      %v2119 = vunpack.c.l.b16 %v583
      %v2120 = vunpack.c.l.b16 %v584
      %v2121 = vunpack.c.l.b16 %v585
      %v2122 = vunpack.c.l.b16 %v586
      %v2123 = vunpack.c.l.b16 %v587
      %v2124 = vpack.c.b16 %v1997, %v1996
      %v2125 = vpack.c.b16 %v1999, %v1998
      %v2126 = vpack.c.b16 %v2001, %v2000
      %v2127 = vpack.c.b16 %v2003, %v2002
      %v2128 = vpack.c.b16 %v2005, %v2004
      %v2129 = vpack.c.b16 %v2007, %v2006
      %v2130 = vpack.c.b16 %v2009, %v2008
      %v2131 = vpack.c.b16 %v2011, %v2010
      %v2132 = vpack.c.b16 %v2013, %v2012
      %v2133 = vpack.c.b16 %v2015, %v2014
      %v2134 = vpack.c.b16 %v2017, %v2016
      %v2135 = vpack.c.b16 %v2019, %v2018
      %v2136 = vpack.c.b16 %v2021, %v2020
      %v2137 = vpack.c.b16 %v2023, %v2022
      %v2138 = vpack.c.b16 %v2025, %v2024
      %v2139 = vpack.c.b16 %v2027, %v2026
      %v2140 = vpack.c.b16 %v2029, %v2028
      %v2141 = vpack.c.b16 %v2031, %v2030
      %v2142 = vpack.c.b16 %v2033, %v2032
      %v2143 = vpack.c.b16 %v2035, %v2034
      %v2144 = vpack.c.b16 %v2037, %v2036
      %v2145 = vpack.c.b16 %v2039, %v2038
      %v2146 = vpack.c.b16 %v2041, %v2040
      %v2147 = vpack.c.b16 %v2043, %v2042
      %v2148 = vpack.c.b16 %v2045, %v2044
      %v2149 = vpack.c.b16 %v2047, %v2046
      %v2150 = vpack.c.b16 %v2049, %v2048
      %v2151 = vpack.c.b16 %v2051, %v2050
      %v2152 = vpack.c.b16 %v2053, %v2052
      %v2153 = vpack.c.b16 %v2055, %v2054
      %v2154 = vpack.c.b16 %v2057, %v2056
      %v2155 = vpack.c.b16 %v2059, %v2058
      %v2156 = vpack.c.b16 %v2061, %v2060
      %v2157 = vpack.c.b16 %v2063, %v2062
      %v2158 = vpack.c.b16 %v2065, %v2064
      %v2159 = vpack.c.b16 %v2067, %v2066
      %v2160 = vpack.c.b16 %v2069, %v2068
      %v2161 = vpack.c.b16 %v2071, %v2070
      %v2162 = vpack.c.b16 %v2073, %v2072
      %v2163 = vpack.c.b16 %v2075, %v2074
      %v2164 = vpack.c.b16 %v2077, %v2076
      %v2165 = vpack.c.b16 %v2079, %v2078
      %v2166 = vpack.c.b16 %v2081, %v2080
      %v2167 = vpack.c.b16 %v2083, %v2082
      %v2168 = vpack.c.b16 %v2085, %v2084
      %v2169 = vpack.c.b16 %v2087, %v2086
      %v2170 = vpack.c.b16 %v2089, %v2088
      %v2171 = vpack.c.b16 %v2091, %v2090
      %v2172 = vpack.c.b16 %v2093, %v2092
      %v2173 = vpack.c.b16 %v2095, %v2094
      %v2174 = vpack.c.b16 %v2097, %v2096
      %v2175 = vpack.c.b16 %v2099, %v2098
      %v2176 = vpack.c.b16 %v2101, %v2100
      %v2177 = vpack.c.b16 %v2103, %v2102
      %v2178 = vpack.c.b16 %v2105, %v2104
      %v2179 = vpack.c.b16 %v2107, %v2106
      %v2180 = vpack.c.b16 %v2109, %v2108
      %v2181 = vpack.c.b16 %v2111, %v2110
      %v2182 = vpack.c.b16 %v2113, %v2112
      %v2183 = vpack.c.b16 %v2115, %v2114
      %v2184 = vpack.c.b16 %v2117, %v2116
      %v2185 = vpack.c.b16 %v2119, %v2118
      %v2186 = vpack.c.b16 %v2121, %v2120
      %v2187 = vpack.c.b16 %v2123, %v2122
      %2252 = vmatpush.bf16.msra.mxu0 %v2131
      %2253 = vmatpush.bf16.msra.mxu0 %v2130
      %2254 = vmatpush.bf16.msra.mxu0 %v2129
      %2255 = vmatpush.bf16.msra.mxu0 %v2128
      %2256 = vmatpush.bf16.msra.mxu0 %v2127
      %2257 = vmatpush.bf16.msra.mxu0 %v2126
      %2258 = vmatpush.bf16.msra.mxu0 %v2125
      %2259 = vmatpush.bf16.msra.mxu0 %v2124
      %2260 = vmatmul.bf16.gmra.mxu0 %v1356
      %v2261 = vpop.f32.mrf.mxu0
      %v2262 = vadd.f32 0.0, %v2261
      %v2263 = vpop.f32.mrf.mxu0
      %v2264 = vadd.f32 0.0, %v2263
      %2265 = vmatmul.bf16.gmra.mxu0 %v1364
      %v2266 = vpop.f32.mrf.mxu0
      %v2267 = vadd.f32 0.0, %v2266
      %v2268 = vpop.f32.mrf.mxu0
      %v2269 = vadd.f32 0.0, %v2268
      %2270 = vmatmul.bf16.gmra.mxu0 %v1372
      %v2271 = vpop.f32.mrf.mxu0
      %v2272 = vadd.f32 0.0, %v2271
      %v2273 = vpop.f32.mrf.mxu0
      %v2274 = vadd.f32 0.0, %v2273
      %2275 = vmatmul.bf16.gmra.mxu0 %v1380
      %v2276 = vpop.f32.mrf.mxu0
      %v2277 = vadd.f32 0.0, %v2276
      %v2278 = vpop.f32.mrf.mxu0
      %v2279 = vadd.f32 0.0, %v2278
      %2280 = vmatmul.bf16.gmra.mxu0 %v1388
      %v2281 = vpop.f32.mrf.mxu0
      %v2282 = vadd.f32 0.0, %v2281
      %v2283 = vpop.f32.mrf.mxu0
      %v2284 = vadd.f32 0.0, %v2283
      %2285 = vmatmul.bf16.gmra.mxu0 %v1396
      %v2286 = vpop.f32.mrf.mxu0
      %v2287 = vadd.f32 0.0, %v2286
      %v2288 = vpop.f32.mrf.mxu0
      %v2289 = vadd.f32 0.0, %v2288
      %2290 = vmatmul.bf16.gmra.mxu0 %v1404
      %v2291 = vpop.f32.mrf.mxu0
      %v2292 = vadd.f32 0.0, %v2291
      %v2293 = vpop.f32.mrf.mxu0
      %v2294 = vadd.f32 0.0, %v2293
      %2295 = vmatmul.bf16.gmra.mxu0 %v1412
      %v2296 = vpop.f32.mrf.mxu0
      %v2297 = vadd.f32 0.0, %v2296
      %v2298 = vpop.f32.mrf.mxu0
      %v2299 = vadd.f32 0.0, %v2298
      %2300 = vmatmul.bf16.gmra.mxu0 %v1420
      %v2301 = vpop.f32.mrf.mxu0
      %v2302 = vadd.f32 0.0, %v2301
      %v2303 = vpop.f32.mrf.mxu0
      %v2304 = vadd.f32 0.0, %v2303
      %2305 = vmatmul.bf16.gmra.mxu0 %v1428
      %v2306 = vpop.f32.mrf.mxu0
      %v2307 = vadd.f32 0.0, %v2306
      %v2308 = vpop.f32.mrf.mxu0
      %v2309 = vadd.f32 0.0, %v2308
      %2310 = vmatmul.bf16.gmra.mxu0 %v1436
      %v2311 = vpop.f32.mrf.mxu0
      %v2312 = vadd.f32 0.0, %v2311
      %v2313 = vpop.f32.mrf.mxu0
      %v2314 = vadd.f32 0.0, %v2313
      %2315 = vmatmul.bf16.gmra.mxu0 %v1444
      %v2316 = vpop.f32.mrf.mxu0
      %v2317 = vadd.f32 0.0, %v2316
      %v2318 = vpop.f32.mrf.mxu0
      %v2319 = vadd.f32 0.0, %v2318
      %2320 = vmatmul.bf16.gmra.mxu0 %v1452
      %v2321 = vpop.f32.mrf.mxu0
      %v2322 = vadd.f32 0.0, %v2321
      %v2323 = vpop.f32.mrf.mxu0
      %v2324 = vadd.f32 0.0, %v2323
      %2325 = vmatmul.bf16.gmra.mxu0 %v1460
      %v2326 = vpop.f32.mrf.mxu0
      %v2327 = vadd.f32 0.0, %v2326
      %v2328 = vpop.f32.mrf.mxu0
      %v2329 = vadd.f32 0.0, %v2328
      %2330 = vmatmul.bf16.gmra.mxu0 %v1468
      %v2331 = vpop.f32.mrf.mxu0
      %v2332 = vadd.f32 0.0, %v2331
      %v2333 = vpop.f32.mrf.mxu0
      %v2334 = vadd.f32 0.0, %v2333
      %2335 = vmatmul.bf16.gmra.mxu0 %v1476
      %v2336 = vpop.f32.mrf.mxu0
      %v2337 = vadd.f32 0.0, %v2336
      %v2338 = vpop.f32.mrf.mxu0
      %v2339 = vadd.f32 0.0, %v2338
      %2340 = vmatmul.bf16.gmra.mxu0 %v1484
      %v2341 = vpop.f32.mrf.mxu0
      %v2342 = vadd.f32 0.0, %v2341
      %v2343 = vpop.f32.mrf.mxu0
      %v2344 = vadd.f32 0.0, %v2343
      %2345 = vmatmul.bf16.gmra.mxu0 %v1492
      %v2346 = vpop.f32.mrf.mxu0
      %v2347 = vadd.f32 0.0, %v2346
      %v2348 = vpop.f32.mrf.mxu0
      %v2349 = vadd.f32 0.0, %v2348
      %2350 = vmatmul.bf16.gmra.mxu0 %v1500
      %v2351 = vpop.f32.mrf.mxu0
      %v2352 = vadd.f32 0.0, %v2351
      %v2353 = vpop.f32.mrf.mxu0
      %v2354 = vadd.f32 0.0, %v2353
      %2355 = vmatmul.bf16.gmra.mxu0 %v1508
      %v2356 = vpop.f32.mrf.mxu0
      %v2357 = vadd.f32 0.0, %v2356
      %v2358 = vpop.f32.mrf.mxu0
      %v2359 = vadd.f32 0.0, %v2358
      %2360 = vmatmul.bf16.gmra.mxu0 %v1516
      %v2361 = vpop.f32.mrf.mxu0
      %v2362 = vadd.f32 0.0, %v2361
      %v2363 = vpop.f32.mrf.mxu0
      %v2364 = vadd.f32 0.0, %v2363
      %2365 = vmatmul.bf16.gmra.mxu0 %v1524
      %v2366 = vpop.f32.mrf.mxu0
      %v2367 = vadd.f32 0.0, %v2366
      %v2368 = vpop.f32.mrf.mxu0
      %v2369 = vadd.f32 0.0, %v2368
      %2370 = vmatmul.bf16.gmra.mxu0 %v1532
      %v2371 = vpop.f32.mrf.mxu0
      %v2372 = vadd.f32 0.0, %v2371
      %v2373 = vpop.f32.mrf.mxu0
      %v2374 = vadd.f32 0.0, %v2373
      %2375 = vmatmul.bf16.gmra.mxu0 %v1540
      %v2376 = vpop.f32.mrf.mxu0
      %v2377 = vadd.f32 0.0, %v2376
      %v2378 = vpop.f32.mrf.mxu0
      %v2379 = vadd.f32 0.0, %v2378
      %2380 = vmatmul.bf16.gmra.mxu0 %v1548
      %v2381 = vpop.f32.mrf.mxu0
      %v2382 = vadd.f32 0.0, %v2381
      %v2383 = vpop.f32.mrf.mxu0
      %v2384 = vadd.f32 0.0, %v2383
      %2385 = vmatmul.bf16.gmra.mxu0 %v1556
      %v2386 = vpop.f32.mrf.mxu0
      %v2387 = vadd.f32 0.0, %v2386
      %v2388 = vpop.f32.mrf.mxu0
      %v2389 = vadd.f32 0.0, %v2388
      %2390 = vmatmul.bf16.gmra.mxu0 %v1564
      %v2391 = vpop.f32.mrf.mxu0
      %v2392 = vadd.f32 0.0, %v2391
      %v2393 = vpop.f32.mrf.mxu0
      %v2394 = vadd.f32 0.0, %v2393
      %2395 = vmatmul.bf16.gmra.mxu0 %v1572
      %v2396 = vpop.f32.mrf.mxu0
      %v2397 = vadd.f32 0.0, %v2396
      %v2398 = vpop.f32.mrf.mxu0
      %v2399 = vadd.f32 0.0, %v2398
      %2400 = vmatmul.bf16.gmra.mxu0 %v1580
      %v2401 = vpop.f32.mrf.mxu0
      %v2402 = vadd.f32 0.0, %v2401
      %v2403 = vpop.f32.mrf.mxu0
      %v2404 = vadd.f32 0.0, %v2403
      %2405 = vmatmul.bf16.gmra.mxu0 %v1588
      %v2406 = vpop.f32.mrf.mxu0
      %v2407 = vadd.f32 0.0, %v2406
      %v2408 = vpop.f32.mrf.mxu0
      %v2409 = vadd.f32 0.0, %v2408
      %2410 = vmatmul.bf16.gmra.mxu0 %v1596
      %v2411 = vpop.f32.mrf.mxu0
      %v2412 = vadd.f32 0.0, %v2411
      %v2413 = vpop.f32.mrf.mxu0
      %v2414 = vadd.f32 0.0, %v2413
      %2415 = vmatmul.bf16.gmra.mxu0 %v1604
      %v2416 = vpop.f32.mrf.mxu0
      %v2417 = vadd.f32 0.0, %v2416
      %v2418 = vpop.f32.mrf.mxu0
      %v2419 = vadd.f32 0.0, %v2418
      %2420 = vdwg.mxu0
      %2421 = vmatpush.bf16.msra.mxu0 %v2139
      %2422 = vmatpush.bf16.msra.mxu0 %v2138
      %2423 = vmatpush.bf16.msra.mxu0 %v2137
      %2424 = vmatpush.bf16.msra.mxu0 %v2136
      %2425 = vmatpush.bf16.msra.mxu0 %v2135
      %2426 = vmatpush.bf16.msra.mxu0 %v2134
      %2427 = vmatpush.bf16.msra.mxu0 %v2133
      %2428 = vmatpush.bf16.msra.mxu0 %v2132
      %2429 = vmatmul.bf16.gmra.mxu0 %v1357
      %v2430 = vpop.f32.mrf.mxu0
      %v2431 = vadd.f32 %v2262, %v2430
      %v2432 = vpop.f32.mrf.mxu0
      %v2433 = vadd.f32 %v2264, %v2432
      %2434 = vmatmul.bf16.gmra.mxu0 %v1365
      %v2435 = vpop.f32.mrf.mxu0
      %v2436 = vadd.f32 %v2267, %v2435
      %v2437 = vpop.f32.mrf.mxu0
      %v2438 = vadd.f32 %v2269, %v2437
      %2439 = vmatmul.bf16.gmra.mxu0 %v1373
      %v2440 = vpop.f32.mrf.mxu0
      %v2441 = vadd.f32 %v2272, %v2440
      %v2442 = vpop.f32.mrf.mxu0
      %v2443 = vadd.f32 %v2274, %v2442
      %2444 = vmatmul.bf16.gmra.mxu0 %v1381
      %v2445 = vpop.f32.mrf.mxu0
      %v2446 = vadd.f32 %v2277, %v2445
      %v2447 = vpop.f32.mrf.mxu0
      %v2448 = vadd.f32 %v2279, %v2447
      %2449 = vmatmul.bf16.gmra.mxu0 %v1389
      %v2450 = vpop.f32.mrf.mxu0
      %v2451 = vadd.f32 %v2282, %v2450
      %v2452 = vpop.f32.mrf.mxu0
      %v2453 = vadd.f32 %v2284, %v2452
      %2454 = vmatmul.bf16.gmra.mxu0 %v1397
      %v2455 = vpop.f32.mrf.mxu0
      %v2456 = vadd.f32 %v2287, %v2455
      %v2457 = vpop.f32.mrf.mxu0
      %v2458 = vadd.f32 %v2289, %v2457
      %2459 = vmatmul.bf16.gmra.mxu0 %v1405
      %v2460 = vpop.f32.mrf.mxu0
      %v2461 = vadd.f32 %v2292, %v2460
      %v2462 = vpop.f32.mrf.mxu0
      %v2463 = vadd.f32 %v2294, %v2462
      %2464 = vmatmul.bf16.gmra.mxu0 %v1413
      %v2465 = vpop.f32.mrf.mxu0
      %v2466 = vadd.f32 %v2297, %v2465
      %v2467 = vpop.f32.mrf.mxu0
      %v2468 = vadd.f32 %v2299, %v2467
      %2469 = vmatmul.bf16.gmra.mxu0 %v1421
      %v2470 = vpop.f32.mrf.mxu0
      %v2471 = vadd.f32 %v2302, %v2470
      %v2472 = vpop.f32.mrf.mxu0
      %v2473 = vadd.f32 %v2304, %v2472
      %2474 = vmatmul.bf16.gmra.mxu0 %v1429
      %v2475 = vpop.f32.mrf.mxu0
      %v2476 = vadd.f32 %v2307, %v2475
      %v2477 = vpop.f32.mrf.mxu0
      %v2478 = vadd.f32 %v2309, %v2477
      %2479 = vmatmul.bf16.gmra.mxu0 %v1437
      %v2480 = vpop.f32.mrf.mxu0
      %v2481 = vadd.f32 %v2312, %v2480
      %v2482 = vpop.f32.mrf.mxu0
      %v2483 = vadd.f32 %v2314, %v2482
      %2484 = vmatmul.bf16.gmra.mxu0 %v1445
      %v2485 = vpop.f32.mrf.mxu0
      %v2486 = vadd.f32 %v2317, %v2485
      %v2487 = vpop.f32.mrf.mxu0
      %v2488 = vadd.f32 %v2319, %v2487
      %2489 = vmatmul.bf16.gmra.mxu0 %v1453
      %v2490 = vpop.f32.mrf.mxu0
      %v2491 = vadd.f32 %v2322, %v2490
      %v2492 = vpop.f32.mrf.mxu0
      %v2493 = vadd.f32 %v2324, %v2492
      %2494 = vmatmul.bf16.gmra.mxu0 %v1461
      %v2495 = vpop.f32.mrf.mxu0
      %v2496 = vadd.f32 %v2327, %v2495
      %v2497 = vpop.f32.mrf.mxu0
      %v2498 = vadd.f32 %v2329, %v2497
      %2499 = vmatmul.bf16.gmra.mxu0 %v1469
      %v2500 = vpop.f32.mrf.mxu0
      %v2501 = vadd.f32 %v2332, %v2500
      %v2502 = vpop.f32.mrf.mxu0
      %v2503 = vadd.f32 %v2334, %v2502
      %2504 = vmatmul.bf16.gmra.mxu0 %v1477
      %v2505 = vpop.f32.mrf.mxu0
      %v2506 = vadd.f32 %v2337, %v2505
      %v2507 = vpop.f32.mrf.mxu0
      %v2508 = vadd.f32 %v2339, %v2507
      %2509 = vmatmul.bf16.gmra.mxu0 %v1485
      %v2510 = vpop.f32.mrf.mxu0
      %v2511 = vadd.f32 %v2342, %v2510
      %v2512 = vpop.f32.mrf.mxu0
      %v2513 = vadd.f32 %v2344, %v2512
      %2514 = vmatmul.bf16.gmra.mxu0 %v1493
      %v2515 = vpop.f32.mrf.mxu0
      %v2516 = vadd.f32 %v2347, %v2515
      %v2517 = vpop.f32.mrf.mxu0
      %v2518 = vadd.f32 %v2349, %v2517
      %2519 = vmatmul.bf16.gmra.mxu0 %v1501
      %v2520 = vpop.f32.mrf.mxu0
      %v2521 = vadd.f32 %v2352, %v2520
      %v2522 = vpop.f32.mrf.mxu0
      %v2523 = vadd.f32 %v2354, %v2522
      %2524 = vmatmul.bf16.gmra.mxu0 %v1509
      %v2525 = vpop.f32.mrf.mxu0
      %v2526 = vadd.f32 %v2357, %v2525
      %v2527 = vpop.f32.mrf.mxu0
      %v2528 = vadd.f32 %v2359, %v2527
      %2529 = vmatmul.bf16.gmra.mxu0 %v1517
      %v2530 = vpop.f32.mrf.mxu0
      %v2531 = vadd.f32 %v2362, %v2530
      %v2532 = vpop.f32.mrf.mxu0
      %v2533 = vadd.f32 %v2364, %v2532
      %2534 = vmatmul.bf16.gmra.mxu0 %v1525
      %v2535 = vpop.f32.mrf.mxu0
      %v2536 = vadd.f32 %v2367, %v2535
      %v2537 = vpop.f32.mrf.mxu0
      %v2538 = vadd.f32 %v2369, %v2537
      %2539 = vmatmul.bf16.gmra.mxu0 %v1533
      %v2540 = vpop.f32.mrf.mxu0
      %v2541 = vadd.f32 %v2372, %v2540
      %v2542 = vpop.f32.mrf.mxu0
      %v2543 = vadd.f32 %v2374, %v2542
      %2544 = vmatmul.bf16.gmra.mxu0 %v1541
      %v2545 = vpop.f32.mrf.mxu0
      %v2546 = vadd.f32 %v2377, %v2545
      %v2547 = vpop.f32.mrf.mxu0
      %v2548 = vadd.f32 %v2379, %v2547
      %2549 = vmatmul.bf16.gmra.mxu0 %v1549
      %v2550 = vpop.f32.mrf.mxu0
      %v2551 = vadd.f32 %v2382, %v2550
      %v2552 = vpop.f32.mrf.mxu0
      %v2553 = vadd.f32 %v2384, %v2552
      %2554 = vmatmul.bf16.gmra.mxu0 %v1557
      %v2555 = vpop.f32.mrf.mxu0
      %v2556 = vadd.f32 %v2387, %v2555
      %v2557 = vpop.f32.mrf.mxu0
      %v2558 = vadd.f32 %v2389, %v2557
      %2559 = vmatmul.bf16.gmra.mxu0 %v1565
      %v2560 = vpop.f32.mrf.mxu0
      %v2561 = vadd.f32 %v2392, %v2560
      %v2562 = vpop.f32.mrf.mxu0
      %v2563 = vadd.f32 %v2394, %v2562
      %2564 = vmatmul.bf16.gmra.mxu0 %v1573
      %v2565 = vpop.f32.mrf.mxu0
      %v2566 = vadd.f32 %v2397, %v2565
      %v2567 = vpop.f32.mrf.mxu0
      %v2568 = vadd.f32 %v2399, %v2567
      %2569 = vmatmul.bf16.gmra.mxu0 %v1581
      %v2570 = vpop.f32.mrf.mxu0
      %v2571 = vadd.f32 %v2402, %v2570
      %v2572 = vpop.f32.mrf.mxu0
      %v2573 = vadd.f32 %v2404, %v2572
      %2574 = vmatmul.bf16.gmra.mxu0 %v1589
      %v2575 = vpop.f32.mrf.mxu0
      %v2576 = vadd.f32 %v2407, %v2575
      %v2577 = vpop.f32.mrf.mxu0
      %v2578 = vadd.f32 %v2409, %v2577
      %2579 = vmatmul.bf16.gmra.mxu0 %v1597
      %v2580 = vpop.f32.mrf.mxu0
      %v2581 = vadd.f32 %v2412, %v2580
      %v2582 = vpop.f32.mrf.mxu0
      %v2583 = vadd.f32 %v2414, %v2582
      %2584 = vmatmul.bf16.gmra.mxu0 %v1605
      %v2585 = vpop.f32.mrf.mxu0
      %v2586 = vadd.f32 %v2417, %v2585
      %v2587 = vpop.f32.mrf.mxu0
      %v2588 = vadd.f32 %v2419, %v2587
      %2589 = vdwg.mxu0
      %2590 = vmatpush.bf16.msra.mxu0 %v2147
      %2591 = vmatpush.bf16.msra.mxu0 %v2146
      %2592 = vmatpush.bf16.msra.mxu0 %v2145
      %2593 = vmatpush.bf16.msra.mxu0 %v2144
      %2594 = vmatpush.bf16.msra.mxu0 %v2143
      %2595 = vmatpush.bf16.msra.mxu0 %v2142
      %2596 = vmatpush.bf16.msra.mxu0 %v2141
      %2597 = vmatpush.bf16.msra.mxu0 %v2140
      %2598 = vmatmul.bf16.gmra.mxu0 %v1358
      %v2599 = vpop.f32.mrf.mxu0
      %v2600 = vadd.f32 %v2431, %v2599
      %v2601 = vpop.f32.mrf.mxu0
      %v2602 = vadd.f32 %v2433, %v2601
      %2603 = vmatmul.bf16.gmra.mxu0 %v1366
      %v2604 = vpop.f32.mrf.mxu0
      %v2605 = vadd.f32 %v2436, %v2604
      %v2606 = vpop.f32.mrf.mxu0
      %v2607 = vadd.f32 %v2438, %v2606
      %2608 = vmatmul.bf16.gmra.mxu0 %v1374
      %v2609 = vpop.f32.mrf.mxu0
      %v2610 = vadd.f32 %v2441, %v2609
      %v2611 = vpop.f32.mrf.mxu0
      %v2612 = vadd.f32 %v2443, %v2611
      %2613 = vmatmul.bf16.gmra.mxu0 %v1382
      %v2614 = vpop.f32.mrf.mxu0
      %v2615 = vadd.f32 %v2446, %v2614
      %v2616 = vpop.f32.mrf.mxu0
      %v2617 = vadd.f32 %v2448, %v2616
      %2618 = vmatmul.bf16.gmra.mxu0 %v1390
      %v2619 = vpop.f32.mrf.mxu0
      %v2620 = vadd.f32 %v2451, %v2619
      %v2621 = vpop.f32.mrf.mxu0
      %v2622 = vadd.f32 %v2453, %v2621
      %2623 = vmatmul.bf16.gmra.mxu0 %v1398
      %v2624 = vpop.f32.mrf.mxu0
      %v2625 = vadd.f32 %v2456, %v2624
      %v2626 = vpop.f32.mrf.mxu0
      %v2627 = vadd.f32 %v2458, %v2626
      %2628 = vmatmul.bf16.gmra.mxu0 %v1406
      %v2629 = vpop.f32.mrf.mxu0
      %v2630 = vadd.f32 %v2461, %v2629
      %v2631 = vpop.f32.mrf.mxu0
      %v2632 = vadd.f32 %v2463, %v2631
      %2633 = vmatmul.bf16.gmra.mxu0 %v1414
      %v2634 = vpop.f32.mrf.mxu0
      %v2635 = vadd.f32 %v2466, %v2634
      %v2636 = vpop.f32.mrf.mxu0
      %v2637 = vadd.f32 %v2468, %v2636
      %2638 = vmatmul.bf16.gmra.mxu0 %v1422
      %v2639 = vpop.f32.mrf.mxu0
      %v2640 = vadd.f32 %v2471, %v2639
      %v2641 = vpop.f32.mrf.mxu0
      %v2642 = vadd.f32 %v2473, %v2641
      %2643 = vmatmul.bf16.gmra.mxu0 %v1430
      %v2644 = vpop.f32.mrf.mxu0
      %v2645 = vadd.f32 %v2476, %v2644
      %v2646 = vpop.f32.mrf.mxu0
      %v2647 = vadd.f32 %v2478, %v2646
      %2648 = vmatmul.bf16.gmra.mxu0 %v1438
      %v2649 = vpop.f32.mrf.mxu0
      %v2650 = vadd.f32 %v2481, %v2649
      %v2651 = vpop.f32.mrf.mxu0
      %v2652 = vadd.f32 %v2483, %v2651
      %2653 = vmatmul.bf16.gmra.mxu0 %v1446
      %v2654 = vpop.f32.mrf.mxu0
      %v2655 = vadd.f32 %v2486, %v2654
      %v2656 = vpop.f32.mrf.mxu0
      %v2657 = vadd.f32 %v2488, %v2656
      %2658 = vmatmul.bf16.gmra.mxu0 %v1454
      %v2659 = vpop.f32.mrf.mxu0
      %v2660 = vadd.f32 %v2491, %v2659
      %v2661 = vpop.f32.mrf.mxu0
      %v2662 = vadd.f32 %v2493, %v2661
      %2663 = vmatmul.bf16.gmra.mxu0 %v1462
      %v2664 = vpop.f32.mrf.mxu0
      %v2665 = vadd.f32 %v2496, %v2664
      %v2666 = vpop.f32.mrf.mxu0
      %v2667 = vadd.f32 %v2498, %v2666
      %2668 = vmatmul.bf16.gmra.mxu0 %v1470
      %v2669 = vpop.f32.mrf.mxu0
      %v2670 = vadd.f32 %v2501, %v2669
      %v2671 = vpop.f32.mrf.mxu0
      %v2672 = vadd.f32 %v2503, %v2671
      %2673 = vmatmul.bf16.gmra.mxu0 %v1478
      %v2674 = vpop.f32.mrf.mxu0
      %v2675 = vadd.f32 %v2506, %v2674
      %v2676 = vpop.f32.mrf.mxu0
      %v2677 = vadd.f32 %v2508, %v2676
      %2678 = vmatmul.bf16.gmra.mxu0 %v1486
      %v2679 = vpop.f32.mrf.mxu0
      %v2680 = vadd.f32 %v2511, %v2679
      %v2681 = vpop.f32.mrf.mxu0
      %v2682 = vadd.f32 %v2513, %v2681
      %2683 = vmatmul.bf16.gmra.mxu0 %v1494
      %v2684 = vpop.f32.mrf.mxu0
      %v2685 = vadd.f32 %v2516, %v2684
      %v2686 = vpop.f32.mrf.mxu0
      %v2687 = vadd.f32 %v2518, %v2686
      %2688 = vmatmul.bf16.gmra.mxu0 %v1502
      %v2689 = vpop.f32.mrf.mxu0
      %v2690 = vadd.f32 %v2521, %v2689
      %v2691 = vpop.f32.mrf.mxu0
      %v2692 = vadd.f32 %v2523, %v2691
      %2693 = vmatmul.bf16.gmra.mxu0 %v1510
      %v2694 = vpop.f32.mrf.mxu0
      %v2695 = vadd.f32 %v2526, %v2694
      %v2696 = vpop.f32.mrf.mxu0
      %v2697 = vadd.f32 %v2528, %v2696
      %2698 = vmatmul.bf16.gmra.mxu0 %v1518
      %v2699 = vpop.f32.mrf.mxu0
      %v2700 = vadd.f32 %v2531, %v2699
      %v2701 = vpop.f32.mrf.mxu0
      %v2702 = vadd.f32 %v2533, %v2701
      %2703 = vmatmul.bf16.gmra.mxu0 %v1526
      %v2704 = vpop.f32.mrf.mxu0
      %v2705 = vadd.f32 %v2536, %v2704
      %v2706 = vpop.f32.mrf.mxu0
      %v2707 = vadd.f32 %v2538, %v2706
      %2708 = vmatmul.bf16.gmra.mxu0 %v1534
      %v2709 = vpop.f32.mrf.mxu0
      %v2710 = vadd.f32 %v2541, %v2709
      %v2711 = vpop.f32.mrf.mxu0
      %v2712 = vadd.f32 %v2543, %v2711
      %2713 = vmatmul.bf16.gmra.mxu0 %v1542
      %v2714 = vpop.f32.mrf.mxu0
      %v2715 = vadd.f32 %v2546, %v2714
      %v2716 = vpop.f32.mrf.mxu0
      %v2717 = vadd.f32 %v2548, %v2716
      %2718 = vmatmul.bf16.gmra.mxu0 %v1550
      %v2719 = vpop.f32.mrf.mxu0
      %v2720 = vadd.f32 %v2551, %v2719
      %v2721 = vpop.f32.mrf.mxu0
      %v2722 = vadd.f32 %v2553, %v2721
      %2723 = vmatmul.bf16.gmra.mxu0 %v1558
      %v2724 = vpop.f32.mrf.mxu0
      %v2725 = vadd.f32 %v2556, %v2724
      %v2726 = vpop.f32.mrf.mxu0
      %v2727 = vadd.f32 %v2558, %v2726
      %2728 = vmatmul.bf16.gmra.mxu0 %v1566
      %v2729 = vpop.f32.mrf.mxu0
      %v2730 = vadd.f32 %v2561, %v2729
      %v2731 = vpop.f32.mrf.mxu0
      %v2732 = vadd.f32 %v2563, %v2731
      %2733 = vmatmul.bf16.gmra.mxu0 %v1574
      %v2734 = vpop.f32.mrf.mxu0
      %v2735 = vadd.f32 %v2566, %v2734
      %v2736 = vpop.f32.mrf.mxu0
      %v2737 = vadd.f32 %v2568, %v2736
      %2738 = vmatmul.bf16.gmra.mxu0 %v1582
      %v2739 = vpop.f32.mrf.mxu0
      %v2740 = vadd.f32 %v2571, %v2739
      %v2741 = vpop.f32.mrf.mxu0
      %v2742 = vadd.f32 %v2573, %v2741
      %2743 = vmatmul.bf16.gmra.mxu0 %v1590
      %v2744 = vpop.f32.mrf.mxu0
      %v2745 = vadd.f32 %v2576, %v2744
      %v2746 = vpop.f32.mrf.mxu0
      %v2747 = vadd.f32 %v2578, %v2746
      %2748 = vmatmul.bf16.gmra.mxu0 %v1598
      %v2749 = vpop.f32.mrf.mxu0
      %v2750 = vadd.f32 %v2581, %v2749
      %v2751 = vpop.f32.mrf.mxu0
      %v2752 = vadd.f32 %v2583, %v2751
      %2753 = vmatmul.bf16.gmra.mxu0 %v1606
      %v2754 = vpop.f32.mrf.mxu0
      %v2755 = vadd.f32 %v2586, %v2754
      %v2756 = vpop.f32.mrf.mxu0
      %v2757 = vadd.f32 %v2588, %v2756
      %2758 = vdwg.mxu0
      %2759 = vmatpush.bf16.msra.mxu0 %v2155
      %2760 = vmatpush.bf16.msra.mxu0 %v2154
      %2761 = vmatpush.bf16.msra.mxu0 %v2153
      %2762 = vmatpush.bf16.msra.mxu0 %v2152
      %2763 = vmatpush.bf16.msra.mxu0 %v2151
      %2764 = vmatpush.bf16.msra.mxu0 %v2150
      %2765 = vmatpush.bf16.msra.mxu0 %v2149
      %2766 = vmatpush.bf16.msra.mxu0 %v2148
      %2767 = vmatmul.bf16.gmra.mxu0 %v1359
      %v2768 = vpop.f32.mrf.mxu0
      %v2769 = vadd.f32 %v2600, %v2768
      %v2770 = vpop.f32.mrf.mxu0
      %v2771 = vadd.f32 %v2602, %v2770
      %2772 = vmatmul.bf16.gmra.mxu0 %v1367
      %v2773 = vpop.f32.mrf.mxu0
      %v2774 = vadd.f32 %v2605, %v2773
      %v2775 = vpop.f32.mrf.mxu0
      %v2776 = vadd.f32 %v2607, %v2775
      %2777 = vmatmul.bf16.gmra.mxu0 %v1375
      %v2778 = vpop.f32.mrf.mxu0
      %v2779 = vadd.f32 %v2610, %v2778
      %v2780 = vpop.f32.mrf.mxu0
      %v2781 = vadd.f32 %v2612, %v2780
      %2782 = vmatmul.bf16.gmra.mxu0 %v1383
      %v2783 = vpop.f32.mrf.mxu0
      %v2784 = vadd.f32 %v2615, %v2783
      %v2785 = vpop.f32.mrf.mxu0
      %v2786 = vadd.f32 %v2617, %v2785
      %2787 = vmatmul.bf16.gmra.mxu0 %v1391
      %v2788 = vpop.f32.mrf.mxu0
      %v2789 = vadd.f32 %v2620, %v2788
      %v2790 = vpop.f32.mrf.mxu0
      %v2791 = vadd.f32 %v2622, %v2790
      %2792 = vmatmul.bf16.gmra.mxu0 %v1399
      %v2793 = vpop.f32.mrf.mxu0
      %v2794 = vadd.f32 %v2625, %v2793
      %v2795 = vpop.f32.mrf.mxu0
      %v2796 = vadd.f32 %v2627, %v2795
      %2797 = vmatmul.bf16.gmra.mxu0 %v1407
      %v2798 = vpop.f32.mrf.mxu0
      %v2799 = vadd.f32 %v2630, %v2798
      %v2800 = vpop.f32.mrf.mxu0
      %v2801 = vadd.f32 %v2632, %v2800
      %2802 = vmatmul.bf16.gmra.mxu0 %v1415
      %v2803 = vpop.f32.mrf.mxu0
      %v2804 = vadd.f32 %v2635, %v2803
      %v2805 = vpop.f32.mrf.mxu0
      %v2806 = vadd.f32 %v2637, %v2805
      %2807 = vmatmul.bf16.gmra.mxu0 %v1423
      %v2808 = vpop.f32.mrf.mxu0
      %v2809 = vadd.f32 %v2640, %v2808
      %v2810 = vpop.f32.mrf.mxu0
      %v2811 = vadd.f32 %v2642, %v2810
      %2812 = vmatmul.bf16.gmra.mxu0 %v1431
      %v2813 = vpop.f32.mrf.mxu0
      %v2814 = vadd.f32 %v2645, %v2813
      %v2815 = vpop.f32.mrf.mxu0
      %v2816 = vadd.f32 %v2647, %v2815
      %2817 = vmatmul.bf16.gmra.mxu0 %v1439
      %v2818 = vpop.f32.mrf.mxu0
      %v2819 = vadd.f32 %v2650, %v2818
      %v2820 = vpop.f32.mrf.mxu0
      %v2821 = vadd.f32 %v2652, %v2820
      %2822 = vmatmul.bf16.gmra.mxu0 %v1447
      %v2823 = vpop.f32.mrf.mxu0
      %v2824 = vadd.f32 %v2655, %v2823
      %v2825 = vpop.f32.mrf.mxu0
      %v2826 = vadd.f32 %v2657, %v2825
      %2827 = vmatmul.bf16.gmra.mxu0 %v1455
      %v2828 = vpop.f32.mrf.mxu0
      %v2829 = vadd.f32 %v2660, %v2828
      %v2830 = vpop.f32.mrf.mxu0
      %v2831 = vadd.f32 %v2662, %v2830
      %2832 = vmatmul.bf16.gmra.mxu0 %v1463
      %v2833 = vpop.f32.mrf.mxu0
      %v2834 = vadd.f32 %v2665, %v2833
      %v2835 = vpop.f32.mrf.mxu0
      %v2836 = vadd.f32 %v2667, %v2835
      %2837 = vmatmul.bf16.gmra.mxu0 %v1471
      %v2838 = vpop.f32.mrf.mxu0
      %v2839 = vadd.f32 %v2670, %v2838
      %v2840 = vpop.f32.mrf.mxu0
      %v2841 = vadd.f32 %v2672, %v2840
      %2842 = vmatmul.bf16.gmra.mxu0 %v1479
      %v2843 = vpop.f32.mrf.mxu0
      %v2844 = vadd.f32 %v2675, %v2843
      %v2845 = vpop.f32.mrf.mxu0
      %v2846 = vadd.f32 %v2677, %v2845
      %2847 = vmatmul.bf16.gmra.mxu0 %v1487
      %v2848 = vpop.f32.mrf.mxu0
      %v2849 = vadd.f32 %v2680, %v2848
      %v2850 = vpop.f32.mrf.mxu0
      %v2851 = vadd.f32 %v2682, %v2850
      %2852 = vmatmul.bf16.gmra.mxu0 %v1495
      %v2853 = vpop.f32.mrf.mxu0
      %v2854 = vadd.f32 %v2685, %v2853
      %v2855 = vpop.f32.mrf.mxu0
      %v2856 = vadd.f32 %v2687, %v2855
      %2857 = vmatmul.bf16.gmra.mxu0 %v1503
      %v2858 = vpop.f32.mrf.mxu0
      %v2859 = vadd.f32 %v2690, %v2858
      %v2860 = vpop.f32.mrf.mxu0
      %v2861 = vadd.f32 %v2692, %v2860
      %2862 = vmatmul.bf16.gmra.mxu0 %v1511
      %v2863 = vpop.f32.mrf.mxu0
      %v2864 = vadd.f32 %v2695, %v2863
      %v2865 = vpop.f32.mrf.mxu0
      %v2866 = vadd.f32 %v2697, %v2865
      %2867 = vmatmul.bf16.gmra.mxu0 %v1519
      %v2868 = vpop.f32.mrf.mxu0
      %v2869 = vadd.f32 %v2700, %v2868
      %v2870 = vpop.f32.mrf.mxu0
      %v2871 = vadd.f32 %v2702, %v2870
      %2872 = vmatmul.bf16.gmra.mxu0 %v1527
      %v2873 = vpop.f32.mrf.mxu0
      %v2874 = vadd.f32 %v2705, %v2873
      %v2875 = vpop.f32.mrf.mxu0
      %v2876 = vadd.f32 %v2707, %v2875
      %2877 = vmatmul.bf16.gmra.mxu0 %v1535
      %v2878 = vpop.f32.mrf.mxu0
      %v2879 = vadd.f32 %v2710, %v2878
      %v2880 = vpop.f32.mrf.mxu0
      %v2881 = vadd.f32 %v2712, %v2880
      %2882 = vmatmul.bf16.gmra.mxu0 %v1543
      %v2883 = vpop.f32.mrf.mxu0
      %v2884 = vadd.f32 %v2715, %v2883
      %v2885 = vpop.f32.mrf.mxu0
      %v2886 = vadd.f32 %v2717, %v2885
      %2887 = vmatmul.bf16.gmra.mxu0 %v1551
      %v2888 = vpop.f32.mrf.mxu0
      %v2889 = vadd.f32 %v2720, %v2888
      %v2890 = vpop.f32.mrf.mxu0
      %v2891 = vadd.f32 %v2722, %v2890
      %2892 = vmatmul.bf16.gmra.mxu0 %v1559
      %v2893 = vpop.f32.mrf.mxu0
      %v2894 = vadd.f32 %v2725, %v2893
      %v2895 = vpop.f32.mrf.mxu0
      %v2896 = vadd.f32 %v2727, %v2895
      %2897 = vmatmul.bf16.gmra.mxu0 %v1567
      %v2898 = vpop.f32.mrf.mxu0
      %v2899 = vadd.f32 %v2730, %v2898
      %v2900 = vpop.f32.mrf.mxu0
      %v2901 = vadd.f32 %v2732, %v2900
      %2902 = vmatmul.bf16.gmra.mxu0 %v1575
      %v2903 = vpop.f32.mrf.mxu0
      %v2904 = vadd.f32 %v2735, %v2903
      %v2905 = vpop.f32.mrf.mxu0
      %v2906 = vadd.f32 %v2737, %v2905
      %2907 = vmatmul.bf16.gmra.mxu0 %v1583
      %v2908 = vpop.f32.mrf.mxu0
      %v2909 = vadd.f32 %v2740, %v2908
      %v2910 = vpop.f32.mrf.mxu0
      %v2911 = vadd.f32 %v2742, %v2910
      %2912 = vmatmul.bf16.gmra.mxu0 %v1591
      %v2913 = vpop.f32.mrf.mxu0
      %v2914 = vadd.f32 %v2745, %v2913
      %v2915 = vpop.f32.mrf.mxu0
      %v2916 = vadd.f32 %v2747, %v2915
      %2917 = vmatmul.bf16.gmra.mxu0 %v1599
      %v2918 = vpop.f32.mrf.mxu0
      %v2919 = vadd.f32 %v2750, %v2918
      %v2920 = vpop.f32.mrf.mxu0
      %v2921 = vadd.f32 %v2752, %v2920
      %2922 = vmatmul.bf16.gmra.mxu0 %v1607
      %v2923 = vpop.f32.mrf.mxu0
      %v2924 = vadd.f32 %v2755, %v2923
      %v2925 = vpop.f32.mrf.mxu0
      %v2926 = vadd.f32 %v2757, %v2925
      %2927 = vdwg.mxu0
      %2928 = vmatpush.bf16.msra.mxu0 %v2163
      %2929 = vmatpush.bf16.msra.mxu0 %v2162
      %2930 = vmatpush.bf16.msra.mxu0 %v2161
      %2931 = vmatpush.bf16.msra.mxu0 %v2160
      %2932 = vmatpush.bf16.msra.mxu0 %v2159
      %2933 = vmatpush.bf16.msra.mxu0 %v2158
      %2934 = vmatpush.bf16.msra.mxu0 %v2157
      %2935 = vmatpush.bf16.msra.mxu0 %v2156
      %2936 = vmatmul.bf16.gmra.mxu0 %v1360
      %v2937 = vpop.f32.mrf.mxu0
      %v2938 = vadd.f32 %v2769, %v2937
      %v2939 = vpop.f32.mrf.mxu0
      %v2940 = vadd.f32 %v2771, %v2939
      %2941 = vmatmul.bf16.gmra.mxu0 %v1368
      %v2942 = vpop.f32.mrf.mxu0
      %v2943 = vadd.f32 %v2774, %v2942
      %v2944 = vpop.f32.mrf.mxu0
      %v2945 = vadd.f32 %v2776, %v2944
      %2946 = vmatmul.bf16.gmra.mxu0 %v1376
      %v2947 = vpop.f32.mrf.mxu0
      %v2948 = vadd.f32 %v2779, %v2947
      %v2949 = vpop.f32.mrf.mxu0
      %v2950 = vadd.f32 %v2781, %v2949
      %2951 = vmatmul.bf16.gmra.mxu0 %v1384
      %v2952 = vpop.f32.mrf.mxu0
      %v2953 = vadd.f32 %v2784, %v2952
      %v2954 = vpop.f32.mrf.mxu0
      %v2955 = vadd.f32 %v2786, %v2954
      %2956 = vmatmul.bf16.gmra.mxu0 %v1392
      %v2957 = vpop.f32.mrf.mxu0
      %v2958 = vadd.f32 %v2789, %v2957
      %v2959 = vpop.f32.mrf.mxu0
      %v2960 = vadd.f32 %v2791, %v2959
      %2961 = vmatmul.bf16.gmra.mxu0 %v1400
      %v2962 = vpop.f32.mrf.mxu0
      %v2963 = vadd.f32 %v2794, %v2962
      %v2964 = vpop.f32.mrf.mxu0
      %v2965 = vadd.f32 %v2796, %v2964
      %2966 = vmatmul.bf16.gmra.mxu0 %v1408
      %v2967 = vpop.f32.mrf.mxu0
      %v2968 = vadd.f32 %v2799, %v2967
      %v2969 = vpop.f32.mrf.mxu0
      %v2970 = vadd.f32 %v2801, %v2969
      %2971 = vmatmul.bf16.gmra.mxu0 %v1416
      %v2972 = vpop.f32.mrf.mxu0
      %v2973 = vadd.f32 %v2804, %v2972
      %v2974 = vpop.f32.mrf.mxu0
      %v2975 = vadd.f32 %v2806, %v2974
      %2976 = vmatmul.bf16.gmra.mxu0 %v1424
      %v2977 = vpop.f32.mrf.mxu0
      %v2978 = vadd.f32 %v2809, %v2977
      %v2979 = vpop.f32.mrf.mxu0
      %v2980 = vadd.f32 %v2811, %v2979
      %2981 = vmatmul.bf16.gmra.mxu0 %v1432
      %v2982 = vpop.f32.mrf.mxu0
      %v2983 = vadd.f32 %v2814, %v2982
      %v2984 = vpop.f32.mrf.mxu0
      %v2985 = vadd.f32 %v2816, %v2984
      %2986 = vmatmul.bf16.gmra.mxu0 %v1440
      %v2987 = vpop.f32.mrf.mxu0
      %v2988 = vadd.f32 %v2819, %v2987
      %v2989 = vpop.f32.mrf.mxu0
      %v2990 = vadd.f32 %v2821, %v2989
      %2991 = vmatmul.bf16.gmra.mxu0 %v1448
      %v2992 = vpop.f32.mrf.mxu0
      %v2993 = vadd.f32 %v2824, %v2992
      %v2994 = vpop.f32.mrf.mxu0
      %v2995 = vadd.f32 %v2826, %v2994
      %2996 = vmatmul.bf16.gmra.mxu0 %v1456
      %v2997 = vpop.f32.mrf.mxu0
      %v2998 = vadd.f32 %v2829, %v2997
      %v2999 = vpop.f32.mrf.mxu0
      %v3000 = vadd.f32 %v2831, %v2999
      %3001 = vmatmul.bf16.gmra.mxu0 %v1464
      %v3002 = vpop.f32.mrf.mxu0
      %v3003 = vadd.f32 %v2834, %v3002
      %v3004 = vpop.f32.mrf.mxu0
      %v3005 = vadd.f32 %v2836, %v3004
      %3006 = vmatmul.bf16.gmra.mxu0 %v1472
      %v3007 = vpop.f32.mrf.mxu0
      %v3008 = vadd.f32 %v2839, %v3007
      %v3009 = vpop.f32.mrf.mxu0
      %v3010 = vadd.f32 %v2841, %v3009
      %3011 = vmatmul.bf16.gmra.mxu0 %v1480
      %v3012 = vpop.f32.mrf.mxu0
      %v3013 = vadd.f32 %v2844, %v3012
      %v3014 = vpop.f32.mrf.mxu0
      %v3015 = vadd.f32 %v2846, %v3014
      %3016 = vmatmul.bf16.gmra.mxu0 %v1488
      %v3017 = vpop.f32.mrf.mxu0
      %v3018 = vadd.f32 %v2849, %v3017
      %v3019 = vpop.f32.mrf.mxu0
      %v3020 = vadd.f32 %v2851, %v3019
      %3021 = vmatmul.bf16.gmra.mxu0 %v1496
      %v3022 = vpop.f32.mrf.mxu0
      %v3023 = vadd.f32 %v2854, %v3022
      %v3024 = vpop.f32.mrf.mxu0
      %v3025 = vadd.f32 %v2856, %v3024
      %3026 = vmatmul.bf16.gmra.mxu0 %v1504
      %v3027 = vpop.f32.mrf.mxu0
      %v3028 = vadd.f32 %v2859, %v3027
      %v3029 = vpop.f32.mrf.mxu0
      %v3030 = vadd.f32 %v2861, %v3029
      %3031 = vmatmul.bf16.gmra.mxu0 %v1512
      %v3032 = vpop.f32.mrf.mxu0
      %v3033 = vadd.f32 %v2864, %v3032
      %v3034 = vpop.f32.mrf.mxu0
      %v3035 = vadd.f32 %v2866, %v3034
      %3036 = vmatmul.bf16.gmra.mxu0 %v1520
      %v3037 = vpop.f32.mrf.mxu0
      %v3038 = vadd.f32 %v2869, %v3037
      %v3039 = vpop.f32.mrf.mxu0
      %v3040 = vadd.f32 %v2871, %v3039
      %3041 = vmatmul.bf16.gmra.mxu0 %v1528
      %v3042 = vpop.f32.mrf.mxu0
      %v3043 = vadd.f32 %v2874, %v3042
      %v3044 = vpop.f32.mrf.mxu0
      %v3045 = vadd.f32 %v2876, %v3044
      %3046 = vmatmul.bf16.gmra.mxu0 %v1536
      %v3047 = vpop.f32.mrf.mxu0
      %v3048 = vadd.f32 %v2879, %v3047
      %v3049 = vpop.f32.mrf.mxu0
      %v3050 = vadd.f32 %v2881, %v3049
      %3051 = vmatmul.bf16.gmra.mxu0 %v1544
      %v3052 = vpop.f32.mrf.mxu0
      %v3053 = vadd.f32 %v2884, %v3052
      %v3054 = vpop.f32.mrf.mxu0
      %v3055 = vadd.f32 %v2886, %v3054
      %3056 = vmatmul.bf16.gmra.mxu0 %v1552
      %v3057 = vpop.f32.mrf.mxu0
      %v3058 = vadd.f32 %v2889, %v3057
      %v3059 = vpop.f32.mrf.mxu0
      %v3060 = vadd.f32 %v2891, %v3059
      %3061 = vmatmul.bf16.gmra.mxu0 %v1560
      %v3062 = vpop.f32.mrf.mxu0
      %v3063 = vadd.f32 %v2894, %v3062
      %v3064 = vpop.f32.mrf.mxu0
      %v3065 = vadd.f32 %v2896, %v3064
      %3066 = vmatmul.bf16.gmra.mxu0 %v1568
      %v3067 = vpop.f32.mrf.mxu0
      %v3068 = vadd.f32 %v2899, %v3067
      %v3069 = vpop.f32.mrf.mxu0
      %v3070 = vadd.f32 %v2901, %v3069
      %3071 = vmatmul.bf16.gmra.mxu0 %v1576
      %v3072 = vpop.f32.mrf.mxu0
      %v3073 = vadd.f32 %v2904, %v3072
      %v3074 = vpop.f32.mrf.mxu0
      %v3075 = vadd.f32 %v2906, %v3074
      %3076 = vmatmul.bf16.gmra.mxu0 %v1584
      %v3077 = vpop.f32.mrf.mxu0
      %v3078 = vadd.f32 %v2909, %v3077
      %v3079 = vpop.f32.mrf.mxu0
      %v3080 = vadd.f32 %v2911, %v3079
      %3081 = vmatmul.bf16.gmra.mxu0 %v1592
      %v3082 = vpop.f32.mrf.mxu0
      %v3083 = vadd.f32 %v2914, %v3082
      %v3084 = vpop.f32.mrf.mxu0
      %v3085 = vadd.f32 %v2916, %v3084
      %3086 = vmatmul.bf16.gmra.mxu0 %v1600
      %v3087 = vpop.f32.mrf.mxu0
      %v3088 = vadd.f32 %v2919, %v3087
      %v3089 = vpop.f32.mrf.mxu0
      %v3090 = vadd.f32 %v2921, %v3089
      %3091 = vmatmul.bf16.gmra.mxu0 %v1608
      %v3092 = vpop.f32.mrf.mxu0
      %v3093 = vadd.f32 %v2924, %v3092
      %v3094 = vpop.f32.mrf.mxu0
      %v3095 = vadd.f32 %v2926, %v3094
      %3096 = vdwg.mxu0
      %3097 = vmatpush.bf16.msra.mxu0 %v2171
      %3098 = vmatpush.bf16.msra.mxu0 %v2170
      %3099 = vmatpush.bf16.msra.mxu0 %v2169
      %3100 = vmatpush.bf16.msra.mxu0 %v2168
      %3101 = vmatpush.bf16.msra.mxu0 %v2167
      %3102 = vmatpush.bf16.msra.mxu0 %v2166
      %3103 = vmatpush.bf16.msra.mxu0 %v2165
      %3104 = vmatpush.bf16.msra.mxu0 %v2164
      %3105 = vmatmul.bf16.gmra.mxu0 %v1361
      %v3106 = vpop.f32.mrf.mxu0
      %v3107 = vadd.f32 %v2938, %v3106
      %v3108 = vpop.f32.mrf.mxu0
      %v3109 = vadd.f32 %v2940, %v3108
      %3110 = vmatmul.bf16.gmra.mxu0 %v1369
      %v3111 = vpop.f32.mrf.mxu0
      %v3112 = vadd.f32 %v2943, %v3111
      %v3113 = vpop.f32.mrf.mxu0
      %v3114 = vadd.f32 %v2945, %v3113
      %3115 = vmatmul.bf16.gmra.mxu0 %v1377
      %v3116 = vpop.f32.mrf.mxu0
      %v3117 = vadd.f32 %v2948, %v3116
      %v3118 = vpop.f32.mrf.mxu0
      %v3119 = vadd.f32 %v2950, %v3118
      %3120 = vmatmul.bf16.gmra.mxu0 %v1385
      %v3121 = vpop.f32.mrf.mxu0
      %v3122 = vadd.f32 %v2953, %v3121
      %v3123 = vpop.f32.mrf.mxu0
      %v3124 = vadd.f32 %v2955, %v3123
      %3125 = vmatmul.bf16.gmra.mxu0 %v1393
      %v3126 = vpop.f32.mrf.mxu0
      %v3127 = vadd.f32 %v2958, %v3126
      %v3128 = vpop.f32.mrf.mxu0
      %v3129 = vadd.f32 %v2960, %v3128
      %3130 = vmatmul.bf16.gmra.mxu0 %v1401
      %v3131 = vpop.f32.mrf.mxu0
      %v3132 = vadd.f32 %v2963, %v3131
      %v3133 = vpop.f32.mrf.mxu0
      %v3134 = vadd.f32 %v2965, %v3133
      %3135 = vmatmul.bf16.gmra.mxu0 %v1409
      %v3136 = vpop.f32.mrf.mxu0
      %v3137 = vadd.f32 %v2968, %v3136
      %v3138 = vpop.f32.mrf.mxu0
      %v3139 = vadd.f32 %v2970, %v3138
      %3140 = vmatmul.bf16.gmra.mxu0 %v1417
      %v3141 = vpop.f32.mrf.mxu0
      %v3142 = vadd.f32 %v2973, %v3141
      %v3143 = vpop.f32.mrf.mxu0
      %v3144 = vadd.f32 %v2975, %v3143
      %3145 = vmatmul.bf16.gmra.mxu0 %v1425
      %v3146 = vpop.f32.mrf.mxu0
      %v3147 = vadd.f32 %v2978, %v3146
      %v3148 = vpop.f32.mrf.mxu0
      %v3149 = vadd.f32 %v2980, %v3148
      %3150 = vmatmul.bf16.gmra.mxu0 %v1433
      %v3151 = vpop.f32.mrf.mxu0
      %v3152 = vadd.f32 %v2983, %v3151
      %v3153 = vpop.f32.mrf.mxu0
      %v3154 = vadd.f32 %v2985, %v3153
      %3155 = vmatmul.bf16.gmra.mxu0 %v1441
      %v3156 = vpop.f32.mrf.mxu0
      %v3157 = vadd.f32 %v2988, %v3156
      %v3158 = vpop.f32.mrf.mxu0
      %v3159 = vadd.f32 %v2990, %v3158
      %3160 = vmatmul.bf16.gmra.mxu0 %v1449
      %v3161 = vpop.f32.mrf.mxu0
      %v3162 = vadd.f32 %v2993, %v3161
      %v3163 = vpop.f32.mrf.mxu0
      %v3164 = vadd.f32 %v2995, %v3163
      %3165 = vmatmul.bf16.gmra.mxu0 %v1457
      %v3166 = vpop.f32.mrf.mxu0
      %v3167 = vadd.f32 %v2998, %v3166
      %v3168 = vpop.f32.mrf.mxu0
      %v3169 = vadd.f32 %v3000, %v3168
      %3170 = vmatmul.bf16.gmra.mxu0 %v1465
      %v3171 = vpop.f32.mrf.mxu0
      %v3172 = vadd.f32 %v3003, %v3171
      %v3173 = vpop.f32.mrf.mxu0
      %v3174 = vadd.f32 %v3005, %v3173
      %3175 = vmatmul.bf16.gmra.mxu0 %v1473
      %v3176 = vpop.f32.mrf.mxu0
      %v3177 = vadd.f32 %v3008, %v3176
      %v3178 = vpop.f32.mrf.mxu0
      %v3179 = vadd.f32 %v3010, %v3178
      %3180 = vmatmul.bf16.gmra.mxu0 %v1481
      %v3181 = vpop.f32.mrf.mxu0
      %v3182 = vadd.f32 %v3013, %v3181
      %v3183 = vpop.f32.mrf.mxu0
      %v3184 = vadd.f32 %v3015, %v3183
      %3185 = vmatmul.bf16.gmra.mxu0 %v1489
      %v3186 = vpop.f32.mrf.mxu0
      %v3187 = vadd.f32 %v3018, %v3186
      %v3188 = vpop.f32.mrf.mxu0
      %v3189 = vadd.f32 %v3020, %v3188
      %3190 = vmatmul.bf16.gmra.mxu0 %v1497
      %v3191 = vpop.f32.mrf.mxu0
      %v3192 = vadd.f32 %v3023, %v3191
      %v3193 = vpop.f32.mrf.mxu0
      %v3194 = vadd.f32 %v3025, %v3193
      %3195 = vmatmul.bf16.gmra.mxu0 %v1505
      %v3196 = vpop.f32.mrf.mxu0
      %v3197 = vadd.f32 %v3028, %v3196
      %v3198 = vpop.f32.mrf.mxu0
      %v3199 = vadd.f32 %v3030, %v3198
      %3200 = vmatmul.bf16.gmra.mxu0 %v1513
      %v3201 = vpop.f32.mrf.mxu0
      %v3202 = vadd.f32 %v3033, %v3201
      %v3203 = vpop.f32.mrf.mxu0
      %v3204 = vadd.f32 %v3035, %v3203
      %3205 = vmatmul.bf16.gmra.mxu0 %v1521
      %v3206 = vpop.f32.mrf.mxu0
      %v3207 = vadd.f32 %v3038, %v3206
      %v3208 = vpop.f32.mrf.mxu0
      %v3209 = vadd.f32 %v3040, %v3208
      %3210 = vmatmul.bf16.gmra.mxu0 %v1529
      %v3211 = vpop.f32.mrf.mxu0
      %v3212 = vadd.f32 %v3043, %v3211
      %v3213 = vpop.f32.mrf.mxu0
      %v3214 = vadd.f32 %v3045, %v3213
      %3215 = vmatmul.bf16.gmra.mxu0 %v1537
      %v3216 = vpop.f32.mrf.mxu0
      %v3217 = vadd.f32 %v3048, %v3216
      %v3218 = vpop.f32.mrf.mxu0
      %v3219 = vadd.f32 %v3050, %v3218
      %3220 = vmatmul.bf16.gmra.mxu0 %v1545
      %v3221 = vpop.f32.mrf.mxu0
      %v3222 = vadd.f32 %v3053, %v3221
      %v3223 = vpop.f32.mrf.mxu0
      %v3224 = vadd.f32 %v3055, %v3223
      %3225 = vmatmul.bf16.gmra.mxu0 %v1553
      %v3226 = vpop.f32.mrf.mxu0
      %v3227 = vadd.f32 %v3058, %v3226
      %v3228 = vpop.f32.mrf.mxu0
      %v3229 = vadd.f32 %v3060, %v3228
      %3230 = vmatmul.bf16.gmra.mxu0 %v1561
      %v3231 = vpop.f32.mrf.mxu0
      %v3232 = vadd.f32 %v3063, %v3231
      %v3233 = vpop.f32.mrf.mxu0
      %v3234 = vadd.f32 %v3065, %v3233
      %3235 = vmatmul.bf16.gmra.mxu0 %v1569
      %v3236 = vpop.f32.mrf.mxu0
      %v3237 = vadd.f32 %v3068, %v3236
      %v3238 = vpop.f32.mrf.mxu0
      %v3239 = vadd.f32 %v3070, %v3238
      %3240 = vmatmul.bf16.gmra.mxu0 %v1577
      %v3241 = vpop.f32.mrf.mxu0
      %v3242 = vadd.f32 %v3073, %v3241
      %v3243 = vpop.f32.mrf.mxu0
      %v3244 = vadd.f32 %v3075, %v3243
      %3245 = vmatmul.bf16.gmra.mxu0 %v1585
      %v3246 = vpop.f32.mrf.mxu0
      %v3247 = vadd.f32 %v3078, %v3246
      %v3248 = vpop.f32.mrf.mxu0
      %v3249 = vadd.f32 %v3080, %v3248
      %3250 = vmatmul.bf16.gmra.mxu0 %v1593
      %v3251 = vpop.f32.mrf.mxu0
      %v3252 = vadd.f32 %v3083, %v3251
      %v3253 = vpop.f32.mrf.mxu0
      %v3254 = vadd.f32 %v3085, %v3253
      %3255 = vmatmul.bf16.gmra.mxu0 %v1601
      %v3256 = vpop.f32.mrf.mxu0
      %v3257 = vadd.f32 %v3088, %v3256
      %v3258 = vpop.f32.mrf.mxu0
      %v3259 = vadd.f32 %v3090, %v3258
      %3260 = vmatmul.bf16.gmra.mxu0 %v1609
      %v3261 = vpop.f32.mrf.mxu0
      %v3262 = vadd.f32 %v3093, %v3261
      %v3263 = vpop.f32.mrf.mxu0
      %v3264 = vadd.f32 %v3095, %v3263
      %3265 = vdwg.mxu0
      %3266 = vmatpush.bf16.msra.mxu0 %v2179
      %3267 = vmatpush.bf16.msra.mxu0 %v2178
      %3268 = vmatpush.bf16.msra.mxu0 %v2177
      %3269 = vmatpush.bf16.msra.mxu0 %v2176
      %3270 = vmatpush.bf16.msra.mxu0 %v2175
      %3271 = vmatpush.bf16.msra.mxu0 %v2174
      %3272 = vmatpush.bf16.msra.mxu0 %v2173
      %3273 = vmatpush.bf16.msra.mxu0 %v2172
      %3274 = vmatmul.bf16.gmra.mxu0 %v1362
      %v3275 = vpop.f32.mrf.mxu0
      %v3276 = vadd.f32 %v3107, %v3275
      %v3277 = vpop.f32.mrf.mxu0
      %v3278 = vadd.f32 %v3109, %v3277
      %3279 = vmatmul.bf16.gmra.mxu0 %v1370
      %v3280 = vpop.f32.mrf.mxu0
      %v3281 = vadd.f32 %v3112, %v3280
      %v3282 = vpop.f32.mrf.mxu0
      %v3283 = vadd.f32 %v3114, %v3282
      %3284 = vmatmul.bf16.gmra.mxu0 %v1378
      %v3285 = vpop.f32.mrf.mxu0
      %v3286 = vadd.f32 %v3117, %v3285
      %v3287 = vpop.f32.mrf.mxu0
      %v3288 = vadd.f32 %v3119, %v3287
      %3289 = vmatmul.bf16.gmra.mxu0 %v1386
      %v3290 = vpop.f32.mrf.mxu0
      %v3291 = vadd.f32 %v3122, %v3290
      %v3292 = vpop.f32.mrf.mxu0
      %v3293 = vadd.f32 %v3124, %v3292
      %3294 = vmatmul.bf16.gmra.mxu0 %v1394
      %v3295 = vpop.f32.mrf.mxu0
      %v3296 = vadd.f32 %v3127, %v3295
      %v3297 = vpop.f32.mrf.mxu0
      %v3298 = vadd.f32 %v3129, %v3297
      %3299 = vmatmul.bf16.gmra.mxu0 %v1402
      %v3300 = vpop.f32.mrf.mxu0
      %v3301 = vadd.f32 %v3132, %v3300
      %v3302 = vpop.f32.mrf.mxu0
      %v3303 = vadd.f32 %v3134, %v3302
      %3304 = vmatmul.bf16.gmra.mxu0 %v1410
      %v3305 = vpop.f32.mrf.mxu0
      %v3306 = vadd.f32 %v3137, %v3305
      %v3307 = vpop.f32.mrf.mxu0
      %v3308 = vadd.f32 %v3139, %v3307
      %3309 = vmatmul.bf16.gmra.mxu0 %v1418
      %v3310 = vpop.f32.mrf.mxu0
      %v3311 = vadd.f32 %v3142, %v3310
      %v3312 = vpop.f32.mrf.mxu0
      %v3313 = vadd.f32 %v3144, %v3312
      %3314 = vmatmul.bf16.gmra.mxu0 %v1426
      %v3315 = vpop.f32.mrf.mxu0
      %v3316 = vadd.f32 %v3147, %v3315
      %v3317 = vpop.f32.mrf.mxu0
      %v3318 = vadd.f32 %v3149, %v3317
      %3319 = vmatmul.bf16.gmra.mxu0 %v1434
      %v3320 = vpop.f32.mrf.mxu0
      %v3321 = vadd.f32 %v3152, %v3320
      %v3322 = vpop.f32.mrf.mxu0
      %v3323 = vadd.f32 %v3154, %v3322
      %3324 = vmatmul.bf16.gmra.mxu0 %v1442
      %v3325 = vpop.f32.mrf.mxu0
      %v3326 = vadd.f32 %v3157, %v3325
      %v3327 = vpop.f32.mrf.mxu0
      %v3328 = vadd.f32 %v3159, %v3327
      %3329 = vmatmul.bf16.gmra.mxu0 %v1450
      %v3330 = vpop.f32.mrf.mxu0
      %v3331 = vadd.f32 %v3162, %v3330
      %v3332 = vpop.f32.mrf.mxu0
      %v3333 = vadd.f32 %v3164, %v3332
      %3334 = vmatmul.bf16.gmra.mxu0 %v1458
      %v3335 = vpop.f32.mrf.mxu0
      %v3336 = vadd.f32 %v3167, %v3335
      %v3337 = vpop.f32.mrf.mxu0
      %v3338 = vadd.f32 %v3169, %v3337
      %3339 = vmatmul.bf16.gmra.mxu0 %v1466
      %v3340 = vpop.f32.mrf.mxu0
      %v3341 = vadd.f32 %v3172, %v3340
      %v3342 = vpop.f32.mrf.mxu0
      %v3343 = vadd.f32 %v3174, %v3342
      %3344 = vmatmul.bf16.gmra.mxu0 %v1474
      %v3345 = vpop.f32.mrf.mxu0
      %v3346 = vadd.f32 %v3177, %v3345
      %v3347 = vpop.f32.mrf.mxu0
      %v3348 = vadd.f32 %v3179, %v3347
      %3349 = vmatmul.bf16.gmra.mxu0 %v1482
      %v3350 = vpop.f32.mrf.mxu0
      %v3351 = vadd.f32 %v3182, %v3350
      %v3352 = vpop.f32.mrf.mxu0
      %v3353 = vadd.f32 %v3184, %v3352
      %3354 = vmatmul.bf16.gmra.mxu0 %v1490
      %v3355 = vpop.f32.mrf.mxu0
      %v3356 = vadd.f32 %v3187, %v3355
      %v3357 = vpop.f32.mrf.mxu0
      %v3358 = vadd.f32 %v3189, %v3357
      %3359 = vmatmul.bf16.gmra.mxu0 %v1498
      %v3360 = vpop.f32.mrf.mxu0
      %v3361 = vadd.f32 %v3192, %v3360
      %v3362 = vpop.f32.mrf.mxu0
      %v3363 = vadd.f32 %v3194, %v3362
      %3364 = vmatmul.bf16.gmra.mxu0 %v1506
      %v3365 = vpop.f32.mrf.mxu0
      %v3366 = vadd.f32 %v3197, %v3365
      %v3367 = vpop.f32.mrf.mxu0
      %v3368 = vadd.f32 %v3199, %v3367
      %3369 = vmatmul.bf16.gmra.mxu0 %v1514
      %v3370 = vpop.f32.mrf.mxu0
      %v3371 = vadd.f32 %v3202, %v3370
      %v3372 = vpop.f32.mrf.mxu0
      %v3373 = vadd.f32 %v3204, %v3372
      %3374 = vmatmul.bf16.gmra.mxu0 %v1522
      %v3375 = vpop.f32.mrf.mxu0
      %v3376 = vadd.f32 %v3207, %v3375
      %v3377 = vpop.f32.mrf.mxu0
      %v3378 = vadd.f32 %v3209, %v3377
      %3379 = vmatmul.bf16.gmra.mxu0 %v1530
      %v3380 = vpop.f32.mrf.mxu0
      %v3381 = vadd.f32 %v3212, %v3380
      %v3382 = vpop.f32.mrf.mxu0
      %v3383 = vadd.f32 %v3214, %v3382
      %3384 = vmatmul.bf16.gmra.mxu0 %v1538
      %v3385 = vpop.f32.mrf.mxu0
      %v3386 = vadd.f32 %v3217, %v3385
      %v3387 = vpop.f32.mrf.mxu0
      %v3388 = vadd.f32 %v3219, %v3387
      %3389 = vmatmul.bf16.gmra.mxu0 %v1546
      %v3390 = vpop.f32.mrf.mxu0
      %v3391 = vadd.f32 %v3222, %v3390
      %v3392 = vpop.f32.mrf.mxu0
      %v3393 = vadd.f32 %v3224, %v3392
      %3394 = vmatmul.bf16.gmra.mxu0 %v1554
      %v3395 = vpop.f32.mrf.mxu0
      %v3396 = vadd.f32 %v3227, %v3395
      %v3397 = vpop.f32.mrf.mxu0
      %v3398 = vadd.f32 %v3229, %v3397
      %3399 = vmatmul.bf16.gmra.mxu0 %v1562
      %v3400 = vpop.f32.mrf.mxu0
      %v3401 = vadd.f32 %v3232, %v3400
      %v3402 = vpop.f32.mrf.mxu0
      %v3403 = vadd.f32 %v3234, %v3402
      %3404 = vmatmul.bf16.gmra.mxu0 %v1570
      %v3405 = vpop.f32.mrf.mxu0
      %v3406 = vadd.f32 %v3237, %v3405
      %v3407 = vpop.f32.mrf.mxu0
      %v3408 = vadd.f32 %v3239, %v3407
      %3409 = vmatmul.bf16.gmra.mxu0 %v1578
      %v3410 = vpop.f32.mrf.mxu0
      %v3411 = vadd.f32 %v3242, %v3410
      %v3412 = vpop.f32.mrf.mxu0
      %v3413 = vadd.f32 %v3244, %v3412
      %3414 = vmatmul.bf16.gmra.mxu0 %v1586
      %v3415 = vpop.f32.mrf.mxu0
      %v3416 = vadd.f32 %v3247, %v3415
      %v3417 = vpop.f32.mrf.mxu0
      %v3418 = vadd.f32 %v3249, %v3417
      %3419 = vmatmul.bf16.gmra.mxu0 %v1594
      %v3420 = vpop.f32.mrf.mxu0
      %v3421 = vadd.f32 %v3252, %v3420
      %v3422 = vpop.f32.mrf.mxu0
      %v3423 = vadd.f32 %v3254, %v3422
      %3424 = vmatmul.bf16.gmra.mxu0 %v1602
      %v3425 = vpop.f32.mrf.mxu0
      %v3426 = vadd.f32 %v3257, %v3425
      %v3427 = vpop.f32.mrf.mxu0
      %v3428 = vadd.f32 %v3259, %v3427
      %3429 = vmatmul.bf16.gmra.mxu0 %v1610
      %v3430 = vpop.f32.mrf.mxu0
      %v3431 = vadd.f32 %v3262, %v3430
      %v3432 = vpop.f32.mrf.mxu0
      %v3433 = vadd.f32 %v3264, %v3432
      %3434 = vdwg.mxu0
      %3435 = vmatpush.bf16.msra.mxu0 %v2187
      %3436 = vmatpush.bf16.msra.mxu0 %v2186
      %3437 = vmatpush.bf16.msra.mxu0 %v2185
      %3438 = vmatpush.bf16.msra.mxu0 %v2184
      %3439 = vmatpush.bf16.msra.mxu0 %v2183
      %3440 = vmatpush.bf16.msra.mxu0 %v2182
      %3441 = vmatpush.bf16.msra.mxu0 %v2181
      %3442 = vmatpush.bf16.msra.mxu0 %v2180
      %3443 = vmatmul.bf16.gmra.mxu0 %v1363
      %v3444 = vpop.f32.mrf.mxu0
      %v3445 = vadd.f32 %v3276, %v3444
      %v3446 = vpop.f32.mrf.mxu0
      %v3447 = vadd.f32 %v3278, %v3446
      %3448 = vmatmul.bf16.gmra.mxu0 %v1371
      %v3449 = vpop.f32.mrf.mxu0
      %v3450 = vadd.f32 %v3281, %v3449
      %v3451 = vpop.f32.mrf.mxu0
      %v3452 = vadd.f32 %v3283, %v3451
      %3453 = vmatmul.bf16.gmra.mxu0 %v1379
      %v3454 = vpop.f32.mrf.mxu0
      %v3455 = vadd.f32 %v3286, %v3454
      %v3456 = vpop.f32.mrf.mxu0
      %v3457 = vadd.f32 %v3288, %v3456
      %3458 = vmatmul.bf16.gmra.mxu0 %v1387
      %v3459 = vpop.f32.mrf.mxu0
      %v3460 = vadd.f32 %v3291, %v3459
      %v3461 = vpop.f32.mrf.mxu0
      %v3462 = vadd.f32 %v3293, %v3461
      %3463 = vmatmul.bf16.gmra.mxu0 %v1395
      %v3464 = vpop.f32.mrf.mxu0
      %v3465 = vadd.f32 %v3296, %v3464
      %v3466 = vpop.f32.mrf.mxu0
      %v3467 = vadd.f32 %v3298, %v3466
      %3468 = vmatmul.bf16.gmra.mxu0 %v1403
      %v3469 = vpop.f32.mrf.mxu0
      %v3470 = vadd.f32 %v3301, %v3469
      %v3471 = vpop.f32.mrf.mxu0
      %v3472 = vadd.f32 %v3303, %v3471
      %3473 = vmatmul.bf16.gmra.mxu0 %v1411
      %v3474 = vpop.f32.mrf.mxu0
      %v3475 = vadd.f32 %v3306, %v3474
      %v3476 = vpop.f32.mrf.mxu0
      %v3477 = vadd.f32 %v3308, %v3476
      %3478 = vmatmul.bf16.gmra.mxu0 %v1419
      %v3479 = vpop.f32.mrf.mxu0
      %v3480 = vadd.f32 %v3311, %v3479
      %v3481 = vpop.f32.mrf.mxu0
      %v3482 = vadd.f32 %v3313, %v3481
      %3483 = vmatmul.bf16.gmra.mxu0 %v1427
      %v3484 = vpop.f32.mrf.mxu0
      %v3485 = vadd.f32 %v3316, %v3484
      %v3486 = vpop.f32.mrf.mxu0
      %v3487 = vadd.f32 %v3318, %v3486
      %3488 = vmatmul.bf16.gmra.mxu0 %v1435
      %v3489 = vpop.f32.mrf.mxu0
      %v3490 = vadd.f32 %v3321, %v3489
      %v3491 = vpop.f32.mrf.mxu0
      %v3492 = vadd.f32 %v3323, %v3491
      %3493 = vmatmul.bf16.gmra.mxu0 %v1443
      %v3494 = vpop.f32.mrf.mxu0
      %v3495 = vadd.f32 %v3326, %v3494
      %v3496 = vpop.f32.mrf.mxu0
      %v3497 = vadd.f32 %v3328, %v3496
      %3498 = vmatmul.bf16.gmra.mxu0 %v1451
      %v3499 = vpop.f32.mrf.mxu0
      %v3500 = vadd.f32 %v3331, %v3499
      %v3501 = vpop.f32.mrf.mxu0
      %v3502 = vadd.f32 %v3333, %v3501
      %3503 = vmatmul.bf16.gmra.mxu0 %v1459
      %v3504 = vpop.f32.mrf.mxu0
      %v3505 = vadd.f32 %v3336, %v3504
      %v3506 = vpop.f32.mrf.mxu0
      %v3507 = vadd.f32 %v3338, %v3506
      %3508 = vmatmul.bf16.gmra.mxu0 %v1467
      %v3509 = vpop.f32.mrf.mxu0
      %v3510 = vadd.f32 %v3341, %v3509
      %v3511 = vpop.f32.mrf.mxu0
      %v3512 = vadd.f32 %v3343, %v3511
      %3513 = vmatmul.bf16.gmra.mxu0 %v1475
      %v3514 = vpop.f32.mrf.mxu0
      %v3515 = vadd.f32 %v3346, %v3514
      %v3516 = vpop.f32.mrf.mxu0
      %v3517 = vadd.f32 %v3348, %v3516
      %3518 = vmatmul.bf16.gmra.mxu0 %v1483
      %v3519 = vpop.f32.mrf.mxu0
      %v3520 = vadd.f32 %v3351, %v3519
      %v3521 = vpop.f32.mrf.mxu0
      %v3522 = vadd.f32 %v3353, %v3521
      %3523 = vmatmul.bf16.gmra.mxu0 %v1491
      %v3524 = vpop.f32.mrf.mxu0
      %v3525 = vadd.f32 %v3356, %v3524
      %v3526 = vpop.f32.mrf.mxu0
      %v3527 = vadd.f32 %v3358, %v3526
      %3528 = vmatmul.bf16.gmra.mxu0 %v1499
      %v3529 = vpop.f32.mrf.mxu0
      %v3530 = vadd.f32 %v3361, %v3529
      %v3531 = vpop.f32.mrf.mxu0
      %v3532 = vadd.f32 %v3363, %v3531
      %3533 = vmatmul.bf16.gmra.mxu0 %v1507
      %v3534 = vpop.f32.mrf.mxu0
      %v3535 = vadd.f32 %v3366, %v3534
      %v3536 = vpop.f32.mrf.mxu0
      %v3537 = vadd.f32 %v3368, %v3536
      %3538 = vmatmul.bf16.gmra.mxu0 %v1515
      %v3539 = vpop.f32.mrf.mxu0
      %v3540 = vadd.f32 %v3371, %v3539
      %v3541 = vpop.f32.mrf.mxu0
      %v3542 = vadd.f32 %v3373, %v3541
      %3543 = vmatmul.bf16.gmra.mxu0 %v1523
      %v3544 = vpop.f32.mrf.mxu0
      %v3545 = vadd.f32 %v3376, %v3544
      %v3546 = vpop.f32.mrf.mxu0
      %v3547 = vadd.f32 %v3378, %v3546
      %3548 = vmatmul.bf16.gmra.mxu0 %v1531
      %v3549 = vpop.f32.mrf.mxu0
      %v3550 = vadd.f32 %v3381, %v3549
      %v3551 = vpop.f32.mrf.mxu0
      %v3552 = vadd.f32 %v3383, %v3551
      %3553 = vmatmul.bf16.gmra.mxu0 %v1539
      %v3554 = vpop.f32.mrf.mxu0
      %v3555 = vadd.f32 %v3386, %v3554
      %v3556 = vpop.f32.mrf.mxu0
      %v3557 = vadd.f32 %v3388, %v3556
      %3558 = vmatmul.bf16.gmra.mxu0 %v1547
      %v3559 = vpop.f32.mrf.mxu0
      %v3560 = vadd.f32 %v3391, %v3559
      %v3561 = vpop.f32.mrf.mxu0
      %v3562 = vadd.f32 %v3393, %v3561
      %3563 = vmatmul.bf16.gmra.mxu0 %v1555
      %v3564 = vpop.f32.mrf.mxu0
      %v3565 = vadd.f32 %v3396, %v3564
      %v3566 = vpop.f32.mrf.mxu0
      %v3567 = vadd.f32 %v3398, %v3566
      %3568 = vmatmul.bf16.gmra.mxu0 %v1563
      %v3569 = vpop.f32.mrf.mxu0
      %v3570 = vadd.f32 %v3401, %v3569
      %v3571 = vpop.f32.mrf.mxu0
      %v3572 = vadd.f32 %v3403, %v3571
      %3573 = vmatmul.bf16.gmra.mxu0 %v1571
      %v3574 = vpop.f32.mrf.mxu0
      %v3575 = vadd.f32 %v3406, %v3574
      %v3576 = vpop.f32.mrf.mxu0
      %v3577 = vadd.f32 %v3408, %v3576
      %3578 = vmatmul.bf16.gmra.mxu0 %v1579
      %v3579 = vpop.f32.mrf.mxu0
      %v3580 = vadd.f32 %v3411, %v3579
      %v3581 = vpop.f32.mrf.mxu0
      %v3582 = vadd.f32 %v3413, %v3581
      %3583 = vmatmul.bf16.gmra.mxu0 %v1587
      %v3584 = vpop.f32.mrf.mxu0
      %v3585 = vadd.f32 %v3416, %v3584
      %v3586 = vpop.f32.mrf.mxu0
      %v3587 = vadd.f32 %v3418, %v3586
      %3588 = vmatmul.bf16.gmra.mxu0 %v1595
      %v3589 = vpop.f32.mrf.mxu0
      %v3590 = vadd.f32 %v3421, %v3589
      %v3591 = vpop.f32.mrf.mxu0
      %v3592 = vadd.f32 %v3423, %v3591
      %3593 = vmatmul.bf16.gmra.mxu0 %v1603
      %v3594 = vpop.f32.mrf.mxu0
      %v3595 = vadd.f32 %v3426, %v3594
      %v3596 = vpop.f32.mrf.mxu0
      %v3597 = vadd.f32 %v3428, %v3596
      %3598 = vmatmul.bf16.gmra.mxu0 %v1611
      %v3599 = vpop.f32.mrf.mxu0
      %v3600 = vadd.f32 %v3431, %v3599
      %v3601 = vpop.f32.mrf.mxu0
      %v3602 = vadd.f32 %v3433, %v3601
      %3603 = vdwg.mxu0
      %v3604 = vld [vmem:[%s2] sm:$0x1]
      %v3606 = vperm.slane %v3604, 0
      %v3608 = vmul.f32 %v3445, %v3606
      %v3609 = vmul.f32 %v3447, %v3606
      %v3610 = vmul.f32 %v3450, %v3606
      %v3611 = vmul.f32 %v3452, %v3606
      %v3612 = vmul.f32 %v3455, %v3606
      %v3613 = vmul.f32 %v3457, %v3606
      %v3614 = vmul.f32 %v3460, %v3606
      %v3615 = vmul.f32 %v3462, %v3606
      %v3616 = vmul.f32 %v3465, %v3606
      %v3617 = vmul.f32 %v3467, %v3606
      %v3618 = vmul.f32 %v3470, %v3606
      %v3619 = vmul.f32 %v3472, %v3606
      %v3620 = vmul.f32 %v3475, %v3606
      %v3621 = vmul.f32 %v3477, %v3606
      %v3622 = vmul.f32 %v3480, %v3606
      %v3623 = vmul.f32 %v3482, %v3606
      %v3624 = vmul.f32 %v3485, %v3606
      %v3625 = vmul.f32 %v3487, %v3606
      %v3626 = vmul.f32 %v3490, %v3606
      %v3627 = vmul.f32 %v3492, %v3606
      %v3628 = vmul.f32 %v3495, %v3606
      %v3629 = vmul.f32 %v3497, %v3606
      %v3630 = vmul.f32 %v3500, %v3606
      %v3631 = vmul.f32 %v3502, %v3606
      %v3632 = vmul.f32 %v3505, %v3606
      %v3633 = vmul.f32 %v3507, %v3606
      %v3634 = vmul.f32 %v3510, %v3606
      %v3635 = vmul.f32 %v3512, %v3606
      %v3636 = vmul.f32 %v3515, %v3606
      %v3637 = vmul.f32 %v3517, %v3606
      %v3638 = vmul.f32 %v3520, %v3606
      %v3639 = vmul.f32 %v3522, %v3606
      %v3640 = vmul.f32 %v3525, %v3606
      %v3641 = vmul.f32 %v3527, %v3606
      %v3642 = vmul.f32 %v3530, %v3606
      %v3643 = vmul.f32 %v3532, %v3606
      %v3644 = vmul.f32 %v3535, %v3606
      %v3645 = vmul.f32 %v3537, %v3606
      %v3646 = vmul.f32 %v3540, %v3606
      %v3647 = vmul.f32 %v3542, %v3606
      %v3648 = vmul.f32 %v3545, %v3606
      %v3649 = vmul.f32 %v3547, %v3606
      %v3650 = vmul.f32 %v3550, %v3606
      %v3651 = vmul.f32 %v3552, %v3606
      %v3652 = vmul.f32 %v3555, %v3606
      %v3653 = vmul.f32 %v3557, %v3606
      %v3654 = vmul.f32 %v3560, %v3606
      %v3655 = vmul.f32 %v3562, %v3606
      %v3656 = vmul.f32 %v3565, %v3606
      %v3657 = vmul.f32 %v3567, %v3606
      %v3658 = vmul.f32 %v3570, %v3606
      %v3659 = vmul.f32 %v3572, %v3606
      %v3660 = vmul.f32 %v3575, %v3606
      %v3661 = vmul.f32 %v3577, %v3606
      %v3662 = vmul.f32 %v3580, %v3606
      %v3663 = vmul.f32 %v3582, %v3606
      %v3664 = vmul.f32 %v3585, %v3606
      %v3665 = vmul.f32 %v3587, %v3606
      %v3666 = vmul.f32 %v3590, %v3606
      %v3667 = vmul.f32 %v3592, %v3606
      %v3668 = vmul.f32 %v3595, %v3606
      %v3669 = vmul.f32 %v3597, %v3606
      %v3670 = vmul.f32 %v3600, %v3606
      %v3671 = vmul.f32 %v3602, %v3606
      %v3672 = vld [vmem:[%s3] sm:$0x1]
      %v3674 = vperm.slane %v3672, 0
      %v3676 = vadd.f32 %v3608, %v3674
      %v3677 = vadd.f32 %v3609, %v3674
      %v3678 = vadd.f32 %v3610, %v3674
      %v3679 = vadd.f32 %v3611, %v3674
      %v3680 = vadd.f32 %v3612, %v3674
      %v3681 = vadd.f32 %v3613, %v3674
      %v3682 = vadd.f32 %v3614, %v3674
      %v3683 = vadd.f32 %v3615, %v3674
      %v3684 = vadd.f32 %v3616, %v3674
      %v3685 = vadd.f32 %v3617, %v3674
      %v3686 = vadd.f32 %v3618, %v3674
      %v3687 = vadd.f32 %v3619, %v3674
      %v3688 = vadd.f32 %v3620, %v3674
      %v3689 = vadd.f32 %v3621, %v3674
      %v3690 = vadd.f32 %v3622, %v3674
      %v3691 = vadd.f32 %v3623, %v3674
      %v3692 = vadd.f32 %v3624, %v3674
      %v3693 = vadd.f32 %v3625, %v3674
      %v3694 = vadd.f32 %v3626, %v3674
      %v3695 = vadd.f32 %v3627, %v3674
      %v3696 = vadd.f32 %v3628, %v3674
      %v3697 = vadd.f32 %v3629, %v3674
      %v3698 = vadd.f32 %v3630, %v3674
      %v3699 = vadd.f32 %v3631, %v3674
      %v3700 = vadd.f32 %v3632, %v3674
      %v3701 = vadd.f32 %v3633, %v3674
      %v3702 = vadd.f32 %v3634, %v3674
      %v3703 = vadd.f32 %v3635, %v3674
      %v3704 = vadd.f32 %v3636, %v3674
      %v3705 = vadd.f32 %v3637, %v3674
      %v3706 = vadd.f32 %v3638, %v3674
      %v3707 = vadd.f32 %v3639, %v3674
      %v3708 = vadd.f32 %v3640, %v3674
      %v3709 = vadd.f32 %v3641, %v3674
      %v3710 = vadd.f32 %v3642, %v3674
      %v3711 = vadd.f32 %v3643, %v3674
      %v3712 = vadd.f32 %v3644, %v3674
      %v3713 = vadd.f32 %v3645, %v3674
      %v3714 = vadd.f32 %v3646, %v3674
      %v3715 = vadd.f32 %v3647, %v3674
      %v3716 = vadd.f32 %v3648, %v3674
      %v3717 = vadd.f32 %v3649, %v3674
      %v3718 = vadd.f32 %v3650, %v3674
      %v3719 = vadd.f32 %v3651, %v3674
      %v3720 = vadd.f32 %v3652, %v3674
      %v3721 = vadd.f32 %v3653, %v3674
      %v3722 = vadd.f32 %v3654, %v3674
      %v3723 = vadd.f32 %v3655, %v3674
      %v3724 = vadd.f32 %v3656, %v3674
      %v3725 = vadd.f32 %v3657, %v3674
      %v3726 = vadd.f32 %v3658, %v3674
      %v3727 = vadd.f32 %v3659, %v3674
      %v3728 = vadd.f32 %v3660, %v3674
      %v3729 = vadd.f32 %v3661, %v3674
      %v3730 = vadd.f32 %v3662, %v3674
      %v3731 = vadd.f32 %v3663, %v3674
      %v3732 = vadd.f32 %v3664, %v3674
      %v3733 = vadd.f32 %v3665, %v3674
      %v3734 = vadd.f32 %v3666, %v3674
      %v3735 = vadd.f32 %v3667, %v3674
      %v3736 = vadd.f32 %v3668, %v3674
      %v3737 = vadd.f32 %v3669, %v3674
      %v3738 = vadd.f32 %v3670, %v3674
      %v3739 = vadd.f32 %v3671, %v3674
      %vm3740 = vcmp.ge.f32.partialorder %v3676, 0.0
      %vm3741 = vcmp.ge.f32.partialorder %v3677, 0.0
      %vm3742 = vcmp.ge.f32.partialorder %v3678, 0.0
      %vm3743 = vcmp.ge.f32.partialorder %v3679, 0.0
      %vm3744 = vcmp.ge.f32.partialorder %v3680, 0.0
      %vm3745 = vcmp.ge.f32.partialorder %v3681, 0.0
      %vm3746 = vcmp.ge.f32.partialorder %v3682, 0.0
      %vm3747 = vcmp.ge.f32.partialorder %v3683, 0.0
      %vm3748 = vcmp.ge.f32.partialorder %v3684, 0.0
      %vm3749 = vcmp.ge.f32.partialorder %v3685, 0.0
      %vm3750 = vcmp.ge.f32.partialorder %v3686, 0.0
      %vm3751 = vcmp.ge.f32.partialorder %v3687, 0.0
      %vm3752 = vcmp.ge.f32.partialorder %v3688, 0.0
      %vm3753 = vcmp.ge.f32.partialorder %v3689, 0.0
      %vm3754 = vcmp.ge.f32.partialorder %v3690, 0.0
      %vm3755 = vcmp.ge.f32.partialorder %v3691, 0.0
      %vm3756 = vcmp.ge.f32.partialorder %v3692, 0.0
      %vm3757 = vcmp.ge.f32.partialorder %v3693, 0.0
      %vm3758 = vcmp.ge.f32.partialorder %v3694, 0.0
      %vm3759 = vcmp.ge.f32.partialorder %v3695, 0.0
      %vm3760 = vcmp.ge.f32.partialorder %v3696, 0.0
      %vm3761 = vcmp.ge.f32.partialorder %v3697, 0.0
      %vm3762 = vcmp.ge.f32.partialorder %v3698, 0.0
      %vm3763 = vcmp.ge.f32.partialorder %v3699, 0.0
      %vm3764 = vcmp.ge.f32.partialorder %v3700, 0.0
      %vm3765 = vcmp.ge.f32.partialorder %v3701, 0.0
      %vm3766 = vcmp.ge.f32.partialorder %v3702, 0.0
      %vm3767 = vcmp.ge.f32.partialorder %v3703, 0.0
      %vm3768 = vcmp.ge.f32.partialorder %v3704, 0.0
      %vm3769 = vcmp.ge.f32.partialorder %v3705, 0.0
      %vm3770 = vcmp.ge.f32.partialorder %v3706, 0.0
      %vm3771 = vcmp.ge.f32.partialorder %v3707, 0.0
      %vm3772 = vcmp.ge.f32.partialorder %v3708, 0.0
      %vm3773 = vcmp.ge.f32.partialorder %v3709, 0.0
      %vm3774 = vcmp.ge.f32.partialorder %v3710, 0.0
      %vm3775 = vcmp.ge.f32.partialorder %v3711, 0.0
      %vm3776 = vcmp.ge.f32.partialorder %v3712, 0.0
      %vm3777 = vcmp.ge.f32.partialorder %v3713, 0.0
      %vm3778 = vcmp.ge.f32.partialorder %v3714, 0.0
      %vm3779 = vcmp.ge.f32.partialorder %v3715, 0.0
      %vm3780 = vcmp.ge.f32.partialorder %v3716, 0.0
      %vm3781 = vcmp.ge.f32.partialorder %v3717, 0.0
      %vm3782 = vcmp.ge.f32.partialorder %v3718, 0.0
      %vm3783 = vcmp.ge.f32.partialorder %v3719, 0.0
      %vm3784 = vcmp.ge.f32.partialorder %v3720, 0.0
      %vm3785 = vcmp.ge.f32.partialorder %v3721, 0.0
      %vm3786 = vcmp.ge.f32.partialorder %v3722, 0.0
      %vm3787 = vcmp.ge.f32.partialorder %v3723, 0.0
      %vm3788 = vcmp.ge.f32.partialorder %v3724, 0.0
      %vm3789 = vcmp.ge.f32.partialorder %v3725, 0.0
      %vm3790 = vcmp.ge.f32.partialorder %v3726, 0.0
      %vm3791 = vcmp.ge.f32.partialorder %v3727, 0.0
      %vm3792 = vcmp.ge.f32.partialorder %v3728, 0.0
      %vm3793 = vcmp.ge.f32.partialorder %v3729, 0.0
      %vm3794 = vcmp.ge.f32.partialorder %v3730, 0.0
      %vm3795 = vcmp.ge.f32.partialorder %v3731, 0.0
      %vm3796 = vcmp.ge.f32.partialorder %v3732, 0.0
      %vm3797 = vcmp.ge.f32.partialorder %v3733, 0.0
      %vm3798 = vcmp.ge.f32.partialorder %v3734, 0.0
      %vm3799 = vcmp.ge.f32.partialorder %v3735, 0.0
      %vm3800 = vcmp.ge.f32.partialorder %v3736, 0.0
      %vm3801 = vcmp.ge.f32.partialorder %v3737, 0.0
      %vm3802 = vcmp.ge.f32.partialorder %v3738, 0.0
      %vm3803 = vcmp.ge.f32.partialorder %v3739, 0.0
      %v3804 = vmul.f32 %v3676, 0.2
      %v3805 = vmul.f32 %v3677, 0.2
      %v3806 = vmul.f32 %v3678, 0.2
      %v3807 = vmul.f32 %v3679, 0.2
      %v3808 = vmul.f32 %v3680, 0.2
      %v3809 = vmul.f32 %v3681, 0.2
      %v3810 = vmul.f32 %v3682, 0.2
      %v3811 = vmul.f32 %v3683, 0.2
      %v3812 = vmul.f32 %v3684, 0.2
      %v3813 = vmul.f32 %v3685, 0.2
      %v3814 = vmul.f32 %v3686, 0.2
      %v3815 = vmul.f32 %v3687, 0.2
      %v3816 = vmul.f32 %v3688, 0.2
      %v3817 = vmul.f32 %v3689, 0.2
      %v3818 = vmul.f32 %v3690, 0.2
      %v3819 = vmul.f32 %v3691, 0.2
      %v3820 = vmul.f32 %v3692, 0.2
      %v3821 = vmul.f32 %v3693, 0.2
      %v3822 = vmul.f32 %v3694, 0.2
      %v3823 = vmul.f32 %v3695, 0.2
      %v3824 = vmul.f32 %v3696, 0.2
      %v3825 = vmul.f32 %v3697, 0.2
      %v3826 = vmul.f32 %v3698, 0.2
      %v3827 = vmul.f32 %v3699, 0.2
      %v3828 = vmul.f32 %v3700, 0.2
      %v3829 = vmul.f32 %v3701, 0.2
      %v3830 = vmul.f32 %v3702, 0.2
      %v3831 = vmul.f32 %v3703, 0.2
      %v3832 = vmul.f32 %v3704, 0.2
      %v3833 = vmul.f32 %v3705, 0.2
      %v3834 = vmul.f32 %v3706, 0.2
      %v3835 = vmul.f32 %v3707, 0.2
      %v3836 = vmul.f32 %v3708, 0.2
      %v3837 = vmul.f32 %v3709, 0.2
      %v3838 = vmul.f32 %v3710, 0.2
      %v3839 = vmul.f32 %v3711, 0.2
      %v3840 = vmul.f32 %v3712, 0.2
      %v3841 = vmul.f32 %v3713, 0.2
      %v3842 = vmul.f32 %v3714, 0.2
      %v3843 = vmul.f32 %v3715, 0.2
      %v3844 = vmul.f32 %v3716, 0.2
      %v3845 = vmul.f32 %v3717, 0.2
      %v3846 = vmul.f32 %v3718, 0.2
      %v3847 = vmul.f32 %v3719, 0.2
      %v3848 = vmul.f32 %v3720, 0.2
      %v3849 = vmul.f32 %v3721, 0.2
      %v3850 = vmul.f32 %v3722, 0.2
      %v3851 = vmul.f32 %v3723, 0.2
      %v3852 = vmul.f32 %v3724, 0.2
      %v3853 = vmul.f32 %v3725, 0.2
      %v3854 = vmul.f32 %v3726, 0.2
      %v3855 = vmul.f32 %v3727, 0.2
      %v3856 = vmul.f32 %v3728, 0.2
      %v3857 = vmul.f32 %v3729, 0.2
      %v3858 = vmul.f32 %v3730, 0.2
      %v3859 = vmul.f32 %v3731, 0.2
      %v3860 = vmul.f32 %v3732, 0.2
      %v3861 = vmul.f32 %v3733, 0.2
      %v3862 = vmul.f32 %v3734, 0.2
      %v3863 = vmul.f32 %v3735, 0.2
      %v3864 = vmul.f32 %v3736, 0.2
      %v3865 = vmul.f32 %v3737, 0.2
      %v3866 = vmul.f32 %v3738, 0.2
      %v3867 = vmul.f32 %v3739, 0.2
      %v3868 = vsel %vm3740, %v3676, %v3804
      %v3869 = vsel %vm3741, %v3677, %v3805
      %v3870 = vsel %vm3742, %v3678, %v3806
      %v3871 = vsel %vm3743, %v3679, %v3807
      %v3872 = vsel %vm3744, %v3680, %v3808
      %v3873 = vsel %vm3745, %v3681, %v3809
      %v3874 = vsel %vm3746, %v3682, %v3810
      %v3875 = vsel %vm3747, %v3683, %v3811
      %v3876 = vsel %vm3748, %v3684, %v3812
      %v3877 = vsel %vm3749, %v3685, %v3813
      %v3878 = vsel %vm3750, %v3686, %v3814
      %v3879 = vsel %vm3751, %v3687, %v3815
      %v3880 = vsel %vm3752, %v3688, %v3816
      %v3881 = vsel %vm3753, %v3689, %v3817
      %v3882 = vsel %vm3754, %v3690, %v3818
      %v3883 = vsel %vm3755, %v3691, %v3819
      %v3884 = vsel %vm3756, %v3692, %v3820
      %v3885 = vsel %vm3757, %v3693, %v3821
      %v3886 = vsel %vm3758, %v3694, %v3822
      %v3887 = vsel %vm3759, %v3695, %v3823
      %v3888 = vsel %vm3760, %v3696, %v3824
      %v3889 = vsel %vm3761, %v3697, %v3825
      %v3890 = vsel %vm3762, %v3698, %v3826
      %v3891 = vsel %vm3763, %v3699, %v3827
      %v3892 = vsel %vm3764, %v3700, %v3828
      %v3893 = vsel %vm3765, %v3701, %v3829
      %v3894 = vsel %vm3766, %v3702, %v3830
      %v3895 = vsel %vm3767, %v3703, %v3831
      %v3896 = vsel %vm3768, %v3704, %v3832
      %v3897 = vsel %vm3769, %v3705, %v3833
      %v3898 = vsel %vm3770, %v3706, %v3834
      %v3899 = vsel %vm3771, %v3707, %v3835
      %v3900 = vsel %vm3772, %v3708, %v3836
      %v3901 = vsel %vm3773, %v3709, %v3837
      %v3902 = vsel %vm3774, %v3710, %v3838
      %v3903 = vsel %vm3775, %v3711, %v3839
      %v3904 = vsel %vm3776, %v3712, %v3840
      %v3905 = vsel %vm3777, %v3713, %v3841
      %v3906 = vsel %vm3778, %v3714, %v3842
      %v3907 = vsel %vm3779, %v3715, %v3843
      %v3908 = vsel %vm3780, %v3716, %v3844
      %v3909 = vsel %vm3781, %v3717, %v3845
      %v3910 = vsel %vm3782, %v3718, %v3846
      %v3911 = vsel %vm3783, %v3719, %v3847
      %v3912 = vsel %vm3784, %v3720, %v3848
      %v3913 = vsel %vm3785, %v3721, %v3849
      %v3914 = vsel %vm3786, %v3722, %v3850
      %v3915 = vsel %vm3787, %v3723, %v3851
      %v3916 = vsel %vm3788, %v3724, %v3852
      %v3917 = vsel %vm3789, %v3725, %v3853
      %v3918 = vsel %vm3790, %v3726, %v3854
      %v3919 = vsel %vm3791, %v3727, %v3855
      %v3920 = vsel %vm3792, %v3728, %v3856
      %v3921 = vsel %vm3793, %v3729, %v3857
      %v3922 = vsel %vm3794, %v3730, %v3858
      %v3923 = vsel %vm3795, %v3731, %v3859
      %v3924 = vsel %vm3796, %v3732, %v3860
      %v3925 = vsel %vm3797, %v3733, %v3861
      %v3926 = vsel %vm3798, %v3734, %v3862
      %v3927 = vsel %vm3799, %v3735, %v3863
      %v3928 = vsel %vm3800, %v3736, %v3864
      %v3929 = vsel %vm3801, %v3737, %v3865
      %v3930 = vsel %vm3802, %v3738, %v3866
      %v3931 = vsel %vm3803, %v3739, %v3867
      %v3932 = vpack.c.bf16 %v3868, %v3868
      %v3933 = vpack.c.bf16 %v3869, %v3869
      %v3934 = vpack.c.bf16 %v3870, %v3870
      %v3935 = vpack.c.bf16 %v3871, %v3871
      %v3936 = vpack.c.bf16 %v3872, %v3872
      %v3937 = vpack.c.bf16 %v3873, %v3873
      %v3938 = vpack.c.bf16 %v3874, %v3874
      %v3939 = vpack.c.bf16 %v3875, %v3875
      %v3940 = vpack.c.bf16 %v3876, %v3876
      %v3941 = vpack.c.bf16 %v3877, %v3877
      %v3942 = vpack.c.bf16 %v3878, %v3878
      %v3943 = vpack.c.bf16 %v3879, %v3879
      %v3944 = vpack.c.bf16 %v3880, %v3880
      %v3945 = vpack.c.bf16 %v3881, %v3881
      %v3946 = vpack.c.bf16 %v3882, %v3882
      %v3947 = vpack.c.bf16 %v3883, %v3883
      %v3948 = vpack.c.bf16 %v3884, %v3884
      %v3949 = vpack.c.bf16 %v3885, %v3885
      %v3950 = vpack.c.bf16 %v3886, %v3886
      %v3951 = vpack.c.bf16 %v3887, %v3887
      %v3952 = vpack.c.bf16 %v3888, %v3888
      %v3953 = vpack.c.bf16 %v3889, %v3889
      %v3954 = vpack.c.bf16 %v3890, %v3890
      %v3955 = vpack.c.bf16 %v3891, %v3891
      %v3956 = vpack.c.bf16 %v3892, %v3892
      %v3957 = vpack.c.bf16 %v3893, %v3893
      %v3958 = vpack.c.bf16 %v3894, %v3894
      %v3959 = vpack.c.bf16 %v3895, %v3895
      %v3960 = vpack.c.bf16 %v3896, %v3896
      %v3961 = vpack.c.bf16 %v3897, %v3897
      %v3962 = vpack.c.bf16 %v3898, %v3898
      %v3963 = vpack.c.bf16 %v3899, %v3899
      %v3964 = vpack.c.bf16 %v3900, %v3900
      %v3965 = vpack.c.bf16 %v3901, %v3901
      %v3966 = vpack.c.bf16 %v3902, %v3902
      %v3967 = vpack.c.bf16 %v3903, %v3903
      %v3968 = vpack.c.bf16 %v3904, %v3904
      %v3969 = vpack.c.bf16 %v3905, %v3905
      %v3970 = vpack.c.bf16 %v3906, %v3906
      %v3971 = vpack.c.bf16 %v3907, %v3907
      %v3972 = vpack.c.bf16 %v3908, %v3908
      %v3973 = vpack.c.bf16 %v3909, %v3909
      %v3974 = vpack.c.bf16 %v3910, %v3910
      %v3975 = vpack.c.bf16 %v3911, %v3911
      %v3976 = vpack.c.bf16 %v3912, %v3912
      %v3977 = vpack.c.bf16 %v3913, %v3913
      %v3978 = vpack.c.bf16 %v3914, %v3914
      %v3979 = vpack.c.bf16 %v3915, %v3915
      %v3980 = vpack.c.bf16 %v3916, %v3916
      %v3981 = vpack.c.bf16 %v3917, %v3917
      %v3982 = vpack.c.bf16 %v3918, %v3918
      %v3983 = vpack.c.bf16 %v3919, %v3919
      %v3984 = vpack.c.bf16 %v3920, %v3920
      %v3985 = vpack.c.bf16 %v3921, %v3921
      %v3986 = vpack.c.bf16 %v3922, %v3922
      %v3987 = vpack.c.bf16 %v3923, %v3923
      %v3988 = vpack.c.bf16 %v3924, %v3924
      %v3989 = vpack.c.bf16 %v3925, %v3925
      %v3990 = vpack.c.bf16 %v3926, %v3926
      %v3991 = vpack.c.bf16 %v3927, %v3927
      %v3992 = vpack.c.bf16 %v3928, %v3928
      %v3993 = vpack.c.bf16 %v3929, %v3929
      %v3994 = vpack.c.bf16 %v3930, %v3930
      %v3995 = vpack.c.bf16 %v3931, %v3931
      %vm3996 = vcmask 257024
      %3997 = vst.msk [vmem:[%s202] sm:$0xf] %vm3996, %v3932
      %3998 = vst.msk [vmem:[%s202 + $0x4] sm:$0xf] %vm3996, %v3933
      %3999 = vst.msk [vmem:[%s202 + $0x8] sm:$0xf] %vm3996, %v3934
      %4000 = vst.msk [vmem:[%s202 + $0xc] sm:$0xf] %vm3996, %v3935
      %4001 = vst.msk [vmem:[%s202 + $0x10] sm:$0xf] %vm3996, %v3936
      %4002 = vst.msk [vmem:[%s202 + $0x14] sm:$0xf] %vm3996, %v3937
      %4003 = vst.msk [vmem:[%s202 + $0x18] sm:$0xf] %vm3996, %v3938
      %4004 = vst.msk [vmem:[%s202 + $0x1c] sm:$0xf] %vm3996, %v3939
      %4005 = vst.msk [vmem:[%s202 + $0x20] sm:$0xf] %vm3996, %v3940
      %4006 = vst.msk [vmem:[%s202 + $0x24] sm:$0xf] %vm3996, %v3941
      %4007 = vst.msk [vmem:[%s202 + $0x28] sm:$0xf] %vm3996, %v3942
      %4008 = vst.msk [vmem:[%s202 + $0x2c] sm:$0xf] %vm3996, %v3943
      %4009 = vst.msk [vmem:[%s202 + $0x30] sm:$0xf] %vm3996, %v3944
      %4010 = vst.msk [vmem:[%s202 + $0x34] sm:$0xf] %vm3996, %v3945
      %4011 = vst.msk [vmem:[%s202 + $0x38] sm:$0xf] %vm3996, %v3946
      %4012 = vst.msk [vmem:[%s202 + $0x3c] sm:$0xf] %vm3996, %v3947
      %4013 = vst.msk [vmem:[%s202 + $0x40] sm:$0xf] %vm3996, %v3948
      %4014 = vst.msk [vmem:[%s202 + $0x44] sm:$0xf] %vm3996, %v3949
      %4015 = vst.msk [vmem:[%s202 + $0x48] sm:$0xf] %vm3996, %v3950
      %4016 = vst.msk [vmem:[%s202 + $0x4c] sm:$0xf] %vm3996, %v3951
      %4017 = vst.msk [vmem:[%s202 + $0x50] sm:$0xf] %vm3996, %v3952
      %4018 = vst.msk [vmem:[%s202 + $0x54] sm:$0xf] %vm3996, %v3953
      %4019 = vst.msk [vmem:[%s202 + $0x58] sm:$0xf] %vm3996, %v3954
      %4020 = vst.msk [vmem:[%s202 + $0x5c] sm:$0xf] %vm3996, %v3955
      %4021 = vst.msk [vmem:[%s202 + $0x60] sm:$0xf] %vm3996, %v3956
      %4022 = vst.msk [vmem:[%s202 + $0x64] sm:$0xf] %vm3996, %v3957
      %4023 = vst.msk [vmem:[%s202 + $0x68] sm:$0xf] %vm3996, %v3958
      %4024 = vst.msk [vmem:[%s202 + $0x6c] sm:$0xf] %vm3996, %v3959
      %4025 = vst.msk [vmem:[%s202 + $0x70] sm:$0xf] %vm3996, %v3960
      %4026 = vst.msk [vmem:[%s202 + $0x74] sm:$0xf] %vm3996, %v3961
      %4027 = vst.msk [vmem:[%s202 + $0x78] sm:$0xf] %vm3996, %v3962
      %4028 = vst.msk [vmem:[%s202 + $0x7c] sm:$0xf] %vm3996, %v3963
      %4029 = vst.msk [vmem:[%s202 + $0x80] sm:$0xf] %vm3996, %v3964
      %4030 = vst.msk [vmem:[%s202 + $0x84] sm:$0xf] %vm3996, %v3965
      %4031 = vst.msk [vmem:[%s202 + $0x88] sm:$0xf] %vm3996, %v3966
      %4032 = vst.msk [vmem:[%s202 + $0x8c] sm:$0xf] %vm3996, %v3967
      %4033 = vst.msk [vmem:[%s202 + $0x90] sm:$0xf] %vm3996, %v3968
      %4034 = vst.msk [vmem:[%s202 + $0x94] sm:$0xf] %vm3996, %v3969
      %4035 = vst.msk [vmem:[%s202 + $0x98] sm:$0xf] %vm3996, %v3970
      %4036 = vst.msk [vmem:[%s202 + $0x9c] sm:$0xf] %vm3996, %v3971
      %4037 = vst.msk [vmem:[%s202 + $0xa0] sm:$0xf] %vm3996, %v3972
      %4038 = vst.msk [vmem:[%s202 + $0xa4] sm:$0xf] %vm3996, %v3973
      %4039 = vst.msk [vmem:[%s202 + $0xa8] sm:$0xf] %vm3996, %v3974
      %4040 = vst.msk [vmem:[%s202 + $0xac] sm:$0xf] %vm3996, %v3975
      %4041 = vst.msk [vmem:[%s202 + $0xb0] sm:$0xf] %vm3996, %v3976
      %4042 = vst.msk [vmem:[%s202 + $0xb4] sm:$0xf] %vm3996, %v3977
      %4043 = vst.msk [vmem:[%s202 + $0xb8] sm:$0xf] %vm3996, %v3978
      %4044 = vst.msk [vmem:[%s202 + $0xbc] sm:$0xf] %vm3996, %v3979
      %4045 = vst.msk [vmem:[%s202 + $0xc0] sm:$0xf] %vm3996, %v3980
      %4046 = vst.msk [vmem:[%s202 + $0xc4] sm:$0xf] %vm3996, %v3981
      %4047 = vst.msk [vmem:[%s202 + $0xc8] sm:$0xf] %vm3996, %v3982
      %4048 = vst.msk [vmem:[%s202 + $0xcc] sm:$0xf] %vm3996, %v3983
      %4049 = vst.msk [vmem:[%s202 + $0xd0] sm:$0xf] %vm3996, %v3984
      %4050 = vst.msk [vmem:[%s202 + $0xd4] sm:$0xf] %vm3996, %v3985
      %4051 = vst.msk [vmem:[%s202 + $0xd8] sm:$0xf] %vm3996, %v3986
      %4052 = vst.msk [vmem:[%s202 + $0xdc] sm:$0xf] %vm3996, %v3987
      %4053 = vst.msk [vmem:[%s202 + $0xe0] sm:$0xf] %vm3996, %v3988
      %4054 = vst.msk [vmem:[%s202 + $0xe4] sm:$0xf] %vm3996, %v3989
      %4055 = vst.msk [vmem:[%s202 + $0xe8] sm:$0xf] %vm3996, %v3990
      %4056 = vst.msk [vmem:[%s202 + $0xec] sm:$0xf] %vm3996, %v3991
      %4057 = vst.msk [vmem:[%s202 + $0xf0] sm:$0xf] %vm3996, %v3992
      %4058 = vst.msk [vmem:[%s202 + $0xf4] sm:$0xf] %vm3996, %v3993
      %4059 = vst.msk [vmem:[%s202 + $0xf8] sm:$0xf] %vm3996, %v3994
      %4060 = vst.msk [vmem:[%s202 + $0xfc] sm:$0xf] %vm3996, %v3995
      %s4061 = smul.u32 64, %s15
      %p4062 = scmp.lt.s32.totalorder %s4061, 127
      %s4063 = scalar_select %p4062, %s4061, 127
      %s4064 = smul.addr %s4063, 4
      %s4065 = scalar_lea.vmem %s4, %s4064
      // Predicated region
      $region37: #{discriminator_forward.5} parent=35 // pred_check
        %p4066 = pneg %p122
      $region38: #{discriminator_forward.5} parent=35 // pred_check_branch
        %4068 = sbr.rel (%p4066) target = $region40
      $region39: #{discriminator_forward.5} parent=35 // pred_region
        %s4069 = smul.u32 64, %s15
      $region40: #{discriminator_forward.5} parent=35 // pred_fallthru
        _
    $region36: #{discriminator_forward.5} parent=5 // pred_fallthru
      _
    %p4070 = scmp.le.s32.totalorder 2, %s10
    // Predicated region
    $region41: #{discriminator_forward.5} parent=5 // pred_check
      %p4071 = pneg %p4070
    $region42: #{discriminator_forward.5} parent=5 // pred_check_branch
      %4073 = sbr.rel (%p4071) target = $region44
    $region43: #{discriminator_forward.5} parent=5 // pred_region
      %s4074 = ssub.s32 %s10, 2
      // Predicated region
      $region45: #{discriminator_forward.5} parent=43 // pred_check
        %p4075 = pneg %p128
      $region46: #{discriminator_forward.5} parent=43 // pred_check_branch
        %4077 = sbr.rel (%p4075) target = $region48
      $region47: #{discriminator_forward.5} parent=43 // pred_region
        %s4078 = smul.u32 64, %s16
        %p4079 = scmp.lt.s32.totalorder %s4078, 127
        %s4080 = scalar_select %p4079, %s4078, 127
        %s4081 = smul.addr %s4080, 4
        %s4082 = scalar_lea.vmem %s4, %s4081
      $region48: #{discriminator_forward.5} parent=43 // pred_fallthru
        _
    $region44: #{discriminator_forward.5} parent=5 // pred_fallthru
      _
  $region6: #{discriminator_forward.5} parent=0 // loop_footer
    %s14 = sadd.s32 1, %s10
  $region7: #{discriminator_forward.5} parent=0 // loop_footer_branch
    %9 = sbr.rel target = $region3
  $region8: #{discriminator_forward.5} parent=0 // loop_exit
    _

// kernel: discriminator_forward.6
$region0: #{discriminator_forward.6}
  #allocation0 [shape = 'u32[]', space=smem, size = 0x4, offset = 0x4, fixed_abs, tag = 'smem constant byte address 0x4 - core index']
  #allocation1 [shape = 'u32[72,128]{1,0:T(1,128)}', space=vmem, size = 0x9000, scoped, tag = 'internal scratch']
  %s0 = inlined_call_operand.vmem [shape: bf16[128,2048], index: 0, kind: input, shape index: {}]
  %s1 = inlined_call_operand.vmem [shape: bf16[2048,64], index: 1, kind: input, shape index: {}]
  %s2 = inlined_call_operand.vmem [shape: f32[1,64], index: 2, kind: input, shape index: {}]
  %s3 = inlined_call_operand.vmem [shape: f32[1,64], index: 3, kind: input, shape index: {}]
  %s4 = inlined_call_operand.vmem [shape: bf16[128,64], index: 4, kind: output, shape index: {}]
  %s5 = sld [smem:[#allocation0]]
  $region26: #{discriminator_forward.6} parent=0
    _
  %s7 = ssub.s32 1, %s5
  %s8 = scalar_select 0, %s7, %s5
  // Predicated region
  $region2: #{discriminator_forward.6} parent=0 // pred_check
    _
  $region3: #{discriminator_forward.6} parent=0 // pred_check_branch
    %10 = sbr.rel (0) target = $region5
  $region4: #{discriminator_forward.6} parent=0 // pred_region
    _
  $region5: #{discriminator_forward.6} parent=0 // pred_fallthru
    _
  // Predicated region
  $region6: #{discriminator_forward.6} parent=0 // pred_check
    _
  $region7: #{discriminator_forward.6} parent=0 // pred_check_branch
    %12 = sbr.rel (0) target = $region9
  $region8: #{discriminator_forward.6} parent=0 // pred_region
    _
  $region9: #{discriminator_forward.6} parent=0 // pred_fallthru
    _
  // Predicated region
  $region10: #{discriminator_forward.6} parent=0 // pred_check
    _
  $region11: #{discriminator_forward.6} parent=0 // pred_check_branch
    %14 = sbr.rel (0) target = $region13
  $region12: #{discriminator_forward.6} parent=0 // pred_region
    _
  $region13: #{discriminator_forward.6} parent=0 // pred_fallthru
    _
  // Predicated region
  $region14: #{discriminator_forward.6} parent=0 // pred_check
    _
  $region15: #{discriminator_forward.6} parent=0 // pred_check_branch
    %16 = sbr.rel (0) target = $region17
  $region16: #{discriminator_forward.6} parent=0 // pred_region
    _
  $region17: #{discriminator_forward.6} parent=0 // pred_fallthru
    _
  %v17 = vld [vmem:[%s0] sm:$0xff]
  %v18 = vld [vmem:[%s0 + $0x8] sm:$0xff]
  %v19 = vld [vmem:[%s0 + $0x10] sm:$0xff]
  %v20 = vld [vmem:[%s0 + $0x18] sm:$0xff]
  %v21 = vld [vmem:[%s0 + $0x20] sm:$0xff]
  %v22 = vld [vmem:[%s0 + $0x28] sm:$0xff]
  %v23 = vld [vmem:[%s0 + $0x30] sm:$0xff]
  %v24 = vld [vmem:[%s0 + $0x38] sm:$0xff]
  %v25 = vld [vmem:[%s0 + $0x40] sm:$0xff]
  %v26 = vld [vmem:[%s0 + $0x48] sm:$0xff]
  %v27 = vld [vmem:[%s0 + $0x50] sm:$0xff]
  %v28 = vld [vmem:[%s0 + $0x58] sm:$0xff]
  %v29 = vld [vmem:[%s0 + $0x60] sm:$0xff]
  %v30 = vld [vmem:[%s0 + $0x68] sm:$0xff]
  %v31 = vld [vmem:[%s0 + $0x70] sm:$0xff]
  %v32 = vld [vmem:[%s0 + $0x78] sm:$0xff]
  %v33 = vld [vmem:[%s0 + $0x80] sm:$0xff]
  %v34 = vld [vmem:[%s0 + $0x88] sm:$0xff]
  %v35 = vld [vmem:[%s0 + $0x90] sm:$0xff]
  %v36 = vld [vmem:[%s0 + $0x98] sm:$0xff]
  %v37 = vld [vmem:[%s0 + $0xa0] sm:$0xff]
  %v38 = vld [vmem:[%s0 + $0xa8] sm:$0xff]
  %v39 = vld [vmem:[%s0 + $0xb0] sm:$0xff]
  %v40 = vld [vmem:[%s0 + $0xb8] sm:$0xff]
  %v41 = vld [vmem:[%s0 + $0xc0] sm:$0xff]
  %v42 = vld [vmem:[%s0 + $0xc8] sm:$0xff]
  %v43 = vld [vmem:[%s0 + $0xd0] sm:$0xff]
  %v44 = vld [vmem:[%s0 + $0xd8] sm:$0xff]
  %v45 = vld [vmem:[%s0 + $0xe0] sm:$0xff]
  %v46 = vld [vmem:[%s0 + $0xe8] sm:$0xff]
  %v47 = vld [vmem:[%s0 + $0xf0] sm:$0xff]
  %v48 = vld [vmem:[%s0 + $0xf8] sm:$0xff]
  %v49 = vld [vmem:[%s0 + $0x100] sm:$0xff]
  %v50 = vld [vmem:[%s0 + $0x108] sm:$0xff]
  %v51 = vld [vmem:[%s0 + $0x110] sm:$0xff]
  %v52 = vld [vmem:[%s0 + $0x118] sm:$0xff]
  %v53 = vld [vmem:[%s0 + $0x120] sm:$0xff]
  %v54 = vld [vmem:[%s0 + $0x128] sm:$0xff]
  %v55 = vld [vmem:[%s0 + $0x130] sm:$0xff]
  %v56 = vld [vmem:[%s0 + $0x138] sm:$0xff]
  %v57 = vld [vmem:[%s0 + $0x140] sm:$0xff]
  %v58 = vld [vmem:[%s0 + $0x148] sm:$0xff]
  %v59 = vld [vmem:[%s0 + $0x150] sm:$0xff]
  %v60 = vld [vmem:[%s0 + $0x158] sm:$0xff]
  %v61 = vld [vmem:[%s0 + $0x160] sm:$0xff]
  %v62 = vld [vmem:[%s0 + $0x168] sm:$0xff]
  %v63 = vld [vmem:[%s0 + $0x170] sm:$0xff]
  %v64 = vld [vmem:[%s0 + $0x178] sm:$0xff]
  %v65 = vld [vmem:[%s0 + $0x180] sm:$0xff]
  %v66 = vld [vmem:[%s0 + $0x188] sm:$0xff]
  %v67 = vld [vmem:[%s0 + $0x190] sm:$0xff]
  %v68 = vld [vmem:[%s0 + $0x198] sm:$0xff]
  %v69 = vld [vmem:[%s0 + $0x1a0] sm:$0xff]
  %v70 = vld [vmem:[%s0 + $0x1a8] sm:$0xff]
  %v71 = vld [vmem:[%s0 + $0x1b0] sm:$0xff]
  %v72 = vld [vmem:[%s0 + $0x1b8] sm:$0xff]
  %v73 = vld [vmem:[%s0 + $0x1c0] sm:$0xff]
  %v74 = vld [vmem:[%s0 + $0x1c8] sm:$0xff]
  %v75 = vld [vmem:[%s0 + $0x1d0] sm:$0xff]
  %v76 = vld [vmem:[%s0 + $0x1d8] sm:$0xff]
  %v77 = vld [vmem:[%s0 + $0x1e0] sm:$0xff]
  %v78 = vld [vmem:[%s0 + $0x1e8] sm:$0xff]
  %v79 = vld [vmem:[%s0 + $0x1f0] sm:$0xff]
  %v80 = vld [vmem:[%s0 + $0x1f8] sm:$0xff]
  %v81 = vld [vmem:[%s0 + $0x200] sm:$0xff]
  %v82 = vld [vmem:[%s0 + $0x208] sm:$0xff]
  %v83 = vld [vmem:[%s0 + $0x210] sm:$0xff]
  %v84 = vld [vmem:[%s0 + $0x218] sm:$0xff]
  %v85 = vld [vmem:[%s0 + $0x220] sm:$0xff]
  %v86 = vld [vmem:[%s0 + $0x228] sm:$0xff]
  %v87 = vld [vmem:[%s0 + $0x230] sm:$0xff]
  %v88 = vld [vmem:[%s0 + $0x238] sm:$0xff]
  %v89 = vld [vmem:[%s0 + $0x240] sm:$0xff]
  %v90 = vld [vmem:[%s0 + $0x248] sm:$0xff]
  %v91 = vld [vmem:[%s0 + $0x250] sm:$0xff]
  %v92 = vld [vmem:[%s0 + $0x258] sm:$0xff]
  %v93 = vld [vmem:[%s0 + $0x260] sm:$0xff]
  %v94 = vld [vmem:[%s0 + $0x268] sm:$0xff]
  %v95 = vld [vmem:[%s0 + $0x270] sm:$0xff]
  %v96 = vld [vmem:[%s0 + $0x278] sm:$0xff]
  %v97 = vld [vmem:[%s0 + $0x280] sm:$0xff]
  %v98 = vld [vmem:[%s0 + $0x288] sm:$0xff]
  %v99 = vld [vmem:[%s0 + $0x290] sm:$0xff]
  %v100 = vld [vmem:[%s0 + $0x298] sm:$0xff]
  %v101 = vld [vmem:[%s0 + $0x2a0] sm:$0xff]
  %v102 = vld [vmem:[%s0 + $0x2a8] sm:$0xff]
  %v103 = vld [vmem:[%s0 + $0x2b0] sm:$0xff]
  %v104 = vld [vmem:[%s0 + $0x2b8] sm:$0xff]
  %v105 = vld [vmem:[%s0 + $0x2c0] sm:$0xff]
  %v106 = vld [vmem:[%s0 + $0x2c8] sm:$0xff]
  %v107 = vld [vmem:[%s0 + $0x2d0] sm:$0xff]
  %v108 = vld [vmem:[%s0 + $0x2d8] sm:$0xff]
  %v109 = vld [vmem:[%s0 + $0x2e0] sm:$0xff]
  %v110 = vld [vmem:[%s0 + $0x2e8] sm:$0xff]
  %v111 = vld [vmem:[%s0 + $0x2f0] sm:$0xff]
  %v112 = vld [vmem:[%s0 + $0x2f8] sm:$0xff]
  %v113 = vld [vmem:[%s0 + $0x300] sm:$0xff]
  %v114 = vld [vmem:[%s0 + $0x308] sm:$0xff]
  %v115 = vld [vmem:[%s0 + $0x310] sm:$0xff]
  %v116 = vld [vmem:[%s0 + $0x318] sm:$0xff]
  %v117 = vld [vmem:[%s0 + $0x320] sm:$0xff]
  %v118 = vld [vmem:[%s0 + $0x328] sm:$0xff]
  %v119 = vld [vmem:[%s0 + $0x330] sm:$0xff]
  %v120 = vld [vmem:[%s0 + $0x338] sm:$0xff]
  %v121 = vld [vmem:[%s0 + $0x340] sm:$0xff]
  %v122 = vld [vmem:[%s0 + $0x348] sm:$0xff]
  %v123 = vld [vmem:[%s0 + $0x350] sm:$0xff]
  %v124 = vld [vmem:[%s0 + $0x358] sm:$0xff]
  %v125 = vld [vmem:[%s0 + $0x360] sm:$0xff]
  %v126 = vld [vmem:[%s0 + $0x368] sm:$0xff]
  %v127 = vld [vmem:[%s0 + $0x370] sm:$0xff]
  %v128 = vld [vmem:[%s0 + $0x378] sm:$0xff]
  %v129 = vld [vmem:[%s0 + $0x380] sm:$0xff]
  %v130 = vld [vmem:[%s0 + $0x388] sm:$0xff]
  %v131 = vld [vmem:[%s0 + $0x390] sm:$0xff]
  %v132 = vld [vmem:[%s0 + $0x398] sm:$0xff]
  %v133 = vld [vmem:[%s0 + $0x3a0] sm:$0xff]
  %v134 = vld [vmem:[%s0 + $0x3a8] sm:$0xff]
  %v135 = vld [vmem:[%s0 + $0x3b0] sm:$0xff]
  %v136 = vld [vmem:[%s0 + $0x3b8] sm:$0xff]
  %v137 = vld [vmem:[%s0 + $0x3c0] sm:$0xff]
  %v138 = vld [vmem:[%s0 + $0x3c8] sm:$0xff]
  %v139 = vld [vmem:[%s0 + $0x3d0] sm:$0xff]
  %v140 = vld [vmem:[%s0 + $0x3d8] sm:$0xff]
  %v141 = vld [vmem:[%s0 + $0x3e0] sm:$0xff]
  %v142 = vld [vmem:[%s0 + $0x3e8] sm:$0xff]
  %v143 = vld [vmem:[%s0 + $0x3f0] sm:$0xff]
  %v144 = vld [vmem:[%s0 + $0x3f8] sm:$0xff]
  %v145 = vld [vmem:[%s1] sm:$0xf]
  %v146 = vld [vmem:[%s1 + $0x4] sm:$0xf]
  %v147 = vld [vmem:[%s1 + $0x8] sm:$0xf]
  %v148 = vld [vmem:[%s1 + $0xc] sm:$0xf]
  %v149 = vld [vmem:[%s1 + $0x10] sm:$0xf]
  %v150 = vld [vmem:[%s1 + $0x14] sm:$0xf]
  %v151 = vld [vmem:[%s1 + $0x18] sm:$0xf]
  %v152 = vld [vmem:[%s1 + $0x1c] sm:$0xf]
  %v153 = vld [vmem:[%s1 + $0x20] sm:$0xf]
  %v154 = vld [vmem:[%s1 + $0x24] sm:$0xf]
  %v155 = vld [vmem:[%s1 + $0x28] sm:$0xf]
  %v156 = vld [vmem:[%s1 + $0x2c] sm:$0xf]
  %v157 = vld [vmem:[%s1 + $0x30] sm:$0xf]
  %v158 = vld [vmem:[%s1 + $0x34] sm:$0xf]
  %v159 = vld [vmem:[%s1 + $0x38] sm:$0xf]
  %v160 = vld [vmem:[%s1 + $0x3c] sm:$0xf]
  %v161 = vld [vmem:[%s1 + $0x40] sm:$0xf]
  %v162 = vld [vmem:[%s1 + $0x44] sm:$0xf]
  %v163 = vld [vmem:[%s1 + $0x48] sm:$0xf]
  %v164 = vld [vmem:[%s1 + $0x4c] sm:$0xf]
  %v165 = vld [vmem:[%s1 + $0x50] sm:$0xf]
  %v166 = vld [vmem:[%s1 + $0x54] sm:$0xf]
  %v167 = vld [vmem:[%s1 + $0x58] sm:$0xf]
  %v168 = vld [vmem:[%s1 + $0x5c] sm:$0xf]
  %v169 = vld [vmem:[%s1 + $0x60] sm:$0xf]
  %v170 = vld [vmem:[%s1 + $0x64] sm:$0xf]
  %v171 = vld [vmem:[%s1 + $0x68] sm:$0xf]
  %v172 = vld [vmem:[%s1 + $0x6c] sm:$0xf]
  %v173 = vld [vmem:[%s1 + $0x70] sm:$0xf]
  %v174 = vld [vmem:[%s1 + $0x74] sm:$0xf]
  %v175 = vld [vmem:[%s1 + $0x78] sm:$0xf]
  %v176 = vld [vmem:[%s1 + $0x7c] sm:$0xf]
  %v177 = vld [vmem:[%s1 + $0x80] sm:$0xf]
  %v178 = vld [vmem:[%s1 + $0x84] sm:$0xf]
  %v179 = vld [vmem:[%s1 + $0x88] sm:$0xf]
  %v180 = vld [vmem:[%s1 + $0x8c] sm:$0xf]
  %v181 = vld [vmem:[%s1 + $0x90] sm:$0xf]
  %v182 = vld [vmem:[%s1 + $0x94] sm:$0xf]
  %v183 = vld [vmem:[%s1 + $0x98] sm:$0xf]
  %v184 = vld [vmem:[%s1 + $0x9c] sm:$0xf]
  %v185 = vld [vmem:[%s1 + $0xa0] sm:$0xf]
  %v186 = vld [vmem:[%s1 + $0xa4] sm:$0xf]
  %v187 = vld [vmem:[%s1 + $0xa8] sm:$0xf]
  %v188 = vld [vmem:[%s1 + $0xac] sm:$0xf]
  %v189 = vld [vmem:[%s1 + $0xb0] sm:$0xf]
  %v190 = vld [vmem:[%s1 + $0xb4] sm:$0xf]
  %v191 = vld [vmem:[%s1 + $0xb8] sm:$0xf]
  %v192 = vld [vmem:[%s1 + $0xbc] sm:$0xf]
  %v193 = vld [vmem:[%s1 + $0xc0] sm:$0xf]
  %v194 = vld [vmem:[%s1 + $0xc4] sm:$0xf]
  %v195 = vld [vmem:[%s1 + $0xc8] sm:$0xf]
  %v196 = vld [vmem:[%s1 + $0xcc] sm:$0xf]
  %v197 = vld [vmem:[%s1 + $0xd0] sm:$0xf]
  %v198 = vld [vmem:[%s1 + $0xd4] sm:$0xf]
  %v199 = vld [vmem:[%s1 + $0xd8] sm:$0xf]
  %v200 = vld [vmem:[%s1 + $0xdc] sm:$0xf]
  %v201 = vld [vmem:[%s1 + $0xe0] sm:$0xf]
  %v202 = vld [vmem:[%s1 + $0xe4] sm:$0xf]
  %v203 = vld [vmem:[%s1 + $0xe8] sm:$0xf]
  %v204 = vld [vmem:[%s1 + $0xec] sm:$0xf]
  %v205 = vld [vmem:[%s1 + $0xf0] sm:$0xf]
  %v206 = vld [vmem:[%s1 + $0xf4] sm:$0xf]
  %v207 = vld [vmem:[%s1 + $0xf8] sm:$0xf]
  %v208 = vld [vmem:[%s1 + $0xfc] sm:$0xf]
  %v209 = vld [vmem:[%s1 + $0x100] sm:$0xf]
  %v210 = vld [vmem:[%s1 + $0x104] sm:$0xf]
  %v211 = vld [vmem:[%s1 + $0x108] sm:$0xf]
  %v212 = vld [vmem:[%s1 + $0x10c] sm:$0xf]
  %v213 = vld [vmem:[%s1 + $0x110] sm:$0xf]
  %v214 = vld [vmem:[%s1 + $0x114] sm:$0xf]
  %v215 = vld [vmem:[%s1 + $0x118] sm:$0xf]
  %v216 = vld [vmem:[%s1 + $0x11c] sm:$0xf]
  %v217 = vld [vmem:[%s1 + $0x120] sm:$0xf]
  %v218 = vld [vmem:[%s1 + $0x124] sm:$0xf]
  %v219 = vld [vmem:[%s1 + $0x128] sm:$0xf]
  %v220 = vld [vmem:[%s1 + $0x12c] sm:$0xf]
  %v221 = vld [vmem:[%s1 + $0x130] sm:$0xf]
  %v222 = vld [vmem:[%s1 + $0x134] sm:$0xf]
  %v223 = vld [vmem:[%s1 + $0x138] sm:$0xf]
  %v224 = vld [vmem:[%s1 + $0x13c] sm:$0xf]
  %v225 = vld [vmem:[%s1 + $0x140] sm:$0xf]
  %v226 = vld [vmem:[%s1 + $0x144] sm:$0xf]
  %v227 = vld [vmem:[%s1 + $0x148] sm:$0xf]
  %v228 = vld [vmem:[%s1 + $0x14c] sm:$0xf]
  %v229 = vld [vmem:[%s1 + $0x150] sm:$0xf]
  %v230 = vld [vmem:[%s1 + $0x154] sm:$0xf]
  %v231 = vld [vmem:[%s1 + $0x158] sm:$0xf]
  %v232 = vld [vmem:[%s1 + $0x15c] sm:$0xf]
  %v233 = vld [vmem:[%s1 + $0x160] sm:$0xf]
  %v234 = vld [vmem:[%s1 + $0x164] sm:$0xf]
  %v235 = vld [vmem:[%s1 + $0x168] sm:$0xf]
  %v236 = vld [vmem:[%s1 + $0x16c] sm:$0xf]
  %v237 = vld [vmem:[%s1 + $0x170] sm:$0xf]
  %v238 = vld [vmem:[%s1 + $0x174] sm:$0xf]
  %v239 = vld [vmem:[%s1 + $0x178] sm:$0xf]
  %v240 = vld [vmem:[%s1 + $0x17c] sm:$0xf]
  %v241 = vld [vmem:[%s1 + $0x180] sm:$0xf]
  %v242 = vld [vmem:[%s1 + $0x184] sm:$0xf]
  %v243 = vld [vmem:[%s1 + $0x188] sm:$0xf]
  %v244 = vld [vmem:[%s1 + $0x18c] sm:$0xf]
  %v245 = vld [vmem:[%s1 + $0x190] sm:$0xf]
  %v246 = vld [vmem:[%s1 + $0x194] sm:$0xf]
  %v247 = vld [vmem:[%s1 + $0x198] sm:$0xf]
  %v248 = vld [vmem:[%s1 + $0x19c] sm:$0xf]
  %v249 = vld [vmem:[%s1 + $0x1a0] sm:$0xf]
  %v250 = vld [vmem:[%s1 + $0x1a4] sm:$0xf]
  %v251 = vld [vmem:[%s1 + $0x1a8] sm:$0xf]
  %v252 = vld [vmem:[%s1 + $0x1ac] sm:$0xf]
  %v253 = vld [vmem:[%s1 + $0x1b0] sm:$0xf]
  %v254 = vld [vmem:[%s1 + $0x1b4] sm:$0xf]
  %v255 = vld [vmem:[%s1 + $0x1b8] sm:$0xf]
  %v256 = vld [vmem:[%s1 + $0x1bc] sm:$0xf]
  %v257 = vld [vmem:[%s1 + $0x1c0] sm:$0xf]
  %v258 = vld [vmem:[%s1 + $0x1c4] sm:$0xf]
  %v259 = vld [vmem:[%s1 + $0x1c8] sm:$0xf]
  %v260 = vld [vmem:[%s1 + $0x1cc] sm:$0xf]
  %v261 = vld [vmem:[%s1 + $0x1d0] sm:$0xf]
  %v262 = vld [vmem:[%s1 + $0x1d4] sm:$0xf]
  %v263 = vld [vmem:[%s1 + $0x1d8] sm:$0xf]
  %v264 = vld [vmem:[%s1 + $0x1dc] sm:$0xf]
  %v265 = vld [vmem:[%s1 + $0x1e0] sm:$0xf]
  %v266 = vld [vmem:[%s1 + $0x1e4] sm:$0xf]
  %v267 = vld [vmem:[%s1 + $0x1e8] sm:$0xf]
  %v268 = vld [vmem:[%s1 + $0x1ec] sm:$0xf]
  %v269 = vld [vmem:[%s1 + $0x1f0] sm:$0xf]
  %v270 = vld [vmem:[%s1 + $0x1f4] sm:$0xf]
  %v271 = vld [vmem:[%s1 + $0x1f8] sm:$0xf]
  %v272 = vld [vmem:[%s1 + $0x1fc] sm:$0xf]
  %v273 = vld [vmem:[%s1 + $0x200] sm:$0xf]
  %v274 = vld [vmem:[%s1 + $0x204] sm:$0xf]
  %v275 = vld [vmem:[%s1 + $0x208] sm:$0xf]
  %v276 = vld [vmem:[%s1 + $0x20c] sm:$0xf]
  %v277 = vld [vmem:[%s1 + $0x210] sm:$0xf]
  %v278 = vld [vmem:[%s1 + $0x214] sm:$0xf]
  %v279 = vld [vmem:[%s1 + $0x218] sm:$0xf]
  %v280 = vld [vmem:[%s1 + $0x21c] sm:$0xf]
  %v281 = vld [vmem:[%s1 + $0x220] sm:$0xf]
  %v282 = vld [vmem:[%s1 + $0x224] sm:$0xf]
  %v283 = vld [vmem:[%s1 + $0x228] sm:$0xf]
  %v284 = vld [vmem:[%s1 + $0x22c] sm:$0xf]
  %v285 = vld [vmem:[%s1 + $0x230] sm:$0xf]
  %v286 = vld [vmem:[%s1 + $0x234] sm:$0xf]
  %v287 = vld [vmem:[%s1 + $0x238] sm:$0xf]
  %v288 = vld [vmem:[%s1 + $0x23c] sm:$0xf]
  %v289 = vld [vmem:[%s1 + $0x240] sm:$0xf]
  %v290 = vld [vmem:[%s1 + $0x244] sm:$0xf]
  %v291 = vld [vmem:[%s1 + $0x248] sm:$0xf]
  %v292 = vld [vmem:[%s1 + $0x24c] sm:$0xf]
  %v293 = vld [vmem:[%s1 + $0x250] sm:$0xf]
  %v294 = vld [vmem:[%s1 + $0x254] sm:$0xf]
  %v295 = vld [vmem:[%s1 + $0x258] sm:$0xf]
  %v296 = vld [vmem:[%s1 + $0x25c] sm:$0xf]
  %v297 = vld [vmem:[%s1 + $0x260] sm:$0xf]
  %v298 = vld [vmem:[%s1 + $0x264] sm:$0xf]
  %v299 = vld [vmem:[%s1 + $0x268] sm:$0xf]
  %v300 = vld [vmem:[%s1 + $0x26c] sm:$0xf]
  %v301 = vld [vmem:[%s1 + $0x270] sm:$0xf]
  %v302 = vld [vmem:[%s1 + $0x274] sm:$0xf]
  %v303 = vld [vmem:[%s1 + $0x278] sm:$0xf]
  %v304 = vld [vmem:[%s1 + $0x27c] sm:$0xf]
  %v305 = vld [vmem:[%s1 + $0x280] sm:$0xf]
  %v306 = vld [vmem:[%s1 + $0x284] sm:$0xf]
  %v307 = vld [vmem:[%s1 + $0x288] sm:$0xf]
  %v308 = vld [vmem:[%s1 + $0x28c] sm:$0xf]
  %v309 = vld [vmem:[%s1 + $0x290] sm:$0xf]
  %v310 = vld [vmem:[%s1 + $0x294] sm:$0xf]
  %v311 = vld [vmem:[%s1 + $0x298] sm:$0xf]
  %v312 = vld [vmem:[%s1 + $0x29c] sm:$0xf]
  %v313 = vld [vmem:[%s1 + $0x2a0] sm:$0xf]
  %v314 = vld [vmem:[%s1 + $0x2a4] sm:$0xf]
  %v315 = vld [vmem:[%s1 + $0x2a8] sm:$0xf]
  %v316 = vld [vmem:[%s1 + $0x2ac] sm:$0xf]
  %v317 = vld [vmem:[%s1 + $0x2b0] sm:$0xf]
  %v318 = vld [vmem:[%s1 + $0x2b4] sm:$0xf]
  %v319 = vld [vmem:[%s1 + $0x2b8] sm:$0xf]
  %v320 = vld [vmem:[%s1 + $0x2bc] sm:$0xf]
  %v321 = vld [vmem:[%s1 + $0x2c0] sm:$0xf]
  %v322 = vld [vmem:[%s1 + $0x2c4] sm:$0xf]
  %v323 = vld [vmem:[%s1 + $0x2c8] sm:$0xf]
  %v324 = vld [vmem:[%s1 + $0x2cc] sm:$0xf]
  %v325 = vld [vmem:[%s1 + $0x2d0] sm:$0xf]
  %v326 = vld [vmem:[%s1 + $0x2d4] sm:$0xf]
  %v327 = vld [vmem:[%s1 + $0x2d8] sm:$0xf]
  %v328 = vld [vmem:[%s1 + $0x2dc] sm:$0xf]
  %v329 = vld [vmem:[%s1 + $0x2e0] sm:$0xf]
  %v330 = vld [vmem:[%s1 + $0x2e4] sm:$0xf]
  %v331 = vld [vmem:[%s1 + $0x2e8] sm:$0xf]
  %v332 = vld [vmem:[%s1 + $0x2ec] sm:$0xf]
  %v333 = vld [vmem:[%s1 + $0x2f0] sm:$0xf]
  %v334 = vld [vmem:[%s1 + $0x2f4] sm:$0xf]
  %v335 = vld [vmem:[%s1 + $0x2f8] sm:$0xf]
  %v336 = vld [vmem:[%s1 + $0x2fc] sm:$0xf]
  %v337 = vld [vmem:[%s1 + $0x300] sm:$0xf]
  %v338 = vld [vmem:[%s1 + $0x304] sm:$0xf]
  %v339 = vld [vmem:[%s1 + $0x308] sm:$0xf]
  %v340 = vld [vmem:[%s1 + $0x30c] sm:$0xf]
  %v341 = vld [vmem:[%s1 + $0x310] sm:$0xf]
  %v342 = vld [vmem:[%s1 + $0x314] sm:$0xf]
  %v343 = vld [vmem:[%s1 + $0x318] sm:$0xf]
  %v344 = vld [vmem:[%s1 + $0x31c] sm:$0xf]
  %v345 = vld [vmem:[%s1 + $0x320] sm:$0xf]
  %v346 = vld [vmem:[%s1 + $0x324] sm:$0xf]
  %v347 = vld [vmem:[%s1 + $0x328] sm:$0xf]
  %v348 = vld [vmem:[%s1 + $0x32c] sm:$0xf]
  %v349 = vld [vmem:[%s1 + $0x330] sm:$0xf]
  %v350 = vld [vmem:[%s1 + $0x334] sm:$0xf]
  %v351 = vld [vmem:[%s1 + $0x338] sm:$0xf]
  %v352 = vld [vmem:[%s1 + $0x33c] sm:$0xf]
  %v353 = vld [vmem:[%s1 + $0x340] sm:$0xf]
  %v354 = vld [vmem:[%s1 + $0x344] sm:$0xf]
  %v355 = vld [vmem:[%s1 + $0x348] sm:$0xf]
  %v356 = vld [vmem:[%s1 + $0x34c] sm:$0xf]
  %v357 = vld [vmem:[%s1 + $0x350] sm:$0xf]
  %v358 = vld [vmem:[%s1 + $0x354] sm:$0xf]
  %v359 = vld [vmem:[%s1 + $0x358] sm:$0xf]
  %v360 = vld [vmem:[%s1 + $0x35c] sm:$0xf]
  %v361 = vld [vmem:[%s1 + $0x360] sm:$0xf]
  %v362 = vld [vmem:[%s1 + $0x364] sm:$0xf]
  %v363 = vld [vmem:[%s1 + $0x368] sm:$0xf]
  %v364 = vld [vmem:[%s1 + $0x36c] sm:$0xf]
  %v365 = vld [vmem:[%s1 + $0x370] sm:$0xf]
  %v366 = vld [vmem:[%s1 + $0x374] sm:$0xf]
  %v367 = vld [vmem:[%s1 + $0x378] sm:$0xf]
  %v368 = vld [vmem:[%s1 + $0x37c] sm:$0xf]
  %v369 = vld [vmem:[%s1 + $0x380] sm:$0xf]
  %v370 = vld [vmem:[%s1 + $0x384] sm:$0xf]
  %v371 = vld [vmem:[%s1 + $0x388] sm:$0xf]
  %v372 = vld [vmem:[%s1 + $0x38c] sm:$0xf]
  %v373 = vld [vmem:[%s1 + $0x390] sm:$0xf]
  %v374 = vld [vmem:[%s1 + $0x394] sm:$0xf]
  %v375 = vld [vmem:[%s1 + $0x398] sm:$0xf]
  %v376 = vld [vmem:[%s1 + $0x39c] sm:$0xf]
  %v377 = vld [vmem:[%s1 + $0x3a0] sm:$0xf]
  %v378 = vld [vmem:[%s1 + $0x3a4] sm:$0xf]
  %v379 = vld [vmem:[%s1 + $0x3a8] sm:$0xf]
  %v380 = vld [vmem:[%s1 + $0x3ac] sm:$0xf]
  %v381 = vld [vmem:[%s1 + $0x3b0] sm:$0xf]
  %v382 = vld [vmem:[%s1 + $0x3b4] sm:$0xf]
  %v383 = vld [vmem:[%s1 + $0x3b8] sm:$0xf]
  %v384 = vld [vmem:[%s1 + $0x3bc] sm:$0xf]
  %v385 = vld [vmem:[%s1 + $0x3c0] sm:$0xf]
  %v386 = vld [vmem:[%s1 + $0x3c4] sm:$0xf]
  %v387 = vld [vmem:[%s1 + $0x3c8] sm:$0xf]
  %v388 = vld [vmem:[%s1 + $0x3cc] sm:$0xf]
  %v389 = vld [vmem:[%s1 + $0x3d0] sm:$0xf]
  %v390 = vld [vmem:[%s1 + $0x3d4] sm:$0xf]
  %v391 = vld [vmem:[%s1 + $0x3d8] sm:$0xf]
  %v392 = vld [vmem:[%s1 + $0x3dc] sm:$0xf]
  %v393 = vld [vmem:[%s1 + $0x3e0] sm:$0xf]
  %v394 = vld [vmem:[%s1 + $0x3e4] sm:$0xf]
  %v395 = vld [vmem:[%s1 + $0x3e8] sm:$0xf]
  %v396 = vld [vmem:[%s1 + $0x3ec] sm:$0xf]
  %v397 = vld [vmem:[%s1 + $0x3f0] sm:$0xf]
  %v398 = vld [vmem:[%s1 + $0x3f4] sm:$0xf]
  %v399 = vld [vmem:[%s1 + $0x3f8] sm:$0xf]
  %v400 = vld [vmem:[%s1 + $0x3fc] sm:$0xf]
  %v529 = vunpack.c.l.b16 %v17
  %v530 = vunpack.c.h.b16 %v17
  %v531 = vunpack.c.l.b16 %v18
  %v532 = vunpack.c.h.b16 %v18
  %v533 = vunpack.c.l.b16 %v19
  %v534 = vunpack.c.h.b16 %v19
  %v535 = vunpack.c.l.b16 %v20
  %v536 = vunpack.c.h.b16 %v20
  %v537 = vunpack.c.l.b16 %v21
  %v538 = vunpack.c.h.b16 %v21
  %v539 = vunpack.c.l.b16 %v22
  %v540 = vunpack.c.h.b16 %v22
  %v541 = vunpack.c.l.b16 %v23
  %v542 = vunpack.c.h.b16 %v23
  %v543 = vunpack.c.l.b16 %v24
  %v544 = vunpack.c.h.b16 %v24
  %v545 = vunpack.c.l.b16 %v25
  %v546 = vunpack.c.h.b16 %v25
  %v547 = vunpack.c.l.b16 %v26
  %v548 = vunpack.c.h.b16 %v26
  %v549 = vunpack.c.l.b16 %v27
  %v550 = vunpack.c.h.b16 %v27
  %v551 = vunpack.c.l.b16 %v28
  %v552 = vunpack.c.h.b16 %v28
  %v553 = vunpack.c.l.b16 %v29
  %v554 = vunpack.c.h.b16 %v29
  %v555 = vunpack.c.l.b16 %v30
  %v556 = vunpack.c.h.b16 %v30
  %v557 = vunpack.c.l.b16 %v31
  %v558 = vunpack.c.h.b16 %v31
  %v559 = vunpack.c.l.b16 %v32
  %v560 = vunpack.c.h.b16 %v32
  %v561 = vunpack.c.l.b16 %v33
  %v562 = vunpack.c.h.b16 %v33
  %v563 = vunpack.c.l.b16 %v34
  %v564 = vunpack.c.h.b16 %v34
  %v565 = vunpack.c.l.b16 %v35
  %v566 = vunpack.c.h.b16 %v35
  %v567 = vunpack.c.l.b16 %v36
  %v568 = vunpack.c.h.b16 %v36
  %v569 = vunpack.c.l.b16 %v37
  %v570 = vunpack.c.h.b16 %v37
  %v571 = vunpack.c.l.b16 %v38
  %v572 = vunpack.c.h.b16 %v38
  %v573 = vunpack.c.l.b16 %v39
  %v574 = vunpack.c.h.b16 %v39
  %v575 = vunpack.c.l.b16 %v40
  %v576 = vunpack.c.h.b16 %v40
  %v577 = vunpack.c.l.b16 %v41
  %v578 = vunpack.c.h.b16 %v41
  %v579 = vunpack.c.l.b16 %v42
  %v580 = vunpack.c.h.b16 %v42
  %v581 = vunpack.c.l.b16 %v43
  %v582 = vunpack.c.h.b16 %v43
  %v583 = vunpack.c.l.b16 %v44
  %v584 = vunpack.c.h.b16 %v44
  %v585 = vunpack.c.l.b16 %v45
  %v586 = vunpack.c.h.b16 %v45
  %v587 = vunpack.c.l.b16 %v46
  %v588 = vunpack.c.h.b16 %v46
  %v589 = vunpack.c.l.b16 %v47
  %v590 = vunpack.c.h.b16 %v47
  %v591 = vunpack.c.l.b16 %v48
  %v592 = vunpack.c.h.b16 %v48
  %v593 = vunpack.c.l.b16 %v49
  %v594 = vunpack.c.h.b16 %v49
  %v595 = vunpack.c.l.b16 %v50
  %v596 = vunpack.c.h.b16 %v50
  %v597 = vunpack.c.l.b16 %v51
  %v598 = vunpack.c.h.b16 %v51
  %v599 = vunpack.c.l.b16 %v52
  %v600 = vunpack.c.h.b16 %v52
  %v601 = vunpack.c.l.b16 %v53
  %v602 = vunpack.c.h.b16 %v53
  %v603 = vunpack.c.l.b16 %v54
  %v604 = vunpack.c.h.b16 %v54
  %v605 = vunpack.c.l.b16 %v55
  %v606 = vunpack.c.h.b16 %v55
  %v607 = vunpack.c.l.b16 %v56
  %v608 = vunpack.c.h.b16 %v56
  %v609 = vunpack.c.l.b16 %v57
  %v610 = vunpack.c.h.b16 %v57
  %v611 = vunpack.c.l.b16 %v58
  %v612 = vunpack.c.h.b16 %v58
  %v613 = vunpack.c.l.b16 %v59
  %v614 = vunpack.c.h.b16 %v59
  %v615 = vunpack.c.l.b16 %v60
  %v616 = vunpack.c.h.b16 %v60
  %v617 = vunpack.c.l.b16 %v61
  %v618 = vunpack.c.h.b16 %v61
  %v619 = vunpack.c.l.b16 %v62
  %v620 = vunpack.c.h.b16 %v62
  %v621 = vunpack.c.l.b16 %v63
  %v622 = vunpack.c.h.b16 %v63
  %v623 = vunpack.c.l.b16 %v64
  %v624 = vunpack.c.h.b16 %v64
  %v625 = vunpack.c.l.b16 %v65
  %v626 = vunpack.c.h.b16 %v65
  %v627 = vunpack.c.l.b16 %v66
  %v628 = vunpack.c.h.b16 %v66
  %v629 = vunpack.c.l.b16 %v67
  %v630 = vunpack.c.h.b16 %v67
  %v631 = vunpack.c.l.b16 %v68
  %v632 = vunpack.c.h.b16 %v68
  %v633 = vunpack.c.l.b16 %v69
  %v634 = vunpack.c.h.b16 %v69
  %v635 = vunpack.c.l.b16 %v70
  %v636 = vunpack.c.h.b16 %v70
  %v637 = vunpack.c.l.b16 %v71
  %v638 = vunpack.c.h.b16 %v71
  %v639 = vunpack.c.l.b16 %v72
  %v640 = vunpack.c.h.b16 %v72
  %v641 = vunpack.c.l.b16 %v73
  %v642 = vunpack.c.h.b16 %v73
  %v643 = vunpack.c.l.b16 %v74
  %v644 = vunpack.c.h.b16 %v74
  %v645 = vunpack.c.l.b16 %v75
  %v646 = vunpack.c.h.b16 %v75
  %v647 = vunpack.c.l.b16 %v76
  %v648 = vunpack.c.h.b16 %v76
  %v649 = vunpack.c.l.b16 %v77
  %v650 = vunpack.c.h.b16 %v77
  %v651 = vunpack.c.l.b16 %v78
  %v652 = vunpack.c.h.b16 %v78
  %v653 = vunpack.c.l.b16 %v79
  %v654 = vunpack.c.h.b16 %v79
  %v655 = vunpack.c.l.b16 %v80
  %v656 = vunpack.c.h.b16 %v80
  %v657 = vunpack.c.l.b16 %v81
  %v658 = vunpack.c.h.b16 %v81
  %v659 = vunpack.c.l.b16 %v82
  %v660 = vunpack.c.h.b16 %v82
  %v661 = vunpack.c.l.b16 %v83
  %v662 = vunpack.c.h.b16 %v83
  %v663 = vunpack.c.l.b16 %v84
  %v664 = vunpack.c.h.b16 %v84
  %v665 = vunpack.c.l.b16 %v85
  %v666 = vunpack.c.h.b16 %v85
  %v667 = vunpack.c.l.b16 %v86
  %v668 = vunpack.c.h.b16 %v86
  %v669 = vunpack.c.l.b16 %v87
  %v670 = vunpack.c.h.b16 %v87
  %v671 = vunpack.c.l.b16 %v88
  %v672 = vunpack.c.h.b16 %v88
  %v673 = vunpack.c.l.b16 %v89
  %v674 = vunpack.c.h.b16 %v89
  %v675 = vunpack.c.l.b16 %v90
  %v676 = vunpack.c.h.b16 %v90
  %v677 = vunpack.c.l.b16 %v91
  %v678 = vunpack.c.h.b16 %v91
  %v679 = vunpack.c.l.b16 %v92
  %v680 = vunpack.c.h.b16 %v92
  %v681 = vunpack.c.l.b16 %v93
  %v682 = vunpack.c.h.b16 %v93
  %v683 = vunpack.c.l.b16 %v94
  %v684 = vunpack.c.h.b16 %v94
  %v685 = vunpack.c.l.b16 %v95
  %v686 = vunpack.c.h.b16 %v95
  %v687 = vunpack.c.l.b16 %v96
  %v688 = vunpack.c.h.b16 %v96
  %v689 = vunpack.c.l.b16 %v97
  %v690 = vunpack.c.h.b16 %v97
  %v691 = vunpack.c.l.b16 %v98
  %v692 = vunpack.c.h.b16 %v98
  %v693 = vunpack.c.l.b16 %v99
  %v694 = vunpack.c.h.b16 %v99
  %v695 = vunpack.c.l.b16 %v100
  %v696 = vunpack.c.h.b16 %v100
  %v697 = vunpack.c.l.b16 %v101
  %v698 = vunpack.c.h.b16 %v101
  %v699 = vunpack.c.l.b16 %v102
  %v700 = vunpack.c.h.b16 %v102
  %v701 = vunpack.c.l.b16 %v103
  %v702 = vunpack.c.h.b16 %v103
  %v703 = vunpack.c.l.b16 %v104
  %v704 = vunpack.c.h.b16 %v104
  %v705 = vunpack.c.l.b16 %v105
  %v706 = vunpack.c.h.b16 %v105
  %v707 = vunpack.c.l.b16 %v106
  %v708 = vunpack.c.h.b16 %v106
  %v709 = vunpack.c.l.b16 %v107
  %v710 = vunpack.c.h.b16 %v107
  %v711 = vunpack.c.l.b16 %v108
  %v712 = vunpack.c.h.b16 %v108
  %v713 = vunpack.c.l.b16 %v109
  %v714 = vunpack.c.h.b16 %v109
  %v715 = vunpack.c.l.b16 %v110
  %v716 = vunpack.c.h.b16 %v110
  %v717 = vunpack.c.l.b16 %v111
  %v718 = vunpack.c.h.b16 %v111
  %v719 = vunpack.c.l.b16 %v112
  %v720 = vunpack.c.h.b16 %v112
  %v721 = vunpack.c.l.b16 %v113
  %v722 = vunpack.c.h.b16 %v113
  %v723 = vunpack.c.l.b16 %v114
  %v724 = vunpack.c.h.b16 %v114
  %v725 = vunpack.c.l.b16 %v115
  %v726 = vunpack.c.h.b16 %v115
  %v727 = vunpack.c.l.b16 %v116
  %v728 = vunpack.c.h.b16 %v116
  %v729 = vunpack.c.l.b16 %v117
  %v730 = vunpack.c.h.b16 %v117
  %v731 = vunpack.c.l.b16 %v118
  %v732 = vunpack.c.h.b16 %v118
  %v733 = vunpack.c.l.b16 %v119
  %v734 = vunpack.c.h.b16 %v119
  %v735 = vunpack.c.l.b16 %v120
  %v736 = vunpack.c.h.b16 %v120
  %v737 = vunpack.c.l.b16 %v121
  %v738 = vunpack.c.h.b16 %v121
  %v739 = vunpack.c.l.b16 %v122
  %v740 = vunpack.c.h.b16 %v122
  %v741 = vunpack.c.l.b16 %v123
  %v742 = vunpack.c.h.b16 %v123
  %v743 = vunpack.c.l.b16 %v124
  %v744 = vunpack.c.h.b16 %v124
  %v745 = vunpack.c.l.b16 %v125
  %v746 = vunpack.c.h.b16 %v125
  %v747 = vunpack.c.l.b16 %v126
  %v748 = vunpack.c.h.b16 %v126
  %v749 = vunpack.c.l.b16 %v127
  %v750 = vunpack.c.h.b16 %v127
  %v751 = vunpack.c.l.b16 %v128
  %v752 = vunpack.c.h.b16 %v128
  %v753 = vunpack.c.l.b16 %v129
  %v754 = vunpack.c.h.b16 %v129
  %v755 = vunpack.c.l.b16 %v130
  %v756 = vunpack.c.h.b16 %v130
  %v757 = vunpack.c.l.b16 %v131
  %v758 = vunpack.c.h.b16 %v131
  %v759 = vunpack.c.l.b16 %v132
  %v760 = vunpack.c.h.b16 %v132
  %v761 = vunpack.c.l.b16 %v133
  %v762 = vunpack.c.h.b16 %v133
  %v763 = vunpack.c.l.b16 %v134
  %v764 = vunpack.c.h.b16 %v134
  %v765 = vunpack.c.l.b16 %v135
  %v766 = vunpack.c.h.b16 %v135
  %v767 = vunpack.c.l.b16 %v136
  %v768 = vunpack.c.h.b16 %v136
  %v769 = vunpack.c.l.b16 %v137
  %v770 = vunpack.c.h.b16 %v137
  %v771 = vunpack.c.l.b16 %v138
  %v772 = vunpack.c.h.b16 %v138
  %v773 = vunpack.c.l.b16 %v139
  %v774 = vunpack.c.h.b16 %v139
  %v775 = vunpack.c.l.b16 %v140
  %v776 = vunpack.c.h.b16 %v140
  %v777 = vunpack.c.l.b16 %v141
  %v778 = vunpack.c.h.b16 %v141
  %v779 = vunpack.c.l.b16 %v142
  %v780 = vunpack.c.h.b16 %v142
  %v781 = vunpack.c.l.b16 %v143
  %v782 = vunpack.c.h.b16 %v143
  %v783 = vunpack.c.l.b16 %v144
  %v784 = vunpack.c.h.b16 %v144
  %v785 = vpack.c.b16 %v545, %v529
  %v786 = vpack.c.b16 %v546, %v530
  %v787 = vpack.c.b16 %v547, %v531
  %v788 = vpack.c.b16 %v548, %v532
  %v789 = vpack.c.b16 %v549, %v533
  %v790 = vpack.c.b16 %v550, %v534
  %v791 = vpack.c.b16 %v551, %v535
  %v792 = vpack.c.b16 %v552, %v536
  %v793 = vpack.c.b16 %v553, %v537
  %v794 = vpack.c.b16 %v554, %v538
  %v795 = vpack.c.b16 %v555, %v539
  %v796 = vpack.c.b16 %v556, %v540
  %v797 = vpack.c.b16 %v557, %v541
  %v798 = vpack.c.b16 %v558, %v542
  %v799 = vpack.c.b16 %v559, %v543
  %v800 = vpack.c.b16 %v560, %v544
  %v801 = vpack.c.b16 %v577, %v561
  %v802 = vpack.c.b16 %v578, %v562
  %v803 = vpack.c.b16 %v579, %v563
  %v804 = vpack.c.b16 %v580, %v564
  %v805 = vpack.c.b16 %v581, %v565
  %v806 = vpack.c.b16 %v582, %v566
  %v807 = vpack.c.b16 %v583, %v567
  %v808 = vpack.c.b16 %v584, %v568
  %v809 = vpack.c.b16 %v585, %v569
  %v810 = vpack.c.b16 %v586, %v570
  %v811 = vpack.c.b16 %v587, %v571
  %v812 = vpack.c.b16 %v588, %v572
  %v813 = vpack.c.b16 %v589, %v573
  %v814 = vpack.c.b16 %v590, %v574
  %v815 = vpack.c.b16 %v591, %v575
  %v816 = vpack.c.b16 %v592, %v576
  %v817 = vpack.c.b16 %v609, %v593
  %v818 = vpack.c.b16 %v610, %v594
  %v819 = vpack.c.b16 %v611, %v595
  %v820 = vpack.c.b16 %v612, %v596
  %v821 = vpack.c.b16 %v613, %v597
  %v822 = vpack.c.b16 %v614, %v598
  %v823 = vpack.c.b16 %v615, %v599
  %v824 = vpack.c.b16 %v616, %v600
  %v825 = vpack.c.b16 %v617, %v601
  %v826 = vpack.c.b16 %v618, %v602
  %v827 = vpack.c.b16 %v619, %v603
  %v828 = vpack.c.b16 %v620, %v604
  %v829 = vpack.c.b16 %v621, %v605
  %v830 = vpack.c.b16 %v622, %v606
  %v831 = vpack.c.b16 %v623, %v607
  %v832 = vpack.c.b16 %v624, %v608
  %v833 = vpack.c.b16 %v641, %v625
  %v834 = vpack.c.b16 %v642, %v626
  %v835 = vpack.c.b16 %v643, %v627
  %v836 = vpack.c.b16 %v644, %v628
  %v837 = vpack.c.b16 %v645, %v629
  %v838 = vpack.c.b16 %v646, %v630
  %v839 = vpack.c.b16 %v647, %v631
  %v840 = vpack.c.b16 %v648, %v632
  %v841 = vpack.c.b16 %v649, %v633
  %v842 = vpack.c.b16 %v650, %v634
  %v843 = vpack.c.b16 %v651, %v635
  %v844 = vpack.c.b16 %v652, %v636
  %v845 = vpack.c.b16 %v653, %v637
  %v846 = vpack.c.b16 %v654, %v638
  %v847 = vpack.c.b16 %v655, %v639
  %v848 = vpack.c.b16 %v656, %v640
  %v849 = vpack.c.b16 %v673, %v657
  %v850 = vpack.c.b16 %v674, %v658
  %v851 = vpack.c.b16 %v675, %v659
  %v852 = vpack.c.b16 %v676, %v660
  %v853 = vpack.c.b16 %v677, %v661
  %v854 = vpack.c.b16 %v678, %v662
  %v855 = vpack.c.b16 %v679, %v663
  %v856 = vpack.c.b16 %v680, %v664
  %v857 = vpack.c.b16 %v681, %v665
  %v858 = vpack.c.b16 %v682, %v666
  %v859 = vpack.c.b16 %v683, %v667
  %v860 = vpack.c.b16 %v684, %v668
  %v861 = vpack.c.b16 %v685, %v669
  %v862 = vpack.c.b16 %v686, %v670
  %v863 = vpack.c.b16 %v687, %v671
  %v864 = vpack.c.b16 %v688, %v672
  %v865 = vpack.c.b16 %v705, %v689
  %v866 = vpack.c.b16 %v706, %v690
  %v867 = vpack.c.b16 %v707, %v691
  %v868 = vpack.c.b16 %v708, %v692
  %v869 = vpack.c.b16 %v709, %v693
  %v870 = vpack.c.b16 %v710, %v694
  %v871 = vpack.c.b16 %v711, %v695
  %v872 = vpack.c.b16 %v712, %v696
  %v873 = vpack.c.b16 %v713, %v697
  %v874 = vpack.c.b16 %v714, %v698
  %v875 = vpack.c.b16 %v715, %v699
  %v876 = vpack.c.b16 %v716, %v700
  %v877 = vpack.c.b16 %v717, %v701
  %v878 = vpack.c.b16 %v718, %v702
  %v879 = vpack.c.b16 %v719, %v703
  %v880 = vpack.c.b16 %v720, %v704
  %v881 = vpack.c.b16 %v737, %v721
  %v882 = vpack.c.b16 %v738, %v722
  %v883 = vpack.c.b16 %v739, %v723
  %v884 = vpack.c.b16 %v740, %v724
  %v885 = vpack.c.b16 %v741, %v725
  %v886 = vpack.c.b16 %v742, %v726
  %v887 = vpack.c.b16 %v743, %v727
  %v888 = vpack.c.b16 %v744, %v728
  %v889 = vpack.c.b16 %v745, %v729
  %v890 = vpack.c.b16 %v746, %v730
  %v891 = vpack.c.b16 %v747, %v731
  %v892 = vpack.c.b16 %v748, %v732
  %v893 = vpack.c.b16 %v749, %v733
  %v894 = vpack.c.b16 %v750, %v734
  %v895 = vpack.c.b16 %v751, %v735
  %v896 = vpack.c.b16 %v752, %v736
  %v897 = vpack.c.b16 %v769, %v753
  %v898 = vpack.c.b16 %v770, %v754
  %v899 = vpack.c.b16 %v771, %v755
  %v900 = vpack.c.b16 %v772, %v756
  %v901 = vpack.c.b16 %v773, %v757
  %v902 = vpack.c.b16 %v774, %v758
  %v903 = vpack.c.b16 %v775, %v759
  %v904 = vpack.c.b16 %v776, %v760
  %v905 = vpack.c.b16 %v777, %v761
  %v906 = vpack.c.b16 %v778, %v762
  %v907 = vpack.c.b16 %v779, %v763
  %v908 = vpack.c.b16 %v780, %v764
  %v909 = vpack.c.b16 %v781, %v765
  %v910 = vpack.c.b16 %v782, %v766
  %v911 = vpack.c.b16 %v783, %v767
  %v912 = vpack.c.b16 %v784, %v768
  %v1297 = vunpack.c.l.b16 %v145
  %v1298 = vunpack.c.l.b16 %v146
  %v1299 = vunpack.c.l.b16 %v147
  %v1300 = vunpack.c.l.b16 %v148
  %v1301 = vunpack.c.l.b16 %v149
  %v1302 = vunpack.c.l.b16 %v150
  %v1303 = vunpack.c.l.b16 %v151
  %v1304 = vunpack.c.l.b16 %v152
  %v1305 = vunpack.c.l.b16 %v153
  %v1306 = vunpack.c.l.b16 %v154
  %v1307 = vunpack.c.l.b16 %v155
  %v1308 = vunpack.c.l.b16 %v156
  %v1309 = vunpack.c.l.b16 %v157
  %v1310 = vunpack.c.l.b16 %v158
  %v1311 = vunpack.c.l.b16 %v159
  %v1312 = vunpack.c.l.b16 %v160
  %v1313 = vunpack.c.l.b16 %v161
  %v1314 = vunpack.c.l.b16 %v162
  %v1315 = vunpack.c.l.b16 %v163
  %v1316 = vunpack.c.l.b16 %v164
  %v1317 = vunpack.c.l.b16 %v165
  %v1318 = vunpack.c.l.b16 %v166
  %v1319 = vunpack.c.l.b16 %v167
  %v1320 = vunpack.c.l.b16 %v168
  %v1321 = vunpack.c.l.b16 %v169
  %v1322 = vunpack.c.l.b16 %v170
  %v1323 = vunpack.c.l.b16 %v171
  %v1324 = vunpack.c.l.b16 %v172
  %v1325 = vunpack.c.l.b16 %v173
  %v1326 = vunpack.c.l.b16 %v174
  %v1327 = vunpack.c.l.b16 %v175
  %v1328 = vunpack.c.l.b16 %v176
  %v1329 = vunpack.c.l.b16 %v177
  %v1330 = vunpack.c.l.b16 %v178
  %v1331 = vunpack.c.l.b16 %v179
  %v1332 = vunpack.c.l.b16 %v180
  %v1333 = vunpack.c.l.b16 %v181
  %v1334 = vunpack.c.l.b16 %v182
  %v1335 = vunpack.c.l.b16 %v183
  %v1336 = vunpack.c.l.b16 %v184
  %v1337 = vunpack.c.l.b16 %v185
  %v1338 = vunpack.c.l.b16 %v186
  %v1339 = vunpack.c.l.b16 %v187
  %v1340 = vunpack.c.l.b16 %v188
  %v1341 = vunpack.c.l.b16 %v189
  %v1342 = vunpack.c.l.b16 %v190
  %v1343 = vunpack.c.l.b16 %v191
  %v1344 = vunpack.c.l.b16 %v192
  %v1345 = vunpack.c.l.b16 %v193
  %v1346 = vunpack.c.l.b16 %v194
  %v1347 = vunpack.c.l.b16 %v195
  %v1348 = vunpack.c.l.b16 %v196
  %v1349 = vunpack.c.l.b16 %v197
  %v1350 = vunpack.c.l.b16 %v198
  %v1351 = vunpack.c.l.b16 %v199
  %v1352 = vunpack.c.l.b16 %v200
  %v1353 = vunpack.c.l.b16 %v201
  %v1354 = vunpack.c.l.b16 %v202
  %v1355 = vunpack.c.l.b16 %v203
  %v1356 = vunpack.c.l.b16 %v204
  %v1357 = vunpack.c.l.b16 %v205
  %v1358 = vunpack.c.l.b16 %v206
  %v1359 = vunpack.c.l.b16 %v207
  %v1360 = vunpack.c.l.b16 %v208
  %v1361 = vunpack.c.l.b16 %v209
  %v1362 = vunpack.c.l.b16 %v210
  %v1363 = vunpack.c.l.b16 %v211
  %v1364 = vunpack.c.l.b16 %v212
  %v1365 = vunpack.c.l.b16 %v213
  %v1366 = vunpack.c.l.b16 %v214
  %v1367 = vunpack.c.l.b16 %v215
  %v1368 = vunpack.c.l.b16 %v216
  %v1369 = vunpack.c.l.b16 %v217
  %v1370 = vunpack.c.l.b16 %v218
  %v1371 = vunpack.c.l.b16 %v219
  %v1372 = vunpack.c.l.b16 %v220
  %v1373 = vunpack.c.l.b16 %v221
  %v1374 = vunpack.c.l.b16 %v222
  %v1375 = vunpack.c.l.b16 %v223
  %v1376 = vunpack.c.l.b16 %v224
  %v1377 = vunpack.c.l.b16 %v225
  %v1378 = vunpack.c.l.b16 %v226
  %v1379 = vunpack.c.l.b16 %v227
  %v1380 = vunpack.c.l.b16 %v228
  %v1381 = vunpack.c.l.b16 %v229
  %v1382 = vunpack.c.l.b16 %v230
  %v1383 = vunpack.c.l.b16 %v231
  %v1384 = vunpack.c.l.b16 %v232
  %v1385 = vunpack.c.l.b16 %v233
  %v1386 = vunpack.c.l.b16 %v234
  %v1387 = vunpack.c.l.b16 %v235
  %v1388 = vunpack.c.l.b16 %v236
  %v1389 = vunpack.c.l.b16 %v237
  %v1390 = vunpack.c.l.b16 %v238
  %v1391 = vunpack.c.l.b16 %v239
  %v1392 = vunpack.c.l.b16 %v240
  %v1393 = vunpack.c.l.b16 %v241
  %v1394 = vunpack.c.l.b16 %v242
  %v1395 = vunpack.c.l.b16 %v243
  %v1396 = vunpack.c.l.b16 %v244
  %v1397 = vunpack.c.l.b16 %v245
  %v1398 = vunpack.c.l.b16 %v246
  %v1399 = vunpack.c.l.b16 %v247
  %v1400 = vunpack.c.l.b16 %v248
  %v1401 = vunpack.c.l.b16 %v249
  %v1402 = vunpack.c.l.b16 %v250
  %v1403 = vunpack.c.l.b16 %v251
  %v1404 = vunpack.c.l.b16 %v252
  %v1405 = vunpack.c.l.b16 %v253
  %v1406 = vunpack.c.l.b16 %v254
  %v1407 = vunpack.c.l.b16 %v255
  %v1408 = vunpack.c.l.b16 %v256
  %v1409 = vunpack.c.l.b16 %v257
  %v1410 = vunpack.c.l.b16 %v258
  %v1411 = vunpack.c.l.b16 %v259
  %v1412 = vunpack.c.l.b16 %v260
  %v1413 = vunpack.c.l.b16 %v261
  %v1414 = vunpack.c.l.b16 %v262
  %v1415 = vunpack.c.l.b16 %v263
  %v1416 = vunpack.c.l.b16 %v264
  %v1417 = vunpack.c.l.b16 %v265
  %v1418 = vunpack.c.l.b16 %v266
  %v1419 = vunpack.c.l.b16 %v267
  %v1420 = vunpack.c.l.b16 %v268
  %v1421 = vunpack.c.l.b16 %v269
  %v1422 = vunpack.c.l.b16 %v270
  %v1423 = vunpack.c.l.b16 %v271
  %v1424 = vunpack.c.l.b16 %v272
  %v1425 = vunpack.c.l.b16 %v273
  %v1426 = vunpack.c.l.b16 %v274
  %v1427 = vunpack.c.l.b16 %v275
  %v1428 = vunpack.c.l.b16 %v276
  %v1429 = vunpack.c.l.b16 %v277
  %v1430 = vunpack.c.l.b16 %v278
  %v1431 = vunpack.c.l.b16 %v279
  %v1432 = vunpack.c.l.b16 %v280
  %v1433 = vunpack.c.l.b16 %v281
  %v1434 = vunpack.c.l.b16 %v282
  %v1435 = vunpack.c.l.b16 %v283
  %v1436 = vunpack.c.l.b16 %v284
  %v1437 = vunpack.c.l.b16 %v285
  %v1438 = vunpack.c.l.b16 %v286
  %v1439 = vunpack.c.l.b16 %v287
  %v1440 = vunpack.c.l.b16 %v288
  %v1441 = vunpack.c.l.b16 %v289
  %v1442 = vunpack.c.l.b16 %v290
  %v1443 = vunpack.c.l.b16 %v291
  %v1444 = vunpack.c.l.b16 %v292
  %v1445 = vunpack.c.l.b16 %v293
  %v1446 = vunpack.c.l.b16 %v294
  %v1447 = vunpack.c.l.b16 %v295
  %v1448 = vunpack.c.l.b16 %v296
  %v1449 = vunpack.c.l.b16 %v297
  %v1450 = vunpack.c.l.b16 %v298
  %v1451 = vunpack.c.l.b16 %v299
  %v1452 = vunpack.c.l.b16 %v300
  %v1453 = vunpack.c.l.b16 %v301
  %v1454 = vunpack.c.l.b16 %v302
  %v1455 = vunpack.c.l.b16 %v303
  %v1456 = vunpack.c.l.b16 %v304
  %v1457 = vunpack.c.l.b16 %v305
  %v1458 = vunpack.c.l.b16 %v306
  %v1459 = vunpack.c.l.b16 %v307
  %v1460 = vunpack.c.l.b16 %v308
  %v1461 = vunpack.c.l.b16 %v309
  %v1462 = vunpack.c.l.b16 %v310
  %v1463 = vunpack.c.l.b16 %v311
  %v1464 = vunpack.c.l.b16 %v312
  %v1465 = vunpack.c.l.b16 %v313
  %v1466 = vunpack.c.l.b16 %v314
  %v1467 = vunpack.c.l.b16 %v315
  %v1468 = vunpack.c.l.b16 %v316
  %v1469 = vunpack.c.l.b16 %v317
  %v1470 = vunpack.c.l.b16 %v318
  %v1471 = vunpack.c.l.b16 %v319
  %v1472 = vunpack.c.l.b16 %v320
  %v1473 = vunpack.c.l.b16 %v321
  %v1474 = vunpack.c.l.b16 %v322
  %v1475 = vunpack.c.l.b16 %v323
  %v1476 = vunpack.c.l.b16 %v324
  %v1477 = vunpack.c.l.b16 %v325
  %v1478 = vunpack.c.l.b16 %v326
  %v1479 = vunpack.c.l.b16 %v327
  %v1480 = vunpack.c.l.b16 %v328
  %v1481 = vunpack.c.l.b16 %v329
  %v1482 = vunpack.c.l.b16 %v330
  %v1483 = vunpack.c.l.b16 %v331
  %v1484 = vunpack.c.l.b16 %v332
  %v1485 = vunpack.c.l.b16 %v333
  %v1486 = vunpack.c.l.b16 %v334
  %v1487 = vunpack.c.l.b16 %v335
  %v1488 = vunpack.c.l.b16 %v336
  %v1489 = vunpack.c.l.b16 %v337
  %v1490 = vunpack.c.l.b16 %v338
  %v1491 = vunpack.c.l.b16 %v339
  %v1492 = vunpack.c.l.b16 %v340
  %v1493 = vunpack.c.l.b16 %v341
  %v1494 = vunpack.c.l.b16 %v342
  %v1495 = vunpack.c.l.b16 %v343
  %v1496 = vunpack.c.l.b16 %v344
  %v1497 = vunpack.c.l.b16 %v345
  %v1498 = vunpack.c.l.b16 %v346
  %v1499 = vunpack.c.l.b16 %v347
  %v1500 = vunpack.c.l.b16 %v348
  %v1501 = vunpack.c.l.b16 %v349
  %v1502 = vunpack.c.l.b16 %v350
  %v1503 = vunpack.c.l.b16 %v351
  %v1504 = vunpack.c.l.b16 %v352
  %v1505 = vunpack.c.l.b16 %v353
  %v1506 = vunpack.c.l.b16 %v354
  %v1507 = vunpack.c.l.b16 %v355
  %v1508 = vunpack.c.l.b16 %v356
  %v1509 = vunpack.c.l.b16 %v357
  %v1510 = vunpack.c.l.b16 %v358
  %v1511 = vunpack.c.l.b16 %v359
  %v1512 = vunpack.c.l.b16 %v360
  %v1513 = vunpack.c.l.b16 %v361
  %v1514 = vunpack.c.l.b16 %v362
  %v1515 = vunpack.c.l.b16 %v363
  %v1516 = vunpack.c.l.b16 %v364
  %v1517 = vunpack.c.l.b16 %v365
  %v1518 = vunpack.c.l.b16 %v366
  %v1519 = vunpack.c.l.b16 %v367
  %v1520 = vunpack.c.l.b16 %v368
  %v1521 = vunpack.c.l.b16 %v369
  %v1522 = vunpack.c.l.b16 %v370
  %v1523 = vunpack.c.l.b16 %v371
  %v1524 = vunpack.c.l.b16 %v372
  %v1525 = vunpack.c.l.b16 %v373
  %v1526 = vunpack.c.l.b16 %v374
  %v1527 = vunpack.c.l.b16 %v375
  %v1528 = vunpack.c.l.b16 %v376
  %v1529 = vunpack.c.l.b16 %v377
  %v1530 = vunpack.c.l.b16 %v378
  %v1531 = vunpack.c.l.b16 %v379
  %v1532 = vunpack.c.l.b16 %v380
  %v1533 = vunpack.c.l.b16 %v381
  %v1534 = vunpack.c.l.b16 %v382
  %v1535 = vunpack.c.l.b16 %v383
  %v1536 = vunpack.c.l.b16 %v384
  %v1537 = vunpack.c.l.b16 %v385
  %v1538 = vunpack.c.l.b16 %v386
  %v1539 = vunpack.c.l.b16 %v387
  %v1540 = vunpack.c.l.b16 %v388
  %v1541 = vunpack.c.l.b16 %v389
  %v1542 = vunpack.c.l.b16 %v390
  %v1543 = vunpack.c.l.b16 %v391
  %v1544 = vunpack.c.l.b16 %v392
  %v1545 = vunpack.c.l.b16 %v393
  %v1546 = vunpack.c.l.b16 %v394
  %v1547 = vunpack.c.l.b16 %v395
  %v1548 = vunpack.c.l.b16 %v396
  %v1549 = vunpack.c.l.b16 %v397
  %v1550 = vunpack.c.l.b16 %v398
  %v1551 = vunpack.c.l.b16 %v399
  %v1552 = vunpack.c.l.b16 %v400
  %v1553 = vpack.c.b16 %v1298, %v1297
  %v1554 = vpack.c.b16 %v1300, %v1299
  %v1555 = vpack.c.b16 %v1302, %v1301
  %v1556 = vpack.c.b16 %v1304, %v1303
  %v1557 = vpack.c.b16 %v1306, %v1305
  %v1558 = vpack.c.b16 %v1308, %v1307
  %v1559 = vpack.c.b16 %v1310, %v1309
  %v1560 = vpack.c.b16 %v1312, %v1311
  %v1561 = vpack.c.b16 %v1314, %v1313
  %v1562 = vpack.c.b16 %v1316, %v1315
  %v1563 = vpack.c.b16 %v1318, %v1317
  %v1564 = vpack.c.b16 %v1320, %v1319
  %v1565 = vpack.c.b16 %v1322, %v1321
  %v1566 = vpack.c.b16 %v1324, %v1323
  %v1567 = vpack.c.b16 %v1326, %v1325
  %v1568 = vpack.c.b16 %v1328, %v1327
  %v1569 = vpack.c.b16 %v1330, %v1329
  %v1570 = vpack.c.b16 %v1332, %v1331
  %v1571 = vpack.c.b16 %v1334, %v1333
  %v1572 = vpack.c.b16 %v1336, %v1335
  %v1573 = vpack.c.b16 %v1338, %v1337
  %v1574 = vpack.c.b16 %v1340, %v1339
  %v1575 = vpack.c.b16 %v1342, %v1341
  %v1576 = vpack.c.b16 %v1344, %v1343
  %v1577 = vpack.c.b16 %v1346, %v1345
  %v1578 = vpack.c.b16 %v1348, %v1347
  %v1579 = vpack.c.b16 %v1350, %v1349
  %v1580 = vpack.c.b16 %v1352, %v1351
  %v1581 = vpack.c.b16 %v1354, %v1353
  %v1582 = vpack.c.b16 %v1356, %v1355
  %v1583 = vpack.c.b16 %v1358, %v1357
  %v1584 = vpack.c.b16 %v1360, %v1359
  %v1585 = vpack.c.b16 %v1362, %v1361
  %v1586 = vpack.c.b16 %v1364, %v1363
  %v1587 = vpack.c.b16 %v1366, %v1365
  %v1588 = vpack.c.b16 %v1368, %v1367
  %v1589 = vpack.c.b16 %v1370, %v1369
  %v1590 = vpack.c.b16 %v1372, %v1371
  %v1591 = vpack.c.b16 %v1374, %v1373
  %v1592 = vpack.c.b16 %v1376, %v1375
  %v1593 = vpack.c.b16 %v1378, %v1377
  %v1594 = vpack.c.b16 %v1380, %v1379
  %v1595 = vpack.c.b16 %v1382, %v1381
  %v1596 = vpack.c.b16 %v1384, %v1383
  %v1597 = vpack.c.b16 %v1386, %v1385
  %v1598 = vpack.c.b16 %v1388, %v1387
  %v1599 = vpack.c.b16 %v1390, %v1389
  %v1600 = vpack.c.b16 %v1392, %v1391
  %v1601 = vpack.c.b16 %v1394, %v1393
  %v1602 = vpack.c.b16 %v1396, %v1395
  %v1603 = vpack.c.b16 %v1398, %v1397
  %v1604 = vpack.c.b16 %v1400, %v1399
  %v1605 = vpack.c.b16 %v1402, %v1401
  %v1606 = vpack.c.b16 %v1404, %v1403
  %v1607 = vpack.c.b16 %v1406, %v1405
  %v1608 = vpack.c.b16 %v1408, %v1407
  %v1609 = vpack.c.b16 %v1410, %v1409
  %v1610 = vpack.c.b16 %v1412, %v1411
  %v1611 = vpack.c.b16 %v1414, %v1413
  %v1612 = vpack.c.b16 %v1416, %v1415
  %v1613 = vpack.c.b16 %v1418, %v1417
  %v1614 = vpack.c.b16 %v1420, %v1419
  %v1615 = vpack.c.b16 %v1422, %v1421
  %v1616 = vpack.c.b16 %v1424, %v1423
  %v1617 = vpack.c.b16 %v1426, %v1425
  %v1618 = vpack.c.b16 %v1428, %v1427
  %v1619 = vpack.c.b16 %v1430, %v1429
  %v1620 = vpack.c.b16 %v1432, %v1431
  %v1621 = vpack.c.b16 %v1434, %v1433
  %v1622 = vpack.c.b16 %v1436, %v1435
  %v1623 = vpack.c.b16 %v1438, %v1437
  %v1624 = vpack.c.b16 %v1440, %v1439
  %v1625 = vpack.c.b16 %v1442, %v1441
  %v1626 = vpack.c.b16 %v1444, %v1443
  %v1627 = vpack.c.b16 %v1446, %v1445
  %v1628 = vpack.c.b16 %v1448, %v1447
  %v1629 = vpack.c.b16 %v1450, %v1449
  %v1630 = vpack.c.b16 %v1452, %v1451
  %v1631 = vpack.c.b16 %v1454, %v1453
  %v1632 = vpack.c.b16 %v1456, %v1455
  %v1633 = vpack.c.b16 %v1458, %v1457
  %v1634 = vpack.c.b16 %v1460, %v1459
  %v1635 = vpack.c.b16 %v1462, %v1461
  %v1636 = vpack.c.b16 %v1464, %v1463
  %v1637 = vpack.c.b16 %v1466, %v1465
  %v1638 = vpack.c.b16 %v1468, %v1467
  %v1639 = vpack.c.b16 %v1470, %v1469
  %v1640 = vpack.c.b16 %v1472, %v1471
  %v1641 = vpack.c.b16 %v1474, %v1473
  %v1642 = vpack.c.b16 %v1476, %v1475
  %v1643 = vpack.c.b16 %v1478, %v1477
  %v1644 = vpack.c.b16 %v1480, %v1479
  %v1645 = vpack.c.b16 %v1482, %v1481
  %v1646 = vpack.c.b16 %v1484, %v1483
  %v1647 = vpack.c.b16 %v1486, %v1485
  %v1648 = vpack.c.b16 %v1488, %v1487
  %v1649 = vpack.c.b16 %v1490, %v1489
  %v1650 = vpack.c.b16 %v1492, %v1491
  %v1651 = vpack.c.b16 %v1494, %v1493
  %v1652 = vpack.c.b16 %v1496, %v1495
  %v1653 = vpack.c.b16 %v1498, %v1497
  %v1654 = vpack.c.b16 %v1500, %v1499
  %v1655 = vpack.c.b16 %v1502, %v1501
  %v1656 = vpack.c.b16 %v1504, %v1503
  %v1657 = vpack.c.b16 %v1506, %v1505
  %v1658 = vpack.c.b16 %v1508, %v1507
  %v1659 = vpack.c.b16 %v1510, %v1509
  %v1660 = vpack.c.b16 %v1512, %v1511
  %v1661 = vpack.c.b16 %v1514, %v1513
  %v1662 = vpack.c.b16 %v1516, %v1515
  %v1663 = vpack.c.b16 %v1518, %v1517
  %v1664 = vpack.c.b16 %v1520, %v1519
  %v1665 = vpack.c.b16 %v1522, %v1521
  %v1666 = vpack.c.b16 %v1524, %v1523
  %v1667 = vpack.c.b16 %v1526, %v1525
  %v1668 = vpack.c.b16 %v1528, %v1527
  %v1669 = vpack.c.b16 %v1530, %v1529
  %v1670 = vpack.c.b16 %v1532, %v1531
  %v1671 = vpack.c.b16 %v1534, %v1533
  %v1672 = vpack.c.b16 %v1536, %v1535
  %v1673 = vpack.c.b16 %v1538, %v1537
  %v1674 = vpack.c.b16 %v1540, %v1539
  %v1675 = vpack.c.b16 %v1542, %v1541
  %v1676 = vpack.c.b16 %v1544, %v1543
  %v1677 = vpack.c.b16 %v1546, %v1545
  %v1678 = vpack.c.b16 %v1548, %v1547
  %v1679 = vpack.c.b16 %v1550, %v1549
  %v1680 = vpack.c.b16 %v1552, %v1551
  %1809 = vmatpush.bf16.msra.mxu0 %v1560
  %1810 = vmatpush.bf16.msra.mxu0 %v1559
  %1811 = vmatpush.bf16.msra.mxu0 %v1558
  %1812 = vmatpush.bf16.msra.mxu0 %v1557
  %1813 = vmatpush.bf16.msra.mxu0 %v1556
  %1814 = vmatpush.bf16.msra.mxu0 %v1555
  %1815 = vmatpush.bf16.msra.mxu0 %v1554
  %1816 = vmatpush.bf16.msra.mxu0 %v1553
  %1817 = vmatmul.bf16.gmra.mxu0 %v785
  %v1818 = vpop.f32.mrf.mxu0
  %v1819 = vadd.f32 0.0, %v1818
  %v1820 = vpop.f32.mrf.mxu0
  %v1821 = vadd.f32 0.0, %v1820
  %1822 = vmatmul.bf16.gmra.mxu0 %v801
  %v1823 = vpop.f32.mrf.mxu0
  %v1824 = vadd.f32 0.0, %v1823
  %v1825 = vpop.f32.mrf.mxu0
  %v1826 = vadd.f32 0.0, %v1825
  %1827 = vmatmul.bf16.gmra.mxu0 %v817
  %v1828 = vpop.f32.mrf.mxu0
  %v1829 = vadd.f32 0.0, %v1828
  %v1830 = vpop.f32.mrf.mxu0
  %v1831 = vadd.f32 0.0, %v1830
  %1832 = vmatmul.bf16.gmra.mxu0 %v833
  %v1833 = vpop.f32.mrf.mxu0
  %v1834 = vadd.f32 0.0, %v1833
  %v1835 = vpop.f32.mrf.mxu0
  %v1836 = vadd.f32 0.0, %v1835
  %1837 = vmatmul.bf16.gmra.mxu0 %v849
  %v1838 = vpop.f32.mrf.mxu0
  %v1839 = vadd.f32 0.0, %v1838
  %v1840 = vpop.f32.mrf.mxu0
  %v1841 = vadd.f32 0.0, %v1840
  %1842 = vmatmul.bf16.gmra.mxu0 %v865
  %v1843 = vpop.f32.mrf.mxu0
  %v1844 = vadd.f32 0.0, %v1843
  %v1845 = vpop.f32.mrf.mxu0
  %v1846 = vadd.f32 0.0, %v1845
  %1847 = vmatmul.bf16.gmra.mxu0 %v881
  %v1848 = vpop.f32.mrf.mxu0
  %v1849 = vadd.f32 0.0, %v1848
  %v1850 = vpop.f32.mrf.mxu0
  %v1851 = vadd.f32 0.0, %v1850
  %1852 = vmatmul.bf16.gmra.mxu0 %v897
  %v1853 = vpop.f32.mrf.mxu0
  %v1854 = vadd.f32 0.0, %v1853
  %v1855 = vpop.f32.mrf.mxu0
  %v1856 = vadd.f32 0.0, %v1855
  %1857 = vdwg.mxu0
  %1858 = vmatpush.bf16.msra.mxu0 %v1568
  %1859 = vmatpush.bf16.msra.mxu0 %v1567
  %1860 = vmatpush.bf16.msra.mxu0 %v1566
  %1861 = vmatpush.bf16.msra.mxu0 %v1565
  %1862 = vmatpush.bf16.msra.mxu0 %v1564
  %1863 = vmatpush.bf16.msra.mxu0 %v1563
  %1864 = vmatpush.bf16.msra.mxu0 %v1562
  %1865 = vmatpush.bf16.msra.mxu0 %v1561
  %1866 = vmatmul.bf16.gmra.mxu0 %v786
  %v1867 = vpop.f32.mrf.mxu0
  %v1868 = vadd.f32 %v1819, %v1867
  %v1869 = vpop.f32.mrf.mxu0
  %v1870 = vadd.f32 %v1821, %v1869
  %1871 = vmatmul.bf16.gmra.mxu0 %v802
  %v1872 = vpop.f32.mrf.mxu0
  %v1873 = vadd.f32 %v1824, %v1872
  %v1874 = vpop.f32.mrf.mxu0
  %v1875 = vadd.f32 %v1826, %v1874
  %1876 = vmatmul.bf16.gmra.mxu0 %v818
  %v1877 = vpop.f32.mrf.mxu0
  %v1878 = vadd.f32 %v1829, %v1877
  %v1879 = vpop.f32.mrf.mxu0
  %v1880 = vadd.f32 %v1831, %v1879
  %1881 = vmatmul.bf16.gmra.mxu0 %v834
  %v1882 = vpop.f32.mrf.mxu0
  %v1883 = vadd.f32 %v1834, %v1882
  %v1884 = vpop.f32.mrf.mxu0
  %v1885 = vadd.f32 %v1836, %v1884
  %1886 = vmatmul.bf16.gmra.mxu0 %v850
  %v1887 = vpop.f32.mrf.mxu0
  %v1888 = vadd.f32 %v1839, %v1887
  %v1889 = vpop.f32.mrf.mxu0
  %v1890 = vadd.f32 %v1841, %v1889
  %1891 = vmatmul.bf16.gmra.mxu0 %v866
  %v1892 = vpop.f32.mrf.mxu0
  %v1893 = vadd.f32 %v1844, %v1892
  %v1894 = vpop.f32.mrf.mxu0
  %v1895 = vadd.f32 %v1846, %v1894
  %1896 = vmatmul.bf16.gmra.mxu0 %v882
  %v1897 = vpop.f32.mrf.mxu0
  %v1898 = vadd.f32 %v1849, %v1897
  %v1899 = vpop.f32.mrf.mxu0
  %v1900 = vadd.f32 %v1851, %v1899
  %1901 = vmatmul.bf16.gmra.mxu0 %v898
  %v1902 = vpop.f32.mrf.mxu0
  %v1903 = vadd.f32 %v1854, %v1902
  %v1904 = vpop.f32.mrf.mxu0
  %v1905 = vadd.f32 %v1856, %v1904
  %1906 = vdwg.mxu0
  %1907 = vmatpush.bf16.msra.mxu0 %v1576
  %1908 = vmatpush.bf16.msra.mxu0 %v1575
  %1909 = vmatpush.bf16.msra.mxu0 %v1574
  %1910 = vmatpush.bf16.msra.mxu0 %v1573
  %1911 = vmatpush.bf16.msra.mxu0 %v1572
  %1912 = vmatpush.bf16.msra.mxu0 %v1571
  %1913 = vmatpush.bf16.msra.mxu0 %v1570
  %1914 = vmatpush.bf16.msra.mxu0 %v1569
  %1915 = vmatmul.bf16.gmra.mxu0 %v787
  %v1916 = vpop.f32.mrf.mxu0
  %v1917 = vadd.f32 %v1868, %v1916
  %v1918 = vpop.f32.mrf.mxu0
  %v1919 = vadd.f32 %v1870, %v1918
  %1920 = vmatmul.bf16.gmra.mxu0 %v803
  %v1921 = vpop.f32.mrf.mxu0
  %v1922 = vadd.f32 %v1873, %v1921
  %v1923 = vpop.f32.mrf.mxu0
  %v1924 = vadd.f32 %v1875, %v1923
  %1925 = vmatmul.bf16.gmra.mxu0 %v819
  %v1926 = vpop.f32.mrf.mxu0
  %v1927 = vadd.f32 %v1878, %v1926
  %v1928 = vpop.f32.mrf.mxu0
  %v1929 = vadd.f32 %v1880, %v1928
  %1930 = vmatmul.bf16.gmra.mxu0 %v835
  %v1931 = vpop.f32.mrf.mxu0
  %v1932 = vadd.f32 %v1883, %v1931
  %v1933 = vpop.f32.mrf.mxu0
  %v1934 = vadd.f32 %v1885, %v1933
  %1935 = vmatmul.bf16.gmra.mxu0 %v851
  %v1936 = vpop.f32.mrf.mxu0
  %v1937 = vadd.f32 %v1888, %v1936
  %v1938 = vpop.f32.mrf.mxu0
  %v1939 = vadd.f32 %v1890, %v1938
  %1940 = vmatmul.bf16.gmra.mxu0 %v867
  %v1941 = vpop.f32.mrf.mxu0
  %v1942 = vadd.f32 %v1893, %v1941
  %v1943 = vpop.f32.mrf.mxu0
  %v1944 = vadd.f32 %v1895, %v1943
  %1945 = vmatmul.bf16.gmra.mxu0 %v883
  %v1946 = vpop.f32.mrf.mxu0
  %v1947 = vadd.f32 %v1898, %v1946
  %v1948 = vpop.f32.mrf.mxu0
  %v1949 = vadd.f32 %v1900, %v1948
  %1950 = vmatmul.bf16.gmra.mxu0 %v899
  %v1951 = vpop.f32.mrf.mxu0
  %v1952 = vadd.f32 %v1903, %v1951
  %v1953 = vpop.f32.mrf.mxu0
  %v1954 = vadd.f32 %v1905, %v1953
  %1955 = vdwg.mxu0
  %1956 = vmatpush.bf16.msra.mxu0 %v1584
  %1957 = vmatpush.bf16.msra.mxu0 %v1583
  %1958 = vmatpush.bf16.msra.mxu0 %v1582
  %1959 = vmatpush.bf16.msra.mxu0 %v1581
  %1960 = vmatpush.bf16.msra.mxu0 %v1580
  %1961 = vmatpush.bf16.msra.mxu0 %v1579
  %1962 = vmatpush.bf16.msra.mxu0 %v1578
  %1963 = vmatpush.bf16.msra.mxu0 %v1577
  %1964 = vmatmul.bf16.gmra.mxu0 %v788
  %v1965 = vpop.f32.mrf.mxu0
  %v1966 = vadd.f32 %v1917, %v1965
  %v1967 = vpop.f32.mrf.mxu0
  %v1968 = vadd.f32 %v1919, %v1967
  %1969 = vmatmul.bf16.gmra.mxu0 %v804
  %v1970 = vpop.f32.mrf.mxu0
  %v1971 = vadd.f32 %v1922, %v1970
  %v1972 = vpop.f32.mrf.mxu0
  %v1973 = vadd.f32 %v1924, %v1972
  %1974 = vmatmul.bf16.gmra.mxu0 %v820
  %v1975 = vpop.f32.mrf.mxu0
  %v1976 = vadd.f32 %v1927, %v1975
  %v1977 = vpop.f32.mrf.mxu0
  %v1978 = vadd.f32 %v1929, %v1977
  %1979 = vmatmul.bf16.gmra.mxu0 %v836
  %v1980 = vpop.f32.mrf.mxu0
  %v1981 = vadd.f32 %v1932, %v1980
  %v1982 = vpop.f32.mrf.mxu0
  %v1983 = vadd.f32 %v1934, %v1982
  %1984 = vmatmul.bf16.gmra.mxu0 %v852
  %v1985 = vpop.f32.mrf.mxu0
  %v1986 = vadd.f32 %v1937, %v1985
  %v1987 = vpop.f32.mrf.mxu0
  %v1988 = vadd.f32 %v1939, %v1987
  %1989 = vmatmul.bf16.gmra.mxu0 %v868
  %v1990 = vpop.f32.mrf.mxu0
  %v1991 = vadd.f32 %v1942, %v1990
  %v1992 = vpop.f32.mrf.mxu0
  %v1993 = vadd.f32 %v1944, %v1992
  %1994 = vmatmul.bf16.gmra.mxu0 %v884
  %v1995 = vpop.f32.mrf.mxu0
  %v1996 = vadd.f32 %v1947, %v1995
  %v1997 = vpop.f32.mrf.mxu0
  %v1998 = vadd.f32 %v1949, %v1997
  %1999 = vmatmul.bf16.gmra.mxu0 %v900
  %v2000 = vpop.f32.mrf.mxu0
  %v2001 = vadd.f32 %v1952, %v2000
  %v2002 = vpop.f32.mrf.mxu0
  %v2003 = vadd.f32 %v1954, %v2002
  %2004 = vdwg.mxu0
  %2005 = vmatpush.bf16.msra.mxu0 %v1592
  %2006 = vmatpush.bf16.msra.mxu0 %v1591
  %2007 = vmatpush.bf16.msra.mxu0 %v1590
  %2008 = vmatpush.bf16.msra.mxu0 %v1589
  %2009 = vmatpush.bf16.msra.mxu0 %v1588
  %2010 = vmatpush.bf16.msra.mxu0 %v1587
  %2011 = vmatpush.bf16.msra.mxu0 %v1586
  %2012 = vmatpush.bf16.msra.mxu0 %v1585
  %2013 = vmatmul.bf16.gmra.mxu0 %v789
  %v2014 = vpop.f32.mrf.mxu0
  %v2015 = vadd.f32 %v1966, %v2014
  %v2016 = vpop.f32.mrf.mxu0
  %v2017 = vadd.f32 %v1968, %v2016
  %2018 = vmatmul.bf16.gmra.mxu0 %v805
  %v2019 = vpop.f32.mrf.mxu0
  %v2020 = vadd.f32 %v1971, %v2019
  %v2021 = vpop.f32.mrf.mxu0
  %v2022 = vadd.f32 %v1973, %v2021
  %2023 = vmatmul.bf16.gmra.mxu0 %v821
  %v2024 = vpop.f32.mrf.mxu0
  %v2025 = vadd.f32 %v1976, %v2024
  %v2026 = vpop.f32.mrf.mxu0
  %v2027 = vadd.f32 %v1978, %v2026
  %2028 = vmatmul.bf16.gmra.mxu0 %v837
  %v2029 = vpop.f32.mrf.mxu0
  %v2030 = vadd.f32 %v1981, %v2029
  %v2031 = vpop.f32.mrf.mxu0
  %v2032 = vadd.f32 %v1983, %v2031
  %2033 = vmatmul.bf16.gmra.mxu0 %v853
  %v2034 = vpop.f32.mrf.mxu0
  %v2035 = vadd.f32 %v1986, %v2034
  %v2036 = vpop.f32.mrf.mxu0
  %v2037 = vadd.f32 %v1988, %v2036
  %2038 = vmatmul.bf16.gmra.mxu0 %v869
  %v2039 = vpop.f32.mrf.mxu0
  %v2040 = vadd.f32 %v1991, %v2039
  %v2041 = vpop.f32.mrf.mxu0
  %v2042 = vadd.f32 %v1993, %v2041
  %2043 = vmatmul.bf16.gmra.mxu0 %v885
  %v2044 = vpop.f32.mrf.mxu0
  %v2045 = vadd.f32 %v1996, %v2044
  %v2046 = vpop.f32.mrf.mxu0
  %v2047 = vadd.f32 %v1998, %v2046
  %2048 = vmatmul.bf16.gmra.mxu0 %v901
  %v2049 = vpop.f32.mrf.mxu0
  %v2050 = vadd.f32 %v2001, %v2049
  %v2051 = vpop.f32.mrf.mxu0
  %v2052 = vadd.f32 %v2003, %v2051
  %2053 = vdwg.mxu0
  %2054 = vmatpush.bf16.msra.mxu0 %v1600
  %2055 = vmatpush.bf16.msra.mxu0 %v1599
  %2056 = vmatpush.bf16.msra.mxu0 %v1598
  %2057 = vmatpush.bf16.msra.mxu0 %v1597
  %2058 = vmatpush.bf16.msra.mxu0 %v1596
  %2059 = vmatpush.bf16.msra.mxu0 %v1595
  %2060 = vmatpush.bf16.msra.mxu0 %v1594
  %2061 = vmatpush.bf16.msra.mxu0 %v1593
  %2062 = vmatmul.bf16.gmra.mxu0 %v790
  %v2063 = vpop.f32.mrf.mxu0
  %v2064 = vadd.f32 %v2015, %v2063
  %v2065 = vpop.f32.mrf.mxu0
  %v2066 = vadd.f32 %v2017, %v2065
  %2067 = vmatmul.bf16.gmra.mxu0 %v806
  %v2068 = vpop.f32.mrf.mxu0
  %v2069 = vadd.f32 %v2020, %v2068
  %v2070 = vpop.f32.mrf.mxu0
  %v2071 = vadd.f32 %v2022, %v2070
  %2072 = vmatmul.bf16.gmra.mxu0 %v822
  %v2073 = vpop.f32.mrf.mxu0
  %v2074 = vadd.f32 %v2025, %v2073
  %v2075 = vpop.f32.mrf.mxu0
  %v2076 = vadd.f32 %v2027, %v2075
  %2077 = vmatmul.bf16.gmra.mxu0 %v838
  %v2078 = vpop.f32.mrf.mxu0
  %v2079 = vadd.f32 %v2030, %v2078
  %v2080 = vpop.f32.mrf.mxu0
  %v2081 = vadd.f32 %v2032, %v2080
  %2082 = vmatmul.bf16.gmra.mxu0 %v854
  %v2083 = vpop.f32.mrf.mxu0
  %v2084 = vadd.f32 %v2035, %v2083
  %v2085 = vpop.f32.mrf.mxu0
  %v2086 = vadd.f32 %v2037, %v2085
  %2087 = vmatmul.bf16.gmra.mxu0 %v870
  %v2088 = vpop.f32.mrf.mxu0
  %v2089 = vadd.f32 %v2040, %v2088
  %v2090 = vpop.f32.mrf.mxu0
  %v2091 = vadd.f32 %v2042, %v2090
  %2092 = vmatmul.bf16.gmra.mxu0 %v886
  %v2093 = vpop.f32.mrf.mxu0
  %v2094 = vadd.f32 %v2045, %v2093
  %v2095 = vpop.f32.mrf.mxu0
  %v2096 = vadd.f32 %v2047, %v2095
  %2097 = vmatmul.bf16.gmra.mxu0 %v902
  %v2098 = vpop.f32.mrf.mxu0
  %v2099 = vadd.f32 %v2050, %v2098
  %v2100 = vpop.f32.mrf.mxu0
  %v2101 = vadd.f32 %v2052, %v2100
  %2102 = vdwg.mxu0
  %2103 = vmatpush.bf16.msra.mxu0 %v1608
  %2104 = vmatpush.bf16.msra.mxu0 %v1607
  %2105 = vmatpush.bf16.msra.mxu0 %v1606
  %2106 = vmatpush.bf16.msra.mxu0 %v1605
  %2107 = vmatpush.bf16.msra.mxu0 %v1604
  %2108 = vmatpush.bf16.msra.mxu0 %v1603
  %2109 = vmatpush.bf16.msra.mxu0 %v1602
  %2110 = vmatpush.bf16.msra.mxu0 %v1601
  %2111 = vmatmul.bf16.gmra.mxu0 %v791
  %v2112 = vpop.f32.mrf.mxu0
  %v2113 = vadd.f32 %v2064, %v2112
  %v2114 = vpop.f32.mrf.mxu0
  %v2115 = vadd.f32 %v2066, %v2114
  %2116 = vmatmul.bf16.gmra.mxu0 %v807
  %v2117 = vpop.f32.mrf.mxu0
  %v2118 = vadd.f32 %v2069, %v2117
  %v2119 = vpop.f32.mrf.mxu0
  %v2120 = vadd.f32 %v2071, %v2119
  %2121 = vmatmul.bf16.gmra.mxu0 %v823
  %v2122 = vpop.f32.mrf.mxu0
  %v2123 = vadd.f32 %v2074, %v2122
  %v2124 = vpop.f32.mrf.mxu0
  %v2125 = vadd.f32 %v2076, %v2124
  %2126 = vmatmul.bf16.gmra.mxu0 %v839
  %v2127 = vpop.f32.mrf.mxu0
  %v2128 = vadd.f32 %v2079, %v2127
  %v2129 = vpop.f32.mrf.mxu0
  %v2130 = vadd.f32 %v2081, %v2129
  %2131 = vmatmul.bf16.gmra.mxu0 %v855
  %v2132 = vpop.f32.mrf.mxu0
  %v2133 = vadd.f32 %v2084, %v2132
  %v2134 = vpop.f32.mrf.mxu0
  %v2135 = vadd.f32 %v2086, %v2134
  %2136 = vmatmul.bf16.gmra.mxu0 %v871
  %v2137 = vpop.f32.mrf.mxu0
  %v2138 = vadd.f32 %v2089, %v2137
  %v2139 = vpop.f32.mrf.mxu0
  %v2140 = vadd.f32 %v2091, %v2139
  %2141 = vmatmul.bf16.gmra.mxu0 %v887
  %v2142 = vpop.f32.mrf.mxu0
  %v2143 = vadd.f32 %v2094, %v2142
  %v2144 = vpop.f32.mrf.mxu0
  %v2145 = vadd.f32 %v2096, %v2144
  %2146 = vmatmul.bf16.gmra.mxu0 %v903
  %v2147 = vpop.f32.mrf.mxu0
  %v2148 = vadd.f32 %v2099, %v2147
  %v2149 = vpop.f32.mrf.mxu0
  %v2150 = vadd.f32 %v2101, %v2149
  %2151 = vdwg.mxu0
  %2152 = vmatpush.bf16.msra.mxu0 %v1616
  %2153 = vmatpush.bf16.msra.mxu0 %v1615
  %2154 = vmatpush.bf16.msra.mxu0 %v1614
  %2155 = vmatpush.bf16.msra.mxu0 %v1613
  %2156 = vmatpush.bf16.msra.mxu0 %v1612
  %2157 = vmatpush.bf16.msra.mxu0 %v1611
  %2158 = vmatpush.bf16.msra.mxu0 %v1610
  %2159 = vmatpush.bf16.msra.mxu0 %v1609
  %2160 = vmatmul.bf16.gmra.mxu0 %v792
  %v2161 = vpop.f32.mrf.mxu0
  %v2162 = vadd.f32 %v2113, %v2161
  %v2163 = vpop.f32.mrf.mxu0
  %v2164 = vadd.f32 %v2115, %v2163
  %2165 = vmatmul.bf16.gmra.mxu0 %v808
  %v2166 = vpop.f32.mrf.mxu0
  %v2167 = vadd.f32 %v2118, %v2166
  %v2168 = vpop.f32.mrf.mxu0
  %v2169 = vadd.f32 %v2120, %v2168
  %2170 = vmatmul.bf16.gmra.mxu0 %v824
  %v2171 = vpop.f32.mrf.mxu0
  %v2172 = vadd.f32 %v2123, %v2171
  %v2173 = vpop.f32.mrf.mxu0
  %v2174 = vadd.f32 %v2125, %v2173
  %2175 = vmatmul.bf16.gmra.mxu0 %v840
  %v2176 = vpop.f32.mrf.mxu0
  %v2177 = vadd.f32 %v2128, %v2176
  %v2178 = vpop.f32.mrf.mxu0
  %v2179 = vadd.f32 %v2130, %v2178
  %2180 = vmatmul.bf16.gmra.mxu0 %v856
  %v2181 = vpop.f32.mrf.mxu0
  %v2182 = vadd.f32 %v2133, %v2181
  %v2183 = vpop.f32.mrf.mxu0
  %v2184 = vadd.f32 %v2135, %v2183
  %2185 = vmatmul.bf16.gmra.mxu0 %v872
  %v2186 = vpop.f32.mrf.mxu0
  %v2187 = vadd.f32 %v2138, %v2186
  %v2188 = vpop.f32.mrf.mxu0
  %v2189 = vadd.f32 %v2140, %v2188
  %2190 = vmatmul.bf16.gmra.mxu0 %v888
  %v2191 = vpop.f32.mrf.mxu0
  %v2192 = vadd.f32 %v2143, %v2191
  %v2193 = vpop.f32.mrf.mxu0
  %v2194 = vadd.f32 %v2145, %v2193
  %2195 = vmatmul.bf16.gmra.mxu0 %v904
  %v2196 = vpop.f32.mrf.mxu0
  %v2197 = vadd.f32 %v2148, %v2196
  %v2198 = vpop.f32.mrf.mxu0
  %v2199 = vadd.f32 %v2150, %v2198
  %2200 = vdwg.mxu0
  %2201 = vmatpush.bf16.msra.mxu0 %v1624
  %2202 = vmatpush.bf16.msra.mxu0 %v1623
  %2203 = vmatpush.bf16.msra.mxu0 %v1622
  %2204 = vmatpush.bf16.msra.mxu0 %v1621
  %2205 = vmatpush.bf16.msra.mxu0 %v1620
  %2206 = vmatpush.bf16.msra.mxu0 %v1619
  %2207 = vmatpush.bf16.msra.mxu0 %v1618
  %2208 = vmatpush.bf16.msra.mxu0 %v1617
  %2209 = vmatmul.bf16.gmra.mxu0 %v793
  %v2210 = vpop.f32.mrf.mxu0
  %v2211 = vadd.f32 %v2162, %v2210
  %v2212 = vpop.f32.mrf.mxu0
  %v2213 = vadd.f32 %v2164, %v2212
  %2214 = vmatmul.bf16.gmra.mxu0 %v809
  %v2215 = vpop.f32.mrf.mxu0
  %v2216 = vadd.f32 %v2167, %v2215
  %v2217 = vpop.f32.mrf.mxu0
  %v2218 = vadd.f32 %v2169, %v2217
  %2219 = vmatmul.bf16.gmra.mxu0 %v825
  %v2220 = vpop.f32.mrf.mxu0
  %v2221 = vadd.f32 %v2172, %v2220
  %v2222 = vpop.f32.mrf.mxu0
  %v2223 = vadd.f32 %v2174, %v2222
  %2224 = vmatmul.bf16.gmra.mxu0 %v841
  %v2225 = vpop.f32.mrf.mxu0
  %v2226 = vadd.f32 %v2177, %v2225
  %v2227 = vpop.f32.mrf.mxu0
  %v2228 = vadd.f32 %v2179, %v2227
  %2229 = vmatmul.bf16.gmra.mxu0 %v857
  %v2230 = vpop.f32.mrf.mxu0
  %v2231 = vadd.f32 %v2182, %v2230
  %v2232 = vpop.f32.mrf.mxu0
  %v2233 = vadd.f32 %v2184, %v2232
  %2234 = vmatmul.bf16.gmra.mxu0 %v873
  %v2235 = vpop.f32.mrf.mxu0
  %v2236 = vadd.f32 %v2187, %v2235
  %v2237 = vpop.f32.mrf.mxu0
  %v2238 = vadd.f32 %v2189, %v2237
  %2239 = vmatmul.bf16.gmra.mxu0 %v889
  %v2240 = vpop.f32.mrf.mxu0
  %v2241 = vadd.f32 %v2192, %v2240
  %v2242 = vpop.f32.mrf.mxu0
  %v2243 = vadd.f32 %v2194, %v2242
  %2244 = vmatmul.bf16.gmra.mxu0 %v905
  %v2245 = vpop.f32.mrf.mxu0
  %v2246 = vadd.f32 %v2197, %v2245
  %v2247 = vpop.f32.mrf.mxu0
  %v2248 = vadd.f32 %v2199, %v2247
  %2249 = vdwg.mxu0
  %2250 = vmatpush.bf16.msra.mxu0 %v1632
  %2251 = vmatpush.bf16.msra.mxu0 %v1631
  %2252 = vmatpush.bf16.msra.mxu0 %v1630
  %2253 = vmatpush.bf16.msra.mxu0 %v1629
  %2254 = vmatpush.bf16.msra.mxu0 %v1628
  %2255 = vmatpush.bf16.msra.mxu0 %v1627
  %2256 = vmatpush.bf16.msra.mxu0 %v1626
  %2257 = vmatpush.bf16.msra.mxu0 %v1625
  %2258 = vmatmul.bf16.gmra.mxu0 %v794
  %v2259 = vpop.f32.mrf.mxu0
  %v2260 = vadd.f32 %v2211, %v2259
  %v2261 = vpop.f32.mrf.mxu0
  %v2262 = vadd.f32 %v2213, %v2261
  %2263 = vmatmul.bf16.gmra.mxu0 %v810
  %v2264 = vpop.f32.mrf.mxu0
  %v2265 = vadd.f32 %v2216, %v2264
  %v2266 = vpop.f32.mrf.mxu0
  %v2267 = vadd.f32 %v2218, %v2266
  %2268 = vmatmul.bf16.gmra.mxu0 %v826
  %v2269 = vpop.f32.mrf.mxu0
  %v2270 = vadd.f32 %v2221, %v2269
  %v2271 = vpop.f32.mrf.mxu0
  %v2272 = vadd.f32 %v2223, %v2271
  %2273 = vmatmul.bf16.gmra.mxu0 %v842
  %v2274 = vpop.f32.mrf.mxu0
  %v2275 = vadd.f32 %v2226, %v2274
  %v2276 = vpop.f32.mrf.mxu0
  %v2277 = vadd.f32 %v2228, %v2276
  %2278 = vmatmul.bf16.gmra.mxu0 %v858
  %v2279 = vpop.f32.mrf.mxu0
  %v2280 = vadd.f32 %v2231, %v2279
  %v2281 = vpop.f32.mrf.mxu0
  %v2282 = vadd.f32 %v2233, %v2281
  %2283 = vmatmul.bf16.gmra.mxu0 %v874
  %v2284 = vpop.f32.mrf.mxu0
  %v2285 = vadd.f32 %v2236, %v2284
  %v2286 = vpop.f32.mrf.mxu0
  %v2287 = vadd.f32 %v2238, %v2286
  %2288 = vmatmul.bf16.gmra.mxu0 %v890
  %v2289 = vpop.f32.mrf.mxu0
  %v2290 = vadd.f32 %v2241, %v2289
  %v2291 = vpop.f32.mrf.mxu0
  %v2292 = vadd.f32 %v2243, %v2291
  %2293 = vmatmul.bf16.gmra.mxu0 %v906
  %v2294 = vpop.f32.mrf.mxu0
  %v2295 = vadd.f32 %v2246, %v2294
  %v2296 = vpop.f32.mrf.mxu0
  %v2297 = vadd.f32 %v2248, %v2296
  %2298 = vdwg.mxu0
  %2299 = vmatpush.bf16.msra.mxu0 %v1640
  %2300 = vmatpush.bf16.msra.mxu0 %v1639
  %2301 = vmatpush.bf16.msra.mxu0 %v1638
  %2302 = vmatpush.bf16.msra.mxu0 %v1637
  %2303 = vmatpush.bf16.msra.mxu0 %v1636
  %2304 = vmatpush.bf16.msra.mxu0 %v1635
  %2305 = vmatpush.bf16.msra.mxu0 %v1634
  %2306 = vmatpush.bf16.msra.mxu0 %v1633
  %2307 = vmatmul.bf16.gmra.mxu0 %v795
  %v2308 = vpop.f32.mrf.mxu0
  %v2309 = vadd.f32 %v2260, %v2308
  %v2310 = vpop.f32.mrf.mxu0
  %v2311 = vadd.f32 %v2262, %v2310
  %2312 = vmatmul.bf16.gmra.mxu0 %v811
  %v2313 = vpop.f32.mrf.mxu0
  %v2314 = vadd.f32 %v2265, %v2313
  %v2315 = vpop.f32.mrf.mxu0
  %v2316 = vadd.f32 %v2267, %v2315
  %2317 = vmatmul.bf16.gmra.mxu0 %v827
  %v2318 = vpop.f32.mrf.mxu0
  %v2319 = vadd.f32 %v2270, %v2318
  %v2320 = vpop.f32.mrf.mxu0
  %v2321 = vadd.f32 %v2272, %v2320
  %2322 = vmatmul.bf16.gmra.mxu0 %v843
  %v2323 = vpop.f32.mrf.mxu0
  %v2324 = vadd.f32 %v2275, %v2323
  %v2325 = vpop.f32.mrf.mxu0
  %v2326 = vadd.f32 %v2277, %v2325
  %2327 = vmatmul.bf16.gmra.mxu0 %v859
  %v2328 = vpop.f32.mrf.mxu0
  %v2329 = vadd.f32 %v2280, %v2328
  %v2330 = vpop.f32.mrf.mxu0
  %v2331 = vadd.f32 %v2282, %v2330
  %2332 = vmatmul.bf16.gmra.mxu0 %v875
  %v2333 = vpop.f32.mrf.mxu0
  %v2334 = vadd.f32 %v2285, %v2333
  %v2335 = vpop.f32.mrf.mxu0
  %v2336 = vadd.f32 %v2287, %v2335
  %2337 = vmatmul.bf16.gmra.mxu0 %v891
  %v2338 = vpop.f32.mrf.mxu0
  %v2339 = vadd.f32 %v2290, %v2338
  %v2340 = vpop.f32.mrf.mxu0
  %v2341 = vadd.f32 %v2292, %v2340
  %2342 = vmatmul.bf16.gmra.mxu0 %v907
  %v2343 = vpop.f32.mrf.mxu0
  %v2344 = vadd.f32 %v2295, %v2343
  %v2345 = vpop.f32.mrf.mxu0
  %v2346 = vadd.f32 %v2297, %v2345
  %2347 = vdwg.mxu0
  %2348 = vmatpush.bf16.msra.mxu0 %v1648
  %2349 = vmatpush.bf16.msra.mxu0 %v1647
  %2350 = vmatpush.bf16.msra.mxu0 %v1646
  %2351 = vmatpush.bf16.msra.mxu0 %v1645
  %2352 = vmatpush.bf16.msra.mxu0 %v1644
  %2353 = vmatpush.bf16.msra.mxu0 %v1643
  %2354 = vmatpush.bf16.msra.mxu0 %v1642
  %2355 = vmatpush.bf16.msra.mxu0 %v1641
  %2356 = vmatmul.bf16.gmra.mxu0 %v796
  %v2357 = vpop.f32.mrf.mxu0
  %v2358 = vadd.f32 %v2309, %v2357
  %v2359 = vpop.f32.mrf.mxu0
  %v2360 = vadd.f32 %v2311, %v2359
  %2361 = vmatmul.bf16.gmra.mxu0 %v812
  %v2362 = vpop.f32.mrf.mxu0
  %v2363 = vadd.f32 %v2314, %v2362
  %v2364 = vpop.f32.mrf.mxu0
  %v2365 = vadd.f32 %v2316, %v2364
  %2366 = vmatmul.bf16.gmra.mxu0 %v828
  %v2367 = vpop.f32.mrf.mxu0
  %v2368 = vadd.f32 %v2319, %v2367
  %v2369 = vpop.f32.mrf.mxu0
  %v2370 = vadd.f32 %v2321, %v2369
  %2371 = vmatmul.bf16.gmra.mxu0 %v844
  %v2372 = vpop.f32.mrf.mxu0
  %v2373 = vadd.f32 %v2324, %v2372
  %v2374 = vpop.f32.mrf.mxu0
  %v2375 = vadd.f32 %v2326, %v2374
  %2376 = vmatmul.bf16.gmra.mxu0 %v860
  %v2377 = vpop.f32.mrf.mxu0
  %v2378 = vadd.f32 %v2329, %v2377
  %v2379 = vpop.f32.mrf.mxu0
  %v2380 = vadd.f32 %v2331, %v2379
  %2381 = vmatmul.bf16.gmra.mxu0 %v876
  %v2382 = vpop.f32.mrf.mxu0
  %v2383 = vadd.f32 %v2334, %v2382
  %v2384 = vpop.f32.mrf.mxu0
  %v2385 = vadd.f32 %v2336, %v2384
  %2386 = vmatmul.bf16.gmra.mxu0 %v892
  %v2387 = vpop.f32.mrf.mxu0
  %v2388 = vadd.f32 %v2339, %v2387
  %v2389 = vpop.f32.mrf.mxu0
  %v2390 = vadd.f32 %v2341, %v2389
  %2391 = vmatmul.bf16.gmra.mxu0 %v908
  %v2392 = vpop.f32.mrf.mxu0
  %v2393 = vadd.f32 %v2344, %v2392
  %v2394 = vpop.f32.mrf.mxu0
  %v2395 = vadd.f32 %v2346, %v2394
  %2396 = vdwg.mxu0
  %2397 = vmatpush.bf16.msra.mxu0 %v1656
  %2398 = vmatpush.bf16.msra.mxu0 %v1655
  %2399 = vmatpush.bf16.msra.mxu0 %v1654
  %2400 = vmatpush.bf16.msra.mxu0 %v1653
  %2401 = vmatpush.bf16.msra.mxu0 %v1652
  %2402 = vmatpush.bf16.msra.mxu0 %v1651
  %2403 = vmatpush.bf16.msra.mxu0 %v1650
  %2404 = vmatpush.bf16.msra.mxu0 %v1649
  %2405 = vmatmul.bf16.gmra.mxu0 %v797
  %v2406 = vpop.f32.mrf.mxu0
  %v2407 = vadd.f32 %v2358, %v2406
  %v2408 = vpop.f32.mrf.mxu0
  %v2409 = vadd.f32 %v2360, %v2408
  %2410 = vmatmul.bf16.gmra.mxu0 %v813
  %v2411 = vpop.f32.mrf.mxu0
  %v2412 = vadd.f32 %v2363, %v2411
  %v2413 = vpop.f32.mrf.mxu0
  %v2414 = vadd.f32 %v2365, %v2413
  %2415 = vmatmul.bf16.gmra.mxu0 %v829
  %v2416 = vpop.f32.mrf.mxu0
  %v2417 = vadd.f32 %v2368, %v2416
  %v2418 = vpop.f32.mrf.mxu0
  %v2419 = vadd.f32 %v2370, %v2418
  %2420 = vmatmul.bf16.gmra.mxu0 %v845
  %v2421 = vpop.f32.mrf.mxu0
  %v2422 = vadd.f32 %v2373, %v2421
  %v2423 = vpop.f32.mrf.mxu0
  %v2424 = vadd.f32 %v2375, %v2423
  %2425 = vmatmul.bf16.gmra.mxu0 %v861
  %v2426 = vpop.f32.mrf.mxu0
  %v2427 = vadd.f32 %v2378, %v2426
  %v2428 = vpop.f32.mrf.mxu0
  %v2429 = vadd.f32 %v2380, %v2428
  %2430 = vmatmul.bf16.gmra.mxu0 %v877
  %v2431 = vpop.f32.mrf.mxu0
  %v2432 = vadd.f32 %v2383, %v2431
  %v2433 = vpop.f32.mrf.mxu0
  %v2434 = vadd.f32 %v2385, %v2433
  %2435 = vmatmul.bf16.gmra.mxu0 %v893
  %v2436 = vpop.f32.mrf.mxu0
  %v2437 = vadd.f32 %v2388, %v2436
  %v2438 = vpop.f32.mrf.mxu0
  %v2439 = vadd.f32 %v2390, %v2438
  %2440 = vmatmul.bf16.gmra.mxu0 %v909
  %v2441 = vpop.f32.mrf.mxu0
  %v2442 = vadd.f32 %v2393, %v2441
  %v2443 = vpop.f32.mrf.mxu0
  %v2444 = vadd.f32 %v2395, %v2443
  %2445 = vdwg.mxu0
  %2446 = vmatpush.bf16.msra.mxu0 %v1664
  %2447 = vmatpush.bf16.msra.mxu0 %v1663
  %2448 = vmatpush.bf16.msra.mxu0 %v1662
  %2449 = vmatpush.bf16.msra.mxu0 %v1661
  %2450 = vmatpush.bf16.msra.mxu0 %v1660
  %2451 = vmatpush.bf16.msra.mxu0 %v1659
  %2452 = vmatpush.bf16.msra.mxu0 %v1658
  %2453 = vmatpush.bf16.msra.mxu0 %v1657
  %2454 = vmatmul.bf16.gmra.mxu0 %v798
  %v2455 = vpop.f32.mrf.mxu0
  %v2456 = vadd.f32 %v2407, %v2455
  %v2457 = vpop.f32.mrf.mxu0
  %v2458 = vadd.f32 %v2409, %v2457
  %2459 = vmatmul.bf16.gmra.mxu0 %v814
  %v2460 = vpop.f32.mrf.mxu0
  %v2461 = vadd.f32 %v2412, %v2460
  %v2462 = vpop.f32.mrf.mxu0
  %v2463 = vadd.f32 %v2414, %v2462
  %2464 = vmatmul.bf16.gmra.mxu0 %v830
  %v2465 = vpop.f32.mrf.mxu0
  %v2466 = vadd.f32 %v2417, %v2465
  %v2467 = vpop.f32.mrf.mxu0
  %v2468 = vadd.f32 %v2419, %v2467
  %2469 = vmatmul.bf16.gmra.mxu0 %v846
  %v2470 = vpop.f32.mrf.mxu0
  %v2471 = vadd.f32 %v2422, %v2470
  %v2472 = vpop.f32.mrf.mxu0
  %v2473 = vadd.f32 %v2424, %v2472
  %2474 = vmatmul.bf16.gmra.mxu0 %v862
  %v2475 = vpop.f32.mrf.mxu0
  %v2476 = vadd.f32 %v2427, %v2475
  %v2477 = vpop.f32.mrf.mxu0
  %v2478 = vadd.f32 %v2429, %v2477
  %2479 = vmatmul.bf16.gmra.mxu0 %v878
  %v2480 = vpop.f32.mrf.mxu0
  %v2481 = vadd.f32 %v2432, %v2480
  %v2482 = vpop.f32.mrf.mxu0
  %v2483 = vadd.f32 %v2434, %v2482
  %2484 = vmatmul.bf16.gmra.mxu0 %v894
  %v2485 = vpop.f32.mrf.mxu0
  %v2486 = vadd.f32 %v2437, %v2485
  %v2487 = vpop.f32.mrf.mxu0
  %v2488 = vadd.f32 %v2439, %v2487
  %2489 = vmatmul.bf16.gmra.mxu0 %v910
  %v2490 = vpop.f32.mrf.mxu0
  %v2491 = vadd.f32 %v2442, %v2490
  %v2492 = vpop.f32.mrf.mxu0
  %v2493 = vadd.f32 %v2444, %v2492
  %2494 = vdwg.mxu0
  %2495 = vmatpush.bf16.msra.mxu0 %v1672
  %2496 = vmatpush.bf16.msra.mxu0 %v1671
  %2497 = vmatpush.bf16.msra.mxu0 %v1670
  %2498 = vmatpush.bf16.msra.mxu0 %v1669
  %2499 = vmatpush.bf16.msra.mxu0 %v1668
  %2500 = vmatpush.bf16.msra.mxu0 %v1667
  %2501 = vmatpush.bf16.msra.mxu0 %v1666
  %2502 = vmatpush.bf16.msra.mxu0 %v1665
  %2503 = vmatmul.bf16.gmra.mxu0 %v799
  %v2504 = vpop.f32.mrf.mxu0
  %v2505 = vadd.f32 %v2456, %v2504
  %v2506 = vpop.f32.mrf.mxu0
  %v2507 = vadd.f32 %v2458, %v2506
  %2508 = vmatmul.bf16.gmra.mxu0 %v815
  %v2509 = vpop.f32.mrf.mxu0
  %v2510 = vadd.f32 %v2461, %v2509
  %v2511 = vpop.f32.mrf.mxu0
  %v2512 = vadd.f32 %v2463, %v2511
  %2513 = vmatmul.bf16.gmra.mxu0 %v831
  %v2514 = vpop.f32.mrf.mxu0
  %v2515 = vadd.f32 %v2466, %v2514
  %v2516 = vpop.f32.mrf.mxu0
  %v2517 = vadd.f32 %v2468, %v2516
  %2518 = vmatmul.bf16.gmra.mxu0 %v847
  %v2519 = vpop.f32.mrf.mxu0
  %v2520 = vadd.f32 %v2471, %v2519
  %v2521 = vpop.f32.mrf.mxu0
  %v2522 = vadd.f32 %v2473, %v2521
  %2523 = vmatmul.bf16.gmra.mxu0 %v863
  %v2524 = vpop.f32.mrf.mxu0
  %v2525 = vadd.f32 %v2476, %v2524
  %v2526 = vpop.f32.mrf.mxu0
  %v2527 = vadd.f32 %v2478, %v2526
  %2528 = vmatmul.bf16.gmra.mxu0 %v879
  %v2529 = vpop.f32.mrf.mxu0
  %v2530 = vadd.f32 %v2481, %v2529
  %v2531 = vpop.f32.mrf.mxu0
  %v2532 = vadd.f32 %v2483, %v2531
  %2533 = vmatmul.bf16.gmra.mxu0 %v895
  %v2534 = vpop.f32.mrf.mxu0
  %v2535 = vadd.f32 %v2486, %v2534
  %v2536 = vpop.f32.mrf.mxu0
  %v2537 = vadd.f32 %v2488, %v2536
  %2538 = vmatmul.bf16.gmra.mxu0 %v911
  %v2539 = vpop.f32.mrf.mxu0
  %v2540 = vadd.f32 %v2491, %v2539
  %v2541 = vpop.f32.mrf.mxu0
  %v2542 = vadd.f32 %v2493, %v2541
  %2543 = vdwg.mxu0
  %2544 = vmatpush.bf16.msra.mxu0 %v1680
  %2545 = vmatpush.bf16.msra.mxu0 %v1679
  %2546 = vmatpush.bf16.msra.mxu0 %v1678
  %2547 = vmatpush.bf16.msra.mxu0 %v1677
  %2548 = vmatpush.bf16.msra.mxu0 %v1676
  %2549 = vmatpush.bf16.msra.mxu0 %v1675
  %2550 = vmatpush.bf16.msra.mxu0 %v1674
  %2551 = vmatpush.bf16.msra.mxu0 %v1673
  %2552 = vmatmul.bf16.gmra.mxu0 %v800
  %v2553 = vpop.f32.mrf.mxu0
  %v2554 = vadd.f32 %v2505, %v2553
  %v2555 = vpop.f32.mrf.mxu0
  %v2556 = vadd.f32 %v2507, %v2555
  %2557 = vmatmul.bf16.gmra.mxu0 %v816
  %v2558 = vpop.f32.mrf.mxu0
  %v2559 = vadd.f32 %v2510, %v2558
  %v2560 = vpop.f32.mrf.mxu0
  %v2561 = vadd.f32 %v2512, %v2560
  %2562 = vmatmul.bf16.gmra.mxu0 %v832
  %v2563 = vpop.f32.mrf.mxu0
  %v2564 = vadd.f32 %v2515, %v2563
  %v2565 = vpop.f32.mrf.mxu0
  %v2566 = vadd.f32 %v2517, %v2565
  %2567 = vmatmul.bf16.gmra.mxu0 %v848
  %v2568 = vpop.f32.mrf.mxu0
  %v2569 = vadd.f32 %v2520, %v2568
  %v2570 = vpop.f32.mrf.mxu0
  %v2571 = vadd.f32 %v2522, %v2570
  %2572 = vmatmul.bf16.gmra.mxu0 %v864
  %v2573 = vpop.f32.mrf.mxu0
  %v2574 = vadd.f32 %v2525, %v2573
  %v2575 = vpop.f32.mrf.mxu0
  %v2576 = vadd.f32 %v2527, %v2575
  %2577 = vmatmul.bf16.gmra.mxu0 %v880
  %v2578 = vpop.f32.mrf.mxu0
  %v2579 = vadd.f32 %v2530, %v2578
  %v2580 = vpop.f32.mrf.mxu0
  %v2581 = vadd.f32 %v2532, %v2580
  %2582 = vmatmul.bf16.gmra.mxu0 %v896
  %v2583 = vpop.f32.mrf.mxu0
  %v2584 = vadd.f32 %v2535, %v2583
  %v2585 = vpop.f32.mrf.mxu0
  %v2586 = vadd.f32 %v2537, %v2585
  %2587 = vmatmul.bf16.gmra.mxu0 %v912
  %v2588 = vpop.f32.mrf.mxu0
  %v2589 = vadd.f32 %v2540, %v2588
  %v2590 = vpop.f32.mrf.mxu0
  %v2591 = vadd.f32 %v2542, %v2590
  %2592 = vdwg.mxu0
  %v2593 = vld [vmem:[%s2] sm:$0x1]
  %v2595 = vperm.slane %v2593, 0
  %v2597 = vmul.f32 %v2554, %v2595
  %v2598 = vmul.f32 %v2556, %v2595
  %v2599 = vmul.f32 %v2559, %v2595
  %v2600 = vmul.f32 %v2561, %v2595
  %v2601 = vmul.f32 %v2564, %v2595
  %v2602 = vmul.f32 %v2566, %v2595
  %v2603 = vmul.f32 %v2569, %v2595
  %v2604 = vmul.f32 %v2571, %v2595
  %v2605 = vmul.f32 %v2574, %v2595
  %v2606 = vmul.f32 %v2576, %v2595
  %v2607 = vmul.f32 %v2579, %v2595
  %v2608 = vmul.f32 %v2581, %v2595
  %v2609 = vmul.f32 %v2584, %v2595
  %v2610 = vmul.f32 %v2586, %v2595
  %v2611 = vmul.f32 %v2589, %v2595
  %v2612 = vmul.f32 %v2591, %v2595
  %v2613 = vld [vmem:[%s3] sm:$0x1]
  %v2615 = vperm.slane %v2613, 0
  %v2617 = vadd.f32 %v2597, %v2615
  %v2618 = vadd.f32 %v2598, %v2615
  %v2619 = vadd.f32 %v2599, %v2615
  %v2620 = vadd.f32 %v2600, %v2615
  %v2621 = vadd.f32 %v2601, %v2615
  %v2622 = vadd.f32 %v2602, %v2615
  %v2623 = vadd.f32 %v2603, %v2615
  %v2624 = vadd.f32 %v2604, %v2615
  %v2625 = vadd.f32 %v2605, %v2615
  %v2626 = vadd.f32 %v2606, %v2615
  %v2627 = vadd.f32 %v2607, %v2615
  %v2628 = vadd.f32 %v2608, %v2615
  %v2629 = vadd.f32 %v2609, %v2615
  %v2630 = vadd.f32 %v2610, %v2615
  %v2631 = vadd.f32 %v2611, %v2615
  %v2632 = vadd.f32 %v2612, %v2615
  %vm2633 = vcmp.ge.f32.partialorder %v2617, 0.0
  %vm2634 = vcmp.ge.f32.partialorder %v2618, 0.0
  %vm2635 = vcmp.ge.f32.partialorder %v2619, 0.0
  %vm2636 = vcmp.ge.f32.partialorder %v2620, 0.0
  %vm2637 = vcmp.ge.f32.partialorder %v2621, 0.0
  %vm2638 = vcmp.ge.f32.partialorder %v2622, 0.0
  %vm2639 = vcmp.ge.f32.partialorder %v2623, 0.0
  %vm2640 = vcmp.ge.f32.partialorder %v2624, 0.0
  %vm2641 = vcmp.ge.f32.partialorder %v2625, 0.0
  %vm2642 = vcmp.ge.f32.partialorder %v2626, 0.0
  %vm2643 = vcmp.ge.f32.partialorder %v2627, 0.0
  %vm2644 = vcmp.ge.f32.partialorder %v2628, 0.0
  %vm2645 = vcmp.ge.f32.partialorder %v2629, 0.0
  %vm2646 = vcmp.ge.f32.partialorder %v2630, 0.0
  %vm2647 = vcmp.ge.f32.partialorder %v2631, 0.0
  %vm2648 = vcmp.ge.f32.partialorder %v2632, 0.0
  %v2649 = vmul.f32 %v2617, 0.2
  %v2650 = vmul.f32 %v2618, 0.2
  %v2651 = vmul.f32 %v2619, 0.2
  %v2652 = vmul.f32 %v2620, 0.2
  %v2653 = vmul.f32 %v2621, 0.2
  %v2654 = vmul.f32 %v2622, 0.2
  %v2655 = vmul.f32 %v2623, 0.2
  %v2656 = vmul.f32 %v2624, 0.2
  %v2657 = vmul.f32 %v2625, 0.2
  %v2658 = vmul.f32 %v2626, 0.2
  %v2659 = vmul.f32 %v2627, 0.2
  %v2660 = vmul.f32 %v2628, 0.2
  %v2661 = vmul.f32 %v2629, 0.2
  %v2662 = vmul.f32 %v2630, 0.2
  %v2663 = vmul.f32 %v2631, 0.2
  %v2664 = vmul.f32 %v2632, 0.2
  %v2665 = vsel %vm2633, %v2617, %v2649
  %v2666 = vsel %vm2634, %v2618, %v2650
  %v2667 = vsel %vm2635, %v2619, %v2651
  %v2668 = vsel %vm2636, %v2620, %v2652
  %v2669 = vsel %vm2637, %v2621, %v2653
  %v2670 = vsel %vm2638, %v2622, %v2654
  %v2671 = vsel %vm2639, %v2623, %v2655
  %v2672 = vsel %vm2640, %v2624, %v2656
  %v2673 = vsel %vm2641, %v2625, %v2657
  %v2674 = vsel %vm2642, %v2626, %v2658
  %v2675 = vsel %vm2643, %v2627, %v2659
  %v2676 = vsel %vm2644, %v2628, %v2660
  %v2677 = vsel %vm2645, %v2629, %v2661
  %v2678 = vsel %vm2646, %v2630, %v2662
  %v2679 = vsel %vm2647, %v2631, %v2663
  %v2680 = vsel %vm2648, %v2632, %v2664
  %v2681 = vpack.c.bf16 %v2665, %v2665
  %v2682 = vpack.c.bf16 %v2666, %v2666
  %v2683 = vpack.c.bf16 %v2667, %v2667
  %v2684 = vpack.c.bf16 %v2668, %v2668
  %v2685 = vpack.c.bf16 %v2669, %v2669
  %v2686 = vpack.c.bf16 %v2670, %v2670
  %v2687 = vpack.c.bf16 %v2671, %v2671
  %v2688 = vpack.c.bf16 %v2672, %v2672
  %v2689 = vpack.c.bf16 %v2673, %v2673
  %v2690 = vpack.c.bf16 %v2674, %v2674
  %v2691 = vpack.c.bf16 %v2675, %v2675
  %v2692 = vpack.c.bf16 %v2676, %v2676
  %v2693 = vpack.c.bf16 %v2677, %v2677
  %v2694 = vpack.c.bf16 %v2678, %v2678
  %v2695 = vpack.c.bf16 %v2679, %v2679
  %v2696 = vpack.c.bf16 %v2680, %v2680
  %vm2697 = vcmask 519168
  %2698 = vst.msk [vmem:[%s4] sm:$0xf] %vm2697, %v2681
  %2699 = vst.msk [vmem:[%s4 + $0x4] sm:$0xf] %vm2697, %v2682
  %2700 = vst.msk [vmem:[%s4 + $0x8] sm:$0xf] %vm2697, %v2683
  %2701 = vst.msk [vmem:[%s4 + $0xc] sm:$0xf] %vm2697, %v2684
  %2702 = vst.msk [vmem:[%s4 + $0x10] sm:$0xf] %vm2697, %v2685
  %2703 = vst.msk [vmem:[%s4 + $0x14] sm:$0xf] %vm2697, %v2686
  %2704 = vst.msk [vmem:[%s4 + $0x18] sm:$0xf] %vm2697, %v2687
  %2705 = vst.msk [vmem:[%s4 + $0x1c] sm:$0xf] %vm2697, %v2688
  %2706 = vst.msk [vmem:[%s4 + $0x20] sm:$0xf] %vm2697, %v2689
  %2707 = vst.msk [vmem:[%s4 + $0x24] sm:$0xf] %vm2697, %v2690
  %2708 = vst.msk [vmem:[%s4 + $0x28] sm:$0xf] %vm2697, %v2691
  %2709 = vst.msk [vmem:[%s4 + $0x2c] sm:$0xf] %vm2697, %v2692
  %2710 = vst.msk [vmem:[%s4 + $0x30] sm:$0xf] %vm2697, %v2693
  %2711 = vst.msk [vmem:[%s4 + $0x34] sm:$0xf] %vm2697, %v2694
  %2712 = vst.msk [vmem:[%s4 + $0x38] sm:$0xf] %vm2697, %v2695
  %2713 = vst.msk [vmem:[%s4 + $0x3c] sm:$0xf] %vm2697, %v2696
  // Predicated region
  $region18: #{discriminator_forward.6} parent=0 // pred_check
    _
  $region19: #{discriminator_forward.6} parent=0 // pred_check_branch
    %2715 = sbr.rel (0) target = $region21
  $region20: #{discriminator_forward.6} parent=0 // pred_region
    _
  $region21: #{discriminator_forward.6} parent=0 // pred_fallthru
    _
  // Predicated region
  $region22: #{discriminator_forward.6} parent=0 // pred_check
    _
  $region23: #{discriminator_forward.6} parent=0 // pred_check_branch
    %2717 = sbr.rel (0) target = $region25
  $region24: #{discriminator_forward.6} parent=0 // pred_region
    _
  $region25: #{discriminator_forward.6} parent=0 // pred_fallthru
    _

// kernel: discriminator_forward.7
$region0: #{discriminator_forward.7}
  #allocation0 [shape = 'u32[]', space=smem, size = 0x4, offset = 0x4, fixed_abs, tag = 'smem constant byte address 0x4 - core index']
  #allocation1 [shape = 'u32[72,128]{1,0:T(1,128)}', space=vmem, size = 0x9000, scoped, tag = 'internal scratch']
  %s0 = inlined_call_operand.vmem [shape: bf16[16,4096], index: 0, kind: input, shape index: {}]
  %s1 = inlined_call_operand.vmem [shape: bf16[4096,128], index: 1, kind: input, shape index: {}]
  %s2 = inlined_call_operand.vmem [shape: f32[1,128], index: 2, kind: input, shape index: {}]
  %s3 = inlined_call_operand.vmem [shape: f32[1,128], index: 3, kind: input, shape index: {}]
  %s4 = inlined_call_operand.vmem [shape: bf16[16,128], index: 4, kind: output, shape index: {}]
  %s5 = sld [smem:[#allocation0]]
  $region26: #{discriminator_forward.7} parent=0
    _
  %s7 = ssub.s32 1, %s5
  %s8 = scalar_select 0, %s7, %s5
  // Predicated region
  $region2: #{discriminator_forward.7} parent=0 // pred_check
    _
  $region3: #{discriminator_forward.7} parent=0 // pred_check_branch
    %10 = sbr.rel (0) target = $region5
  $region4: #{discriminator_forward.7} parent=0 // pred_region
    _
  $region5: #{discriminator_forward.7} parent=0 // pred_fallthru
    _
  // Predicated region
  $region6: #{discriminator_forward.7} parent=0 // pred_check
    _
  $region7: #{discriminator_forward.7} parent=0 // pred_check_branch
    %12 = sbr.rel (0) target = $region9
  $region8: #{discriminator_forward.7} parent=0 // pred_region
    _
  $region9: #{discriminator_forward.7} parent=0 // pred_fallthru
    _
  // Predicated region
  $region10: #{discriminator_forward.7} parent=0 // pred_check
    _
  $region11: #{discriminator_forward.7} parent=0 // pred_check_branch
    %14 = sbr.rel (0) target = $region13
  $region12: #{discriminator_forward.7} parent=0 // pred_region
    _
  $region13: #{discriminator_forward.7} parent=0 // pred_fallthru
    _
  // Predicated region
  $region14: #{discriminator_forward.7} parent=0 // pred_check
    _
  $region15: #{discriminator_forward.7} parent=0 // pred_check_branch
    %16 = sbr.rel (0) target = $region17
  $region16: #{discriminator_forward.7} parent=0 // pred_region
    _
  $region17: #{discriminator_forward.7} parent=0 // pred_fallthru
    _
  %v17 = vld [vmem:[%s0] sm:$0xff]
  %v18 = vld [vmem:[%s0 + $0x8] sm:$0xff]
  %v19 = vld [vmem:[%s0 + $0x10] sm:$0xff]
  %v20 = vld [vmem:[%s0 + $0x18] sm:$0xff]
  %v21 = vld [vmem:[%s0 + $0x20] sm:$0xff]
  %v22 = vld [vmem:[%s0 + $0x28] sm:$0xff]
  %v23 = vld [vmem:[%s0 + $0x30] sm:$0xff]
  %v24 = vld [vmem:[%s0 + $0x38] sm:$0xff]
  %v25 = vld [vmem:[%s0 + $0x40] sm:$0xff]
  %v26 = vld [vmem:[%s0 + $0x48] sm:$0xff]
  %v27 = vld [vmem:[%s0 + $0x50] sm:$0xff]
  %v28 = vld [vmem:[%s0 + $0x58] sm:$0xff]
  %v29 = vld [vmem:[%s0 + $0x60] sm:$0xff]
  %v30 = vld [vmem:[%s0 + $0x68] sm:$0xff]
  %v31 = vld [vmem:[%s0 + $0x70] sm:$0xff]
  %v32 = vld [vmem:[%s0 + $0x78] sm:$0xff]
  %v33 = vld [vmem:[%s0 + $0x80] sm:$0xff]
  %v34 = vld [vmem:[%s0 + $0x88] sm:$0xff]
  %v35 = vld [vmem:[%s0 + $0x90] sm:$0xff]
  %v36 = vld [vmem:[%s0 + $0x98] sm:$0xff]
  %v37 = vld [vmem:[%s0 + $0xa0] sm:$0xff]
  %v38 = vld [vmem:[%s0 + $0xa8] sm:$0xff]
  %v39 = vld [vmem:[%s0 + $0xb0] sm:$0xff]
  %v40 = vld [vmem:[%s0 + $0xb8] sm:$0xff]
  %v41 = vld [vmem:[%s0 + $0xc0] sm:$0xff]
  %v42 = vld [vmem:[%s0 + $0xc8] sm:$0xff]
  %v43 = vld [vmem:[%s0 + $0xd0] sm:$0xff]
  %v44 = vld [vmem:[%s0 + $0xd8] sm:$0xff]
  %v45 = vld [vmem:[%s0 + $0xe0] sm:$0xff]
  %v46 = vld [vmem:[%s0 + $0xe8] sm:$0xff]
  %v47 = vld [vmem:[%s0 + $0xf0] sm:$0xff]
  %v48 = vld [vmem:[%s0 + $0xf8] sm:$0xff]
  %v49 = vld [vmem:[%s1] sm:$0xf]
  %v50 = vld [vmem:[%s1 + $0x4] sm:$0xf]
  %v51 = vld [vmem:[%s1 + $0x8] sm:$0xf]
  %v52 = vld [vmem:[%s1 + $0xc] sm:$0xf]
  %v53 = vld [vmem:[%s1 + $0x10] sm:$0xf]
  %v54 = vld [vmem:[%s1 + $0x14] sm:$0xf]
  %v55 = vld [vmem:[%s1 + $0x18] sm:$0xf]
  %v56 = vld [vmem:[%s1 + $0x1c] sm:$0xf]
  %v57 = vld [vmem:[%s1 + $0x20] sm:$0xf]
  %v58 = vld [vmem:[%s1 + $0x24] sm:$0xf]
  %v59 = vld [vmem:[%s1 + $0x28] sm:$0xf]
  %v60 = vld [vmem:[%s1 + $0x2c] sm:$0xf]
  %v61 = vld [vmem:[%s1 + $0x30] sm:$0xf]
  %v62 = vld [vmem:[%s1 + $0x34] sm:$0xf]
  %v63 = vld [vmem:[%s1 + $0x38] sm:$0xf]
  %v64 = vld [vmem:[%s1 + $0x3c] sm:$0xf]
  %v65 = vld [vmem:[%s1 + $0x40] sm:$0xf]
  %v66 = vld [vmem:[%s1 + $0x44] sm:$0xf]
  %v67 = vld [vmem:[%s1 + $0x48] sm:$0xf]
  %v68 = vld [vmem:[%s1 + $0x4c] sm:$0xf]
  %v69 = vld [vmem:[%s1 + $0x50] sm:$0xf]
  %v70 = vld [vmem:[%s1 + $0x54] sm:$0xf]
  %v71 = vld [vmem:[%s1 + $0x58] sm:$0xf]
  %v72 = vld [vmem:[%s1 + $0x5c] sm:$0xf]
  %v73 = vld [vmem:[%s1 + $0x60] sm:$0xf]
  %v74 = vld [vmem:[%s1 + $0x64] sm:$0xf]
  %v75 = vld [vmem:[%s1 + $0x68] sm:$0xf]
  %v76 = vld [vmem:[%s1 + $0x6c] sm:$0xf]
  %v77 = vld [vmem:[%s1 + $0x70] sm:$0xf]
  %v78 = vld [vmem:[%s1 + $0x74] sm:$0xf]
  %v79 = vld [vmem:[%s1 + $0x78] sm:$0xf]
  %v80 = vld [vmem:[%s1 + $0x7c] sm:$0xf]
  %v81 = vld [vmem:[%s1 + $0x80] sm:$0xf]
  %v82 = vld [vmem:[%s1 + $0x84] sm:$0xf]
  %v83 = vld [vmem:[%s1 + $0x88] sm:$0xf]
  %v84 = vld [vmem:[%s1 + $0x8c] sm:$0xf]
  %v85 = vld [vmem:[%s1 + $0x90] sm:$0xf]
  %v86 = vld [vmem:[%s1 + $0x94] sm:$0xf]
  %v87 = vld [vmem:[%s1 + $0x98] sm:$0xf]
  %v88 = vld [vmem:[%s1 + $0x9c] sm:$0xf]
  %v89 = vld [vmem:[%s1 + $0xa0] sm:$0xf]
  %v90 = vld [vmem:[%s1 + $0xa4] sm:$0xf]
  %v91 = vld [vmem:[%s1 + $0xa8] sm:$0xf]
  %v92 = vld [vmem:[%s1 + $0xac] sm:$0xf]
  %v93 = vld [vmem:[%s1 + $0xb0] sm:$0xf]
  %v94 = vld [vmem:[%s1 + $0xb4] sm:$0xf]
  %v95 = vld [vmem:[%s1 + $0xb8] sm:$0xf]
  %v96 = vld [vmem:[%s1 + $0xbc] sm:$0xf]
  %v97 = vld [vmem:[%s1 + $0xc0] sm:$0xf]
  %v98 = vld [vmem:[%s1 + $0xc4] sm:$0xf]
  %v99 = vld [vmem:[%s1 + $0xc8] sm:$0xf]
  %v100 = vld [vmem:[%s1 + $0xcc] sm:$0xf]
  %v101 = vld [vmem:[%s1 + $0xd0] sm:$0xf]
  %v102 = vld [vmem:[%s1 + $0xd4] sm:$0xf]
  %v103 = vld [vmem:[%s1 + $0xd8] sm:$0xf]
  %v104 = vld [vmem:[%s1 + $0xdc] sm:$0xf]
  %v105 = vld [vmem:[%s1 + $0xe0] sm:$0xf]
  %v106 = vld [vmem:[%s1 + $0xe4] sm:$0xf]
  %v107 = vld [vmem:[%s1 + $0xe8] sm:$0xf]
  %v108 = vld [vmem:[%s1 + $0xec] sm:$0xf]
  %v109 = vld [vmem:[%s1 + $0xf0] sm:$0xf]
  %v110 = vld [vmem:[%s1 + $0xf4] sm:$0xf]
  %v111 = vld [vmem:[%s1 + $0xf8] sm:$0xf]
  %v112 = vld [vmem:[%s1 + $0xfc] sm:$0xf]
  %v113 = vld [vmem:[%s1 + $0x100] sm:$0xf]
  %v114 = vld [vmem:[%s1 + $0x104] sm:$0xf]
  %v115 = vld [vmem:[%s1 + $0x108] sm:$0xf]
  %v116 = vld [vmem:[%s1 + $0x10c] sm:$0xf]
  %v117 = vld [vmem:[%s1 + $0x110] sm:$0xf]
  %v118 = vld [vmem:[%s1 + $0x114] sm:$0xf]
  %v119 = vld [vmem:[%s1 + $0x118] sm:$0xf]
  %v120 = vld [vmem:[%s1 + $0x11c] sm:$0xf]
  %v121 = vld [vmem:[%s1 + $0x120] sm:$0xf]
  %v122 = vld [vmem:[%s1 + $0x124] sm:$0xf]
  %v123 = vld [vmem:[%s1 + $0x128] sm:$0xf]
  %v124 = vld [vmem:[%s1 + $0x12c] sm:$0xf]
  %v125 = vld [vmem:[%s1 + $0x130] sm:$0xf]
  %v126 = vld [vmem:[%s1 + $0x134] sm:$0xf]
  %v127 = vld [vmem:[%s1 + $0x138] sm:$0xf]
  %v128 = vld [vmem:[%s1 + $0x13c] sm:$0xf]
  %v129 = vld [vmem:[%s1 + $0x140] sm:$0xf]
  %v130 = vld [vmem:[%s1 + $0x144] sm:$0xf]
  %v131 = vld [vmem:[%s1 + $0x148] sm:$0xf]
  %v132 = vld [vmem:[%s1 + $0x14c] sm:$0xf]
  %v133 = vld [vmem:[%s1 + $0x150] sm:$0xf]
  %v134 = vld [vmem:[%s1 + $0x154] sm:$0xf]
  %v135 = vld [vmem:[%s1 + $0x158] sm:$0xf]
  %v136 = vld [vmem:[%s1 + $0x15c] sm:$0xf]
  %v137 = vld [vmem:[%s1 + $0x160] sm:$0xf]
  %v138 = vld [vmem:[%s1 + $0x164] sm:$0xf]
  %v139 = vld [vmem:[%s1 + $0x168] sm:$0xf]
  %v140 = vld [vmem:[%s1 + $0x16c] sm:$0xf]
  %v141 = vld [vmem:[%s1 + $0x170] sm:$0xf]
  %v142 = vld [vmem:[%s1 + $0x174] sm:$0xf]
  %v143 = vld [vmem:[%s1 + $0x178] sm:$0xf]
  %v144 = vld [vmem:[%s1 + $0x17c] sm:$0xf]
  %v145 = vld [vmem:[%s1 + $0x180] sm:$0xf]
  %v146 = vld [vmem:[%s1 + $0x184] sm:$0xf]
  %v147 = vld [vmem:[%s1 + $0x188] sm:$0xf]
  %v148 = vld [vmem:[%s1 + $0x18c] sm:$0xf]
  %v149 = vld [vmem:[%s1 + $0x190] sm:$0xf]
  %v150 = vld [vmem:[%s1 + $0x194] sm:$0xf]
  %v151 = vld [vmem:[%s1 + $0x198] sm:$0xf]
  %v152 = vld [vmem:[%s1 + $0x19c] sm:$0xf]
  %v153 = vld [vmem:[%s1 + $0x1a0] sm:$0xf]
  %v154 = vld [vmem:[%s1 + $0x1a4] sm:$0xf]
  %v155 = vld [vmem:[%s1 + $0x1a8] sm:$0xf]
  %v156 = vld [vmem:[%s1 + $0x1ac] sm:$0xf]
  %v157 = vld [vmem:[%s1 + $0x1b0] sm:$0xf]
  %v158 = vld [vmem:[%s1 + $0x1b4] sm:$0xf]
  %v159 = vld [vmem:[%s1 + $0x1b8] sm:$0xf]
  %v160 = vld [vmem:[%s1 + $0x1bc] sm:$0xf]
  %v161 = vld [vmem:[%s1 + $0x1c0] sm:$0xf]
  %v162 = vld [vmem:[%s1 + $0x1c4] sm:$0xf]
  %v163 = vld [vmem:[%s1 + $0x1c8] sm:$0xf]
  %v164 = vld [vmem:[%s1 + $0x1cc] sm:$0xf]
  %v165 = vld [vmem:[%s1 + $0x1d0] sm:$0xf]
  %v166 = vld [vmem:[%s1 + $0x1d4] sm:$0xf]
  %v167 = vld [vmem:[%s1 + $0x1d8] sm:$0xf]
  %v168 = vld [vmem:[%s1 + $0x1dc] sm:$0xf]
  %v169 = vld [vmem:[%s1 + $0x1e0] sm:$0xf]
  %v170 = vld [vmem:[%s1 + $0x1e4] sm:$0xf]
  %v171 = vld [vmem:[%s1 + $0x1e8] sm:$0xf]
  %v172 = vld [vmem:[%s1 + $0x1ec] sm:$0xf]
  %v173 = vld [vmem:[%s1 + $0x1f0] sm:$0xf]
  %v174 = vld [vmem:[%s1 + $0x1f4] sm:$0xf]
  %v175 = vld [vmem:[%s1 + $0x1f8] sm:$0xf]
  %v176 = vld [vmem:[%s1 + $0x1fc] sm:$0xf]
  %v177 = vld [vmem:[%s1 + $0x200] sm:$0xf]
  %v178 = vld [vmem:[%s1 + $0x204] sm:$0xf]
  %v179 = vld [vmem:[%s1 + $0x208] sm:$0xf]
  %v180 = vld [vmem:[%s1 + $0x20c] sm:$0xf]
  %v181 = vld [vmem:[%s1 + $0x210] sm:$0xf]
  %v182 = vld [vmem:[%s1 + $0x214] sm:$0xf]
  %v183 = vld [vmem:[%s1 + $0x218] sm:$0xf]
  %v184 = vld [vmem:[%s1 + $0x21c] sm:$0xf]
  %v185 = vld [vmem:[%s1 + $0x220] sm:$0xf]
  %v186 = vld [vmem:[%s1 + $0x224] sm:$0xf]
  %v187 = vld [vmem:[%s1 + $0x228] sm:$0xf]
  %v188 = vld [vmem:[%s1 + $0x22c] sm:$0xf]
  %v189 = vld [vmem:[%s1 + $0x230] sm:$0xf]
  %v190 = vld [vmem:[%s1 + $0x234] sm:$0xf]
  %v191 = vld [vmem:[%s1 + $0x238] sm:$0xf]
  %v192 = vld [vmem:[%s1 + $0x23c] sm:$0xf]
  %v193 = vld [vmem:[%s1 + $0x240] sm:$0xf]
  %v194 = vld [vmem:[%s1 + $0x244] sm:$0xf]
  %v195 = vld [vmem:[%s1 + $0x248] sm:$0xf]
  %v196 = vld [vmem:[%s1 + $0x24c] sm:$0xf]
  %v197 = vld [vmem:[%s1 + $0x250] sm:$0xf]
  %v198 = vld [vmem:[%s1 + $0x254] sm:$0xf]
  %v199 = vld [vmem:[%s1 + $0x258] sm:$0xf]
  %v200 = vld [vmem:[%s1 + $0x25c] sm:$0xf]
  %v201 = vld [vmem:[%s1 + $0x260] sm:$0xf]
  %v202 = vld [vmem:[%s1 + $0x264] sm:$0xf]
  %v203 = vld [vmem:[%s1 + $0x268] sm:$0xf]
  %v204 = vld [vmem:[%s1 + $0x26c] sm:$0xf]
  %v205 = vld [vmem:[%s1 + $0x270] sm:$0xf]
  %v206 = vld [vmem:[%s1 + $0x274] sm:$0xf]
  %v207 = vld [vmem:[%s1 + $0x278] sm:$0xf]
  %v208 = vld [vmem:[%s1 + $0x27c] sm:$0xf]
  %v209 = vld [vmem:[%s1 + $0x280] sm:$0xf]
  %v210 = vld [vmem:[%s1 + $0x284] sm:$0xf]
  %v211 = vld [vmem:[%s1 + $0x288] sm:$0xf]
  %v212 = vld [vmem:[%s1 + $0x28c] sm:$0xf]
  %v213 = vld [vmem:[%s1 + $0x290] sm:$0xf]
  %v214 = vld [vmem:[%s1 + $0x294] sm:$0xf]
  %v215 = vld [vmem:[%s1 + $0x298] sm:$0xf]
  %v216 = vld [vmem:[%s1 + $0x29c] sm:$0xf]
  %v217 = vld [vmem:[%s1 + $0x2a0] sm:$0xf]
  %v218 = vld [vmem:[%s1 + $0x2a4] sm:$0xf]
  %v219 = vld [vmem:[%s1 + $0x2a8] sm:$0xf]
  %v220 = vld [vmem:[%s1 + $0x2ac] sm:$0xf]
  %v221 = vld [vmem:[%s1 + $0x2b0] sm:$0xf]
  %v222 = vld [vmem:[%s1 + $0x2b4] sm:$0xf]
  %v223 = vld [vmem:[%s1 + $0x2b8] sm:$0xf]
  %v224 = vld [vmem:[%s1 + $0x2bc] sm:$0xf]
  %v225 = vld [vmem:[%s1 + $0x2c0] sm:$0xf]
  %v226 = vld [vmem:[%s1 + $0x2c4] sm:$0xf]
  %v227 = vld [vmem:[%s1 + $0x2c8] sm:$0xf]
  %v228 = vld [vmem:[%s1 + $0x2cc] sm:$0xf]
  %v229 = vld [vmem:[%s1 + $0x2d0] sm:$0xf]
  %v230 = vld [vmem:[%s1 + $0x2d4] sm:$0xf]
  %v231 = vld [vmem:[%s1 + $0x2d8] sm:$0xf]
  %v232 = vld [vmem:[%s1 + $0x2dc] sm:$0xf]
  %v233 = vld [vmem:[%s1 + $0x2e0] sm:$0xf]
  %v234 = vld [vmem:[%s1 + $0x2e4] sm:$0xf]
  %v235 = vld [vmem:[%s1 + $0x2e8] sm:$0xf]
  %v236 = vld [vmem:[%s1 + $0x2ec] sm:$0xf]
  %v237 = vld [vmem:[%s1 + $0x2f0] sm:$0xf]
  %v238 = vld [vmem:[%s1 + $0x2f4] sm:$0xf]
  %v239 = vld [vmem:[%s1 + $0x2f8] sm:$0xf]
  %v240 = vld [vmem:[%s1 + $0x2fc] sm:$0xf]
  %v241 = vld [vmem:[%s1 + $0x300] sm:$0xf]
  %v242 = vld [vmem:[%s1 + $0x304] sm:$0xf]
  %v243 = vld [vmem:[%s1 + $0x308] sm:$0xf]
  %v244 = vld [vmem:[%s1 + $0x30c] sm:$0xf]
  %v245 = vld [vmem:[%s1 + $0x310] sm:$0xf]
  %v246 = vld [vmem:[%s1 + $0x314] sm:$0xf]
  %v247 = vld [vmem:[%s1 + $0x318] sm:$0xf]
  %v248 = vld [vmem:[%s1 + $0x31c] sm:$0xf]
  %v249 = vld [vmem:[%s1 + $0x320] sm:$0xf]
  %v250 = vld [vmem:[%s1 + $0x324] sm:$0xf]
  %v251 = vld [vmem:[%s1 + $0x328] sm:$0xf]
  %v252 = vld [vmem:[%s1 + $0x32c] sm:$0xf]
  %v253 = vld [vmem:[%s1 + $0x330] sm:$0xf]
  %v254 = vld [vmem:[%s1 + $0x334] sm:$0xf]
  %v255 = vld [vmem:[%s1 + $0x338] sm:$0xf]
  %v256 = vld [vmem:[%s1 + $0x33c] sm:$0xf]
  %v257 = vld [vmem:[%s1 + $0x340] sm:$0xf]
  %v258 = vld [vmem:[%s1 + $0x344] sm:$0xf]
  %v259 = vld [vmem:[%s1 + $0x348] sm:$0xf]
  %v260 = vld [vmem:[%s1 + $0x34c] sm:$0xf]
  %v261 = vld [vmem:[%s1 + $0x350] sm:$0xf]
  %v262 = vld [vmem:[%s1 + $0x354] sm:$0xf]
  %v263 = vld [vmem:[%s1 + $0x358] sm:$0xf]
  %v264 = vld [vmem:[%s1 + $0x35c] sm:$0xf]
  %v265 = vld [vmem:[%s1 + $0x360] sm:$0xf]
  %v266 = vld [vmem:[%s1 + $0x364] sm:$0xf]
  %v267 = vld [vmem:[%s1 + $0x368] sm:$0xf]
  %v268 = vld [vmem:[%s1 + $0x36c] sm:$0xf]
  %v269 = vld [vmem:[%s1 + $0x370] sm:$0xf]
  %v270 = vld [vmem:[%s1 + $0x374] sm:$0xf]
  %v271 = vld [vmem:[%s1 + $0x378] sm:$0xf]
  %v272 = vld [vmem:[%s1 + $0x37c] sm:$0xf]
  %v273 = vld [vmem:[%s1 + $0x380] sm:$0xf]
  %v274 = vld [vmem:[%s1 + $0x384] sm:$0xf]
  %v275 = vld [vmem:[%s1 + $0x388] sm:$0xf]
  %v276 = vld [vmem:[%s1 + $0x38c] sm:$0xf]
  %v277 = vld [vmem:[%s1 + $0x390] sm:$0xf]
  %v278 = vld [vmem:[%s1 + $0x394] sm:$0xf]
  %v279 = vld [vmem:[%s1 + $0x398] sm:$0xf]
  %v280 = vld [vmem:[%s1 + $0x39c] sm:$0xf]
  %v281 = vld [vmem:[%s1 + $0x3a0] sm:$0xf]
  %v282 = vld [vmem:[%s1 + $0x3a4] sm:$0xf]
  %v283 = vld [vmem:[%s1 + $0x3a8] sm:$0xf]
  %v284 = vld [vmem:[%s1 + $0x3ac] sm:$0xf]
  %v285 = vld [vmem:[%s1 + $0x3b0] sm:$0xf]
  %v286 = vld [vmem:[%s1 + $0x3b4] sm:$0xf]
  %v287 = vld [vmem:[%s1 + $0x3b8] sm:$0xf]
  %v288 = vld [vmem:[%s1 + $0x3bc] sm:$0xf]
  %v289 = vld [vmem:[%s1 + $0x3c0] sm:$0xf]
  %v290 = vld [vmem:[%s1 + $0x3c4] sm:$0xf]
  %v291 = vld [vmem:[%s1 + $0x3c8] sm:$0xf]
  %v292 = vld [vmem:[%s1 + $0x3cc] sm:$0xf]
  %v293 = vld [vmem:[%s1 + $0x3d0] sm:$0xf]
  %v294 = vld [vmem:[%s1 + $0x3d4] sm:$0xf]
  %v295 = vld [vmem:[%s1 + $0x3d8] sm:$0xf]
  %v296 = vld [vmem:[%s1 + $0x3dc] sm:$0xf]
  %v297 = vld [vmem:[%s1 + $0x3e0] sm:$0xf]
  %v298 = vld [vmem:[%s1 + $0x3e4] sm:$0xf]
  %v299 = vld [vmem:[%s1 + $0x3e8] sm:$0xf]
  %v300 = vld [vmem:[%s1 + $0x3ec] sm:$0xf]
  %v301 = vld [vmem:[%s1 + $0x3f0] sm:$0xf]
  %v302 = vld [vmem:[%s1 + $0x3f4] sm:$0xf]
  %v303 = vld [vmem:[%s1 + $0x3f8] sm:$0xf]
  %v304 = vld [vmem:[%s1 + $0x3fc] sm:$0xf]
  %v305 = vld [vmem:[%s1 + $0x400] sm:$0xf]
  %v306 = vld [vmem:[%s1 + $0x404] sm:$0xf]
  %v307 = vld [vmem:[%s1 + $0x408] sm:$0xf]
  %v308 = vld [vmem:[%s1 + $0x40c] sm:$0xf]
  %v309 = vld [vmem:[%s1 + $0x410] sm:$0xf]
  %v310 = vld [vmem:[%s1 + $0x414] sm:$0xf]
  %v311 = vld [vmem:[%s1 + $0x418] sm:$0xf]
  %v312 = vld [vmem:[%s1 + $0x41c] sm:$0xf]
  %v313 = vld [vmem:[%s1 + $0x420] sm:$0xf]
  %v314 = vld [vmem:[%s1 + $0x424] sm:$0xf]
  %v315 = vld [vmem:[%s1 + $0x428] sm:$0xf]
  %v316 = vld [vmem:[%s1 + $0x42c] sm:$0xf]
  %v317 = vld [vmem:[%s1 + $0x430] sm:$0xf]
  %v318 = vld [vmem:[%s1 + $0x434] sm:$0xf]
  %v319 = vld [vmem:[%s1 + $0x438] sm:$0xf]
  %v320 = vld [vmem:[%s1 + $0x43c] sm:$0xf]
  %v321 = vld [vmem:[%s1 + $0x440] sm:$0xf]
  %v322 = vld [vmem:[%s1 + $0x444] sm:$0xf]
  %v323 = vld [vmem:[%s1 + $0x448] sm:$0xf]
  %v324 = vld [vmem:[%s1 + $0x44c] sm:$0xf]
  %v325 = vld [vmem:[%s1 + $0x450] sm:$0xf]
  %v326 = vld [vmem:[%s1 + $0x454] sm:$0xf]
  %v327 = vld [vmem:[%s1 + $0x458] sm:$0xf]
  %v328 = vld [vmem:[%s1 + $0x45c] sm:$0xf]
  %v329 = vld [vmem:[%s1 + $0x460] sm:$0xf]
  %v330 = vld [vmem:[%s1 + $0x464] sm:$0xf]
  %v331 = vld [vmem:[%s1 + $0x468] sm:$0xf]
  %v332 = vld [vmem:[%s1 + $0x46c] sm:$0xf]
  %v333 = vld [vmem:[%s1 + $0x470] sm:$0xf]
  %v334 = vld [vmem:[%s1 + $0x474] sm:$0xf]
  %v335 = vld [vmem:[%s1 + $0x478] sm:$0xf]
  %v336 = vld [vmem:[%s1 + $0x47c] sm:$0xf]
  %v337 = vld [vmem:[%s1 + $0x480] sm:$0xf]
  %v338 = vld [vmem:[%s1 + $0x484] sm:$0xf]
  %v339 = vld [vmem:[%s1 + $0x488] sm:$0xf]
  %v340 = vld [vmem:[%s1 + $0x48c] sm:$0xf]
  %v341 = vld [vmem:[%s1 + $0x490] sm:$0xf]
  %v342 = vld [vmem:[%s1 + $0x494] sm:$0xf]
  %v343 = vld [vmem:[%s1 + $0x498] sm:$0xf]
  %v344 = vld [vmem:[%s1 + $0x49c] sm:$0xf]
  %v345 = vld [vmem:[%s1 + $0x4a0] sm:$0xf]
  %v346 = vld [vmem:[%s1 + $0x4a4] sm:$0xf]
  %v347 = vld [vmem:[%s1 + $0x4a8] sm:$0xf]
  %v348 = vld [vmem:[%s1 + $0x4ac] sm:$0xf]
  %v349 = vld [vmem:[%s1 + $0x4b0] sm:$0xf]
  %v350 = vld [vmem:[%s1 + $0x4b4] sm:$0xf]
  %v351 = vld [vmem:[%s1 + $0x4b8] sm:$0xf]
  %v352 = vld [vmem:[%s1 + $0x4bc] sm:$0xf]
  %v353 = vld [vmem:[%s1 + $0x4c0] sm:$0xf]
  %v354 = vld [vmem:[%s1 + $0x4c4] sm:$0xf]
  %v355 = vld [vmem:[%s1 + $0x4c8] sm:$0xf]
  %v356 = vld [vmem:[%s1 + $0x4cc] sm:$0xf]
  %v357 = vld [vmem:[%s1 + $0x4d0] sm:$0xf]
  %v358 = vld [vmem:[%s1 + $0x4d4] sm:$0xf]
  %v359 = vld [vmem:[%s1 + $0x4d8] sm:$0xf]
  %v360 = vld [vmem:[%s1 + $0x4dc] sm:$0xf]
  %v361 = vld [vmem:[%s1 + $0x4e0] sm:$0xf]
  %v362 = vld [vmem:[%s1 + $0x4e4] sm:$0xf]
  %v363 = vld [vmem:[%s1 + $0x4e8] sm:$0xf]
  %v364 = vld [vmem:[%s1 + $0x4ec] sm:$0xf]
  %v365 = vld [vmem:[%s1 + $0x4f0] sm:$0xf]
  %v366 = vld [vmem:[%s1 + $0x4f4] sm:$0xf]
  %v367 = vld [vmem:[%s1 + $0x4f8] sm:$0xf]
  %v368 = vld [vmem:[%s1 + $0x4fc] sm:$0xf]
  %v369 = vld [vmem:[%s1 + $0x500] sm:$0xf]
  %v370 = vld [vmem:[%s1 + $0x504] sm:$0xf]
  %v371 = vld [vmem:[%s1 + $0x508] sm:$0xf]
  %v372 = vld [vmem:[%s1 + $0x50c] sm:$0xf]
  %v373 = vld [vmem:[%s1 + $0x510] sm:$0xf]
  %v374 = vld [vmem:[%s1 + $0x514] sm:$0xf]
  %v375 = vld [vmem:[%s1 + $0x518] sm:$0xf]
  %v376 = vld [vmem:[%s1 + $0x51c] sm:$0xf]
  %v377 = vld [vmem:[%s1 + $0x520] sm:$0xf]
  %v378 = vld [vmem:[%s1 + $0x524] sm:$0xf]
  %v379 = vld [vmem:[%s1 + $0x528] sm:$0xf]
  %v380 = vld [vmem:[%s1 + $0x52c] sm:$0xf]
  %v381 = vld [vmem:[%s1 + $0x530] sm:$0xf]
  %v382 = vld [vmem:[%s1 + $0x534] sm:$0xf]
  %v383 = vld [vmem:[%s1 + $0x538] sm:$0xf]
  %v384 = vld [vmem:[%s1 + $0x53c] sm:$0xf]
  %v385 = vld [vmem:[%s1 + $0x540] sm:$0xf]
  %v386 = vld [vmem:[%s1 + $0x544] sm:$0xf]
  %v387 = vld [vmem:[%s1 + $0x548] sm:$0xf]
  %v388 = vld [vmem:[%s1 + $0x54c] sm:$0xf]
  %v389 = vld [vmem:[%s1 + $0x550] sm:$0xf]
  %v390 = vld [vmem:[%s1 + $0x554] sm:$0xf]
  %v391 = vld [vmem:[%s1 + $0x558] sm:$0xf]
  %v392 = vld [vmem:[%s1 + $0x55c] sm:$0xf]
  %v393 = vld [vmem:[%s1 + $0x560] sm:$0xf]
  %v394 = vld [vmem:[%s1 + $0x564] sm:$0xf]
  %v395 = vld [vmem:[%s1 + $0x568] sm:$0xf]
  %v396 = vld [vmem:[%s1 + $0x56c] sm:$0xf]
  %v397 = vld [vmem:[%s1 + $0x570] sm:$0xf]
  %v398 = vld [vmem:[%s1 + $0x574] sm:$0xf]
  %v399 = vld [vmem:[%s1 + $0x578] sm:$0xf]
  %v400 = vld [vmem:[%s1 + $0x57c] sm:$0xf]
  %v401 = vld [vmem:[%s1 + $0x580] sm:$0xf]
  %v402 = vld [vmem:[%s1 + $0x584] sm:$0xf]
  %v403 = vld [vmem:[%s1 + $0x588] sm:$0xf]
  %v404 = vld [vmem:[%s1 + $0x58c] sm:$0xf]
  %v405 = vld [vmem:[%s1 + $0x590] sm:$0xf]
  %v406 = vld [vmem:[%s1 + $0x594] sm:$0xf]
  %v407 = vld [vmem:[%s1 + $0x598] sm:$0xf]
  %v408 = vld [vmem:[%s1 + $0x59c] sm:$0xf]
  %v409 = vld [vmem:[%s1 + $0x5a0] sm:$0xf]
  %v410 = vld [vmem:[%s1 + $0x5a4] sm:$0xf]
  %v411 = vld [vmem:[%s1 + $0x5a8] sm:$0xf]
  %v412 = vld [vmem:[%s1 + $0x5ac] sm:$0xf]
  %v413 = vld [vmem:[%s1 + $0x5b0] sm:$0xf]
  %v414 = vld [vmem:[%s1 + $0x5b4] sm:$0xf]
  %v415 = vld [vmem:[%s1 + $0x5b8] sm:$0xf]
  %v416 = vld [vmem:[%s1 + $0x5bc] sm:$0xf]
  %v417 = vld [vmem:[%s1 + $0x5c0] sm:$0xf]
  %v418 = vld [vmem:[%s1 + $0x5c4] sm:$0xf]
  %v419 = vld [vmem:[%s1 + $0x5c8] sm:$0xf]
  %v420 = vld [vmem:[%s1 + $0x5cc] sm:$0xf]
  %v421 = vld [vmem:[%s1 + $0x5d0] sm:$0xf]
  %v422 = vld [vmem:[%s1 + $0x5d4] sm:$0xf]
  %v423 = vld [vmem:[%s1 + $0x5d8] sm:$0xf]
  %v424 = vld [vmem:[%s1 + $0x5dc] sm:$0xf]
  %v425 = vld [vmem:[%s1 + $0x5e0] sm:$0xf]
  %v426 = vld [vmem:[%s1 + $0x5e4] sm:$0xf]
  %v427 = vld [vmem:[%s1 + $0x5e8] sm:$0xf]
  %v428 = vld [vmem:[%s1 + $0x5ec] sm:$0xf]
  %v429 = vld [vmem:[%s1 + $0x5f0] sm:$0xf]
  %v430 = vld [vmem:[%s1 + $0x5f4] sm:$0xf]
  %v431 = vld [vmem:[%s1 + $0x5f8] sm:$0xf]
  %v432 = vld [vmem:[%s1 + $0x5fc] sm:$0xf]
  %v433 = vld [vmem:[%s1 + $0x600] sm:$0xf]
  %v434 = vld [vmem:[%s1 + $0x604] sm:$0xf]
  %v435 = vld [vmem:[%s1 + $0x608] sm:$0xf]
  %v436 = vld [vmem:[%s1 + $0x60c] sm:$0xf]
  %v437 = vld [vmem:[%s1 + $0x610] sm:$0xf]
  %v438 = vld [vmem:[%s1 + $0x614] sm:$0xf]
  %v439 = vld [vmem:[%s1 + $0x618] sm:$0xf]
  %v440 = vld [vmem:[%s1 + $0x61c] sm:$0xf]
  %v441 = vld [vmem:[%s1 + $0x620] sm:$0xf]
  %v442 = vld [vmem:[%s1 + $0x624] sm:$0xf]
  %v443 = vld [vmem:[%s1 + $0x628] sm:$0xf]
  %v444 = vld [vmem:[%s1 + $0x62c] sm:$0xf]
  %v445 = vld [vmem:[%s1 + $0x630] sm:$0xf]
  %v446 = vld [vmem:[%s1 + $0x634] sm:$0xf]
  %v447 = vld [vmem:[%s1 + $0x638] sm:$0xf]
  %v448 = vld [vmem:[%s1 + $0x63c] sm:$0xf]
  %v449 = vld [vmem:[%s1 + $0x640] sm:$0xf]
  %v450 = vld [vmem:[%s1 + $0x644] sm:$0xf]
  %v451 = vld [vmem:[%s1 + $0x648] sm:$0xf]
  %v452 = vld [vmem:[%s1 + $0x64c] sm:$0xf]
  %v453 = vld [vmem:[%s1 + $0x650] sm:$0xf]
  %v454 = vld [vmem:[%s1 + $0x654] sm:$0xf]
  %v455 = vld [vmem:[%s1 + $0x658] sm:$0xf]
  %v456 = vld [vmem:[%s1 + $0x65c] sm:$0xf]
  %v457 = vld [vmem:[%s1 + $0x660] sm:$0xf]
  %v458 = vld [vmem:[%s1 + $0x664] sm:$0xf]
  %v459 = vld [vmem:[%s1 + $0x668] sm:$0xf]
  %v460 = vld [vmem:[%s1 + $0x66c] sm:$0xf]
  %v461 = vld [vmem:[%s1 + $0x670] sm:$0xf]
  %v462 = vld [vmem:[%s1 + $0x674] sm:$0xf]
  %v463 = vld [vmem:[%s1 + $0x678] sm:$0xf]
  %v464 = vld [vmem:[%s1 + $0x67c] sm:$0xf]
  %v465 = vld [vmem:[%s1 + $0x680] sm:$0xf]
  %v466 = vld [vmem:[%s1 + $0x684] sm:$0xf]
  %v467 = vld [vmem:[%s1 + $0x688] sm:$0xf]
  %v468 = vld [vmem:[%s1 + $0x68c] sm:$0xf]
  %v469 = vld [vmem:[%s1 + $0x690] sm:$0xf]
  %v470 = vld [vmem:[%s1 + $0x694] sm:$0xf]
  %v471 = vld [vmem:[%s1 + $0x698] sm:$0xf]
  %v472 = vld [vmem:[%s1 + $0x69c] sm:$0xf]
  %v473 = vld [vmem:[%s1 + $0x6a0] sm:$0xf]
  %v474 = vld [vmem:[%s1 + $0x6a4] sm:$0xf]
  %v475 = vld [vmem:[%s1 + $0x6a8] sm:$0xf]
  %v476 = vld [vmem:[%s1 + $0x6ac] sm:$0xf]
  %v477 = vld [vmem:[%s1 + $0x6b0] sm:$0xf]
  %v478 = vld [vmem:[%s1 + $0x6b4] sm:$0xf]
  %v479 = vld [vmem:[%s1 + $0x6b8] sm:$0xf]
  %v480 = vld [vmem:[%s1 + $0x6bc] sm:$0xf]
  %v481 = vld [vmem:[%s1 + $0x6c0] sm:$0xf]
  %v482 = vld [vmem:[%s1 + $0x6c4] sm:$0xf]
  %v483 = vld [vmem:[%s1 + $0x6c8] sm:$0xf]
  %v484 = vld [vmem:[%s1 + $0x6cc] sm:$0xf]
  %v485 = vld [vmem:[%s1 + $0x6d0] sm:$0xf]
  %v486 = vld [vmem:[%s1 + $0x6d4] sm:$0xf]
  %v487 = vld [vmem:[%s1 + $0x6d8] sm:$0xf]
  %v488 = vld [vmem:[%s1 + $0x6dc] sm:$0xf]
  %v489 = vld [vmem:[%s1 + $0x6e0] sm:$0xf]
  %v490 = vld [vmem:[%s1 + $0x6e4] sm:$0xf]
  %v491 = vld [vmem:[%s1 + $0x6e8] sm:$0xf]
  %v492 = vld [vmem:[%s1 + $0x6ec] sm:$0xf]
  %v493 = vld [vmem:[%s1 + $0x6f0] sm:$0xf]
  %v494 = vld [vmem:[%s1 + $0x6f4] sm:$0xf]
  %v495 = vld [vmem:[%s1 + $0x6f8] sm:$0xf]
  %v496 = vld [vmem:[%s1 + $0x6fc] sm:$0xf]
  %v497 = vld [vmem:[%s1 + $0x700] sm:$0xf]
  %v498 = vld [vmem:[%s1 + $0x704] sm:$0xf]
  %v499 = vld [vmem:[%s1 + $0x708] sm:$0xf]
  %v500 = vld [vmem:[%s1 + $0x70c] sm:$0xf]
  %v501 = vld [vmem:[%s1 + $0x710] sm:$0xf]
  %v502 = vld [vmem:[%s1 + $0x714] sm:$0xf]
  %v503 = vld [vmem:[%s1 + $0x718] sm:$0xf]
  %v504 = vld [vmem:[%s1 + $0x71c] sm:$0xf]
  %v505 = vld [vmem:[%s1 + $0x720] sm:$0xf]
  %v506 = vld [vmem:[%s1 + $0x724] sm:$0xf]
  %v507 = vld [vmem:[%s1 + $0x728] sm:$0xf]
  %v508 = vld [vmem:[%s1 + $0x72c] sm:$0xf]
  %v509 = vld [vmem:[%s1 + $0x730] sm:$0xf]
  %v510 = vld [vmem:[%s1 + $0x734] sm:$0xf]
  %v511 = vld [vmem:[%s1 + $0x738] sm:$0xf]
  %v512 = vld [vmem:[%s1 + $0x73c] sm:$0xf]
  %v513 = vld [vmem:[%s1 + $0x740] sm:$0xf]
  %v514 = vld [vmem:[%s1 + $0x744] sm:$0xf]
  %v515 = vld [vmem:[%s1 + $0x748] sm:$0xf]
  %v516 = vld [vmem:[%s1 + $0x74c] sm:$0xf]
  %v517 = vld [vmem:[%s1 + $0x750] sm:$0xf]
  %v518 = vld [vmem:[%s1 + $0x754] sm:$0xf]
  %v519 = vld [vmem:[%s1 + $0x758] sm:$0xf]
  %v520 = vld [vmem:[%s1 + $0x75c] sm:$0xf]
  %v521 = vld [vmem:[%s1 + $0x760] sm:$0xf]
  %v522 = vld [vmem:[%s1 + $0x764] sm:$0xf]
  %v523 = vld [vmem:[%s1 + $0x768] sm:$0xf]
  %v524 = vld [vmem:[%s1 + $0x76c] sm:$0xf]
  %v525 = vld [vmem:[%s1 + $0x770] sm:$0xf]
  %v526 = vld [vmem:[%s1 + $0x774] sm:$0xf]
  %v527 = vld [vmem:[%s1 + $0x778] sm:$0xf]
  %v528 = vld [vmem:[%s1 + $0x77c] sm:$0xf]
  %v529 = vld [vmem:[%s1 + $0x780] sm:$0xf]
  %v530 = vld [vmem:[%s1 + $0x784] sm:$0xf]
  %v531 = vld [vmem:[%s1 + $0x788] sm:$0xf]
  %v532 = vld [vmem:[%s1 + $0x78c] sm:$0xf]
  %v533 = vld [vmem:[%s1 + $0x790] sm:$0xf]
  %v534 = vld [vmem:[%s1 + $0x794] sm:$0xf]
  %v535 = vld [vmem:[%s1 + $0x798] sm:$0xf]
  %v536 = vld [vmem:[%s1 + $0x79c] sm:$0xf]
  %v537 = vld [vmem:[%s1 + $0x7a0] sm:$0xf]
  %v538 = vld [vmem:[%s1 + $0x7a4] sm:$0xf]
  %v539 = vld [vmem:[%s1 + $0x7a8] sm:$0xf]
  %v540 = vld [vmem:[%s1 + $0x7ac] sm:$0xf]
  %v541 = vld [vmem:[%s1 + $0x7b0] sm:$0xf]
  %v542 = vld [vmem:[%s1 + $0x7b4] sm:$0xf]
  %v543 = vld [vmem:[%s1 + $0x7b8] sm:$0xf]
  %v544 = vld [vmem:[%s1 + $0x7bc] sm:$0xf]
  %v545 = vld [vmem:[%s1 + $0x7c0] sm:$0xf]
  %v546 = vld [vmem:[%s1 + $0x7c4] sm:$0xf]
  %v547 = vld [vmem:[%s1 + $0x7c8] sm:$0xf]
  %v548 = vld [vmem:[%s1 + $0x7cc] sm:$0xf]
  %v549 = vld [vmem:[%s1 + $0x7d0] sm:$0xf]
  %v550 = vld [vmem:[%s1 + $0x7d4] sm:$0xf]
  %v551 = vld [vmem:[%s1 + $0x7d8] sm:$0xf]
  %v552 = vld [vmem:[%s1 + $0x7dc] sm:$0xf]
  %v553 = vld [vmem:[%s1 + $0x7e0] sm:$0xf]
  %v554 = vld [vmem:[%s1 + $0x7e4] sm:$0xf]
  %v555 = vld [vmem:[%s1 + $0x7e8] sm:$0xf]
  %v556 = vld [vmem:[%s1 + $0x7ec] sm:$0xf]
  %v557 = vld [vmem:[%s1 + $0x7f0] sm:$0xf]
  %v558 = vld [vmem:[%s1 + $0x7f4] sm:$0xf]
  %v559 = vld [vmem:[%s1 + $0x7f8] sm:$0xf]
  %v560 = vld [vmem:[%s1 + $0x7fc] sm:$0xf]
  %v593 = vunpack.c.l.b16 %v17
  %v594 = vunpack.c.h.b16 %v17
  %v595 = vunpack.c.l.b16 %v18
  %v596 = vunpack.c.h.b16 %v18
  %v597 = vunpack.c.l.b16 %v19
  %v598 = vunpack.c.h.b16 %v19
  %v599 = vunpack.c.l.b16 %v20
  %v600 = vunpack.c.h.b16 %v20
  %v601 = vunpack.c.l.b16 %v21
  %v602 = vunpack.c.h.b16 %v21
  %v603 = vunpack.c.l.b16 %v22
  %v604 = vunpack.c.h.b16 %v22
  %v605 = vunpack.c.l.b16 %v23
  %v606 = vunpack.c.h.b16 %v23
  %v607 = vunpack.c.l.b16 %v24
  %v608 = vunpack.c.h.b16 %v24
  %v609 = vunpack.c.l.b16 %v25
  %v610 = vunpack.c.h.b16 %v25
  %v611 = vunpack.c.l.b16 %v26
  %v612 = vunpack.c.h.b16 %v26
  %v613 = vunpack.c.l.b16 %v27
  %v614 = vunpack.c.h.b16 %v27
  %v615 = vunpack.c.l.b16 %v28
  %v616 = vunpack.c.h.b16 %v28
  %v617 = vunpack.c.l.b16 %v29
  %v618 = vunpack.c.h.b16 %v29
  %v619 = vunpack.c.l.b16 %v30
  %v620 = vunpack.c.h.b16 %v30
  %v621 = vunpack.c.l.b16 %v31
  %v622 = vunpack.c.h.b16 %v31
  %v623 = vunpack.c.l.b16 %v32
  %v624 = vunpack.c.h.b16 %v32
  %v625 = vunpack.c.l.b16 %v33
  %v626 = vunpack.c.h.b16 %v33
  %v627 = vunpack.c.l.b16 %v34
  %v628 = vunpack.c.h.b16 %v34
  %v629 = vunpack.c.l.b16 %v35
  %v630 = vunpack.c.h.b16 %v35
  %v631 = vunpack.c.l.b16 %v36
  %v632 = vunpack.c.h.b16 %v36
  %v633 = vunpack.c.l.b16 %v37
  %v634 = vunpack.c.h.b16 %v37
  %v635 = vunpack.c.l.b16 %v38
  %v636 = vunpack.c.h.b16 %v38
  %v637 = vunpack.c.l.b16 %v39
  %v638 = vunpack.c.h.b16 %v39
  %v639 = vunpack.c.l.b16 %v40
  %v640 = vunpack.c.h.b16 %v40
  %v641 = vunpack.c.l.b16 %v41
  %v642 = vunpack.c.h.b16 %v41
  %v643 = vunpack.c.l.b16 %v42
  %v644 = vunpack.c.h.b16 %v42
  %v645 = vunpack.c.l.b16 %v43
  %v646 = vunpack.c.h.b16 %v43
  %v647 = vunpack.c.l.b16 %v44
  %v648 = vunpack.c.h.b16 %v44
  %v649 = vunpack.c.l.b16 %v45
  %v650 = vunpack.c.h.b16 %v45
  %v651 = vunpack.c.l.b16 %v46
  %v652 = vunpack.c.h.b16 %v46
  %v653 = vunpack.c.l.b16 %v47
  %v654 = vunpack.c.h.b16 %v47
  %v655 = vunpack.c.l.b16 %v48
  %v656 = vunpack.c.h.b16 %v48
  %v657 = vpack.c.b16 %v625, %v593
  %v658 = vpack.c.b16 %v626, %v594
  %v659 = vpack.c.b16 %v627, %v595
  %v660 = vpack.c.b16 %v628, %v596
  %v661 = vpack.c.b16 %v629, %v597
  %v662 = vpack.c.b16 %v630, %v598
  %v663 = vpack.c.b16 %v631, %v599
  %v664 = vpack.c.b16 %v632, %v600
  %v665 = vpack.c.b16 %v633, %v601
  %v666 = vpack.c.b16 %v634, %v602
  %v667 = vpack.c.b16 %v635, %v603
  %v668 = vpack.c.b16 %v636, %v604
  %v669 = vpack.c.b16 %v637, %v605
  %v670 = vpack.c.b16 %v638, %v606
  %v671 = vpack.c.b16 %v639, %v607
  %v672 = vpack.c.b16 %v640, %v608
  %v673 = vpack.c.b16 %v641, %v609
  %v674 = vpack.c.b16 %v642, %v610
  %v675 = vpack.c.b16 %v643, %v611
  %v676 = vpack.c.b16 %v644, %v612
  %v677 = vpack.c.b16 %v645, %v613
  %v678 = vpack.c.b16 %v646, %v614
  %v679 = vpack.c.b16 %v647, %v615
  %v680 = vpack.c.b16 %v648, %v616
  %v681 = vpack.c.b16 %v649, %v617
  %v682 = vpack.c.b16 %v650, %v618
  %v683 = vpack.c.b16 %v651, %v619
  %v684 = vpack.c.b16 %v652, %v620
  %v685 = vpack.c.b16 %v653, %v621
  %v686 = vpack.c.b16 %v654, %v622
  %v687 = vpack.c.b16 %v655, %v623
  %v688 = vpack.c.b16 %v656, %v624
  %v1233 = vunpack.c.l.b16 %v49
  %v1234 = vunpack.c.l.b16 %v50
  %v1235 = vunpack.c.l.b16 %v51
  %v1236 = vunpack.c.l.b16 %v52
  %v1237 = vunpack.c.l.b16 %v53
  %v1238 = vunpack.c.l.b16 %v54
  %v1239 = vunpack.c.l.b16 %v55
  %v1240 = vunpack.c.l.b16 %v56
  %v1241 = vunpack.c.l.b16 %v57
  %v1242 = vunpack.c.l.b16 %v58
  %v1243 = vunpack.c.l.b16 %v59
  %v1244 = vunpack.c.l.b16 %v60
  %v1245 = vunpack.c.l.b16 %v61
  %v1246 = vunpack.c.l.b16 %v62
  %v1247 = vunpack.c.l.b16 %v63
  %v1248 = vunpack.c.l.b16 %v64
  %v1249 = vunpack.c.l.b16 %v65
  %v1250 = vunpack.c.l.b16 %v66
  %v1251 = vunpack.c.l.b16 %v67
  %v1252 = vunpack.c.l.b16 %v68
  %v1253 = vunpack.c.l.b16 %v69
  %v1254 = vunpack.c.l.b16 %v70
  %v1255 = vunpack.c.l.b16 %v71
  %v1256 = vunpack.c.l.b16 %v72
  %v1257 = vunpack.c.l.b16 %v73
  %v1258 = vunpack.c.l.b16 %v74
  %v1259 = vunpack.c.l.b16 %v75
  %v1260 = vunpack.c.l.b16 %v76
  %v1261 = vunpack.c.l.b16 %v77
  %v1262 = vunpack.c.l.b16 %v78
  %v1263 = vunpack.c.l.b16 %v79
  %v1264 = vunpack.c.l.b16 %v80
  %v1265 = vunpack.c.l.b16 %v81
  %v1266 = vunpack.c.l.b16 %v82
  %v1267 = vunpack.c.l.b16 %v83
  %v1268 = vunpack.c.l.b16 %v84
  %v1269 = vunpack.c.l.b16 %v85
  %v1270 = vunpack.c.l.b16 %v86
  %v1271 = vunpack.c.l.b16 %v87
  %v1272 = vunpack.c.l.b16 %v88
  %v1273 = vunpack.c.l.b16 %v89
  %v1274 = vunpack.c.l.b16 %v90
  %v1275 = vunpack.c.l.b16 %v91
  %v1276 = vunpack.c.l.b16 %v92
  %v1277 = vunpack.c.l.b16 %v93
  %v1278 = vunpack.c.l.b16 %v94
  %v1279 = vunpack.c.l.b16 %v95
  %v1280 = vunpack.c.l.b16 %v96
  %v1281 = vunpack.c.l.b16 %v97
  %v1282 = vunpack.c.l.b16 %v98
  %v1283 = vunpack.c.l.b16 %v99
  %v1284 = vunpack.c.l.b16 %v100
  %v1285 = vunpack.c.l.b16 %v101
  %v1286 = vunpack.c.l.b16 %v102
  %v1287 = vunpack.c.l.b16 %v103
  %v1288 = vunpack.c.l.b16 %v104
  %v1289 = vunpack.c.l.b16 %v105
  %v1290 = vunpack.c.l.b16 %v106
  %v1291 = vunpack.c.l.b16 %v107
  %v1292 = vunpack.c.l.b16 %v108
  %v1293 = vunpack.c.l.b16 %v109
  %v1294 = vunpack.c.l.b16 %v110
  %v1295 = vunpack.c.l.b16 %v111
  %v1296 = vunpack.c.l.b16 %v112
  %v1297 = vunpack.c.l.b16 %v113
  %v1298 = vunpack.c.l.b16 %v114
  %v1299 = vunpack.c.l.b16 %v115
  %v1300 = vunpack.c.l.b16 %v116
  %v1301 = vunpack.c.l.b16 %v117
  %v1302 = vunpack.c.l.b16 %v118
  %v1303 = vunpack.c.l.b16 %v119
  %v1304 = vunpack.c.l.b16 %v120
  %v1305 = vunpack.c.l.b16 %v121
  %v1306 = vunpack.c.l.b16 %v122
  %v1307 = vunpack.c.l.b16 %v123
  %v1308 = vunpack.c.l.b16 %v124
  %v1309 = vunpack.c.l.b16 %v125
  %v1310 = vunpack.c.l.b16 %v126
  %v1311 = vunpack.c.l.b16 %v127
  %v1312 = vunpack.c.l.b16 %v128
  %v1313 = vunpack.c.l.b16 %v129
  %v1314 = vunpack.c.l.b16 %v130
  %v1315 = vunpack.c.l.b16 %v131
  %v1316 = vunpack.c.l.b16 %v132
  %v1317 = vunpack.c.l.b16 %v133
  %v1318 = vunpack.c.l.b16 %v134
  %v1319 = vunpack.c.l.b16 %v135
  %v1320 = vunpack.c.l.b16 %v136
  %v1321 = vunpack.c.l.b16 %v137
  %v1322 = vunpack.c.l.b16 %v138
  %v1323 = vunpack.c.l.b16 %v139
  %v1324 = vunpack.c.l.b16 %v140
  %v1325 = vunpack.c.l.b16 %v141
  %v1326 = vunpack.c.l.b16 %v142
  %v1327 = vunpack.c.l.b16 %v143
  %v1328 = vunpack.c.l.b16 %v144
  %v1329 = vunpack.c.l.b16 %v145
  %v1330 = vunpack.c.l.b16 %v146
  %v1331 = vunpack.c.l.b16 %v147
  %v1332 = vunpack.c.l.b16 %v148
  %v1333 = vunpack.c.l.b16 %v149
  %v1334 = vunpack.c.l.b16 %v150
  %v1335 = vunpack.c.l.b16 %v151
  %v1336 = vunpack.c.l.b16 %v152
  %v1337 = vunpack.c.l.b16 %v153
  %v1338 = vunpack.c.l.b16 %v154
  %v1339 = vunpack.c.l.b16 %v155
  %v1340 = vunpack.c.l.b16 %v156
  %v1341 = vunpack.c.l.b16 %v157
  %v1342 = vunpack.c.l.b16 %v158
  %v1343 = vunpack.c.l.b16 %v159
  %v1344 = vunpack.c.l.b16 %v160
  %v1345 = vunpack.c.l.b16 %v161
  %v1346 = vunpack.c.l.b16 %v162
  %v1347 = vunpack.c.l.b16 %v163
  %v1348 = vunpack.c.l.b16 %v164
  %v1349 = vunpack.c.l.b16 %v165
  %v1350 = vunpack.c.l.b16 %v166
  %v1351 = vunpack.c.l.b16 %v167
  %v1352 = vunpack.c.l.b16 %v168
  %v1353 = vunpack.c.l.b16 %v169
  %v1354 = vunpack.c.l.b16 %v170
  %v1355 = vunpack.c.l.b16 %v171
  %v1356 = vunpack.c.l.b16 %v172
  %v1357 = vunpack.c.l.b16 %v173
  %v1358 = vunpack.c.l.b16 %v174
  %v1359 = vunpack.c.l.b16 %v175
  %v1360 = vunpack.c.l.b16 %v176
  %v1361 = vunpack.c.l.b16 %v177
  %v1362 = vunpack.c.l.b16 %v178
  %v1363 = vunpack.c.l.b16 %v179
  %v1364 = vunpack.c.l.b16 %v180
  %v1365 = vunpack.c.l.b16 %v181
  %v1366 = vunpack.c.l.b16 %v182
  %v1367 = vunpack.c.l.b16 %v183
  %v1368 = vunpack.c.l.b16 %v184
  %v1369 = vunpack.c.l.b16 %v185
  %v1370 = vunpack.c.l.b16 %v186
  %v1371 = vunpack.c.l.b16 %v187
  %v1372 = vunpack.c.l.b16 %v188
  %v1373 = vunpack.c.l.b16 %v189
  %v1374 = vunpack.c.l.b16 %v190
  %v1375 = vunpack.c.l.b16 %v191
  %v1376 = vunpack.c.l.b16 %v192
  %v1377 = vunpack.c.l.b16 %v193
  %v1378 = vunpack.c.l.b16 %v194
  %v1379 = vunpack.c.l.b16 %v195
  %v1380 = vunpack.c.l.b16 %v196
  %v1381 = vunpack.c.l.b16 %v197
  %v1382 = vunpack.c.l.b16 %v198
  %v1383 = vunpack.c.l.b16 %v199
  %v1384 = vunpack.c.l.b16 %v200
  %v1385 = vunpack.c.l.b16 %v201
  %v1386 = vunpack.c.l.b16 %v202
  %v1387 = vunpack.c.l.b16 %v203
  %v1388 = vunpack.c.l.b16 %v204
  %v1389 = vunpack.c.l.b16 %v205
  %v1390 = vunpack.c.l.b16 %v206
  %v1391 = vunpack.c.l.b16 %v207
  %v1392 = vunpack.c.l.b16 %v208
  %v1393 = vunpack.c.l.b16 %v209
  %v1394 = vunpack.c.l.b16 %v210
  %v1395 = vunpack.c.l.b16 %v211
  %v1396 = vunpack.c.l.b16 %v212
  %v1397 = vunpack.c.l.b16 %v213
  %v1398 = vunpack.c.l.b16 %v214
  %v1399 = vunpack.c.l.b16 %v215
  %v1400 = vunpack.c.l.b16 %v216
  %v1401 = vunpack.c.l.b16 %v217
  %v1402 = vunpack.c.l.b16 %v218
  %v1403 = vunpack.c.l.b16 %v219
  %v1404 = vunpack.c.l.b16 %v220
  %v1405 = vunpack.c.l.b16 %v221
  %v1406 = vunpack.c.l.b16 %v222
  %v1407 = vunpack.c.l.b16 %v223
  %v1408 = vunpack.c.l.b16 %v224
  %v1409 = vunpack.c.l.b16 %v225
  %v1410 = vunpack.c.l.b16 %v226
  %v1411 = vunpack.c.l.b16 %v227
  %v1412 = vunpack.c.l.b16 %v228
  %v1413 = vunpack.c.l.b16 %v229
  %v1414 = vunpack.c.l.b16 %v230
  %v1415 = vunpack.c.l.b16 %v231
  %v1416 = vunpack.c.l.b16 %v232
  %v1417 = vunpack.c.l.b16 %v233
  %v1418 = vunpack.c.l.b16 %v234
  %v1419 = vunpack.c.l.b16 %v235
  %v1420 = vunpack.c.l.b16 %v236
  %v1421 = vunpack.c.l.b16 %v237
  %v1422 = vunpack.c.l.b16 %v238
  %v1423 = vunpack.c.l.b16 %v239
  %v1424 = vunpack.c.l.b16 %v240
  %v1425 = vunpack.c.l.b16 %v241
  %v1426 = vunpack.c.l.b16 %v242
  %v1427 = vunpack.c.l.b16 %v243
  %v1428 = vunpack.c.l.b16 %v244
  %v1429 = vunpack.c.l.b16 %v245
  %v1430 = vunpack.c.l.b16 %v246
  %v1431 = vunpack.c.l.b16 %v247
  %v1432 = vunpack.c.l.b16 %v248
  %v1433 = vunpack.c.l.b16 %v249
  %v1434 = vunpack.c.l.b16 %v250
  %v1435 = vunpack.c.l.b16 %v251
  %v1436 = vunpack.c.l.b16 %v252
  %v1437 = vunpack.c.l.b16 %v253
  %v1438 = vunpack.c.l.b16 %v254
  %v1439 = vunpack.c.l.b16 %v255
  %v1440 = vunpack.c.l.b16 %v256
  %v1441 = vunpack.c.l.b16 %v257
  %v1442 = vunpack.c.l.b16 %v258
  %v1443 = vunpack.c.l.b16 %v259
  %v1444 = vunpack.c.l.b16 %v260
  %v1445 = vunpack.c.l.b16 %v261
  %v1446 = vunpack.c.l.b16 %v262
  %v1447 = vunpack.c.l.b16 %v263
  %v1448 = vunpack.c.l.b16 %v264
  %v1449 = vunpack.c.l.b16 %v265
  %v1450 = vunpack.c.l.b16 %v266
  %v1451 = vunpack.c.l.b16 %v267
  %v1452 = vunpack.c.l.b16 %v268
  %v1453 = vunpack.c.l.b16 %v269
  %v1454 = vunpack.c.l.b16 %v270
  %v1455 = vunpack.c.l.b16 %v271
  %v1456 = vunpack.c.l.b16 %v272
  %v1457 = vunpack.c.l.b16 %v273
  %v1458 = vunpack.c.l.b16 %v274
  %v1459 = vunpack.c.l.b16 %v275
  %v1460 = vunpack.c.l.b16 %v276
  %v1461 = vunpack.c.l.b16 %v277
  %v1462 = vunpack.c.l.b16 %v278
  %v1463 = vunpack.c.l.b16 %v279
  %v1464 = vunpack.c.l.b16 %v280
  %v1465 = vunpack.c.l.b16 %v281
  %v1466 = vunpack.c.l.b16 %v282
  %v1467 = vunpack.c.l.b16 %v283
  %v1468 = vunpack.c.l.b16 %v284
  %v1469 = vunpack.c.l.b16 %v285
  %v1470 = vunpack.c.l.b16 %v286
  %v1471 = vunpack.c.l.b16 %v287
  %v1472 = vunpack.c.l.b16 %v288
  %v1473 = vunpack.c.l.b16 %v289
  %v1474 = vunpack.c.l.b16 %v290
  %v1475 = vunpack.c.l.b16 %v291
  %v1476 = vunpack.c.l.b16 %v292
  %v1477 = vunpack.c.l.b16 %v293
  %v1478 = vunpack.c.l.b16 %v294
  %v1479 = vunpack.c.l.b16 %v295
  %v1480 = vunpack.c.l.b16 %v296
  %v1481 = vunpack.c.l.b16 %v297
  %v1482 = vunpack.c.l.b16 %v298
  %v1483 = vunpack.c.l.b16 %v299
  %v1484 = vunpack.c.l.b16 %v300
  %v1485 = vunpack.c.l.b16 %v301
  %v1486 = vunpack.c.l.b16 %v302
  %v1487 = vunpack.c.l.b16 %v303
  %v1488 = vunpack.c.l.b16 %v304
  %v1489 = vunpack.c.l.b16 %v305
  %v1490 = vunpack.c.l.b16 %v306
  %v1491 = vunpack.c.l.b16 %v307
  %v1492 = vunpack.c.l.b16 %v308
  %v1493 = vunpack.c.l.b16 %v309
  %v1494 = vunpack.c.l.b16 %v310
  %v1495 = vunpack.c.l.b16 %v311
  %v1496 = vunpack.c.l.b16 %v312
  %v1497 = vunpack.c.l.b16 %v313
  %v1498 = vunpack.c.l.b16 %v314
  %v1499 = vunpack.c.l.b16 %v315
  %v1500 = vunpack.c.l.b16 %v316
  %v1501 = vunpack.c.l.b16 %v317
  %v1502 = vunpack.c.l.b16 %v318
  %v1503 = vunpack.c.l.b16 %v319
  %v1504 = vunpack.c.l.b16 %v320
  %v1505 = vunpack.c.l.b16 %v321
  %v1506 = vunpack.c.l.b16 %v322
  %v1507 = vunpack.c.l.b16 %v323
  %v1508 = vunpack.c.l.b16 %v324
  %v1509 = vunpack.c.l.b16 %v325
  %v1510 = vunpack.c.l.b16 %v326
  %v1511 = vunpack.c.l.b16 %v327
  %v1512 = vunpack.c.l.b16 %v328
  %v1513 = vunpack.c.l.b16 %v329
  %v1514 = vunpack.c.l.b16 %v330
  %v1515 = vunpack.c.l.b16 %v331
  %v1516 = vunpack.c.l.b16 %v332
  %v1517 = vunpack.c.l.b16 %v333
  %v1518 = vunpack.c.l.b16 %v334
  %v1519 = vunpack.c.l.b16 %v335
  %v1520 = vunpack.c.l.b16 %v336
  %v1521 = vunpack.c.l.b16 %v337
  %v1522 = vunpack.c.l.b16 %v338
  %v1523 = vunpack.c.l.b16 %v339
  %v1524 = vunpack.c.l.b16 %v340
  %v1525 = vunpack.c.l.b16 %v341
  %v1526 = vunpack.c.l.b16 %v342
  %v1527 = vunpack.c.l.b16 %v343
  %v1528 = vunpack.c.l.b16 %v344
  %v1529 = vunpack.c.l.b16 %v345
  %v1530 = vunpack.c.l.b16 %v346
  %v1531 = vunpack.c.l.b16 %v347
  %v1532 = vunpack.c.l.b16 %v348
  %v1533 = vunpack.c.l.b16 %v349
  %v1534 = vunpack.c.l.b16 %v350
  %v1535 = vunpack.c.l.b16 %v351
  %v1536 = vunpack.c.l.b16 %v352
  %v1537 = vunpack.c.l.b16 %v353
  %v1538 = vunpack.c.l.b16 %v354
  %v1539 = vunpack.c.l.b16 %v355
  %v1540 = vunpack.c.l.b16 %v356
  %v1541 = vunpack.c.l.b16 %v357
  %v1542 = vunpack.c.l.b16 %v358
  %v1543 = vunpack.c.l.b16 %v359
  %v1544 = vunpack.c.l.b16 %v360
  %v1545 = vunpack.c.l.b16 %v361
  %v1546 = vunpack.c.l.b16 %v362
  %v1547 = vunpack.c.l.b16 %v363
  %v1548 = vunpack.c.l.b16 %v364
  %v1549 = vunpack.c.l.b16 %v365
  %v1550 = vunpack.c.l.b16 %v366
  %v1551 = vunpack.c.l.b16 %v367
  %v1552 = vunpack.c.l.b16 %v368
  %v1553 = vunpack.c.l.b16 %v369
  %v1554 = vunpack.c.l.b16 %v370
  %v1555 = vunpack.c.l.b16 %v371
  %v1556 = vunpack.c.l.b16 %v372
  %v1557 = vunpack.c.l.b16 %v373
  %v1558 = vunpack.c.l.b16 %v374
  %v1559 = vunpack.c.l.b16 %v375
  %v1560 = vunpack.c.l.b16 %v376
  %v1561 = vunpack.c.l.b16 %v377
  %v1562 = vunpack.c.l.b16 %v378
  %v1563 = vunpack.c.l.b16 %v379
  %v1564 = vunpack.c.l.b16 %v380
  %v1565 = vunpack.c.l.b16 %v381
  %v1566 = vunpack.c.l.b16 %v382
  %v1567 = vunpack.c.l.b16 %v383
  %v1568 = vunpack.c.l.b16 %v384
  %v1569 = vunpack.c.l.b16 %v385
  %v1570 = vunpack.c.l.b16 %v386
  %v1571 = vunpack.c.l.b16 %v387
  %v1572 = vunpack.c.l.b16 %v388
  %v1573 = vunpack.c.l.b16 %v389
  %v1574 = vunpack.c.l.b16 %v390
  %v1575 = vunpack.c.l.b16 %v391
  %v1576 = vunpack.c.l.b16 %v392
  %v1577 = vunpack.c.l.b16 %v393
  %v1578 = vunpack.c.l.b16 %v394
  %v1579 = vunpack.c.l.b16 %v395
  %v1580 = vunpack.c.l.b16 %v396
  %v1581 = vunpack.c.l.b16 %v397
  %v1582 = vunpack.c.l.b16 %v398
  %v1583 = vunpack.c.l.b16 %v399
  %v1584 = vunpack.c.l.b16 %v400
  %v1585 = vunpack.c.l.b16 %v401
  %v1586 = vunpack.c.l.b16 %v402
  %v1587 = vunpack.c.l.b16 %v403
  %v1588 = vunpack.c.l.b16 %v404
  %v1589 = vunpack.c.l.b16 %v405
  %v1590 = vunpack.c.l.b16 %v406
  %v1591 = vunpack.c.l.b16 %v407
  %v1592 = vunpack.c.l.b16 %v408
  %v1593 = vunpack.c.l.b16 %v409
  %v1594 = vunpack.c.l.b16 %v410
  %v1595 = vunpack.c.l.b16 %v411
  %v1596 = vunpack.c.l.b16 %v412
  %v1597 = vunpack.c.l.b16 %v413
  %v1598 = vunpack.c.l.b16 %v414
  %v1599 = vunpack.c.l.b16 %v415
  %v1600 = vunpack.c.l.b16 %v416
  %v1601 = vunpack.c.l.b16 %v417
  %v1602 = vunpack.c.l.b16 %v418
  %v1603 = vunpack.c.l.b16 %v419
  %v1604 = vunpack.c.l.b16 %v420
  %v1605 = vunpack.c.l.b16 %v421
  %v1606 = vunpack.c.l.b16 %v422
  %v1607 = vunpack.c.l.b16 %v423
  %v1608 = vunpack.c.l.b16 %v424
  %v1609 = vunpack.c.l.b16 %v425
  %v1610 = vunpack.c.l.b16 %v426
  %v1611 = vunpack.c.l.b16 %v427
  %v1612 = vunpack.c.l.b16 %v428
  %v1613 = vunpack.c.l.b16 %v429
  %v1614 = vunpack.c.l.b16 %v430
  %v1615 = vunpack.c.l.b16 %v431
  %v1616 = vunpack.c.l.b16 %v432
  %v1617 = vunpack.c.l.b16 %v433
  %v1618 = vunpack.c.l.b16 %v434
  %v1619 = vunpack.c.l.b16 %v435
  %v1620 = vunpack.c.l.b16 %v436
  %v1621 = vunpack.c.l.b16 %v437
  %v1622 = vunpack.c.l.b16 %v438
  %v1623 = vunpack.c.l.b16 %v439
  %v1624 = vunpack.c.l.b16 %v440
  %v1625 = vunpack.c.l.b16 %v441
  %v1626 = vunpack.c.l.b16 %v442
  %v1627 = vunpack.c.l.b16 %v443
  %v1628 = vunpack.c.l.b16 %v444
  %v1629 = vunpack.c.l.b16 %v445
  %v1630 = vunpack.c.l.b16 %v446
  %v1631 = vunpack.c.l.b16 %v447
  %v1632 = vunpack.c.l.b16 %v448
  %v1633 = vunpack.c.l.b16 %v449
  %v1634 = vunpack.c.l.b16 %v450
  %v1635 = vunpack.c.l.b16 %v451
  %v1636 = vunpack.c.l.b16 %v452
  %v1637 = vunpack.c.l.b16 %v453
  %v1638 = vunpack.c.l.b16 %v454
  %v1639 = vunpack.c.l.b16 %v455
  %v1640 = vunpack.c.l.b16 %v456
  %v1641 = vunpack.c.l.b16 %v457
  %v1642 = vunpack.c.l.b16 %v458
  %v1643 = vunpack.c.l.b16 %v459
  %v1644 = vunpack.c.l.b16 %v460
  %v1645 = vunpack.c.l.b16 %v461
  %v1646 = vunpack.c.l.b16 %v462
  %v1647 = vunpack.c.l.b16 %v463
  %v1648 = vunpack.c.l.b16 %v464
  %v1649 = vunpack.c.l.b16 %v465
  %v1650 = vunpack.c.l.b16 %v466
  %v1651 = vunpack.c.l.b16 %v467
  %v1652 = vunpack.c.l.b16 %v468
  %v1653 = vunpack.c.l.b16 %v469
  %v1654 = vunpack.c.l.b16 %v470
  %v1655 = vunpack.c.l.b16 %v471
  %v1656 = vunpack.c.l.b16 %v472
  %v1657 = vunpack.c.l.b16 %v473
  %v1658 = vunpack.c.l.b16 %v474
  %v1659 = vunpack.c.l.b16 %v475
  %v1660 = vunpack.c.l.b16 %v476
  %v1661 = vunpack.c.l.b16 %v477
  %v1662 = vunpack.c.l.b16 %v478
  %v1663 = vunpack.c.l.b16 %v479
  %v1664 = vunpack.c.l.b16 %v480
  %v1665 = vunpack.c.l.b16 %v481
  %v1666 = vunpack.c.l.b16 %v482
  %v1667 = vunpack.c.l.b16 %v483
  %v1668 = vunpack.c.l.b16 %v484
  %v1669 = vunpack.c.l.b16 %v485
  %v1670 = vunpack.c.l.b16 %v486
  %v1671 = vunpack.c.l.b16 %v487
  %v1672 = vunpack.c.l.b16 %v488
  %v1673 = vunpack.c.l.b16 %v489
  %v1674 = vunpack.c.l.b16 %v490
  %v1675 = vunpack.c.l.b16 %v491
  %v1676 = vunpack.c.l.b16 %v492
  %v1677 = vunpack.c.l.b16 %v493
  %v1678 = vunpack.c.l.b16 %v494
  %v1679 = vunpack.c.l.b16 %v495
  %v1680 = vunpack.c.l.b16 %v496
  %v1681 = vunpack.c.l.b16 %v497
  %v1682 = vunpack.c.l.b16 %v498
  %v1683 = vunpack.c.l.b16 %v499
  %v1684 = vunpack.c.l.b16 %v500
  %v1685 = vunpack.c.l.b16 %v501
  %v1686 = vunpack.c.l.b16 %v502
  %v1687 = vunpack.c.l.b16 %v503
  %v1688 = vunpack.c.l.b16 %v504
  %v1689 = vunpack.c.l.b16 %v505
  %v1690 = vunpack.c.l.b16 %v506
  %v1691 = vunpack.c.l.b16 %v507
  %v1692 = vunpack.c.l.b16 %v508
  %v1693 = vunpack.c.l.b16 %v509
  %v1694 = vunpack.c.l.b16 %v510
  %v1695 = vunpack.c.l.b16 %v511
  %v1696 = vunpack.c.l.b16 %v512
  %v1697 = vunpack.c.l.b16 %v513
  %v1698 = vunpack.c.l.b16 %v514
  %v1699 = vunpack.c.l.b16 %v515
  %v1700 = vunpack.c.l.b16 %v516
  %v1701 = vunpack.c.l.b16 %v517
  %v1702 = vunpack.c.l.b16 %v518
  %v1703 = vunpack.c.l.b16 %v519
  %v1704 = vunpack.c.l.b16 %v520
  %v1705 = vunpack.c.l.b16 %v521
  %v1706 = vunpack.c.l.b16 %v522
  %v1707 = vunpack.c.l.b16 %v523
  %v1708 = vunpack.c.l.b16 %v524
  %v1709 = vunpack.c.l.b16 %v525
  %v1710 = vunpack.c.l.b16 %v526
  %v1711 = vunpack.c.l.b16 %v527
  %v1712 = vunpack.c.l.b16 %v528
  %v1713 = vunpack.c.l.b16 %v529
  %v1714 = vunpack.c.l.b16 %v530
  %v1715 = vunpack.c.l.b16 %v531
  %v1716 = vunpack.c.l.b16 %v532
  %v1717 = vunpack.c.l.b16 %v533
  %v1718 = vunpack.c.l.b16 %v534
  %v1719 = vunpack.c.l.b16 %v535
  %v1720 = vunpack.c.l.b16 %v536
  %v1721 = vunpack.c.l.b16 %v537
  %v1722 = vunpack.c.l.b16 %v538
  %v1723 = vunpack.c.l.b16 %v539
  %v1724 = vunpack.c.l.b16 %v540
  %v1725 = vunpack.c.l.b16 %v541
  %v1726 = vunpack.c.l.b16 %v542
  %v1727 = vunpack.c.l.b16 %v543
  %v1728 = vunpack.c.l.b16 %v544
  %v1729 = vunpack.c.l.b16 %v545
  %v1730 = vunpack.c.l.b16 %v546
  %v1731 = vunpack.c.l.b16 %v547
  %v1732 = vunpack.c.l.b16 %v548
  %v1733 = vunpack.c.l.b16 %v549
  %v1734 = vunpack.c.l.b16 %v550
  %v1735 = vunpack.c.l.b16 %v551
  %v1736 = vunpack.c.l.b16 %v552
  %v1737 = vunpack.c.l.b16 %v553
  %v1738 = vunpack.c.l.b16 %v554
  %v1739 = vunpack.c.l.b16 %v555
  %v1740 = vunpack.c.l.b16 %v556
  %v1741 = vunpack.c.l.b16 %v557
  %v1742 = vunpack.c.l.b16 %v558
  %v1743 = vunpack.c.l.b16 %v559
  %v1744 = vunpack.c.l.b16 %v560
  %v1745 = vpack.c.b16 %v1234, %v1233
  %v1746 = vpack.c.b16 %v1236, %v1235
  %v1747 = vpack.c.b16 %v1238, %v1237
  %v1748 = vpack.c.b16 %v1240, %v1239
  %v1749 = vpack.c.b16 %v1242, %v1241
  %v1750 = vpack.c.b16 %v1244, %v1243
  %v1751 = vpack.c.b16 %v1246, %v1245
  %v1752 = vpack.c.b16 %v1248, %v1247
  %v1753 = vpack.c.b16 %v1250, %v1249
  %v1754 = vpack.c.b16 %v1252, %v1251
  %v1755 = vpack.c.b16 %v1254, %v1253
  %v1756 = vpack.c.b16 %v1256, %v1255
  %v1757 = vpack.c.b16 %v1258, %v1257
  %v1758 = vpack.c.b16 %v1260, %v1259
  %v1759 = vpack.c.b16 %v1262, %v1261
  %v1760 = vpack.c.b16 %v1264, %v1263
  %v1761 = vpack.c.b16 %v1266, %v1265
  %v1762 = vpack.c.b16 %v1268, %v1267
  %v1763 = vpack.c.b16 %v1270, %v1269
  %v1764 = vpack.c.b16 %v1272, %v1271
  %v1765 = vpack.c.b16 %v1274, %v1273
  %v1766 = vpack.c.b16 %v1276, %v1275
  %v1767 = vpack.c.b16 %v1278, %v1277
  %v1768 = vpack.c.b16 %v1280, %v1279
  %v1769 = vpack.c.b16 %v1282, %v1281
  %v1770 = vpack.c.b16 %v1284, %v1283
  %v1771 = vpack.c.b16 %v1286, %v1285
  %v1772 = vpack.c.b16 %v1288, %v1287
  %v1773 = vpack.c.b16 %v1290, %v1289
  %v1774 = vpack.c.b16 %v1292, %v1291
  %v1775 = vpack.c.b16 %v1294, %v1293
  %v1776 = vpack.c.b16 %v1296, %v1295
  %v1777 = vpack.c.b16 %v1298, %v1297
  %v1778 = vpack.c.b16 %v1300, %v1299
  %v1779 = vpack.c.b16 %v1302, %v1301
  %v1780 = vpack.c.b16 %v1304, %v1303
  %v1781 = vpack.c.b16 %v1306, %v1305
  %v1782 = vpack.c.b16 %v1308, %v1307
  %v1783 = vpack.c.b16 %v1310, %v1309
  %v1784 = vpack.c.b16 %v1312, %v1311
  %v1785 = vpack.c.b16 %v1314, %v1313
  %v1786 = vpack.c.b16 %v1316, %v1315
  %v1787 = vpack.c.b16 %v1318, %v1317
  %v1788 = vpack.c.b16 %v1320, %v1319
  %v1789 = vpack.c.b16 %v1322, %v1321
  %v1790 = vpack.c.b16 %v1324, %v1323
  %v1791 = vpack.c.b16 %v1326, %v1325
  %v1792 = vpack.c.b16 %v1328, %v1327
  %v1793 = vpack.c.b16 %v1330, %v1329
  %v1794 = vpack.c.b16 %v1332, %v1331
  %v1795 = vpack.c.b16 %v1334, %v1333
  %v1796 = vpack.c.b16 %v1336, %v1335
  %v1797 = vpack.c.b16 %v1338, %v1337
  %v1798 = vpack.c.b16 %v1340, %v1339
  %v1799 = vpack.c.b16 %v1342, %v1341
  %v1800 = vpack.c.b16 %v1344, %v1343
  %v1801 = vpack.c.b16 %v1346, %v1345
  %v1802 = vpack.c.b16 %v1348, %v1347
  %v1803 = vpack.c.b16 %v1350, %v1349
  %v1804 = vpack.c.b16 %v1352, %v1351
  %v1805 = vpack.c.b16 %v1354, %v1353
  %v1806 = vpack.c.b16 %v1356, %v1355
  %v1807 = vpack.c.b16 %v1358, %v1357
  %v1808 = vpack.c.b16 %v1360, %v1359
  %v1809 = vpack.c.b16 %v1362, %v1361
  %v1810 = vpack.c.b16 %v1364, %v1363
  %v1811 = vpack.c.b16 %v1366, %v1365
  %v1812 = vpack.c.b16 %v1368, %v1367
  %v1813 = vpack.c.b16 %v1370, %v1369
  %v1814 = vpack.c.b16 %v1372, %v1371
  %v1815 = vpack.c.b16 %v1374, %v1373
  %v1816 = vpack.c.b16 %v1376, %v1375
  %v1817 = vpack.c.b16 %v1378, %v1377
  %v1818 = vpack.c.b16 %v1380, %v1379
  %v1819 = vpack.c.b16 %v1382, %v1381
  %v1820 = vpack.c.b16 %v1384, %v1383
  %v1821 = vpack.c.b16 %v1386, %v1385
  %v1822 = vpack.c.b16 %v1388, %v1387
  %v1823 = vpack.c.b16 %v1390, %v1389
  %v1824 = vpack.c.b16 %v1392, %v1391
  %v1825 = vpack.c.b16 %v1394, %v1393
  %v1826 = vpack.c.b16 %v1396, %v1395
  %v1827 = vpack.c.b16 %v1398, %v1397
  %v1828 = vpack.c.b16 %v1400, %v1399
  %v1829 = vpack.c.b16 %v1402, %v1401
  %v1830 = vpack.c.b16 %v1404, %v1403
  %v1831 = vpack.c.b16 %v1406, %v1405
  %v1832 = vpack.c.b16 %v1408, %v1407
  %v1833 = vpack.c.b16 %v1410, %v1409
  %v1834 = vpack.c.b16 %v1412, %v1411
  %v1835 = vpack.c.b16 %v1414, %v1413
  %v1836 = vpack.c.b16 %v1416, %v1415
  %v1837 = vpack.c.b16 %v1418, %v1417
  %v1838 = vpack.c.b16 %v1420, %v1419
  %v1839 = vpack.c.b16 %v1422, %v1421
  %v1840 = vpack.c.b16 %v1424, %v1423
  %v1841 = vpack.c.b16 %v1426, %v1425
  %v1842 = vpack.c.b16 %v1428, %v1427
  %v1843 = vpack.c.b16 %v1430, %v1429
  %v1844 = vpack.c.b16 %v1432, %v1431
  %v1845 = vpack.c.b16 %v1434, %v1433
  %v1846 = vpack.c.b16 %v1436, %v1435
  %v1847 = vpack.c.b16 %v1438, %v1437
  %v1848 = vpack.c.b16 %v1440, %v1439
  %v1849 = vpack.c.b16 %v1442, %v1441
  %v1850 = vpack.c.b16 %v1444, %v1443
  %v1851 = vpack.c.b16 %v1446, %v1445
  %v1852 = vpack.c.b16 %v1448, %v1447
  %v1853 = vpack.c.b16 %v1450, %v1449
  %v1854 = vpack.c.b16 %v1452, %v1451
  %v1855 = vpack.c.b16 %v1454, %v1453
  %v1856 = vpack.c.b16 %v1456, %v1455
  %v1857 = vpack.c.b16 %v1458, %v1457
  %v1858 = vpack.c.b16 %v1460, %v1459
  %v1859 = vpack.c.b16 %v1462, %v1461
  %v1860 = vpack.c.b16 %v1464, %v1463
  %v1861 = vpack.c.b16 %v1466, %v1465
  %v1862 = vpack.c.b16 %v1468, %v1467
  %v1863 = vpack.c.b16 %v1470, %v1469
  %v1864 = vpack.c.b16 %v1472, %v1471
  %v1865 = vpack.c.b16 %v1474, %v1473
  %v1866 = vpack.c.b16 %v1476, %v1475
  %v1867 = vpack.c.b16 %v1478, %v1477
  %v1868 = vpack.c.b16 %v1480, %v1479
  %v1869 = vpack.c.b16 %v1482, %v1481
  %v1870 = vpack.c.b16 %v1484, %v1483
  %v1871 = vpack.c.b16 %v1486, %v1485
  %v1872 = vpack.c.b16 %v1488, %v1487
  %v1873 = vpack.c.b16 %v1490, %v1489
  %v1874 = vpack.c.b16 %v1492, %v1491
  %v1875 = vpack.c.b16 %v1494, %v1493
  %v1876 = vpack.c.b16 %v1496, %v1495
  %v1877 = vpack.c.b16 %v1498, %v1497
  %v1878 = vpack.c.b16 %v1500, %v1499
  %v1879 = vpack.c.b16 %v1502, %v1501
  %v1880 = vpack.c.b16 %v1504, %v1503
  %v1881 = vpack.c.b16 %v1506, %v1505
  %v1882 = vpack.c.b16 %v1508, %v1507
  %v1883 = vpack.c.b16 %v1510, %v1509
  %v1884 = vpack.c.b16 %v1512, %v1511
  %v1885 = vpack.c.b16 %v1514, %v1513
  %v1886 = vpack.c.b16 %v1516, %v1515
  %v1887 = vpack.c.b16 %v1518, %v1517
  %v1888 = vpack.c.b16 %v1520, %v1519
  %v1889 = vpack.c.b16 %v1522, %v1521
  %v1890 = vpack.c.b16 %v1524, %v1523
  %v1891 = vpack.c.b16 %v1526, %v1525
  %v1892 = vpack.c.b16 %v1528, %v1527
  %v1893 = vpack.c.b16 %v1530, %v1529
  %v1894 = vpack.c.b16 %v1532, %v1531
  %v1895 = vpack.c.b16 %v1534, %v1533
  %v1896 = vpack.c.b16 %v1536, %v1535
  %v1897 = vpack.c.b16 %v1538, %v1537
  %v1898 = vpack.c.b16 %v1540, %v1539
  %v1899 = vpack.c.b16 %v1542, %v1541
  %v1900 = vpack.c.b16 %v1544, %v1543
  %v1901 = vpack.c.b16 %v1546, %v1545
  %v1902 = vpack.c.b16 %v1548, %v1547
  %v1903 = vpack.c.b16 %v1550, %v1549
  %v1904 = vpack.c.b16 %v1552, %v1551
  %v1905 = vpack.c.b16 %v1554, %v1553
  %v1906 = vpack.c.b16 %v1556, %v1555
  %v1907 = vpack.c.b16 %v1558, %v1557
  %v1908 = vpack.c.b16 %v1560, %v1559
  %v1909 = vpack.c.b16 %v1562, %v1561
  %v1910 = vpack.c.b16 %v1564, %v1563
  %v1911 = vpack.c.b16 %v1566, %v1565
  %v1912 = vpack.c.b16 %v1568, %v1567
  %v1913 = vpack.c.b16 %v1570, %v1569
  %v1914 = vpack.c.b16 %v1572, %v1571
  %v1915 = vpack.c.b16 %v1574, %v1573
  %v1916 = vpack.c.b16 %v1576, %v1575
  %v1917 = vpack.c.b16 %v1578, %v1577
  %v1918 = vpack.c.b16 %v1580, %v1579
  %v1919 = vpack.c.b16 %v1582, %v1581
  %v1920 = vpack.c.b16 %v1584, %v1583
  %v1921 = vpack.c.b16 %v1586, %v1585
  %v1922 = vpack.c.b16 %v1588, %v1587
  %v1923 = vpack.c.b16 %v1590, %v1589
  %v1924 = vpack.c.b16 %v1592, %v1591
  %v1925 = vpack.c.b16 %v1594, %v1593
  %v1926 = vpack.c.b16 %v1596, %v1595
  %v1927 = vpack.c.b16 %v1598, %v1597
  %v1928 = vpack.c.b16 %v1600, %v1599
  %v1929 = vpack.c.b16 %v1602, %v1601
  %v1930 = vpack.c.b16 %v1604, %v1603
  %v1931 = vpack.c.b16 %v1606, %v1605
  %v1932 = vpack.c.b16 %v1608, %v1607
  %v1933 = vpack.c.b16 %v1610, %v1609
  %v1934 = vpack.c.b16 %v1612, %v1611
  %v1935 = vpack.c.b16 %v1614, %v1613
  %v1936 = vpack.c.b16 %v1616, %v1615
  %v1937 = vpack.c.b16 %v1618, %v1617
  %v1938 = vpack.c.b16 %v1620, %v1619
  %v1939 = vpack.c.b16 %v1622, %v1621
  %v1940 = vpack.c.b16 %v1624, %v1623
  %v1941 = vpack.c.b16 %v1626, %v1625
  %v1942 = vpack.c.b16 %v1628, %v1627
  %v1943 = vpack.c.b16 %v1630, %v1629
  %v1944 = vpack.c.b16 %v1632, %v1631
  %v1945 = vpack.c.b16 %v1634, %v1633
  %v1946 = vpack.c.b16 %v1636, %v1635
  %v1947 = vpack.c.b16 %v1638, %v1637
  %v1948 = vpack.c.b16 %v1640, %v1639
  %v1949 = vpack.c.b16 %v1642, %v1641
  %v1950 = vpack.c.b16 %v1644, %v1643
  %v1951 = vpack.c.b16 %v1646, %v1645
  %v1952 = vpack.c.b16 %v1648, %v1647
  %v1953 = vpack.c.b16 %v1650, %v1649
  %v1954 = vpack.c.b16 %v1652, %v1651
  %v1955 = vpack.c.b16 %v1654, %v1653
  %v1956 = vpack.c.b16 %v1656, %v1655
  %v1957 = vpack.c.b16 %v1658, %v1657
  %v1958 = vpack.c.b16 %v1660, %v1659
  %v1959 = vpack.c.b16 %v1662, %v1661
  %v1960 = vpack.c.b16 %v1664, %v1663
  %v1961 = vpack.c.b16 %v1666, %v1665
  %v1962 = vpack.c.b16 %v1668, %v1667
  %v1963 = vpack.c.b16 %v1670, %v1669
  %v1964 = vpack.c.b16 %v1672, %v1671
  %v1965 = vpack.c.b16 %v1674, %v1673
  %v1966 = vpack.c.b16 %v1676, %v1675
  %v1967 = vpack.c.b16 %v1678, %v1677
  %v1968 = vpack.c.b16 %v1680, %v1679
  %v1969 = vpack.c.b16 %v1682, %v1681
  %v1970 = vpack.c.b16 %v1684, %v1683
  %v1971 = vpack.c.b16 %v1686, %v1685
  %v1972 = vpack.c.b16 %v1688, %v1687
  %v1973 = vpack.c.b16 %v1690, %v1689
  %v1974 = vpack.c.b16 %v1692, %v1691
  %v1975 = vpack.c.b16 %v1694, %v1693
  %v1976 = vpack.c.b16 %v1696, %v1695
  %v1977 = vpack.c.b16 %v1698, %v1697
  %v1978 = vpack.c.b16 %v1700, %v1699
  %v1979 = vpack.c.b16 %v1702, %v1701
  %v1980 = vpack.c.b16 %v1704, %v1703
  %v1981 = vpack.c.b16 %v1706, %v1705
  %v1982 = vpack.c.b16 %v1708, %v1707
  %v1983 = vpack.c.b16 %v1710, %v1709
  %v1984 = vpack.c.b16 %v1712, %v1711
  %v1985 = vpack.c.b16 %v1714, %v1713
  %v1986 = vpack.c.b16 %v1716, %v1715
  %v1987 = vpack.c.b16 %v1718, %v1717
  %v1988 = vpack.c.b16 %v1720, %v1719
  %v1989 = vpack.c.b16 %v1722, %v1721
  %v1990 = vpack.c.b16 %v1724, %v1723
  %v1991 = vpack.c.b16 %v1726, %v1725
  %v1992 = vpack.c.b16 %v1728, %v1727
  %v1993 = vpack.c.b16 %v1730, %v1729
  %v1994 = vpack.c.b16 %v1732, %v1731
  %v1995 = vpack.c.b16 %v1734, %v1733
  %v1996 = vpack.c.b16 %v1736, %v1735
  %v1997 = vpack.c.b16 %v1738, %v1737
  %v1998 = vpack.c.b16 %v1740, %v1739
  %v1999 = vpack.c.b16 %v1742, %v1741
  %v2000 = vpack.c.b16 %v1744, %v1743
  %2257 = vmatpush.bf16.msra.mxu0 %v1752
  %2258 = vmatpush.bf16.msra.mxu0 %v1751
  %2259 = vmatpush.bf16.msra.mxu0 %v1750
  %2260 = vmatpush.bf16.msra.mxu0 %v1749
  %2261 = vmatpush.bf16.msra.mxu0 %v1748
  %2262 = vmatpush.bf16.msra.mxu0 %v1747
  %2263 = vmatpush.bf16.msra.mxu0 %v1746
  %2264 = vmatpush.bf16.msra.mxu0 %v1745
  %2265 = vmatmul.bf16.gmra.mxu0 %v657
  %v2266 = vpop.f32.mrf.mxu0
  %v2267 = vadd.f32 0.0, %v2266
  %v2268 = vpop.f32.mrf.mxu0
  %v2269 = vadd.f32 0.0, %v2268
  %2270 = vdwg.mxu0
  %2271 = vmatpush.bf16.msra.mxu0 %v1760
  %2272 = vmatpush.bf16.msra.mxu0 %v1759
  %2273 = vmatpush.bf16.msra.mxu0 %v1758
  %2274 = vmatpush.bf16.msra.mxu0 %v1757
  %2275 = vmatpush.bf16.msra.mxu0 %v1756
  %2276 = vmatpush.bf16.msra.mxu0 %v1755
  %2277 = vmatpush.bf16.msra.mxu0 %v1754
  %2278 = vmatpush.bf16.msra.mxu0 %v1753
  %2279 = vmatmul.bf16.gmra.mxu0 %v658
  %v2280 = vpop.f32.mrf.mxu0
  %v2281 = vadd.f32 %v2267, %v2280
  %v2282 = vpop.f32.mrf.mxu0
  %v2283 = vadd.f32 %v2269, %v2282
  %2284 = vdwg.mxu0
  %2285 = vmatpush.bf16.msra.mxu0 %v1768
  %2286 = vmatpush.bf16.msra.mxu0 %v1767
  %2287 = vmatpush.bf16.msra.mxu0 %v1766
  %2288 = vmatpush.bf16.msra.mxu0 %v1765
  %2289 = vmatpush.bf16.msra.mxu0 %v1764
  %2290 = vmatpush.bf16.msra.mxu0 %v1763
  %2291 = vmatpush.bf16.msra.mxu0 %v1762
  %2292 = vmatpush.bf16.msra.mxu0 %v1761
  %2293 = vmatmul.bf16.gmra.mxu0 %v659
  %v2294 = vpop.f32.mrf.mxu0
  %v2295 = vadd.f32 %v2281, %v2294
  %v2296 = vpop.f32.mrf.mxu0
  %v2297 = vadd.f32 %v2283, %v2296
  %2298 = vdwg.mxu0
  %2299 = vmatpush.bf16.msra.mxu0 %v1776
  %2300 = vmatpush.bf16.msra.mxu0 %v1775
  %2301 = vmatpush.bf16.msra.mxu0 %v1774
  %2302 = vmatpush.bf16.msra.mxu0 %v1773
  %2303 = vmatpush.bf16.msra.mxu0 %v1772
  %2304 = vmatpush.bf16.msra.mxu0 %v1771
  %2305 = vmatpush.bf16.msra.mxu0 %v1770
  %2306 = vmatpush.bf16.msra.mxu0 %v1769
  %2307 = vmatmul.bf16.gmra.mxu0 %v660
  %v2308 = vpop.f32.mrf.mxu0
  %v2309 = vadd.f32 %v2295, %v2308
  %v2310 = vpop.f32.mrf.mxu0
  %v2311 = vadd.f32 %v2297, %v2310
  %2312 = vdwg.mxu0
  %2313 = vmatpush.bf16.msra.mxu0 %v1784
  %2314 = vmatpush.bf16.msra.mxu0 %v1783
  %2315 = vmatpush.bf16.msra.mxu0 %v1782
  %2316 = vmatpush.bf16.msra.mxu0 %v1781
  %2317 = vmatpush.bf16.msra.mxu0 %v1780
  %2318 = vmatpush.bf16.msra.mxu0 %v1779
  %2319 = vmatpush.bf16.msra.mxu0 %v1778
  %2320 = vmatpush.bf16.msra.mxu0 %v1777
  %2321 = vmatmul.bf16.gmra.mxu0 %v661
  %v2322 = vpop.f32.mrf.mxu0
  %v2323 = vadd.f32 %v2309, %v2322
  %v2324 = vpop.f32.mrf.mxu0
  %v2325 = vadd.f32 %v2311, %v2324
  %2326 = vdwg.mxu0
  %2327 = vmatpush.bf16.msra.mxu0 %v1792
  %2328 = vmatpush.bf16.msra.mxu0 %v1791
  %2329 = vmatpush.bf16.msra.mxu0 %v1790
  %2330 = vmatpush.bf16.msra.mxu0 %v1789
  %2331 = vmatpush.bf16.msra.mxu0 %v1788
  %2332 = vmatpush.bf16.msra.mxu0 %v1787
  %2333 = vmatpush.bf16.msra.mxu0 %v1786
  %2334 = vmatpush.bf16.msra.mxu0 %v1785
  %2335 = vmatmul.bf16.gmra.mxu0 %v662
  %v2336 = vpop.f32.mrf.mxu0
  %v2337 = vadd.f32 %v2323, %v2336
  %v2338 = vpop.f32.mrf.mxu0
  %v2339 = vadd.f32 %v2325, %v2338
  %2340 = vdwg.mxu0
  %2341 = vmatpush.bf16.msra.mxu0 %v1800
  %2342 = vmatpush.bf16.msra.mxu0 %v1799
  %2343 = vmatpush.bf16.msra.mxu0 %v1798
  %2344 = vmatpush.bf16.msra.mxu0 %v1797
  %2345 = vmatpush.bf16.msra.mxu0 %v1796
  %2346 = vmatpush.bf16.msra.mxu0 %v1795
  %2347 = vmatpush.bf16.msra.mxu0 %v1794
  %2348 = vmatpush.bf16.msra.mxu0 %v1793
  %2349 = vmatmul.bf16.gmra.mxu0 %v663
  %v2350 = vpop.f32.mrf.mxu0
  %v2351 = vadd.f32 %v2337, %v2350
  %v2352 = vpop.f32.mrf.mxu0
  %v2353 = vadd.f32 %v2339, %v2352
  %2354 = vdwg.mxu0
  %2355 = vmatpush.bf16.msra.mxu0 %v1808
  %2356 = vmatpush.bf16.msra.mxu0 %v1807
  %2357 = vmatpush.bf16.msra.mxu0 %v1806
  %2358 = vmatpush.bf16.msra.mxu0 %v1805
  %2359 = vmatpush.bf16.msra.mxu0 %v1804
  %2360 = vmatpush.bf16.msra.mxu0 %v1803
  %2361 = vmatpush.bf16.msra.mxu0 %v1802
  %2362 = vmatpush.bf16.msra.mxu0 %v1801
  %2363 = vmatmul.bf16.gmra.mxu0 %v664
  %v2364 = vpop.f32.mrf.mxu0
  %v2365 = vadd.f32 %v2351, %v2364
  %v2366 = vpop.f32.mrf.mxu0
  %v2367 = vadd.f32 %v2353, %v2366
  %2368 = vdwg.mxu0
  %2369 = vmatpush.bf16.msra.mxu0 %v1816
  %2370 = vmatpush.bf16.msra.mxu0 %v1815
  %2371 = vmatpush.bf16.msra.mxu0 %v1814
  %2372 = vmatpush.bf16.msra.mxu0 %v1813
  %2373 = vmatpush.bf16.msra.mxu0 %v1812
  %2374 = vmatpush.bf16.msra.mxu0 %v1811
  %2375 = vmatpush.bf16.msra.mxu0 %v1810
  %2376 = vmatpush.bf16.msra.mxu0 %v1809
  %2377 = vmatmul.bf16.gmra.mxu0 %v665
  %v2378 = vpop.f32.mrf.mxu0
  %v2379 = vadd.f32 %v2365, %v2378
  %v2380 = vpop.f32.mrf.mxu0
  %v2381 = vadd.f32 %v2367, %v2380
  %2382 = vdwg.mxu0
  %2383 = vmatpush.bf16.msra.mxu0 %v1824
  %2384 = vmatpush.bf16.msra.mxu0 %v1823
  %2385 = vmatpush.bf16.msra.mxu0 %v1822
  %2386 = vmatpush.bf16.msra.mxu0 %v1821
  %2387 = vmatpush.bf16.msra.mxu0 %v1820
  %2388 = vmatpush.bf16.msra.mxu0 %v1819
  %2389 = vmatpush.bf16.msra.mxu0 %v1818
  %2390 = vmatpush.bf16.msra.mxu0 %v1817
  %2391 = vmatmul.bf16.gmra.mxu0 %v666
  %v2392 = vpop.f32.mrf.mxu0
  %v2393 = vadd.f32 %v2379, %v2392
  %v2394 = vpop.f32.mrf.mxu0
  %v2395 = vadd.f32 %v2381, %v2394
  %2396 = vdwg.mxu0
  %2397 = vmatpush.bf16.msra.mxu0 %v1832
  %2398 = vmatpush.bf16.msra.mxu0 %v1831
  %2399 = vmatpush.bf16.msra.mxu0 %v1830
  %2400 = vmatpush.bf16.msra.mxu0 %v1829
  %2401 = vmatpush.bf16.msra.mxu0 %v1828
  %2402 = vmatpush.bf16.msra.mxu0 %v1827
  %2403 = vmatpush.bf16.msra.mxu0 %v1826
  %2404 = vmatpush.bf16.msra.mxu0 %v1825
  %2405 = vmatmul.bf16.gmra.mxu0 %v667
  %v2406 = vpop.f32.mrf.mxu0
  %v2407 = vadd.f32 %v2393, %v2406
  %v2408 = vpop.f32.mrf.mxu0
  %v2409 = vadd.f32 %v2395, %v2408
  %2410 = vdwg.mxu0
  %2411 = vmatpush.bf16.msra.mxu0 %v1840
  %2412 = vmatpush.bf16.msra.mxu0 %v1839
  %2413 = vmatpush.bf16.msra.mxu0 %v1838
  %2414 = vmatpush.bf16.msra.mxu0 %v1837
  %2415 = vmatpush.bf16.msra.mxu0 %v1836
  %2416 = vmatpush.bf16.msra.mxu0 %v1835
  %2417 = vmatpush.bf16.msra.mxu0 %v1834
  %2418 = vmatpush.bf16.msra.mxu0 %v1833
  %2419 = vmatmul.bf16.gmra.mxu0 %v668
  %v2420 = vpop.f32.mrf.mxu0
  %v2421 = vadd.f32 %v2407, %v2420
  %v2422 = vpop.f32.mrf.mxu0
  %v2423 = vadd.f32 %v2409, %v2422
  %2424 = vdwg.mxu0
  %2425 = vmatpush.bf16.msra.mxu0 %v1848
  %2426 = vmatpush.bf16.msra.mxu0 %v1847
  %2427 = vmatpush.bf16.msra.mxu0 %v1846
  %2428 = vmatpush.bf16.msra.mxu0 %v1845
  %2429 = vmatpush.bf16.msra.mxu0 %v1844
  %2430 = vmatpush.bf16.msra.mxu0 %v1843
  %2431 = vmatpush.bf16.msra.mxu0 %v1842
  %2432 = vmatpush.bf16.msra.mxu0 %v1841
  %2433 = vmatmul.bf16.gmra.mxu0 %v669
  %v2434 = vpop.f32.mrf.mxu0
  %v2435 = vadd.f32 %v2421, %v2434
  %v2436 = vpop.f32.mrf.mxu0
  %v2437 = vadd.f32 %v2423, %v2436
  %2438 = vdwg.mxu0
  %2439 = vmatpush.bf16.msra.mxu0 %v1856
  %2440 = vmatpush.bf16.msra.mxu0 %v1855
  %2441 = vmatpush.bf16.msra.mxu0 %v1854
  %2442 = vmatpush.bf16.msra.mxu0 %v1853
  %2443 = vmatpush.bf16.msra.mxu0 %v1852
  %2444 = vmatpush.bf16.msra.mxu0 %v1851
  %2445 = vmatpush.bf16.msra.mxu0 %v1850
  %2446 = vmatpush.bf16.msra.mxu0 %v1849
  %2447 = vmatmul.bf16.gmra.mxu0 %v670
  %v2448 = vpop.f32.mrf.mxu0
  %v2449 = vadd.f32 %v2435, %v2448
  %v2450 = vpop.f32.mrf.mxu0
  %v2451 = vadd.f32 %v2437, %v2450
  %2452 = vdwg.mxu0
  %2453 = vmatpush.bf16.msra.mxu0 %v1864
  %2454 = vmatpush.bf16.msra.mxu0 %v1863
  %2455 = vmatpush.bf16.msra.mxu0 %v1862
  %2456 = vmatpush.bf16.msra.mxu0 %v1861
  %2457 = vmatpush.bf16.msra.mxu0 %v1860
  %2458 = vmatpush.bf16.msra.mxu0 %v1859
  %2459 = vmatpush.bf16.msra.mxu0 %v1858
  %2460 = vmatpush.bf16.msra.mxu0 %v1857
  %2461 = vmatmul.bf16.gmra.mxu0 %v671
  %v2462 = vpop.f32.mrf.mxu0
  %v2463 = vadd.f32 %v2449, %v2462
  %v2464 = vpop.f32.mrf.mxu0
  %v2465 = vadd.f32 %v2451, %v2464
  %2466 = vdwg.mxu0
  %2467 = vmatpush.bf16.msra.mxu0 %v1872
  %2468 = vmatpush.bf16.msra.mxu0 %v1871
  %2469 = vmatpush.bf16.msra.mxu0 %v1870
  %2470 = vmatpush.bf16.msra.mxu0 %v1869
  %2471 = vmatpush.bf16.msra.mxu0 %v1868
  %2472 = vmatpush.bf16.msra.mxu0 %v1867
  %2473 = vmatpush.bf16.msra.mxu0 %v1866
  %2474 = vmatpush.bf16.msra.mxu0 %v1865
  %2475 = vmatmul.bf16.gmra.mxu0 %v672
  %v2476 = vpop.f32.mrf.mxu0
  %v2477 = vadd.f32 %v2463, %v2476
  %v2478 = vpop.f32.mrf.mxu0
  %v2479 = vadd.f32 %v2465, %v2478
  %2480 = vdwg.mxu0
  %2481 = vmatpush.bf16.msra.mxu0 %v1880
  %2482 = vmatpush.bf16.msra.mxu0 %v1879
  %2483 = vmatpush.bf16.msra.mxu0 %v1878
  %2484 = vmatpush.bf16.msra.mxu0 %v1877
  %2485 = vmatpush.bf16.msra.mxu0 %v1876
  %2486 = vmatpush.bf16.msra.mxu0 %v1875
  %2487 = vmatpush.bf16.msra.mxu0 %v1874
  %2488 = vmatpush.bf16.msra.mxu0 %v1873
  %2489 = vmatmul.bf16.gmra.mxu0 %v673
  %v2490 = vpop.f32.mrf.mxu0
  %v2491 = vadd.f32 %v2477, %v2490
  %v2492 = vpop.f32.mrf.mxu0
  %v2493 = vadd.f32 %v2479, %v2492
  %2494 = vdwg.mxu0
  %2495 = vmatpush.bf16.msra.mxu0 %v1888
  %2496 = vmatpush.bf16.msra.mxu0 %v1887
  %2497 = vmatpush.bf16.msra.mxu0 %v1886
  %2498 = vmatpush.bf16.msra.mxu0 %v1885
  %2499 = vmatpush.bf16.msra.mxu0 %v1884
  %2500 = vmatpush.bf16.msra.mxu0 %v1883
  %2501 = vmatpush.bf16.msra.mxu0 %v1882
  %2502 = vmatpush.bf16.msra.mxu0 %v1881
  %2503 = vmatmul.bf16.gmra.mxu0 %v674
  %v2504 = vpop.f32.mrf.mxu0
  %v2505 = vadd.f32 %v2491, %v2504
  %v2506 = vpop.f32.mrf.mxu0
  %v2507 = vadd.f32 %v2493, %v2506
  %2508 = vdwg.mxu0
  %2509 = vmatpush.bf16.msra.mxu0 %v1896
  %2510 = vmatpush.bf16.msra.mxu0 %v1895
  %2511 = vmatpush.bf16.msra.mxu0 %v1894
  %2512 = vmatpush.bf16.msra.mxu0 %v1893
  %2513 = vmatpush.bf16.msra.mxu0 %v1892
  %2514 = vmatpush.bf16.msra.mxu0 %v1891
  %2515 = vmatpush.bf16.msra.mxu0 %v1890
  %2516 = vmatpush.bf16.msra.mxu0 %v1889
  %2517 = vmatmul.bf16.gmra.mxu0 %v675
  %v2518 = vpop.f32.mrf.mxu0
  %v2519 = vadd.f32 %v2505, %v2518
  %v2520 = vpop.f32.mrf.mxu0
  %v2521 = vadd.f32 %v2507, %v2520
  %2522 = vdwg.mxu0
  %2523 = vmatpush.bf16.msra.mxu0 %v1904
  %2524 = vmatpush.bf16.msra.mxu0 %v1903
  %2525 = vmatpush.bf16.msra.mxu0 %v1902
  %2526 = vmatpush.bf16.msra.mxu0 %v1901
  %2527 = vmatpush.bf16.msra.mxu0 %v1900
  %2528 = vmatpush.bf16.msra.mxu0 %v1899
  %2529 = vmatpush.bf16.msra.mxu0 %v1898
  %2530 = vmatpush.bf16.msra.mxu0 %v1897
  %2531 = vmatmul.bf16.gmra.mxu0 %v676
  %v2532 = vpop.f32.mrf.mxu0
  %v2533 = vadd.f32 %v2519, %v2532
  %v2534 = vpop.f32.mrf.mxu0
  %v2535 = vadd.f32 %v2521, %v2534
  %2536 = vdwg.mxu0
  %2537 = vmatpush.bf16.msra.mxu0 %v1912
  %2538 = vmatpush.bf16.msra.mxu0 %v1911
  %2539 = vmatpush.bf16.msra.mxu0 %v1910
  %2540 = vmatpush.bf16.msra.mxu0 %v1909
  %2541 = vmatpush.bf16.msra.mxu0 %v1908
  %2542 = vmatpush.bf16.msra.mxu0 %v1907
  %2543 = vmatpush.bf16.msra.mxu0 %v1906
  %2544 = vmatpush.bf16.msra.mxu0 %v1905
  %2545 = vmatmul.bf16.gmra.mxu0 %v677
  %v2546 = vpop.f32.mrf.mxu0
  %v2547 = vadd.f32 %v2533, %v2546
  %v2548 = vpop.f32.mrf.mxu0
  %v2549 = vadd.f32 %v2535, %v2548
  %2550 = vdwg.mxu0
  %2551 = vmatpush.bf16.msra.mxu0 %v1920
  %2552 = vmatpush.bf16.msra.mxu0 %v1919
  %2553 = vmatpush.bf16.msra.mxu0 %v1918
  %2554 = vmatpush.bf16.msra.mxu0 %v1917
  %2555 = vmatpush.bf16.msra.mxu0 %v1916
  %2556 = vmatpush.bf16.msra.mxu0 %v1915
  %2557 = vmatpush.bf16.msra.mxu0 %v1914
  %2558 = vmatpush.bf16.msra.mxu0 %v1913
  %2559 = vmatmul.bf16.gmra.mxu0 %v678
  %v2560 = vpop.f32.mrf.mxu0
  %v2561 = vadd.f32 %v2547, %v2560
  %v2562 = vpop.f32.mrf.mxu0
  %v2563 = vadd.f32 %v2549, %v2562
  %2564 = vdwg.mxu0
  %2565 = vmatpush.bf16.msra.mxu0 %v1928
  %2566 = vmatpush.bf16.msra.mxu0 %v1927
  %2567 = vmatpush.bf16.msra.mxu0 %v1926
  %2568 = vmatpush.bf16.msra.mxu0 %v1925
  %2569 = vmatpush.bf16.msra.mxu0 %v1924
  %2570 = vmatpush.bf16.msra.mxu0 %v1923
  %2571 = vmatpush.bf16.msra.mxu0 %v1922
  %2572 = vmatpush.bf16.msra.mxu0 %v1921
  %2573 = vmatmul.bf16.gmra.mxu0 %v679
  %v2574 = vpop.f32.mrf.mxu0
  %v2575 = vadd.f32 %v2561, %v2574
  %v2576 = vpop.f32.mrf.mxu0
  %v2577 = vadd.f32 %v2563, %v2576
  %2578 = vdwg.mxu0
  %2579 = vmatpush.bf16.msra.mxu0 %v1936
  %2580 = vmatpush.bf16.msra.mxu0 %v1935
  %2581 = vmatpush.bf16.msra.mxu0 %v1934
  %2582 = vmatpush.bf16.msra.mxu0 %v1933
  %2583 = vmatpush.bf16.msra.mxu0 %v1932
  %2584 = vmatpush.bf16.msra.mxu0 %v1931
  %2585 = vmatpush.bf16.msra.mxu0 %v1930
  %2586 = vmatpush.bf16.msra.mxu0 %v1929
  %2587 = vmatmul.bf16.gmra.mxu0 %v680
  %v2588 = vpop.f32.mrf.mxu0
  %v2589 = vadd.f32 %v2575, %v2588
  %v2590 = vpop.f32.mrf.mxu0
  %v2591 = vadd.f32 %v2577, %v2590
  %2592 = vdwg.mxu0
  %2593 = vmatpush.bf16.msra.mxu0 %v1944
  %2594 = vmatpush.bf16.msra.mxu0 %v1943
  %2595 = vmatpush.bf16.msra.mxu0 %v1942
  %2596 = vmatpush.bf16.msra.mxu0 %v1941
  %2597 = vmatpush.bf16.msra.mxu0 %v1940
  %2598 = vmatpush.bf16.msra.mxu0 %v1939
  %2599 = vmatpush.bf16.msra.mxu0 %v1938
  %2600 = vmatpush.bf16.msra.mxu0 %v1937
  %2601 = vmatmul.bf16.gmra.mxu0 %v681
  %v2602 = vpop.f32.mrf.mxu0
  %v2603 = vadd.f32 %v2589, %v2602
  %v2604 = vpop.f32.mrf.mxu0
  %v2605 = vadd.f32 %v2591, %v2604
  %2606 = vdwg.mxu0
  %2607 = vmatpush.bf16.msra.mxu0 %v1952
  %2608 = vmatpush.bf16.msra.mxu0 %v1951
  %2609 = vmatpush.bf16.msra.mxu0 %v1950
  %2610 = vmatpush.bf16.msra.mxu0 %v1949
  %2611 = vmatpush.bf16.msra.mxu0 %v1948
  %2612 = vmatpush.bf16.msra.mxu0 %v1947
  %2613 = vmatpush.bf16.msra.mxu0 %v1946
  %2614 = vmatpush.bf16.msra.mxu0 %v1945
  %2615 = vmatmul.bf16.gmra.mxu0 %v682
  %v2616 = vpop.f32.mrf.mxu0
  %v2617 = vadd.f32 %v2603, %v2616
  %v2618 = vpop.f32.mrf.mxu0
  %v2619 = vadd.f32 %v2605, %v2618
  %2620 = vdwg.mxu0
  %2621 = vmatpush.bf16.msra.mxu0 %v1960
  %2622 = vmatpush.bf16.msra.mxu0 %v1959
  %2623 = vmatpush.bf16.msra.mxu0 %v1958
  %2624 = vmatpush.bf16.msra.mxu0 %v1957
  %2625 = vmatpush.bf16.msra.mxu0 %v1956
  %2626 = vmatpush.bf16.msra.mxu0 %v1955
  %2627 = vmatpush.bf16.msra.mxu0 %v1954
  %2628 = vmatpush.bf16.msra.mxu0 %v1953
  %2629 = vmatmul.bf16.gmra.mxu0 %v683
  %v2630 = vpop.f32.mrf.mxu0
  %v2631 = vadd.f32 %v2617, %v2630
  %v2632 = vpop.f32.mrf.mxu0
  %v2633 = vadd.f32 %v2619, %v2632
  %2634 = vdwg.mxu0
  %2635 = vmatpush.bf16.msra.mxu0 %v1968
  %2636 = vmatpush.bf16.msra.mxu0 %v1967
  %2637 = vmatpush.bf16.msra.mxu0 %v1966
  %2638 = vmatpush.bf16.msra.mxu0 %v1965
  %2639 = vmatpush.bf16.msra.mxu0 %v1964
  %2640 = vmatpush.bf16.msra.mxu0 %v1963
  %2641 = vmatpush.bf16.msra.mxu0 %v1962
  %2642 = vmatpush.bf16.msra.mxu0 %v1961
  %2643 = vmatmul.bf16.gmra.mxu0 %v684
  %v2644 = vpop.f32.mrf.mxu0
  %v2645 = vadd.f32 %v2631, %v2644
  %v2646 = vpop.f32.mrf.mxu0
  %v2647 = vadd.f32 %v2633, %v2646
  %2648 = vdwg.mxu0
  %2649 = vmatpush.bf16.msra.mxu0 %v1976
  %2650 = vmatpush.bf16.msra.mxu0 %v1975
  %2651 = vmatpush.bf16.msra.mxu0 %v1974
  %2652 = vmatpush.bf16.msra.mxu0 %v1973
  %2653 = vmatpush.bf16.msra.mxu0 %v1972
  %2654 = vmatpush.bf16.msra.mxu0 %v1971
  %2655 = vmatpush.bf16.msra.mxu0 %v1970
  %2656 = vmatpush.bf16.msra.mxu0 %v1969
  %2657 = vmatmul.bf16.gmra.mxu0 %v685
  %v2658 = vpop.f32.mrf.mxu0
  %v2659 = vadd.f32 %v2645, %v2658
  %v2660 = vpop.f32.mrf.mxu0
  %v2661 = vadd.f32 %v2647, %v2660
  %2662 = vdwg.mxu0
  %2663 = vmatpush.bf16.msra.mxu0 %v1984
  %2664 = vmatpush.bf16.msra.mxu0 %v1983
  %2665 = vmatpush.bf16.msra.mxu0 %v1982
  %2666 = vmatpush.bf16.msra.mxu0 %v1981
  %2667 = vmatpush.bf16.msra.mxu0 %v1980
  %2668 = vmatpush.bf16.msra.mxu0 %v1979
  %2669 = vmatpush.bf16.msra.mxu0 %v1978
  %2670 = vmatpush.bf16.msra.mxu0 %v1977
  %2671 = vmatmul.bf16.gmra.mxu0 %v686
  %v2672 = vpop.f32.mrf.mxu0
  %v2673 = vadd.f32 %v2659, %v2672
  %v2674 = vpop.f32.mrf.mxu0
  %v2675 = vadd.f32 %v2661, %v2674
  %2676 = vdwg.mxu0
  %2677 = vmatpush.bf16.msra.mxu0 %v1992
  %2678 = vmatpush.bf16.msra.mxu0 %v1991
  %2679 = vmatpush.bf16.msra.mxu0 %v1990
  %2680 = vmatpush.bf16.msra.mxu0 %v1989
  %2681 = vmatpush.bf16.msra.mxu0 %v1988
  %2682 = vmatpush.bf16.msra.mxu0 %v1987
  %2683 = vmatpush.bf16.msra.mxu0 %v1986
  %2684 = vmatpush.bf16.msra.mxu0 %v1985
  %2685 = vmatmul.bf16.gmra.mxu0 %v687
  %v2686 = vpop.f32.mrf.mxu0
  %v2687 = vadd.f32 %v2673, %v2686
  %v2688 = vpop.f32.mrf.mxu0
  %v2689 = vadd.f32 %v2675, %v2688
  %2690 = vdwg.mxu0
  %2691 = vmatpush.bf16.msra.mxu0 %v2000
  %2692 = vmatpush.bf16.msra.mxu0 %v1999
  %2693 = vmatpush.bf16.msra.mxu0 %v1998
  %2694 = vmatpush.bf16.msra.mxu0 %v1997
  %2695 = vmatpush.bf16.msra.mxu0 %v1996
  %2696 = vmatpush.bf16.msra.mxu0 %v1995
  %2697 = vmatpush.bf16.msra.mxu0 %v1994
  %2698 = vmatpush.bf16.msra.mxu0 %v1993
  %2699 = vmatmul.bf16.gmra.mxu0 %v688
  %v2700 = vpop.f32.mrf.mxu0
  %v2701 = vadd.f32 %v2687, %v2700
  %v2702 = vpop.f32.mrf.mxu0
  %v2703 = vadd.f32 %v2689, %v2702
  %2704 = vdwg.mxu0
  %v2705 = vld [vmem:[%s2] sm:$0x1]
  %v2707 = vperm.slane %v2705, 0
  %v2709 = vmul.f32 %v2701, %v2707
  %v2710 = vmul.f32 %v2703, %v2707
  %v2711 = vld [vmem:[%s3] sm:$0x1]
  %v2713 = vperm.slane %v2711, 0
  %v2715 = vadd.f32 %v2709, %v2713
  %v2716 = vadd.f32 %v2710, %v2713
  %vm2717 = vcmp.ge.f32.partialorder %v2715, 0.0
  %vm2718 = vcmp.ge.f32.partialorder %v2716, 0.0
  %v2719 = vmul.f32 %v2715, 0.2
  %v2720 = vmul.f32 %v2716, 0.2
  %v2721 = vsel %vm2717, %v2715, %v2719
  %v2722 = vsel %vm2718, %v2716, %v2720
  %v2723 = vpack.c.bf16 %v2721, %v2721
  %v2724 = vpack.c.bf16 %v2722, %v2722
  %2725 = vst [vmem:[%s4] sm:$0xf] %v2723
  %2726 = vst [vmem:[%s4 + $0x4] sm:$0xf] %v2724
  // Predicated region
  $region18: #{discriminator_forward.7} parent=0 // pred_check
    _
  $region19: #{discriminator_forward.7} parent=0 // pred_check_branch
    %2728 = sbr.rel (0) target = $region21
  $region20: #{discriminator_forward.7} parent=0 // pred_region
    _
  $region21: #{discriminator_forward.7} parent=0 // pred_fallthru
    _
  // Predicated region
  $region22: #{discriminator_forward.7} parent=0 // pred_check
    _
  $region23: #{discriminator_forward.7} parent=0 // pred_check_branch
    %2730 = sbr.rel (0) target = $region25
  $region24: #{discriminator_forward.7} parent=0 // pred_region
    _
  $region25: #{discriminator_forward.7} parent=0 // pred_fallthru
    _

</llo_original>
